<compile_context>
chip_gen: v7x
topology: tpu7x:2x2x1
jax: 0.10.0
libtpu: 0.0.40
codegen_flags: <defaults>
</compile_context>

<pallas_src>
from functools import partial

import jax
import jax.numpy as jnp
import numpy as np
from jax.experimental import pallas as pl
from jax.experimental.pallas import tpu as pltpu

OUTPUT_SIZE = 6      # module default output_size
HEAD_WIDTH = 128     # lane-dense fused mean/std head width (>= 2 * OUTPUT_SIZE)


def _softplus(x):
    # numerically stable softplus == torch.nn.Softplus(beta=1)
    return jnp.maximum(x, 0.0) + jnp.log1p(jnp.exp(-jnp.abs(x)))


def sirats_kernel(gap_ref, wp_ref, bp_ref, w1_ref, b1_ref, w2_ref, b2_ref,
                  whm_ref, whs_ref, bh_ref, out_ref):
    bf16 = jnp.bfloat16

    # --- backbone stub (part 2): learned projection to 2048 features + ReLU ---
    gap = gap_ref[...].astype(jnp.float32)                      # (TB, C)
    feat = jnp.dot(gap.astype(bf16), wp_ref[...],
                   preferred_element_type=jnp.float32) + bp_ref[...]
    feat = jnp.maximum(feat, 0.0)                               # (TB, 2048) f32

    # --- self.fc: Linear(2048,1024) -> ReLU -> Dropout(id) -> Linear(1024,512) ---
    h = jnp.dot(feat.astype(bf16), w1_ref[...],
                preferred_element_type=jnp.float32) + b1_ref[...]
    h = jnp.maximum(h, 0.0)
    h = jnp.dot(h.astype(bf16), w2_ref[...],
                preferred_element_type=jnp.float32) + b2_ref[...]   # (TB, 512) f32

    # --- fused mean/std head: two accumulating dots into one lane-dense tile ---
    #   whm: wm packed into lanes [0, OUT)        (input: h)
    #   whs: ws packed into lanes [OUT, 2*OUT)    (input: relu(h))
    h_bf = h.astype(bf16)
    hr_bf = jnp.maximum(h, 0.0).astype(bf16)
    head = (jnp.dot(h_bf, whm_ref[...], preferred_element_type=jnp.float32)
            + jnp.dot(hr_bf, whs_ref[...], preferred_element_type=jnp.float32)
            + bh_ref[...])                                       # (TB, 128) f32

    # softplus only on the std lanes; mean lanes pass through raw
    lane = jax.lax.broadcasted_iota(jnp.int32, head.shape, dimension=1)
    out = jnp.where(lane < OUTPUT_SIZE, head, _softplus(head))
    out_ref[...] = out.astype(out_ref.dtype)


def _round_up(n, m):
    return ((n + m - 1) // m) * m


@partial(jax.jit, static_argnames=("batch_tile",))
def sirats_forward(x, params, *, batch_tile=128):
    """Returns (mean, std), the parameters of the Normal distribution."""
    wp, bp, w1, b1, w2, b2, wm, bm, ws, bs = params
    B, C = x.shape[0], x.shape[1]
    OUT = OUTPUT_SIZE

    # --- backbone stub (part 1): global average pool, streamed by XLA ---
    gap = jnp.mean(x.astype(jnp.float32), axis=(2, 3))          # (B, C)

    # batch tile: multiple of 8 sublanes, capped at batch_tile
    TB = min(batch_tile, _round_up(B, 8))
    B_pad = _round_up(B, TB)
    gap = jnp.pad(gap, ((0, B_pad - B), (0, 0)))

    # --- zero-padded, lane-dense head weights (mean lanes 0:OUT, std OUT:2*OUT) ---
    whm = jnp.zeros((512, HEAD_WIDTH), jnp.float32).at[:, :OUT].set(wm)
    whs = jnp.zeros((512, HEAD_WIDTH), jnp.float32).at[:, OUT:2 * OUT].set(ws)
    bh = jnp.zeros((1, HEAD_WIDTH), jnp.float32)
    bh = bh.at[:, :OUT].set(bm)
    bh = bh.at[:, OUT:2 * OUT].set(bs)

    # --- bf16 weights (halve HBM bytes, native MXU); biases stay f32 ---
    wp_b = wp.astype(jnp.bfloat16)
    w1_b = w1.astype(jnp.bfloat16)
    w2_b = w2.astype(jnp.bfloat16)
    whm_b = whm.astype(jnp.bfloat16)
    whs_b = whs.astype(jnp.bfloat16)

    grid = (B_pad // TB,)
    const2 = lambda i: (0, 0)                 # weights resident across batch tiles

    out = pl.pallas_call(
        sirats_kernel,
        out_shape=jax.ShapeDtypeStruct((B_pad, HEAD_WIDTH), jnp.float32),
        grid_spec=pltpu.PrefetchScalarGridSpec(
            num_scalar_prefetch=0,
            grid=grid,
            in_specs=[
                pl.BlockSpec((TB, C), lambda i: (i, 0)),      # GAP features
                pl.BlockSpec(wp_b.shape, const2),             # backbone-stub proj
                pl.BlockSpec(bp.shape, const2),
                pl.BlockSpec(w1_b.shape, const2),             # fc[0]
                pl.BlockSpec(b1.shape, const2),
                pl.BlockSpec(w2_b.shape, const2),             # fc[3]
                pl.BlockSpec(b2.shape, const2),
                pl.BlockSpec(whm_b.shape, const2),            # mean head (padded)
                pl.BlockSpec(whs_b.shape, const2),            # std head (padded)
                pl.BlockSpec(bh.shape, const2),
            ],
            out_specs=pl.BlockSpec((TB, HEAD_WIDTH), lambda i: (i, 0))),
        compiler_params=pltpu.CompilerParams(
            dimension_semantics=("parallel",),                # batch tiles split across TCs
            vmem_limit_bytes=48 * 1024 * 1024),               # fits v7x's 64 MiB VMEM
    )(gap, wp_b, bp, w1_b, b1, w2_b, b2, whm_b, whs_b, bh)

    mean = out[:B, :OUT]
    std = out[:B, OUT:2 * OUT]
    return mean, std


def init_params(key, in_channels=3):
    """Deterministic synthetic parameters with the module's layer shapes."""
    ks = jax.random.split(key, 10)

    def lin(kw, kb, fan_in, fan_out):
        w = (jax.random.normal(kw, (fan_in, fan_out), jnp.float32)
             / np.sqrt(float(fan_in)))
        b = jax.random.normal(kb, (1, fan_out), jnp.float32) * 0.01
        return w, b

    wp, bp = lin(ks[0], ks[1], in_channels, 2048)   # backbone-stub projection
    w1, b1 = lin(ks[2], ks[3], 2048, 1024)          # fc[0]
    w2, b2 = lin(ks[4], ks[5], 1024, 512)           # fc[3]
    wm, bm = lin(ks[6], ks[7], 512, OUTPUT_SIZE)    # mean_layer Linear
    ws, bs = lin(ks[8], ks[9], 512, OUTPUT_SIZE)    # std_layer Linear
    return (wp, bp, w1, b1, w2, b2, wm, bm, ws, bs)


def reference_forward(x, params):
    """Pure-JAX reference mirroring the kernel's bf16 weight/activation casts."""
    wp, bp, w1, b1, w2, b2, wm, bm, ws, bs = params
    bf = jnp.bfloat16
    gap = jnp.mean(x.astype(jnp.float32), axis=(2, 3))
    feat = jnp.maximum(
        jnp.dot(gap.astype(bf), wp.astype(bf),
                preferred_element_type=jnp.float32) + bp, 0.0)
    h = jnp.maximum(
        jnp.dot(feat.astype(bf), w1.astype(bf),
                preferred_element_type=jnp.float32) + b1, 0.0)
    h = jnp.dot(h.astype(bf), w2.astype(bf),
                preferred_element_type=jnp.float32) + b2
    mean = jnp.dot(h.astype(bf), wm.astype(bf),
                   preferred_element_type=jnp.float32) + bm
    hr = jnp.maximum(h, 0.0)
    std = jax.nn.softplus(
        jnp.dot(hr.astype(bf), ws.astype(bf),
                preferred_element_type=jnp.float32) + bs)
    return mean, std


if __name__ == "__main__":
    key = jax.random.PRNGKey(0)
    kx, kp = jax.random.split(key)

    # small NCHW image batch (module default img_shape is [3, 512, 512]; use 32x32 here)
    x = jax.random.normal(kx, (2, 3, 32, 32), jnp.float32)
    params = init_params(kp, in_channels=3)

    mean, std = sirats_forward(x, params)
    jax.block_until_ready((mean, std))

    mean_ref, std_ref = reference_forward(x, params)
    np.testing.assert_allclose(np.asarray(mean), np.asarray(mean_ref),
                               rtol=5e-3, atol=5e-3)
    np.testing.assert_allclose(np.asarray(std), np.asarray(std_ref),
                               rtol=5e-3, atol=5e-3)
    assert mean.shape == (2, OUTPUT_SIZE) and std.shape == (2, OUTPUT_SIZE)
    assert bool(jnp.all(std > 0))  # softplus output is strictly positive
    print("KERNEL_OK")
</pallas_src>

<mosaic_0001>
module attributes {stable_mosaic.version = 11 : i64} {
  func.func @sirats_kernel(%arg0: i32, %arg1: memref<8x3xf32, #tpu.memory_space<vmem>>, %arg2: memref<3x2048xbf16, #tpu.memory_space<vmem>>, %arg3: memref<1x2048xf32, #tpu.memory_space<vmem>>, %arg4: memref<2048x1024xbf16, #tpu.memory_space<vmem>>, %arg5: memref<1x1024xf32, #tpu.memory_space<vmem>>, %arg6: memref<1024x512xbf16, #tpu.memory_space<vmem>>, %arg7: memref<1x512xf32, #tpu.memory_space<vmem>>, %arg8: memref<512x128xbf16, #tpu.memory_space<vmem>>, %arg9: memref<512x128xbf16, #tpu.memory_space<vmem>>, %arg10: memref<1x128xf32, #tpu.memory_space<vmem>>, %arg11: memref<8x128xf32, #tpu.memory_space<vmem>>) attributes {dimension_semantics = [#tpu.dimension_semantics<parallel>], iteration_bounds = array<i64: 1>, scalar_prefetch = 0 : i64, scratch_operands = 0 : i64, tpu.core_type = #tpu.core_type<tc>, window_params = [{transform_indices = @transform_0, window_bounds = array<i64: 8, 3>}, {pipeline_mode = #tpu.pipeline_mode<synchronous>, transform_indices = @transform_1, window_bounds = array<i64: 3, 2048>}, {pipeline_mode = #tpu.pipeline_mode<synchronous>, transform_indices = @transform_2, window_bounds = array<i64: 1, 2048>}, {pipeline_mode = #tpu.pipeline_mode<synchronous>, transform_indices = @transform_3, window_bounds = array<i64: 2048, 1024>}, {pipeline_mode = #tpu.pipeline_mode<synchronous>, transform_indices = @transform_4, window_bounds = array<i64: 1, 1024>}, {pipeline_mode = #tpu.pipeline_mode<synchronous>, transform_indices = @transform_5, window_bounds = array<i64: 1024, 512>}, {pipeline_mode = #tpu.pipeline_mode<synchronous>, transform_indices = @transform_6, window_bounds = array<i64: 1, 512>}, {pipeline_mode = #tpu.pipeline_mode<synchronous>, transform_indices = @transform_7, window_bounds = array<i64: 512, 128>}, {pipeline_mode = #tpu.pipeline_mode<synchronous>, transform_indices = @transform_8, window_bounds = array<i64: 512, 128>}, {pipeline_mode = #tpu.pipeline_mode<synchronous>, transform_indices = @transform_9, window_bounds = array<i64: 1, 128>}, {transform_indices = @transform_10, window_bounds = array<i64: 8, 128>}]} {
    %c0 = arith.constant 0 : index
    %c0_0 = arith.constant 0 : index
    %0 = vector.load %arg1[%c0, %c0_0] : memref<8x3xf32, #tpu.memory_space<vmem>>, vector<8x3xf32>
    %1 = arith.truncf %0 : vector<8x3xf32> to vector<8x3xbf16>
    %c0_1 = arith.constant 0 : index
    %c0_2 = arith.constant 0 : index
    %2 = vector.load %arg2[%c0_1, %c0_2] : memref<3x2048xbf16, #tpu.memory_space<vmem>>, vector<3x2048xbf16>
    %cst = arith.constant dense<0.000000e+00> : vector<8x2048xf32>
    %3 = tpu.matmul %1, %2, %cst {dimension_numbers = #tpu.dot_dimension_numbers<[1], [0], [0], [1], [0, 0, 1, 1], [], []>} : vector<8x3xbf16>, vector<3x2048xbf16>, vector<8x2048xf32> -> vector<8x2048xf32>
    %c0_3 = arith.constant 0 : index
    %c0_4 = arith.constant 0 : index
    %4 = vector.load %arg3[%c0_3, %c0_4] : memref<1x2048xf32, #tpu.memory_space<vmem>>, vector<1x2048xf32>
    %5 = vector.broadcast %4 : vector<1x2048xf32> to vector<8x2048xf32>
    %6 = arith.addf %3, %5 : vector<8x2048xf32>
    %cst_5 = arith.constant 0.000000e+00 : f32
    %7 = vector.broadcast %cst_5 : f32 to vector<8x2048xf32>
    %8 = arith.maximumf %6, %7 : vector<8x2048xf32>
    %9 = arith.truncf %8 : vector<8x2048xf32> to vector<8x2048xbf16>
    %c0_6 = arith.constant 0 : index
    %c0_7 = arith.constant 0 : index
    %10 = vector.load %arg4[%c0_6, %c0_7] : memref<2048x1024xbf16, #tpu.memory_space<vmem>>, vector<2048x1024xbf16>
    %cst_8 = arith.constant dense<0.000000e+00> : vector<8x1024xf32>
    %11 = tpu.matmul %9, %10, %cst_8 {dimension_numbers = #tpu.dot_dimension_numbers<[1], [0], [0], [1], [0, 0, 1, 1], [], []>} : vector<8x2048xbf16>, vector<2048x1024xbf16>, vector<8x1024xf32> -> vector<8x1024xf32>
    %c0_9 = arith.constant 0 : index
    %c0_10 = arith.constant 0 : index
    %12 = vector.load %arg5[%c0_9, %c0_10] : memref<1x1024xf32, #tpu.memory_space<vmem>>, vector<1x1024xf32>
    %13 = vector.broadcast %12 : vector<1x1024xf32> to vector<8x1024xf32>
    %14 = arith.addf %11, %13 : vector<8x1024xf32>
    %cst_11 = arith.constant 0.000000e+00 : f32
    %15 = vector.broadcast %cst_11 : f32 to vector<8x1024xf32>
    %16 = arith.maximumf %14, %15 : vector<8x1024xf32>
    %17 = arith.truncf %16 : vector<8x1024xf32> to vector<8x1024xbf16>
    %c0_12 = arith.constant 0 : index
    %c0_13 = arith.constant 0 : index
    %18 = vector.load %arg6[%c0_12, %c0_13] : memref<1024x512xbf16, #tpu.memory_space<vmem>>, vector<1024x512xbf16>
    %cst_14 = arith.constant dense<0.000000e+00> : vector<8x512xf32>
    %19 = tpu.matmul %17, %18, %cst_14 {dimension_numbers = #tpu.dot_dimension_numbers<[1], [0], [0], [1], [0, 0, 1, 1], [], []>} : vector<8x1024xbf16>, vector<1024x512xbf16>, vector<8x512xf32> -> vector<8x512xf32>
    %c0_15 = arith.constant 0 : index
    %c0_16 = arith.constant 0 : index
    %20 = vector.load %arg7[%c0_15, %c0_16] : memref<1x512xf32, #tpu.memory_space<vmem>>, vector<1x512xf32>
    %21 = vector.broadcast %20 : vector<1x512xf32> to vector<8x512xf32>
    %22 = arith.addf %19, %21 : vector<8x512xf32>
    %23 = arith.truncf %22 : vector<8x512xf32> to vector<8x512xbf16>
    %cst_17 = arith.constant 0.000000e+00 : f32
    %24 = vector.broadcast %cst_17 : f32 to vector<8x512xf32>
    %25 = arith.maximumf %22, %24 : vector<8x512xf32>
    %26 = arith.truncf %25 : vector<8x512xf32> to vector<8x512xbf16>
    %c0_18 = arith.constant 0 : index
    %c0_19 = arith.constant 0 : index
    %27 = vector.load %arg8[%c0_18, %c0_19] : memref<512x128xbf16, #tpu.memory_space<vmem>>, vector<512x128xbf16>
    %cst_20 = arith.constant dense<0.000000e+00> : vector<8x128xf32>
    %28 = tpu.matmul %23, %27, %cst_20 {dimension_numbers = #tpu.dot_dimension_numbers<[1], [0], [0], [1], [0, 0, 1, 1], [], []>} : vector<8x512xbf16>, vector<512x128xbf16>, vector<8x128xf32> -> vector<8x128xf32>
    %c0_21 = arith.constant 0 : index
    %c0_22 = arith.constant 0 : index
    %29 = vector.load %arg9[%c0_21, %c0_22] : memref<512x128xbf16, #tpu.memory_space<vmem>>, vector<512x128xbf16>
    %cst_23 = arith.constant dense<0.000000e+00> : vector<8x128xf32>
    %30 = tpu.matmul %26, %29, %cst_23 {dimension_numbers = #tpu.dot_dimension_numbers<[1], [0], [0], [1], [0, 0, 1, 1], [], []>} : vector<8x512xbf16>, vector<512x128xbf16>, vector<8x128xf32> -> vector<8x128xf32>
    %31 = arith.addf %28, %30 : vector<8x128xf32>
    %c0_24 = arith.constant 0 : index
    %c0_25 = arith.constant 0 : index
    %32 = vector.load %arg10[%c0_24, %c0_25] : memref<1x128xf32, #tpu.memory_space<vmem>>, vector<1x128xf32>
    %33 = vector.broadcast %32 : vector<1x128xf32> to vector<8x128xf32>
    %34 = arith.addf %31, %33 : vector<8x128xf32>
    %35 = tpu.iota {dimensions = array<i32: 1>} : vector<8x128xi32>
    %c6_i32 = arith.constant 6 : i32
    %36 = vector.broadcast %c6_i32 : i32 to vector<8x128xi32>
    %37 = arith.cmpi slt, %35, %36 : vector<8x128xi32>
    %cst_26 = arith.constant 0.000000e+00 : f32
    %38 = vector.broadcast %cst_26 : f32 to vector<8x128xf32>
    %39 = arith.maximumf %34, %38 : vector<8x128xf32>
    %40 = math.absf %34 : vector<8x128xf32>
    %cst_27 = arith.constant 0.000000e+00 : f32
    %41 = vector.broadcast %cst_27 : f32 to vector<8x128xf32>
    %42 = arith.subf %41, %40 : vector<8x128xf32>
    %43 = math.exp %42 : vector<8x128xf32>
    %44 = math.log1p %43 : vector<8x128xf32>
    %45 = arith.addf %39, %44 : vector<8x128xf32>
    %46 = arith.select %37, %34, %45 : vector<8x128xi1>, vector<8x128xf32>
    %c0_28 = arith.constant 0 : index
    %c0_29 = arith.constant 0 : index
    %47 = vector.load %arg11[%c0_28, %c0_29] : memref<8x128xf32, #tpu.memory_space<vmem>>, vector<8x128xf32>
    tpu.vector_store %arg11[%c0_28, %c0_29], %46 {strides = array<i32>} : memref<8x128xf32, #tpu.memory_space<vmem>>, vector<8x128xf32>,
    return
  }
  func.func @transform_0(%arg0: i32) -> (i32, i32) {
    %c0_i32 = arith.constant 0 : i32
    %c0_i32_0 = arith.constant 0 : i32
    return %arg0, %c0_i32 : i32, i32
  }
  func.func @transform_1(%arg0: i32) -> (i32, i32) {
    %c0_i32 = arith.constant 0 : i32
    %c0_i32_0 = arith.constant 0 : i32
    %c0_i32_1 = arith.constant 0 : i32
    return %c0_i32, %c0_i32_0 : i32, i32
  }
  func.func @transform_2(%arg0: i32) -> (i32, i32) {
    %c0_i32 = arith.constant 0 : i32
    %c0_i32_0 = arith.constant 0 : i32
    %c0_i32_1 = arith.constant 0 : i32
    return %c0_i32, %c0_i32_0 : i32, i32
  }
  func.func @transform_3(%arg0: i32) -> (i32, i32) {
    %c0_i32 = arith.constant 0 : i32
    %c0_i32_0 = arith.constant 0 : i32
    %c0_i32_1 = arith.constant 0 : i32
    return %c0_i32, %c0_i32_0 : i32, i32
  }
  func.func @transform_4(%arg0: i32) -> (i32, i32) {
    %c0_i32 = arith.constant 0 : i32
    %c0_i32_0 = arith.constant 0 : i32
    %c0_i32_1 = arith.constant 0 : i32
    return %c0_i32, %c0_i32_0 : i32, i32
  }
  func.func @transform_5(%arg0: i32) -> (i32, i32) {
    %c0_i32 = arith.constant 0 : i32
    %c0_i32_0 = arith.constant 0 : i32
    %c0_i32_1 = arith.constant 0 : i32
    return %c0_i32, %c0_i32_0 : i32, i32
  }
  func.func @transform_6(%arg0: i32) -> (i32, i32) {
    %c0_i32 = arith.constant 0 : i32
    %c0_i32_0 = arith.constant 0 : i32
    %c0_i32_1 = arith.constant 0 : i32
    return %c0_i32, %c0_i32_0 : i32, i32
  }
  func.func @transform_7(%arg0: i32) -> (i32, i32) {
    %c0_i32 = arith.constant 0 : i32
    %c0_i32_0 = arith.constant 0 : i32
    %c0_i32_1 = arith.constant 0 : i32
    return %c0_i32, %c0_i32_0 : i32, i32
  }
  func.func @transform_8(%arg0: i32) -> (i32, i32) {
    %c0_i32 = arith.constant 0 : i32
    %c0_i32_0 = arith.constant 0 : i32
    %c0_i32_1 = arith.constant 0 : i32
    return %c0_i32, %c0_i32_0 : i32, i32
  }
  func.func @transform_9(%arg0: i32) -> (i32, i32) {
    %c0_i32 = arith.constant 0 : i32
    %c0_i32_0 = arith.constant 0 : i32
    %c0_i32_1 = arith.constant 0 : i32
    return %c0_i32, %c0_i32_0 : i32, i32
  }
  func.func @transform_10(%arg0: i32) -> (i32, i32) {
    %c0_i32 = arith.constant 0 : i32
    %c0_i32_0 = arith.constant 0 : i32
    return %arg0, %c0_i32 : i32, i32
  }
}

</mosaic_0001>

<llo_original>
// kernel: sirats_forward.1
$region0: #{sirats_forward.1}
  #allocation0 [shape = 'u32[]', space=smem, size = 0x4, offset = 0x4, fixed_abs, tag = 'smem constant byte address 0x4 - core index']
  #allocation1 [shape = 'u32[144,128]{1,0:T(1,128)}', space=vmem, size = 0x12000, scoped, tag = 'internal scratch']
  %s0 = inlined_call_operand.vmem [shape: f32[8,3], index: 0, kind: input, shape index: {}]
  %s1 = inlined_call_operand.vmem [shape: bf16[3,2048], index: 1, kind: input, shape index: {}]
  %s2 = inlined_call_operand.vmem [shape: f32[1,2048], index: 2, kind: input, shape index: {}]
  %s3 = inlined_call_operand.vmem [shape: bf16[2048,1024], index: 3, kind: input, shape index: {}]
  %s4 = inlined_call_operand.vmem [shape: f32[1,1024], index: 4, kind: input, shape index: {}]
  %s5 = inlined_call_operand.vmem [shape: bf16[1024,512], index: 5, kind: input, shape index: {}]
  %s6 = inlined_call_operand.vmem [shape: f32[1,512], index: 6, kind: input, shape index: {}]
  %s7 = inlined_call_operand.vmem [shape: bf16[512,128], index: 7, kind: input, shape index: {}]
  %s8 = inlined_call_operand.vmem [shape: bf16[512,128], index: 8, kind: input, shape index: {}]
  %s9 = inlined_call_operand.vmem [shape: f32[1,128], index: 9, kind: input, shape index: {}]
  %s10 = inlined_call_operand.vmem [shape: f32[8,128], index: 10, kind: output, shape index: {}]
  %s11 = sld [smem:[#allocation0]]
  $region50: #{sirats_forward.1} parent=0
    _
  %s13 = ssub.s32 1, %s11
  %s14 = scalar_select 0, %s13, %s11
  // Predicated region
  $region2: #{sirats_forward.1} parent=0 // pred_check
    _
  $region3: #{sirats_forward.1} parent=0 // pred_check_branch
    %16 = sbr.rel (0) target = $region5
  $region4: #{sirats_forward.1} parent=0 // pred_region
    _
  $region5: #{sirats_forward.1} parent=0 // pred_fallthru
    _
  // Predicated region
  $region6: #{sirats_forward.1} parent=0 // pred_check
    _
  $region7: #{sirats_forward.1} parent=0 // pred_check_branch
    %18 = sbr.rel (0) target = $region9
  $region8: #{sirats_forward.1} parent=0 // pred_region
    _
  $region9: #{sirats_forward.1} parent=0 // pred_fallthru
    _
  // Predicated region
  $region10: #{sirats_forward.1} parent=0 // pred_check
    _
  $region11: #{sirats_forward.1} parent=0 // pred_check_branch
    %20 = sbr.rel (0) target = $region13
  $region12: #{sirats_forward.1} parent=0 // pred_region
    _
  $region13: #{sirats_forward.1} parent=0 // pred_fallthru
    _
  // Predicated region
  $region14: #{sirats_forward.1} parent=0 // pred_check
    _
  $region15: #{sirats_forward.1} parent=0 // pred_check_branch
    %22 = sbr.rel (0) target = $region17
  $region16: #{sirats_forward.1} parent=0 // pred_region
    _
  $region17: #{sirats_forward.1} parent=0 // pred_fallthru
    _
  // Predicated region
  $region18: #{sirats_forward.1} parent=0 // pred_check
    _
  $region19: #{sirats_forward.1} parent=0 // pred_check_branch
    %24 = sbr.rel (0) target = $region21
  $region20: #{sirats_forward.1} parent=0 // pred_region
    _
  $region21: #{sirats_forward.1} parent=0 // pred_fallthru
    _
  // Predicated region
  $region22: #{sirats_forward.1} parent=0 // pred_check
    _
  $region23: #{sirats_forward.1} parent=0 // pred_check_branch
    %26 = sbr.rel (0) target = $region25
  $region24: #{sirats_forward.1} parent=0 // pred_region
    _
  $region25: #{sirats_forward.1} parent=0 // pred_fallthru
    _
  // Predicated region
  $region26: #{sirats_forward.1} parent=0 // pred_check
    _
  $region27: #{sirats_forward.1} parent=0 // pred_check_branch
    %28 = sbr.rel (0) target = $region29
  $region28: #{sirats_forward.1} parent=0 // pred_region
    _
  $region29: #{sirats_forward.1} parent=0 // pred_fallthru
    _
  // Predicated region
  $region30: #{sirats_forward.1} parent=0 // pred_check
    _
  $region31: #{sirats_forward.1} parent=0 // pred_check_branch
    %30 = sbr.rel (0) target = $region33
  $region32: #{sirats_forward.1} parent=0 // pred_region
    _
  $region33: #{sirats_forward.1} parent=0 // pred_fallthru
    _
  // Predicated region
  $region34: #{sirats_forward.1} parent=0 // pred_check
    _
  $region35: #{sirats_forward.1} parent=0 // pred_check_branch
    %32 = sbr.rel (0) target = $region37
  $region36: #{sirats_forward.1} parent=0 // pred_region
    _
  $region37: #{sirats_forward.1} parent=0 // pred_fallthru
    _
  // Predicated region
  $region38: #{sirats_forward.1} parent=0 // pred_check
    _
  $region39: #{sirats_forward.1} parent=0 // pred_check_branch
    %34 = sbr.rel (0) target = $region41
  $region40: #{sirats_forward.1} parent=0 // pred_region
    _
  $region41: #{sirats_forward.1} parent=0 // pred_fallthru
    _
  %v36 = vld [vmem:[%s0] sm:$0xff]
  %v37 = vpack.c.bf16 %v36, %v36
  %v38 = vld [vmem:[%s1] sm:$0xff]
  %v39 = vld [vmem:[%s1 + $0x8] sm:$0xff]
  %v40 = vld [vmem:[%s1 + $0x10] sm:$0xff]
  %v41 = vld [vmem:[%s1 + $0x18] sm:$0xff]
  %v42 = vld [vmem:[%s2] sm:$0xff]
  %v43 = vld [vmem:[%s2 + $0x8] sm:$0xff]
  %v46 = vlaneseq
  %v47 = vshrl.u32 %v46, 7
  %v48 = vsub.s32 0, %v47
  %v49 = vrot.slane %v42, %v48
  %v50 = vlaneseq
  %v51 = vshrl.u32 %v50, 7
  %v52 = vsub.s32 1, %v51
  %v53 = vrot.slane %v42, %v52
  %v54 = vlaneseq
  %v55 = vshrl.u32 %v54, 7
  %v56 = vsub.s32 2, %v55
  %v57 = vrot.slane %v42, %v56
  %v58 = vlaneseq
  %v59 = vshrl.u32 %v58, 7
  %v60 = vsub.s32 3, %v59
  %v61 = vrot.slane %v42, %v60
  %v62 = vlaneseq
  %v63 = vshrl.u32 %v62, 7
  %v64 = vsub.s32 4, %v63
  %v65 = vrot.slane %v42, %v64
  %v66 = vlaneseq
  %v67 = vshrl.u32 %v66, 7
  %v68 = vsub.s32 5, %v67
  %v69 = vrot.slane %v42, %v68
  %v70 = vlaneseq
  %v71 = vshrl.u32 %v70, 7
  %v72 = vsub.s32 6, %v71
  %v73 = vrot.slane %v42, %v72
  %v74 = vlaneseq
  %v75 = vshrl.u32 %v74, 7
  %v76 = vsub.s32 7, %v75
  %v77 = vrot.slane %v42, %v76
  %v78 = vlaneseq
  %v79 = vshrl.u32 %v78, 7
  %v80 = vsub.s32 0, %v79
  %v81 = vrot.slane %v43, %v80
  %v82 = vlaneseq
  %v83 = vshrl.u32 %v82, 7
  %v84 = vsub.s32 1, %v83
  %v85 = vrot.slane %v43, %v84
  %v86 = vlaneseq
  %v87 = vshrl.u32 %v86, 7
  %v88 = vsub.s32 2, %v87
  %v89 = vrot.slane %v43, %v88
  %v90 = vlaneseq
  %v91 = vshrl.u32 %v90, 7
  %v92 = vsub.s32 3, %v91
  %v93 = vrot.slane %v43, %v92
  %v94 = vlaneseq
  %v95 = vshrl.u32 %v94, 7
  %v96 = vsub.s32 4, %v95
  %v97 = vrot.slane %v43, %v96
  %v98 = vlaneseq
  %v99 = vshrl.u32 %v98, 7
  %v100 = vsub.s32 5, %v99
  %v101 = vrot.slane %v43, %v100
  %v102 = vlaneseq
  %v103 = vshrl.u32 %v102, 7
  %v104 = vsub.s32 6, %v103
  %v105 = vrot.slane %v43, %v104
  %v106 = vlaneseq
  %v107 = vshrl.u32 %v106, 7
  %v108 = vsub.s32 7, %v107
  %v109 = vrot.slane %v43, %v108
  %v130 = vcombine.high %v38, %v38
  %v132 = vunpack.c.l.s4 1983009808
  %v133 = vunpack.c.0.s8 %v132
  %v134 = vlaneseq
  %v135 = vshrl.u32 %v134, 7
  %v136 = vsub.s32 %v133, %v135
  %v137 = vrot.slane %v38, %v136
  %v139 = vunpack.c.l.s4 1983009808
  %v140 = vunpack.c.0.s8 %v139
  %v141 = vlaneseq
  %v142 = vshrl.u32 %v141, 7
  %v143 = vsub.s32 %v140, %v142
  %v144 = vrot.slane %v130, %v143
  %v145 = vcombine.high %v137, %v137
  %v146 = vcombine.high %v144, %v144
  %v147 = vcombine.high %v39, %v39
  %v149 = vunpack.c.l.s4 1983009808
  %v150 = vunpack.c.0.s8 %v149
  %v151 = vlaneseq
  %v152 = vshrl.u32 %v151, 7
  %v153 = vsub.s32 %v150, %v152
  %v154 = vrot.slane %v39, %v153
  %v156 = vunpack.c.l.s4 1983009808
  %v157 = vunpack.c.0.s8 %v156
  %v158 = vlaneseq
  %v159 = vshrl.u32 %v158, 7
  %v160 = vsub.s32 %v157, %v159
  %v161 = vrot.slane %v147, %v160
  %v162 = vcombine.high %v154, %v154
  %v163 = vcombine.high %v161, %v161
  %v164 = vcombine.high %v40, %v40
  %v166 = vunpack.c.l.s4 1983009808
  %v167 = vunpack.c.0.s8 %v166
  %v168 = vlaneseq
  %v169 = vshrl.u32 %v168, 7
  %v170 = vsub.s32 %v167, %v169
  %v171 = vrot.slane %v40, %v170
  %v173 = vunpack.c.l.s4 1983009808
  %v174 = vunpack.c.0.s8 %v173
  %v175 = vlaneseq
  %v176 = vshrl.u32 %v175, 7
  %v177 = vsub.s32 %v174, %v176
  %v178 = vrot.slane %v164, %v177
  %v179 = vcombine.high %v171, %v171
  %v180 = vcombine.high %v178, %v178
  %v181 = vcombine.high %v41, %v41
  %v183 = vunpack.c.l.s4 1983009808
  %v184 = vunpack.c.0.s8 %v183
  %v185 = vlaneseq
  %v186 = vshrl.u32 %v185, 7
  %v187 = vsub.s32 %v184, %v186
  %v188 = vrot.slane %v41, %v187
  %v190 = vunpack.c.l.s4 1983009808
  %v191 = vunpack.c.0.s8 %v190
  %v192 = vlaneseq
  %v193 = vshrl.u32 %v192, 7
  %v194 = vsub.s32 %v191, %v193
  %v195 = vrot.slane %v181, %v194
  %v196 = vcombine.high %v188, %v188
  %v197 = vcombine.high %v195, %v195
  %vm198 = vcmask 23552
  %v200 = vsel %vm198, %v37, 0
  %vm202 = vcmask 1040384
  %vm203 = vcmask 1041408
  %v204 = vsel %vm202, 4294967295, 65535
  %v205 = vsel %vm203, %v204, 0
  %v207 = vand.u32 %v137, %v205
  %v210 = vand.u32 %v145, %v205
  %v213 = vand.u32 %v144, %v205
  %v216 = vand.u32 %v146, %v205
  %v219 = vand.u32 %v154, %v205
  %v222 = vand.u32 %v162, %v205
  %v225 = vand.u32 %v161, %v205
  %v228 = vand.u32 %v163, %v205
  %v231 = vand.u32 %v171, %v205
  %v234 = vand.u32 %v179, %v205
  %v237 = vand.u32 %v178, %v205
  %v240 = vand.u32 %v180, %v205
  %v243 = vand.u32 %v188, %v205
  %v246 = vand.u32 %v196, %v205
  %v249 = vand.u32 %v195, %v205
  %v252 = vand.u32 %v197, %v205
  %254 = vmatprep.subr.bf16.mxu0 %v210
  %255 = vmatpush1.bf16.msra.mxu0 %v207
  %256 = vmatprep.subr.bf16.mxu0 0
  %257 = vmatpush1.bf16.msra.mxu0 0
  %258 = vmatprep.subr.bf16.mxu0 0
  %259 = vmatpush1.bf16.msra.mxu0 0
  %260 = vmatprep.subr.bf16.mxu0 0
  %261 = vmatpush1.bf16.msra.mxu0 0
  %262 = vmatprep.subr.bf16.mxu0 0
  %263 = vmatpush1.bf16.msra.mxu0 0
  %264 = vmatprep.subr.bf16.mxu0 0
  %265 = vmatpush1.bf16.msra.mxu0 0
  %266 = vmatprep.subr.bf16.mxu0 0
  %267 = vmatpush1.bf16.msra.mxu0 0
  %268 = vmatprep.subr.bf16.mxu0 0
  %269 = vmatpush1.bf16.msra.mxu0 0
  %270 = vmatprep.subr.bf16.mxu0 0
  %271 = vmatpush1.bf16.msra.mxu0 0
  %272 = vmatprep.subr.bf16.mxu0 0
  %273 = vmatpush1.bf16.msra.mxu0 0
  %274 = vmatprep.subr.bf16.mxu0 0
  %275 = vmatpush1.bf16.msra.mxu0 0
  %276 = vmatprep.subr.bf16.mxu0 0
  %277 = vmatpush1.bf16.msra.mxu0 0
  %278 = vmatprep.subr.bf16.mxu0 0
  %279 = vmatpush1.bf16.msra.mxu0 0
  %280 = vmatprep.subr.bf16.mxu0 0
  %281 = vmatpush1.bf16.msra.mxu0 0
  %282 = vmatprep.subr.bf16.mxu0 0
  %283 = vmatpush1.bf16.msra.mxu0 0
  %284 = vmatprep.subr.bf16.mxu0 0
  %285 = vmatpush1.bf16.msra.mxu0 0
  %286 = vmatprep.mubr.bf16.mxu0 0
  %287 = vmatmul.mubr.bf16.gmra.mrb[0].mxu0 %v200
  %v288 = vpop.f32.mrb[0].mxu0
  %v289 = vadd.f32 %v49, %v288
  %v290 = vpop.f32.mrb[0].mxu0
  %v291 = vadd.f32 %v53, %v290
  %v292 = vpop.f32.mrb[0].mxu0
  %v293 = vpop.f32.mrb[0].mxu0
  %294 = vdwg.mxu0
  %295 = vmatprep.subr.bf16.mxu0 %v216
  %296 = vmatpush1.bf16.msra.mxu0 %v213
  %297 = vmatprep.subr.bf16.mxu0 0
  %298 = vmatpush1.bf16.msra.mxu0 0
  %299 = vmatprep.subr.bf16.mxu0 0
  %300 = vmatpush1.bf16.msra.mxu0 0
  %301 = vmatprep.subr.bf16.mxu0 0
  %302 = vmatpush1.bf16.msra.mxu0 0
  %303 = vmatprep.subr.bf16.mxu0 0
  %304 = vmatpush1.bf16.msra.mxu0 0
  %305 = vmatprep.subr.bf16.mxu0 0
  %306 = vmatpush1.bf16.msra.mxu0 0
  %307 = vmatprep.subr.bf16.mxu0 0
  %308 = vmatpush1.bf16.msra.mxu0 0
  %309 = vmatprep.subr.bf16.mxu0 0
  %310 = vmatpush1.bf16.msra.mxu0 0
  %311 = vmatprep.subr.bf16.mxu0 0
  %312 = vmatpush1.bf16.msra.mxu0 0
  %313 = vmatprep.subr.bf16.mxu0 0
  %314 = vmatpush1.bf16.msra.mxu0 0
  %315 = vmatprep.subr.bf16.mxu0 0
  %316 = vmatpush1.bf16.msra.mxu0 0
  %317 = vmatprep.subr.bf16.mxu0 0
  %318 = vmatpush1.bf16.msra.mxu0 0
  %319 = vmatprep.subr.bf16.mxu0 0
  %320 = vmatpush1.bf16.msra.mxu0 0
  %321 = vmatprep.subr.bf16.mxu0 0
  %322 = vmatpush1.bf16.msra.mxu0 0
  %323 = vmatprep.subr.bf16.mxu0 0
  %324 = vmatpush1.bf16.msra.mxu0 0
  %325 = vmatprep.subr.bf16.mxu0 0
  %326 = vmatpush1.bf16.msra.mxu0 0
  %327 = vmatprep.mubr.bf16.mxu0 0
  %328 = vmatmul.mubr.bf16.gmra.mrb[0].mxu0 %v200
  %v329 = vpop.f32.mrb[0].mxu0
  %v330 = vadd.f32 %v57, %v329
  %v331 = vpop.f32.mrb[0].mxu0
  %v332 = vadd.f32 %v61, %v331
  %v333 = vpop.f32.mrb[0].mxu0
  %v334 = vpop.f32.mrb[0].mxu0
  %335 = vdwg.mxu0
  %336 = vmatprep.subr.bf16.mxu0 %v222
  %337 = vmatpush1.bf16.msra.mxu0 %v219
  %338 = vmatprep.subr.bf16.mxu0 0
  %339 = vmatpush1.bf16.msra.mxu0 0
  %340 = vmatprep.subr.bf16.mxu0 0
  %341 = vmatpush1.bf16.msra.mxu0 0
  %342 = vmatprep.subr.bf16.mxu0 0
  %343 = vmatpush1.bf16.msra.mxu0 0
  %344 = vmatprep.subr.bf16.mxu0 0
  %345 = vmatpush1.bf16.msra.mxu0 0
  %346 = vmatprep.subr.bf16.mxu0 0
  %347 = vmatpush1.bf16.msra.mxu0 0
  %348 = vmatprep.subr.bf16.mxu0 0
  %349 = vmatpush1.bf16.msra.mxu0 0
  %350 = vmatprep.subr.bf16.mxu0 0
  %351 = vmatpush1.bf16.msra.mxu0 0
  %352 = vmatprep.subr.bf16.mxu0 0
  %353 = vmatpush1.bf16.msra.mxu0 0
  %354 = vmatprep.subr.bf16.mxu0 0
  %355 = vmatpush1.bf16.msra.mxu0 0
  %356 = vmatprep.subr.bf16.mxu0 0
  %357 = vmatpush1.bf16.msra.mxu0 0
  %358 = vmatprep.subr.bf16.mxu0 0
  %359 = vmatpush1.bf16.msra.mxu0 0
  %360 = vmatprep.subr.bf16.mxu0 0
  %361 = vmatpush1.bf16.msra.mxu0 0
  %362 = vmatprep.subr.bf16.mxu0 0
  %363 = vmatpush1.bf16.msra.mxu0 0
  %364 = vmatprep.subr.bf16.mxu0 0
  %365 = vmatpush1.bf16.msra.mxu0 0
  %366 = vmatprep.subr.bf16.mxu0 0
  %367 = vmatpush1.bf16.msra.mxu0 0
  %368 = vmatprep.mubr.bf16.mxu0 0
  %369 = vmatmul.mubr.bf16.gmra.mrb[0].mxu0 %v200
  %v370 = vpop.f32.mrb[0].mxu0
  %v371 = vadd.f32 %v65, %v370
  %v372 = vpop.f32.mrb[0].mxu0
  %v373 = vadd.f32 %v69, %v372
  %v374 = vpop.f32.mrb[0].mxu0
  %v375 = vpop.f32.mrb[0].mxu0
  %376 = vdwg.mxu0
  %377 = vmatprep.subr.bf16.mxu0 %v228
  %378 = vmatpush1.bf16.msra.mxu0 %v225
  %379 = vmatprep.subr.bf16.mxu0 0
  %380 = vmatpush1.bf16.msra.mxu0 0
  %381 = vmatprep.subr.bf16.mxu0 0
  %382 = vmatpush1.bf16.msra.mxu0 0
  %383 = vmatprep.subr.bf16.mxu0 0
  %384 = vmatpush1.bf16.msra.mxu0 0
  %385 = vmatprep.subr.bf16.mxu0 0
  %386 = vmatpush1.bf16.msra.mxu0 0
  %387 = vmatprep.subr.bf16.mxu0 0
  %388 = vmatpush1.bf16.msra.mxu0 0
  %389 = vmatprep.subr.bf16.mxu0 0
  %390 = vmatpush1.bf16.msra.mxu0 0
  %391 = vmatprep.subr.bf16.mxu0 0
  %392 = vmatpush1.bf16.msra.mxu0 0
  %393 = vmatprep.subr.bf16.mxu0 0
  %394 = vmatpush1.bf16.msra.mxu0 0
  %395 = vmatprep.subr.bf16.mxu0 0
  %396 = vmatpush1.bf16.msra.mxu0 0
  %397 = vmatprep.subr.bf16.mxu0 0
  %398 = vmatpush1.bf16.msra.mxu0 0
  %399 = vmatprep.subr.bf16.mxu0 0
  %400 = vmatpush1.bf16.msra.mxu0 0
  %401 = vmatprep.subr.bf16.mxu0 0
  %402 = vmatpush1.bf16.msra.mxu0 0
  %403 = vmatprep.subr.bf16.mxu0 0
  %404 = vmatpush1.bf16.msra.mxu0 0
  %405 = vmatprep.subr.bf16.mxu0 0
  %406 = vmatpush1.bf16.msra.mxu0 0
  %407 = vmatprep.subr.bf16.mxu0 0
  %408 = vmatpush1.bf16.msra.mxu0 0
  %409 = vmatprep.mubr.bf16.mxu0 0
  %410 = vmatmul.mubr.bf16.gmra.mrb[0].mxu0 %v200
  %v411 = vpop.f32.mrb[0].mxu0
  %v412 = vadd.f32 %v73, %v411
  %v413 = vpop.f32.mrb[0].mxu0
  %v414 = vadd.f32 %v77, %v413
  %v415 = vpop.f32.mrb[0].mxu0
  %v416 = vpop.f32.mrb[0].mxu0
  %417 = vdwg.mxu0
  %418 = vmatprep.subr.bf16.mxu0 %v234
  %419 = vmatpush1.bf16.msra.mxu0 %v231
  %420 = vmatprep.subr.bf16.mxu0 0
  %421 = vmatpush1.bf16.msra.mxu0 0
  %422 = vmatprep.subr.bf16.mxu0 0
  %423 = vmatpush1.bf16.msra.mxu0 0
  %424 = vmatprep.subr.bf16.mxu0 0
  %425 = vmatpush1.bf16.msra.mxu0 0
  %426 = vmatprep.subr.bf16.mxu0 0
  %427 = vmatpush1.bf16.msra.mxu0 0
  %428 = vmatprep.subr.bf16.mxu0 0
  %429 = vmatpush1.bf16.msra.mxu0 0
  %430 = vmatprep.subr.bf16.mxu0 0
  %431 = vmatpush1.bf16.msra.mxu0 0
  %432 = vmatprep.subr.bf16.mxu0 0
  %433 = vmatpush1.bf16.msra.mxu0 0
  %434 = vmatprep.subr.bf16.mxu0 0
  %435 = vmatpush1.bf16.msra.mxu0 0
  %436 = vmatprep.subr.bf16.mxu0 0
  %437 = vmatpush1.bf16.msra.mxu0 0
  %438 = vmatprep.subr.bf16.mxu0 0
  %439 = vmatpush1.bf16.msra.mxu0 0
  %440 = vmatprep.subr.bf16.mxu0 0
  %441 = vmatpush1.bf16.msra.mxu0 0
  %442 = vmatprep.subr.bf16.mxu0 0
  %443 = vmatpush1.bf16.msra.mxu0 0
  %444 = vmatprep.subr.bf16.mxu0 0
  %445 = vmatpush1.bf16.msra.mxu0 0
  %446 = vmatprep.subr.bf16.mxu0 0
  %447 = vmatpush1.bf16.msra.mxu0 0
  %448 = vmatprep.subr.bf16.mxu0 0
  %449 = vmatpush1.bf16.msra.mxu0 0
  %450 = vmatprep.mubr.bf16.mxu0 0
  %451 = vmatmul.mubr.bf16.gmra.mrb[0].mxu0 %v200
  %v452 = vpop.f32.mrb[0].mxu0
  %v453 = vadd.f32 %v81, %v452
  %v454 = vpop.f32.mrb[0].mxu0
  %v455 = vadd.f32 %v85, %v454
  %v456 = vpop.f32.mrb[0].mxu0
  %v457 = vpop.f32.mrb[0].mxu0
  %458 = vdwg.mxu0
  %459 = vmatprep.subr.bf16.mxu0 %v240
  %460 = vmatpush1.bf16.msra.mxu0 %v237
  %461 = vmatprep.subr.bf16.mxu0 0
  %462 = vmatpush1.bf16.msra.mxu0 0
  %463 = vmatprep.subr.bf16.mxu0 0
  %464 = vmatpush1.bf16.msra.mxu0 0
  %465 = vmatprep.subr.bf16.mxu0 0
  %466 = vmatpush1.bf16.msra.mxu0 0
  %467 = vmatprep.subr.bf16.mxu0 0
  %468 = vmatpush1.bf16.msra.mxu0 0
  %469 = vmatprep.subr.bf16.mxu0 0
  %470 = vmatpush1.bf16.msra.mxu0 0
  %471 = vmatprep.subr.bf16.mxu0 0
  %472 = vmatpush1.bf16.msra.mxu0 0
  %473 = vmatprep.subr.bf16.mxu0 0
  %474 = vmatpush1.bf16.msra.mxu0 0
  %475 = vmatprep.subr.bf16.mxu0 0
  %476 = vmatpush1.bf16.msra.mxu0 0
  %477 = vmatprep.subr.bf16.mxu0 0
  %478 = vmatpush1.bf16.msra.mxu0 0
  %479 = vmatprep.subr.bf16.mxu0 0
  %480 = vmatpush1.bf16.msra.mxu0 0
  %481 = vmatprep.subr.bf16.mxu0 0
  %482 = vmatpush1.bf16.msra.mxu0 0
  %483 = vmatprep.subr.bf16.mxu0 0
  %484 = vmatpush1.bf16.msra.mxu0 0
  %485 = vmatprep.subr.bf16.mxu0 0
  %486 = vmatpush1.bf16.msra.mxu0 0
  %487 = vmatprep.subr.bf16.mxu0 0
  %488 = vmatpush1.bf16.msra.mxu0 0
  %489 = vmatprep.subr.bf16.mxu0 0
  %490 = vmatpush1.bf16.msra.mxu0 0
  %491 = vmatprep.mubr.bf16.mxu0 0
  %492 = vmatmul.mubr.bf16.gmra.mrb[0].mxu0 %v200
  %v493 = vpop.f32.mrb[0].mxu0
  %v494 = vadd.f32 %v89, %v493
  %v495 = vpop.f32.mrb[0].mxu0
  %v496 = vadd.f32 %v93, %v495
  %v497 = vpop.f32.mrb[0].mxu0
  %v498 = vpop.f32.mrb[0].mxu0
  %499 = vdwg.mxu0
  %500 = vmatprep.subr.bf16.mxu0 %v246
  %501 = vmatpush1.bf16.msra.mxu0 %v243
  %502 = vmatprep.subr.bf16.mxu0 0
  %503 = vmatpush1.bf16.msra.mxu0 0
  %504 = vmatprep.subr.bf16.mxu0 0
  %505 = vmatpush1.bf16.msra.mxu0 0
  %506 = vmatprep.subr.bf16.mxu0 0
  %507 = vmatpush1.bf16.msra.mxu0 0
  %508 = vmatprep.subr.bf16.mxu0 0
  %509 = vmatpush1.bf16.msra.mxu0 0
  %510 = vmatprep.subr.bf16.mxu0 0
  %511 = vmatpush1.bf16.msra.mxu0 0
  %512 = vmatprep.subr.bf16.mxu0 0
  %513 = vmatpush1.bf16.msra.mxu0 0
  %514 = vmatprep.subr.bf16.mxu0 0
  %515 = vmatpush1.bf16.msra.mxu0 0
  %516 = vmatprep.subr.bf16.mxu0 0
  %517 = vmatpush1.bf16.msra.mxu0 0
  %518 = vmatprep.subr.bf16.mxu0 0
  %519 = vmatpush1.bf16.msra.mxu0 0
  %520 = vmatprep.subr.bf16.mxu0 0
  %521 = vmatpush1.bf16.msra.mxu0 0
  %522 = vmatprep.subr.bf16.mxu0 0
  %523 = vmatpush1.bf16.msra.mxu0 0
  %524 = vmatprep.subr.bf16.mxu0 0
  %525 = vmatpush1.bf16.msra.mxu0 0
  %526 = vmatprep.subr.bf16.mxu0 0
  %527 = vmatpush1.bf16.msra.mxu0 0
  %528 = vmatprep.subr.bf16.mxu0 0
  %529 = vmatpush1.bf16.msra.mxu0 0
  %530 = vmatprep.subr.bf16.mxu0 0
  %531 = vmatpush1.bf16.msra.mxu0 0
  %532 = vmatprep.mubr.bf16.mxu0 0
  %533 = vmatmul.mubr.bf16.gmra.mrb[0].mxu0 %v200
  %v534 = vpop.f32.mrb[0].mxu0
  %v535 = vadd.f32 %v97, %v534
  %v536 = vpop.f32.mrb[0].mxu0
  %v537 = vadd.f32 %v101, %v536
  %v538 = vpop.f32.mrb[0].mxu0
  %v539 = vpop.f32.mrb[0].mxu0
  %540 = vdwg.mxu0
  %541 = vmatprep.subr.bf16.mxu0 %v252
  %542 = vmatpush1.bf16.msra.mxu0 %v249
  %543 = vmatprep.subr.bf16.mxu0 0
  %544 = vmatpush1.bf16.msra.mxu0 0
  %545 = vmatprep.subr.bf16.mxu0 0
  %546 = vmatpush1.bf16.msra.mxu0 0
  %547 = vmatprep.subr.bf16.mxu0 0
  %548 = vmatpush1.bf16.msra.mxu0 0
  %549 = vmatprep.subr.bf16.mxu0 0
  %550 = vmatpush1.bf16.msra.mxu0 0
  %551 = vmatprep.subr.bf16.mxu0 0
  %552 = vmatpush1.bf16.msra.mxu0 0
  %553 = vmatprep.subr.bf16.mxu0 0
  %554 = vmatpush1.bf16.msra.mxu0 0
  %555 = vmatprep.subr.bf16.mxu0 0
  %556 = vmatpush1.bf16.msra.mxu0 0
  %557 = vmatprep.subr.bf16.mxu0 0
  %558 = vmatpush1.bf16.msra.mxu0 0
  %559 = vmatprep.subr.bf16.mxu0 0
  %560 = vmatpush1.bf16.msra.mxu0 0
  %561 = vmatprep.subr.bf16.mxu0 0
  %562 = vmatpush1.bf16.msra.mxu0 0
  %563 = vmatprep.subr.bf16.mxu0 0
  %564 = vmatpush1.bf16.msra.mxu0 0
  %565 = vmatprep.subr.bf16.mxu0 0
  %566 = vmatpush1.bf16.msra.mxu0 0
  %567 = vmatprep.subr.bf16.mxu0 0
  %568 = vmatpush1.bf16.msra.mxu0 0
  %569 = vmatprep.subr.bf16.mxu0 0
  %570 = vmatpush1.bf16.msra.mxu0 0
  %571 = vmatprep.subr.bf16.mxu0 0
  %572 = vmatpush1.bf16.msra.mxu0 0
  %573 = vmatprep.mubr.bf16.mxu0 0
  %574 = vmatmul.mubr.bf16.gmra.mrb[0].mxu0 %v200
  %v575 = vpop.f32.mrb[0].mxu0
  %v576 = vadd.f32 %v105, %v575
  %v577 = vpop.f32.mrb[0].mxu0
  %v578 = vadd.f32 %v109, %v577
  %v579 = vpop.f32.mrb[0].mxu0
  %v580 = vpop.f32.mrb[0].mxu0
  %581 = vdwg.mxu0
  %v582 = vmax.f32 %v289, 0.0
  %v583 = vmax.f32 %v291, 0.0
  %v584 = vmax.f32 %v330, 0.0
  %v585 = vmax.f32 %v332, 0.0
  %v586 = vmax.f32 %v371, 0.0
  %v587 = vmax.f32 %v373, 0.0
  %v588 = vmax.f32 %v412, 0.0
  %v589 = vmax.f32 %v414, 0.0
  %v590 = vmax.f32 %v453, 0.0
  %v591 = vmax.f32 %v455, 0.0
  %v592 = vmax.f32 %v494, 0.0
  %v593 = vmax.f32 %v496, 0.0
  %v594 = vmax.f32 %v535, 0.0
  %v595 = vmax.f32 %v537, 0.0
  %v596 = vmax.f32 %v576, 0.0
  %v597 = vmax.f32 %v578, 0.0
  %v598 = vpack.c.bf16 %v582, %v582
  %v599 = vpack.c.bf16 %v583, %v583
  %v600 = vpack.c.bf16 %v584, %v584
  %v601 = vpack.c.bf16 %v585, %v585
  %v602 = vpack.c.bf16 %v586, %v586
  %v603 = vpack.c.bf16 %v587, %v587
  %v604 = vpack.c.bf16 %v588, %v588
  %v605 = vpack.c.bf16 %v589, %v589
  %v606 = vpack.c.bf16 %v590, %v590
  %v607 = vpack.c.bf16 %v591, %v591
  %v608 = vpack.c.bf16 %v592, %v592
  %v609 = vpack.c.bf16 %v593, %v593
  %v610 = vpack.c.bf16 %v594, %v594
  %v611 = vpack.c.bf16 %v595, %v595
  %v612 = vpack.c.bf16 %v596, %v596
  %v613 = vpack.c.bf16 %v597, %v597
  %v614 = vld [vmem:[%s3] sm:$0xff]
  %v615 = vld [vmem:[%s3 + $0x8] sm:$0xff]
  %v616 = vld [vmem:[%s3 + $0x10] sm:$0xff]
  %v617 = vld [vmem:[%s3 + $0x18] sm:$0xff]
  %v618 = vld [vmem:[%s3 + $0x20] sm:$0xff]
  %v619 = vld [vmem:[%s3 + $0x28] sm:$0xff]
  %v620 = vld [vmem:[%s3 + $0x30] sm:$0xff]
  %v621 = vld [vmem:[%s3 + $0x38] sm:$0xff]
  %v622 = vld [vmem:[%s3 + $0x40] sm:$0xff]
  %v623 = vld [vmem:[%s3 + $0x48] sm:$0xff]
  %v624 = vld [vmem:[%s3 + $0x50] sm:$0xff]
  %v625 = vld [vmem:[%s3 + $0x58] sm:$0xff]
  %v626 = vld [vmem:[%s3 + $0x60] sm:$0xff]
  %v627 = vld [vmem:[%s3 + $0x68] sm:$0xff]
  %v628 = vld [vmem:[%s3 + $0x70] sm:$0xff]
  %v629 = vld [vmem:[%s3 + $0x78] sm:$0xff]
  %v630 = vld [vmem:[%s3 + $0x80] sm:$0xff]
  %v631 = vld [vmem:[%s3 + $0x88] sm:$0xff]
  %v632 = vld [vmem:[%s3 + $0x90] sm:$0xff]
  %v633 = vld [vmem:[%s3 + $0x98] sm:$0xff]
  %v634 = vld [vmem:[%s3 + $0xa0] sm:$0xff]
  %v635 = vld [vmem:[%s3 + $0xa8] sm:$0xff]
  %v636 = vld [vmem:[%s3 + $0xb0] sm:$0xff]
  %v637 = vld [vmem:[%s3 + $0xb8] sm:$0xff]
  %v638 = vld [vmem:[%s3 + $0xc0] sm:$0xff]
  %v639 = vld [vmem:[%s3 + $0xc8] sm:$0xff]
  %v640 = vld [vmem:[%s3 + $0xd0] sm:$0xff]
  %v641 = vld [vmem:[%s3 + $0xd8] sm:$0xff]
  %v642 = vld [vmem:[%s3 + $0xe0] sm:$0xff]
  %v643 = vld [vmem:[%s3 + $0xe8] sm:$0xff]
  %v644 = vld [vmem:[%s3 + $0xf0] sm:$0xff]
  %v645 = vld [vmem:[%s3 + $0xf8] sm:$0xff]
  %v646 = vld [vmem:[%s3 + $0x100] sm:$0xff]
  %v647 = vld [vmem:[%s3 + $0x108] sm:$0xff]
  %v648 = vld [vmem:[%s3 + $0x110] sm:$0xff]
  %v649 = vld [vmem:[%s3 + $0x118] sm:$0xff]
  %v650 = vld [vmem:[%s3 + $0x120] sm:$0xff]
  %v651 = vld [vmem:[%s3 + $0x128] sm:$0xff]
  %v652 = vld [vmem:[%s3 + $0x130] sm:$0xff]
  %v653 = vld [vmem:[%s3 + $0x138] sm:$0xff]
  %v654 = vld [vmem:[%s3 + $0x140] sm:$0xff]
  %v655 = vld [vmem:[%s3 + $0x148] sm:$0xff]
  %v656 = vld [vmem:[%s3 + $0x150] sm:$0xff]
  %v657 = vld [vmem:[%s3 + $0x158] sm:$0xff]
  %v658 = vld [vmem:[%s3 + $0x160] sm:$0xff]
  %v659 = vld [vmem:[%s3 + $0x168] sm:$0xff]
  %v660 = vld [vmem:[%s3 + $0x170] sm:$0xff]
  %v661 = vld [vmem:[%s3 + $0x178] sm:$0xff]
  %v662 = vld [vmem:[%s3 + $0x180] sm:$0xff]
  %v663 = vld [vmem:[%s3 + $0x188] sm:$0xff]
  %v664 = vld [vmem:[%s3 + $0x190] sm:$0xff]
  %v665 = vld [vmem:[%s3 + $0x198] sm:$0xff]
  %v666 = vld [vmem:[%s3 + $0x1a0] sm:$0xff]
  %v667 = vld [vmem:[%s3 + $0x1a8] sm:$0xff]
  %v668 = vld [vmem:[%s3 + $0x1b0] sm:$0xff]
  %v669 = vld [vmem:[%s3 + $0x1b8] sm:$0xff]
  %v670 = vld [vmem:[%s3 + $0x1c0] sm:$0xff]
  %v671 = vld [vmem:[%s3 + $0x1c8] sm:$0xff]
  %v672 = vld [vmem:[%s3 + $0x1d0] sm:$0xff]
  %v673 = vld [vmem:[%s3 + $0x1d8] sm:$0xff]
  %v674 = vld [vmem:[%s3 + $0x1e0] sm:$0xff]
  %v675 = vld [vmem:[%s3 + $0x1e8] sm:$0xff]
  %v676 = vld [vmem:[%s3 + $0x1f0] sm:$0xff]
  %v677 = vld [vmem:[%s3 + $0x1f8] sm:$0xff]
  %v678 = vld [vmem:[%s3 + $0x200] sm:$0xff]
  %v679 = vld [vmem:[%s3 + $0x208] sm:$0xff]
  %v680 = vld [vmem:[%s3 + $0x210] sm:$0xff]
  %v681 = vld [vmem:[%s3 + $0x218] sm:$0xff]
  %v682 = vld [vmem:[%s3 + $0x220] sm:$0xff]
  %v683 = vld [vmem:[%s3 + $0x228] sm:$0xff]
  %v684 = vld [vmem:[%s3 + $0x230] sm:$0xff]
  %v685 = vld [vmem:[%s3 + $0x238] sm:$0xff]
  %v686 = vld [vmem:[%s3 + $0x240] sm:$0xff]
  %v687 = vld [vmem:[%s3 + $0x248] sm:$0xff]
  %v688 = vld [vmem:[%s3 + $0x250] sm:$0xff]
  %v689 = vld [vmem:[%s3 + $0x258] sm:$0xff]
  %v690 = vld [vmem:[%s3 + $0x260] sm:$0xff]
  %v691 = vld [vmem:[%s3 + $0x268] sm:$0xff]
  %v692 = vld [vmem:[%s3 + $0x270] sm:$0xff]
  %v693 = vld [vmem:[%s3 + $0x278] sm:$0xff]
  %v694 = vld [vmem:[%s3 + $0x280] sm:$0xff]
  %v695 = vld [vmem:[%s3 + $0x288] sm:$0xff]
  %v696 = vld [vmem:[%s3 + $0x290] sm:$0xff]
  %v697 = vld [vmem:[%s3 + $0x298] sm:$0xff]
  %v698 = vld [vmem:[%s3 + $0x2a0] sm:$0xff]
  %v699 = vld [vmem:[%s3 + $0x2a8] sm:$0xff]
  %v700 = vld [vmem:[%s3 + $0x2b0] sm:$0xff]
  %v701 = vld [vmem:[%s3 + $0x2b8] sm:$0xff]
  %v702 = vld [vmem:[%s3 + $0x2c0] sm:$0xff]
  %v703 = vld [vmem:[%s3 + $0x2c8] sm:$0xff]
  %v704 = vld [vmem:[%s3 + $0x2d0] sm:$0xff]
  %v705 = vld [vmem:[%s3 + $0x2d8] sm:$0xff]
  %v706 = vld [vmem:[%s3 + $0x2e0] sm:$0xff]
  %v707 = vld [vmem:[%s3 + $0x2e8] sm:$0xff]
  %v708 = vld [vmem:[%s3 + $0x2f0] sm:$0xff]
  %v709 = vld [vmem:[%s3 + $0x2f8] sm:$0xff]
  %v710 = vld [vmem:[%s3 + $0x300] sm:$0xff]
  %v711 = vld [vmem:[%s3 + $0x308] sm:$0xff]
  %v712 = vld [vmem:[%s3 + $0x310] sm:$0xff]
  %v713 = vld [vmem:[%s3 + $0x318] sm:$0xff]
  %v714 = vld [vmem:[%s3 + $0x320] sm:$0xff]
  %v715 = vld [vmem:[%s3 + $0x328] sm:$0xff]
  %v716 = vld [vmem:[%s3 + $0x330] sm:$0xff]
  %v717 = vld [vmem:[%s3 + $0x338] sm:$0xff]
  %v718 = vld [vmem:[%s3 + $0x340] sm:$0xff]
  %v719 = vld [vmem:[%s3 + $0x348] sm:$0xff]
  %v720 = vld [vmem:[%s3 + $0x350] sm:$0xff]
  %v721 = vld [vmem:[%s3 + $0x358] sm:$0xff]
  %v722 = vld [vmem:[%s3 + $0x360] sm:$0xff]
  %v723 = vld [vmem:[%s3 + $0x368] sm:$0xff]
  %v724 = vld [vmem:[%s3 + $0x370] sm:$0xff]
  %v725 = vld [vmem:[%s3 + $0x378] sm:$0xff]
  %v726 = vld [vmem:[%s3 + $0x380] sm:$0xff]
  %v727 = vld [vmem:[%s3 + $0x388] sm:$0xff]
  %v728 = vld [vmem:[%s3 + $0x390] sm:$0xff]
  %v729 = vld [vmem:[%s3 + $0x398] sm:$0xff]
  %v730 = vld [vmem:[%s3 + $0x3a0] sm:$0xff]
  %v731 = vld [vmem:[%s3 + $0x3a8] sm:$0xff]
  %v732 = vld [vmem:[%s3 + $0x3b0] sm:$0xff]
  %v733 = vld [vmem:[%s3 + $0x3b8] sm:$0xff]
  %v734 = vld [vmem:[%s3 + $0x3c0] sm:$0xff]
  %v735 = vld [vmem:[%s3 + $0x3c8] sm:$0xff]
  %v736 = vld [vmem:[%s3 + $0x3d0] sm:$0xff]
  %v737 = vld [vmem:[%s3 + $0x3d8] sm:$0xff]
  %v738 = vld [vmem:[%s3 + $0x3e0] sm:$0xff]
  %v739 = vld [vmem:[%s3 + $0x3e8] sm:$0xff]
  %v740 = vld [vmem:[%s3 + $0x3f0] sm:$0xff]
  %v741 = vld [vmem:[%s3 + $0x3f8] sm:$0xff]
  %v742 = vld [vmem:[%s3 + $0x400] sm:$0xff]
  %v743 = vld [vmem:[%s3 + $0x408] sm:$0xff]
  %v744 = vld [vmem:[%s3 + $0x410] sm:$0xff]
  %v745 = vld [vmem:[%s3 + $0x418] sm:$0xff]
  %v746 = vld [vmem:[%s3 + $0x420] sm:$0xff]
  %v747 = vld [vmem:[%s3 + $0x428] sm:$0xff]
  %v748 = vld [vmem:[%s3 + $0x430] sm:$0xff]
  %v749 = vld [vmem:[%s3 + $0x438] sm:$0xff]
  %v750 = vld [vmem:[%s3 + $0x440] sm:$0xff]
  %v751 = vld [vmem:[%s3 + $0x448] sm:$0xff]
  %v752 = vld [vmem:[%s3 + $0x450] sm:$0xff]
  %v753 = vld [vmem:[%s3 + $0x458] sm:$0xff]
  %v754 = vld [vmem:[%s3 + $0x460] sm:$0xff]
  %v755 = vld [vmem:[%s3 + $0x468] sm:$0xff]
  %v756 = vld [vmem:[%s3 + $0x470] sm:$0xff]
  %v757 = vld [vmem:[%s3 + $0x478] sm:$0xff]
  %v758 = vld [vmem:[%s3 + $0x480] sm:$0xff]
  %v759 = vld [vmem:[%s3 + $0x488] sm:$0xff]
  %v760 = vld [vmem:[%s3 + $0x490] sm:$0xff]
  %v761 = vld [vmem:[%s3 + $0x498] sm:$0xff]
  %v762 = vld [vmem:[%s3 + $0x4a0] sm:$0xff]
  %v763 = vld [vmem:[%s3 + $0x4a8] sm:$0xff]
  %v764 = vld [vmem:[%s3 + $0x4b0] sm:$0xff]
  %v765 = vld [vmem:[%s3 + $0x4b8] sm:$0xff]
  %v766 = vld [vmem:[%s3 + $0x4c0] sm:$0xff]
  %v767 = vld [vmem:[%s3 + $0x4c8] sm:$0xff]
  %v768 = vld [vmem:[%s3 + $0x4d0] sm:$0xff]
  %v769 = vld [vmem:[%s3 + $0x4d8] sm:$0xff]
  %v770 = vld [vmem:[%s3 + $0x4e0] sm:$0xff]
  %v771 = vld [vmem:[%s3 + $0x4e8] sm:$0xff]
  %v772 = vld [vmem:[%s3 + $0x4f0] sm:$0xff]
  %v773 = vld [vmem:[%s3 + $0x4f8] sm:$0xff]
  %v774 = vld [vmem:[%s3 + $0x500] sm:$0xff]
  %v775 = vld [vmem:[%s3 + $0x508] sm:$0xff]
  %v776 = vld [vmem:[%s3 + $0x510] sm:$0xff]
  %v777 = vld [vmem:[%s3 + $0x518] sm:$0xff]
  %v778 = vld [vmem:[%s3 + $0x520] sm:$0xff]
  %v779 = vld [vmem:[%s3 + $0x528] sm:$0xff]
  %v780 = vld [vmem:[%s3 + $0x530] sm:$0xff]
  %v781 = vld [vmem:[%s3 + $0x538] sm:$0xff]
  %v782 = vld [vmem:[%s3 + $0x540] sm:$0xff]
  %v783 = vld [vmem:[%s3 + $0x548] sm:$0xff]
  %v784 = vld [vmem:[%s3 + $0x550] sm:$0xff]
  %v785 = vld [vmem:[%s3 + $0x558] sm:$0xff]
  %v786 = vld [vmem:[%s3 + $0x560] sm:$0xff]
  %v787 = vld [vmem:[%s3 + $0x568] sm:$0xff]
  %v788 = vld [vmem:[%s3 + $0x570] sm:$0xff]
  %v789 = vld [vmem:[%s3 + $0x578] sm:$0xff]
  %v790 = vld [vmem:[%s3 + $0x580] sm:$0xff]
  %v791 = vld [vmem:[%s3 + $0x588] sm:$0xff]
  %v792 = vld [vmem:[%s3 + $0x590] sm:$0xff]
  %v793 = vld [vmem:[%s3 + $0x598] sm:$0xff]
  %v794 = vld [vmem:[%s3 + $0x5a0] sm:$0xff]
  %v795 = vld [vmem:[%s3 + $0x5a8] sm:$0xff]
  %v796 = vld [vmem:[%s3 + $0x5b0] sm:$0xff]
  %v797 = vld [vmem:[%s3 + $0x5b8] sm:$0xff]
  %v798 = vld [vmem:[%s3 + $0x5c0] sm:$0xff]
  %v799 = vld [vmem:[%s3 + $0x5c8] sm:$0xff]
  %v800 = vld [vmem:[%s3 + $0x5d0] sm:$0xff]
  %v801 = vld [vmem:[%s3 + $0x5d8] sm:$0xff]
  %v802 = vld [vmem:[%s3 + $0x5e0] sm:$0xff]
  %v803 = vld [vmem:[%s3 + $0x5e8] sm:$0xff]
  %v804 = vld [vmem:[%s3 + $0x5f0] sm:$0xff]
  %v805 = vld [vmem:[%s3 + $0x5f8] sm:$0xff]
  %v806 = vld [vmem:[%s3 + $0x600] sm:$0xff]
  %v807 = vld [vmem:[%s3 + $0x608] sm:$0xff]
  %v808 = vld [vmem:[%s3 + $0x610] sm:$0xff]
  %v809 = vld [vmem:[%s3 + $0x618] sm:$0xff]
  %v810 = vld [vmem:[%s3 + $0x620] sm:$0xff]
  %v811 = vld [vmem:[%s3 + $0x628] sm:$0xff]
  %v812 = vld [vmem:[%s3 + $0x630] sm:$0xff]
  %v813 = vld [vmem:[%s3 + $0x638] sm:$0xff]
  %v814 = vld [vmem:[%s3 + $0x640] sm:$0xff]
  %v815 = vld [vmem:[%s3 + $0x648] sm:$0xff]
  %v816 = vld [vmem:[%s3 + $0x650] sm:$0xff]
  %v817 = vld [vmem:[%s3 + $0x658] sm:$0xff]
  %v818 = vld [vmem:[%s3 + $0x660] sm:$0xff]
  %v819 = vld [vmem:[%s3 + $0x668] sm:$0xff]
  %v820 = vld [vmem:[%s3 + $0x670] sm:$0xff]
  %v821 = vld [vmem:[%s3 + $0x678] sm:$0xff]
  %v822 = vld [vmem:[%s3 + $0x680] sm:$0xff]
  %v823 = vld [vmem:[%s3 + $0x688] sm:$0xff]
  %v824 = vld [vmem:[%s3 + $0x690] sm:$0xff]
  %v825 = vld [vmem:[%s3 + $0x698] sm:$0xff]
  %v826 = vld [vmem:[%s3 + $0x6a0] sm:$0xff]
  %v827 = vld [vmem:[%s3 + $0x6a8] sm:$0xff]
  %v828 = vld [vmem:[%s3 + $0x6b0] sm:$0xff]
  %v829 = vld [vmem:[%s3 + $0x6b8] sm:$0xff]
  %v830 = vld [vmem:[%s3 + $0x6c0] sm:$0xff]
  %v831 = vld [vmem:[%s3 + $0x6c8] sm:$0xff]
  %v832 = vld [vmem:[%s3 + $0x6d0] sm:$0xff]
  %v833 = vld [vmem:[%s3 + $0x6d8] sm:$0xff]
  %v834 = vld [vmem:[%s3 + $0x6e0] sm:$0xff]
  %v835 = vld [vmem:[%s3 + $0x6e8] sm:$0xff]
  %v836 = vld [vmem:[%s3 + $0x6f0] sm:$0xff]
  %v837 = vld [vmem:[%s3 + $0x6f8] sm:$0xff]
  %v838 = vld [vmem:[%s3 + $0x700] sm:$0xff]
  %v839 = vld [vmem:[%s3 + $0x708] sm:$0xff]
  %v840 = vld [vmem:[%s3 + $0x710] sm:$0xff]
  %v841 = vld [vmem:[%s3 + $0x718] sm:$0xff]
  %v842 = vld [vmem:[%s3 + $0x720] sm:$0xff]
  %v843 = vld [vmem:[%s3 + $0x728] sm:$0xff]
  %v844 = vld [vmem:[%s3 + $0x730] sm:$0xff]
  %v845 = vld [vmem:[%s3 + $0x738] sm:$0xff]
  %v846 = vld [vmem:[%s3 + $0x740] sm:$0xff]
  %v847 = vld [vmem:[%s3 + $0x748] sm:$0xff]
  %v848 = vld [vmem:[%s3 + $0x750] sm:$0xff]
  %v849 = vld [vmem:[%s3 + $0x758] sm:$0xff]
  %v850 = vld [vmem:[%s3 + $0x760] sm:$0xff]
  %v851 = vld [vmem:[%s3 + $0x768] sm:$0xff]
  %v852 = vld [vmem:[%s3 + $0x770] sm:$0xff]
  %v853 = vld [vmem:[%s3 + $0x778] sm:$0xff]
  %v854 = vld [vmem:[%s3 + $0x780] sm:$0xff]
  %v855 = vld [vmem:[%s3 + $0x788] sm:$0xff]
  %v856 = vld [vmem:[%s3 + $0x790] sm:$0xff]
  %v857 = vld [vmem:[%s3 + $0x798] sm:$0xff]
  %v858 = vld [vmem:[%s3 + $0x7a0] sm:$0xff]
  %v859 = vld [vmem:[%s3 + $0x7a8] sm:$0xff]
  %v860 = vld [vmem:[%s3 + $0x7b0] sm:$0xff]
  %v861 = vld [vmem:[%s3 + $0x7b8] sm:$0xff]
  %v862 = vld [vmem:[%s3 + $0x7c0] sm:$0xff]
  %v863 = vld [vmem:[%s3 + $0x7c8] sm:$0xff]
  %v864 = vld [vmem:[%s3 + $0x7d0] sm:$0xff]
  %v865 = vld [vmem:[%s3 + $0x7d8] sm:$0xff]
  %v866 = vld [vmem:[%s3 + $0x7e0] sm:$0xff]
  %v867 = vld [vmem:[%s3 + $0x7e8] sm:$0xff]
  %v868 = vld [vmem:[%s3 + $0x7f0] sm:$0xff]
  %v869 = vld [vmem:[%s3 + $0x7f8] sm:$0xff]
  %v870 = vld [vmem:[%s3 + $0x800] sm:$0xff]
  %v871 = vld [vmem:[%s3 + $0x808] sm:$0xff]
  %v872 = vld [vmem:[%s3 + $0x810] sm:$0xff]
  %v873 = vld [vmem:[%s3 + $0x818] sm:$0xff]
  %v874 = vld [vmem:[%s3 + $0x820] sm:$0xff]
  %v875 = vld [vmem:[%s3 + $0x828] sm:$0xff]
  %v876 = vld [vmem:[%s3 + $0x830] sm:$0xff]
  %v877 = vld [vmem:[%s3 + $0x838] sm:$0xff]
  %v878 = vld [vmem:[%s3 + $0x840] sm:$0xff]
  %v879 = vld [vmem:[%s3 + $0x848] sm:$0xff]
  %v880 = vld [vmem:[%s3 + $0x850] sm:$0xff]
  %v881 = vld [vmem:[%s3 + $0x858] sm:$0xff]
  %v882 = vld [vmem:[%s3 + $0x860] sm:$0xff]
  %v883 = vld [vmem:[%s3 + $0x868] sm:$0xff]
  %v884 = vld [vmem:[%s3 + $0x870] sm:$0xff]
  %v885 = vld [vmem:[%s3 + $0x878] sm:$0xff]
  %v886 = vld [vmem:[%s3 + $0x880] sm:$0xff]
  %v887 = vld [vmem:[%s3 + $0x888] sm:$0xff]
  %v888 = vld [vmem:[%s3 + $0x890] sm:$0xff]
  %v889 = vld [vmem:[%s3 + $0x898] sm:$0xff]
  %v890 = vld [vmem:[%s3 + $0x8a0] sm:$0xff]
  %v891 = vld [vmem:[%s3 + $0x8a8] sm:$0xff]
  %v892 = vld [vmem:[%s3 + $0x8b0] sm:$0xff]
  %v893 = vld [vmem:[%s3 + $0x8b8] sm:$0xff]
  %v894 = vld [vmem:[%s3 + $0x8c0] sm:$0xff]
  %v895 = vld [vmem:[%s3 + $0x8c8] sm:$0xff]
  %v896 = vld [vmem:[%s3 + $0x8d0] sm:$0xff]
  %v897 = vld [vmem:[%s3 + $0x8d8] sm:$0xff]
  %v898 = vld [vmem:[%s3 + $0x8e0] sm:$0xff]
  %v899 = vld [vmem:[%s3 + $0x8e8] sm:$0xff]
  %v900 = vld [vmem:[%s3 + $0x8f0] sm:$0xff]
  %v901 = vld [vmem:[%s3 + $0x8f8] sm:$0xff]
  %v902 = vld [vmem:[%s3 + $0x900] sm:$0xff]
  %v903 = vld [vmem:[%s3 + $0x908] sm:$0xff]
  %v904 = vld [vmem:[%s3 + $0x910] sm:$0xff]
  %v905 = vld [vmem:[%s3 + $0x918] sm:$0xff]
  %v906 = vld [vmem:[%s3 + $0x920] sm:$0xff]
  %v907 = vld [vmem:[%s3 + $0x928] sm:$0xff]
  %v908 = vld [vmem:[%s3 + $0x930] sm:$0xff]
  %v909 = vld [vmem:[%s3 + $0x938] sm:$0xff]
  %v910 = vld [vmem:[%s3 + $0x940] sm:$0xff]
  %v911 = vld [vmem:[%s3 + $0x948] sm:$0xff]
  %v912 = vld [vmem:[%s3 + $0x950] sm:$0xff]
  %v913 = vld [vmem:[%s3 + $0x958] sm:$0xff]
  %v914 = vld [vmem:[%s3 + $0x960] sm:$0xff]
  %v915 = vld [vmem:[%s3 + $0x968] sm:$0xff]
  %v916 = vld [vmem:[%s3 + $0x970] sm:$0xff]
  %v917 = vld [vmem:[%s3 + $0x978] sm:$0xff]
  %v918 = vld [vmem:[%s3 + $0x980] sm:$0xff]
  %v919 = vld [vmem:[%s3 + $0x988] sm:$0xff]
  %v920 = vld [vmem:[%s3 + $0x990] sm:$0xff]
  %v921 = vld [vmem:[%s3 + $0x998] sm:$0xff]
  %v922 = vld [vmem:[%s3 + $0x9a0] sm:$0xff]
  %v923 = vld [vmem:[%s3 + $0x9a8] sm:$0xff]
  %v924 = vld [vmem:[%s3 + $0x9b0] sm:$0xff]
  %v925 = vld [vmem:[%s3 + $0x9b8] sm:$0xff]
  %v926 = vld [vmem:[%s3 + $0x9c0] sm:$0xff]
  %v927 = vld [vmem:[%s3 + $0x9c8] sm:$0xff]
  %v928 = vld [vmem:[%s3 + $0x9d0] sm:$0xff]
  %v929 = vld [vmem:[%s3 + $0x9d8] sm:$0xff]
  %v930 = vld [vmem:[%s3 + $0x9e0] sm:$0xff]
  %v931 = vld [vmem:[%s3 + $0x9e8] sm:$0xff]
  %v932 = vld [vmem:[%s3 + $0x9f0] sm:$0xff]
  %v933 = vld [vmem:[%s3 + $0x9f8] sm:$0xff]
  %v934 = vld [vmem:[%s3 + $0xa00] sm:$0xff]
  %v935 = vld [vmem:[%s3 + $0xa08] sm:$0xff]
  %v936 = vld [vmem:[%s3 + $0xa10] sm:$0xff]
  %v937 = vld [vmem:[%s3 + $0xa18] sm:$0xff]
  %v938 = vld [vmem:[%s3 + $0xa20] sm:$0xff]
  %v939 = vld [vmem:[%s3 + $0xa28] sm:$0xff]
  %v940 = vld [vmem:[%s3 + $0xa30] sm:$0xff]
  %v941 = vld [vmem:[%s3 + $0xa38] sm:$0xff]
  %v942 = vld [vmem:[%s3 + $0xa40] sm:$0xff]
  %v943 = vld [vmem:[%s3 + $0xa48] sm:$0xff]
  %v944 = vld [vmem:[%s3 + $0xa50] sm:$0xff]
  %v945 = vld [vmem:[%s3 + $0xa58] sm:$0xff]
  %v946 = vld [vmem:[%s3 + $0xa60] sm:$0xff]
  %v947 = vld [vmem:[%s3 + $0xa68] sm:$0xff]
  %v948 = vld [vmem:[%s3 + $0xa70] sm:$0xff]
  %v949 = vld [vmem:[%s3 + $0xa78] sm:$0xff]
  %v950 = vld [vmem:[%s3 + $0xa80] sm:$0xff]
  %v951 = vld [vmem:[%s3 + $0xa88] sm:$0xff]
  %v952 = vld [vmem:[%s3 + $0xa90] sm:$0xff]
  %v953 = vld [vmem:[%s3 + $0xa98] sm:$0xff]
  %v954 = vld [vmem:[%s3 + $0xaa0] sm:$0xff]
  %v955 = vld [vmem:[%s3 + $0xaa8] sm:$0xff]
  %v956 = vld [vmem:[%s3 + $0xab0] sm:$0xff]
  %v957 = vld [vmem:[%s3 + $0xab8] sm:$0xff]
  %v958 = vld [vmem:[%s3 + $0xac0] sm:$0xff]
  %v959 = vld [vmem:[%s3 + $0xac8] sm:$0xff]
  %v960 = vld [vmem:[%s3 + $0xad0] sm:$0xff]
  %v961 = vld [vmem:[%s3 + $0xad8] sm:$0xff]
  %v962 = vld [vmem:[%s3 + $0xae0] sm:$0xff]
  %v963 = vld [vmem:[%s3 + $0xae8] sm:$0xff]
  %v964 = vld [vmem:[%s3 + $0xaf0] sm:$0xff]
  %v965 = vld [vmem:[%s3 + $0xaf8] sm:$0xff]
  %v966 = vld [vmem:[%s3 + $0xb00] sm:$0xff]
  %v967 = vld [vmem:[%s3 + $0xb08] sm:$0xff]
  %v968 = vld [vmem:[%s3 + $0xb10] sm:$0xff]
  %v969 = vld [vmem:[%s3 + $0xb18] sm:$0xff]
  %v970 = vld [vmem:[%s3 + $0xb20] sm:$0xff]
  %v971 = vld [vmem:[%s3 + $0xb28] sm:$0xff]
  %v972 = vld [vmem:[%s3 + $0xb30] sm:$0xff]
  %v973 = vld [vmem:[%s3 + $0xb38] sm:$0xff]
  %v974 = vld [vmem:[%s3 + $0xb40] sm:$0xff]
  %v975 = vld [vmem:[%s3 + $0xb48] sm:$0xff]
  %v976 = vld [vmem:[%s3 + $0xb50] sm:$0xff]
  %v977 = vld [vmem:[%s3 + $0xb58] sm:$0xff]
  %v978 = vld [vmem:[%s3 + $0xb60] sm:$0xff]
  %v979 = vld [vmem:[%s3 + $0xb68] sm:$0xff]
  %v980 = vld [vmem:[%s3 + $0xb70] sm:$0xff]
  %v981 = vld [vmem:[%s3 + $0xb78] sm:$0xff]
  %v982 = vld [vmem:[%s3 + $0xb80] sm:$0xff]
  %v983 = vld [vmem:[%s3 + $0xb88] sm:$0xff]
  %v984 = vld [vmem:[%s3 + $0xb90] sm:$0xff]
  %v985 = vld [vmem:[%s3 + $0xb98] sm:$0xff]
  %v986 = vld [vmem:[%s3 + $0xba0] sm:$0xff]
  %v987 = vld [vmem:[%s3 + $0xba8] sm:$0xff]
  %v988 = vld [vmem:[%s3 + $0xbb0] sm:$0xff]
  %v989 = vld [vmem:[%s3 + $0xbb8] sm:$0xff]
  %v990 = vld [vmem:[%s3 + $0xbc0] sm:$0xff]
  %v991 = vld [vmem:[%s3 + $0xbc8] sm:$0xff]
  %v992 = vld [vmem:[%s3 + $0xbd0] sm:$0xff]
  %v993 = vld [vmem:[%s3 + $0xbd8] sm:$0xff]
  %v994 = vld [vmem:[%s3 + $0xbe0] sm:$0xff]
  %v995 = vld [vmem:[%s3 + $0xbe8] sm:$0xff]
  %v996 = vld [vmem:[%s3 + $0xbf0] sm:$0xff]
  %v997 = vld [vmem:[%s3 + $0xbf8] sm:$0xff]
  %v998 = vld [vmem:[%s3 + $0xc00] sm:$0xff]
  %v999 = vld [vmem:[%s3 + $0xc08] sm:$0xff]
  %v1000 = vld [vmem:[%s3 + $0xc10] sm:$0xff]
  %v1001 = vld [vmem:[%s3 + $0xc18] sm:$0xff]
  %v1002 = vld [vmem:[%s3 + $0xc20] sm:$0xff]
  %v1003 = vld [vmem:[%s3 + $0xc28] sm:$0xff]
  %v1004 = vld [vmem:[%s3 + $0xc30] sm:$0xff]
  %v1005 = vld [vmem:[%s3 + $0xc38] sm:$0xff]
  %v1006 = vld [vmem:[%s3 + $0xc40] sm:$0xff]
  %v1007 = vld [vmem:[%s3 + $0xc48] sm:$0xff]
  %v1008 = vld [vmem:[%s3 + $0xc50] sm:$0xff]
  %v1009 = vld [vmem:[%s3 + $0xc58] sm:$0xff]
  %v1010 = vld [vmem:[%s3 + $0xc60] sm:$0xff]
  %v1011 = vld [vmem:[%s3 + $0xc68] sm:$0xff]
  %v1012 = vld [vmem:[%s3 + $0xc70] sm:$0xff]
  %v1013 = vld [vmem:[%s3 + $0xc78] sm:$0xff]
  %v1014 = vld [vmem:[%s3 + $0xc80] sm:$0xff]
  %v1015 = vld [vmem:[%s3 + $0xc88] sm:$0xff]
  %v1016 = vld [vmem:[%s3 + $0xc90] sm:$0xff]
  %v1017 = vld [vmem:[%s3 + $0xc98] sm:$0xff]
  %v1018 = vld [vmem:[%s3 + $0xca0] sm:$0xff]
  %v1019 = vld [vmem:[%s3 + $0xca8] sm:$0xff]
  %v1020 = vld [vmem:[%s3 + $0xcb0] sm:$0xff]
  %v1021 = vld [vmem:[%s3 + $0xcb8] sm:$0xff]
  %v1022 = vld [vmem:[%s3 + $0xcc0] sm:$0xff]
  %v1023 = vld [vmem:[%s3 + $0xcc8] sm:$0xff]
  %v1024 = vld [vmem:[%s3 + $0xcd0] sm:$0xff]
  %v1025 = vld [vmem:[%s3 + $0xcd8] sm:$0xff]
  %v1026 = vld [vmem:[%s3 + $0xce0] sm:$0xff]
  %v1027 = vld [vmem:[%s3 + $0xce8] sm:$0xff]
  %v1028 = vld [vmem:[%s3 + $0xcf0] sm:$0xff]
  %v1029 = vld [vmem:[%s3 + $0xcf8] sm:$0xff]
  %v1030 = vld [vmem:[%s3 + $0xd00] sm:$0xff]
  %v1031 = vld [vmem:[%s3 + $0xd08] sm:$0xff]
  %v1032 = vld [vmem:[%s3 + $0xd10] sm:$0xff]
  %v1033 = vld [vmem:[%s3 + $0xd18] sm:$0xff]
  %v1034 = vld [vmem:[%s3 + $0xd20] sm:$0xff]
  %v1035 = vld [vmem:[%s3 + $0xd28] sm:$0xff]
  %v1036 = vld [vmem:[%s3 + $0xd30] sm:$0xff]
  %v1037 = vld [vmem:[%s3 + $0xd38] sm:$0xff]
  %v1038 = vld [vmem:[%s3 + $0xd40] sm:$0xff]
  %v1039 = vld [vmem:[%s3 + $0xd48] sm:$0xff]
  %v1040 = vld [vmem:[%s3 + $0xd50] sm:$0xff]
  %v1041 = vld [vmem:[%s3 + $0xd58] sm:$0xff]
  %v1042 = vld [vmem:[%s3 + $0xd60] sm:$0xff]
  %v1043 = vld [vmem:[%s3 + $0xd68] sm:$0xff]
  %v1044 = vld [vmem:[%s3 + $0xd70] sm:$0xff]
  %v1045 = vld [vmem:[%s3 + $0xd78] sm:$0xff]
  %v1046 = vld [vmem:[%s3 + $0xd80] sm:$0xff]
  %v1047 = vld [vmem:[%s3 + $0xd88] sm:$0xff]
  %v1048 = vld [vmem:[%s3 + $0xd90] sm:$0xff]
  %v1049 = vld [vmem:[%s3 + $0xd98] sm:$0xff]
  %v1050 = vld [vmem:[%s3 + $0xda0] sm:$0xff]
  %v1051 = vld [vmem:[%s3 + $0xda8] sm:$0xff]
  %v1052 = vld [vmem:[%s3 + $0xdb0] sm:$0xff]
  %v1053 = vld [vmem:[%s3 + $0xdb8] sm:$0xff]
  %v1054 = vld [vmem:[%s3 + $0xdc0] sm:$0xff]
  %v1055 = vld [vmem:[%s3 + $0xdc8] sm:$0xff]
  %v1056 = vld [vmem:[%s3 + $0xdd0] sm:$0xff]
  %v1057 = vld [vmem:[%s3 + $0xdd8] sm:$0xff]
  %v1058 = vld [vmem:[%s3 + $0xde0] sm:$0xff]
  %v1059 = vld [vmem:[%s3 + $0xde8] sm:$0xff]
  %v1060 = vld [vmem:[%s3 + $0xdf0] sm:$0xff]
  %v1061 = vld [vmem:[%s3 + $0xdf8] sm:$0xff]
  %v1062 = vld [vmem:[%s3 + $0xe00] sm:$0xff]
  %v1063 = vld [vmem:[%s3 + $0xe08] sm:$0xff]
  %v1064 = vld [vmem:[%s3 + $0xe10] sm:$0xff]
  %v1065 = vld [vmem:[%s3 + $0xe18] sm:$0xff]
  %v1066 = vld [vmem:[%s3 + $0xe20] sm:$0xff]
  %v1067 = vld [vmem:[%s3 + $0xe28] sm:$0xff]
  %v1068 = vld [vmem:[%s3 + $0xe30] sm:$0xff]
  %v1069 = vld [vmem:[%s3 + $0xe38] sm:$0xff]
  %v1070 = vld [vmem:[%s3 + $0xe40] sm:$0xff]
  %v1071 = vld [vmem:[%s3 + $0xe48] sm:$0xff]
  %v1072 = vld [vmem:[%s3 + $0xe50] sm:$0xff]
  %v1073 = vld [vmem:[%s3 + $0xe58] sm:$0xff]
  %v1074 = vld [vmem:[%s3 + $0xe60] sm:$0xff]
  %v1075 = vld [vmem:[%s3 + $0xe68] sm:$0xff]
  %v1076 = vld [vmem:[%s3 + $0xe70] sm:$0xff]
  %v1077 = vld [vmem:[%s3 + $0xe78] sm:$0xff]
  %v1078 = vld [vmem:[%s3 + $0xe80] sm:$0xff]
  %v1079 = vld [vmem:[%s3 + $0xe88] sm:$0xff]
  %v1080 = vld [vmem:[%s3 + $0xe90] sm:$0xff]
  %v1081 = vld [vmem:[%s3 + $0xe98] sm:$0xff]
  %v1082 = vld [vmem:[%s3 + $0xea0] sm:$0xff]
  %v1083 = vld [vmem:[%s3 + $0xea8] sm:$0xff]
  %v1084 = vld [vmem:[%s3 + $0xeb0] sm:$0xff]
  %v1085 = vld [vmem:[%s3 + $0xeb8] sm:$0xff]
  %v1086 = vld [vmem:[%s3 + $0xec0] sm:$0xff]
  %v1087 = vld [vmem:[%s3 + $0xec8] sm:$0xff]
  %v1088 = vld [vmem:[%s3 + $0xed0] sm:$0xff]
  %v1089 = vld [vmem:[%s3 + $0xed8] sm:$0xff]
  %v1090 = vld [vmem:[%s3 + $0xee0] sm:$0xff]
  %v1091 = vld [vmem:[%s3 + $0xee8] sm:$0xff]
  %v1092 = vld [vmem:[%s3 + $0xef0] sm:$0xff]
  %v1093 = vld [vmem:[%s3 + $0xef8] sm:$0xff]
  %v1094 = vld [vmem:[%s3 + $0xf00] sm:$0xff]
  %v1095 = vld [vmem:[%s3 + $0xf08] sm:$0xff]
  %v1096 = vld [vmem:[%s3 + $0xf10] sm:$0xff]
  %v1097 = vld [vmem:[%s3 + $0xf18] sm:$0xff]
  %v1098 = vld [vmem:[%s3 + $0xf20] sm:$0xff]
  %v1099 = vld [vmem:[%s3 + $0xf28] sm:$0xff]
  %v1100 = vld [vmem:[%s3 + $0xf30] sm:$0xff]
  %v1101 = vld [vmem:[%s3 + $0xf38] sm:$0xff]
  %v1102 = vld [vmem:[%s3 + $0xf40] sm:$0xff]
  %v1103 = vld [vmem:[%s3 + $0xf48] sm:$0xff]
  %v1104 = vld [vmem:[%s3 + $0xf50] sm:$0xff]
  %v1105 = vld [vmem:[%s3 + $0xf58] sm:$0xff]
  %v1106 = vld [vmem:[%s3 + $0xf60] sm:$0xff]
  %v1107 = vld [vmem:[%s3 + $0xf68] sm:$0xff]
  %v1108 = vld [vmem:[%s3 + $0xf70] sm:$0xff]
  %v1109 = vld [vmem:[%s3 + $0xf78] sm:$0xff]
  %v1110 = vld [vmem:[%s3 + $0xf80] sm:$0xff]
  %v1111 = vld [vmem:[%s3 + $0xf88] sm:$0xff]
  %v1112 = vld [vmem:[%s3 + $0xf90] sm:$0xff]
  %v1113 = vld [vmem:[%s3 + $0xf98] sm:$0xff]
  %v1114 = vld [vmem:[%s3 + $0xfa0] sm:$0xff]
  %v1115 = vld [vmem:[%s3 + $0xfa8] sm:$0xff]
  %v1116 = vld [vmem:[%s3 + $0xfb0] sm:$0xff]
  %v1117 = vld [vmem:[%s3 + $0xfb8] sm:$0xff]
  %v1118 = vld [vmem:[%s3 + $0xfc0] sm:$0xff]
  %v1119 = vld [vmem:[%s3 + $0xfc8] sm:$0xff]
  %v1120 = vld [vmem:[%s3 + $0xfd0] sm:$0xff]
  %v1121 = vld [vmem:[%s3 + $0xfd8] sm:$0xff]
  %v1122 = vld [vmem:[%s3 + $0xfe0] sm:$0xff]
  %v1123 = vld [vmem:[%s3 + $0xfe8] sm:$0xff]
  %v1124 = vld [vmem:[%s3 + $0xff0] sm:$0xff]
  %v1125 = vld [vmem:[%s3 + $0xff8] sm:$0xff]
  %v1126 = vld [vmem:[%s3 + $0x1000] sm:$0xff]
  %v1127 = vld [vmem:[%s3 + $0x1008] sm:$0xff]
  %v1128 = vld [vmem:[%s3 + $0x1010] sm:$0xff]
  %v1129 = vld [vmem:[%s3 + $0x1018] sm:$0xff]
  %v1130 = vld [vmem:[%s3 + $0x1020] sm:$0xff]
  %v1131 = vld [vmem:[%s3 + $0x1028] sm:$0xff]
  %v1132 = vld [vmem:[%s3 + $0x1030] sm:$0xff]
  %v1133 = vld [vmem:[%s3 + $0x1038] sm:$0xff]
  %v1134 = vld [vmem:[%s3 + $0x1040] sm:$0xff]
  %v1135 = vld [vmem:[%s3 + $0x1048] sm:$0xff]
  %v1136 = vld [vmem:[%s3 + $0x1050] sm:$0xff]
  %v1137 = vld [vmem:[%s3 + $0x1058] sm:$0xff]
  %v1138 = vld [vmem:[%s3 + $0x1060] sm:$0xff]
  %v1139 = vld [vmem:[%s3 + $0x1068] sm:$0xff]
  %v1140 = vld [vmem:[%s3 + $0x1070] sm:$0xff]
  %v1141 = vld [vmem:[%s3 + $0x1078] sm:$0xff]
  %v1142 = vld [vmem:[%s3 + $0x1080] sm:$0xff]
  %v1143 = vld [vmem:[%s3 + $0x1088] sm:$0xff]
  %v1144 = vld [vmem:[%s3 + $0x1090] sm:$0xff]
  %v1145 = vld [vmem:[%s3 + $0x1098] sm:$0xff]
  %v1146 = vld [vmem:[%s3 + $0x10a0] sm:$0xff]
  %v1147 = vld [vmem:[%s3 + $0x10a8] sm:$0xff]
  %v1148 = vld [vmem:[%s3 + $0x10b0] sm:$0xff]
  %v1149 = vld [vmem:[%s3 + $0x10b8] sm:$0xff]
  %v1150 = vld [vmem:[%s3 + $0x10c0] sm:$0xff]
  %v1151 = vld [vmem:[%s3 + $0x10c8] sm:$0xff]
  %v1152 = vld [vmem:[%s3 + $0x10d0] sm:$0xff]
  %v1153 = vld [vmem:[%s3 + $0x10d8] sm:$0xff]
  %v1154 = vld [vmem:[%s3 + $0x10e0] sm:$0xff]
  %v1155 = vld [vmem:[%s3 + $0x10e8] sm:$0xff]
  %v1156 = vld [vmem:[%s3 + $0x10f0] sm:$0xff]
  %v1157 = vld [vmem:[%s3 + $0x10f8] sm:$0xff]
  %v1158 = vld [vmem:[%s3 + $0x1100] sm:$0xff]
  %v1159 = vld [vmem:[%s3 + $0x1108] sm:$0xff]
  %v1160 = vld [vmem:[%s3 + $0x1110] sm:$0xff]
  %v1161 = vld [vmem:[%s3 + $0x1118] sm:$0xff]
  %v1162 = vld [vmem:[%s3 + $0x1120] sm:$0xff]
  %v1163 = vld [vmem:[%s3 + $0x1128] sm:$0xff]
  %v1164 = vld [vmem:[%s3 + $0x1130] sm:$0xff]
  %v1165 = vld [vmem:[%s3 + $0x1138] sm:$0xff]
  %v1166 = vld [vmem:[%s3 + $0x1140] sm:$0xff]
  %v1167 = vld [vmem:[%s3 + $0x1148] sm:$0xff]
  %v1168 = vld [vmem:[%s3 + $0x1150] sm:$0xff]
  %v1169 = vld [vmem:[%s3 + $0x1158] sm:$0xff]
  %v1170 = vld [vmem:[%s3 + $0x1160] sm:$0xff]
  %v1171 = vld [vmem:[%s3 + $0x1168] sm:$0xff]
  %v1172 = vld [vmem:[%s3 + $0x1170] sm:$0xff]
  %v1173 = vld [vmem:[%s3 + $0x1178] sm:$0xff]
  %v1174 = vld [vmem:[%s3 + $0x1180] sm:$0xff]
  %v1175 = vld [vmem:[%s3 + $0x1188] sm:$0xff]
  %v1176 = vld [vmem:[%s3 + $0x1190] sm:$0xff]
  %v1177 = vld [vmem:[%s3 + $0x1198] sm:$0xff]
  %v1178 = vld [vmem:[%s3 + $0x11a0] sm:$0xff]
  %v1179 = vld [vmem:[%s3 + $0x11a8] sm:$0xff]
  %v1180 = vld [vmem:[%s3 + $0x11b0] sm:$0xff]
  %v1181 = vld [vmem:[%s3 + $0x11b8] sm:$0xff]
  %v1182 = vld [vmem:[%s3 + $0x11c0] sm:$0xff]
  %v1183 = vld [vmem:[%s3 + $0x11c8] sm:$0xff]
  %v1184 = vld [vmem:[%s3 + $0x11d0] sm:$0xff]
  %v1185 = vld [vmem:[%s3 + $0x11d8] sm:$0xff]
  %v1186 = vld [vmem:[%s3 + $0x11e0] sm:$0xff]
  %v1187 = vld [vmem:[%s3 + $0x11e8] sm:$0xff]
  %v1188 = vld [vmem:[%s3 + $0x11f0] sm:$0xff]
  %v1189 = vld [vmem:[%s3 + $0x11f8] sm:$0xff]
  %v1190 = vld [vmem:[%s3 + $0x1200] sm:$0xff]
  %v1191 = vld [vmem:[%s3 + $0x1208] sm:$0xff]
  %v1192 = vld [vmem:[%s3 + $0x1210] sm:$0xff]
  %v1193 = vld [vmem:[%s3 + $0x1218] sm:$0xff]
  %v1194 = vld [vmem:[%s3 + $0x1220] sm:$0xff]
  %v1195 = vld [vmem:[%s3 + $0x1228] sm:$0xff]
  %v1196 = vld [vmem:[%s3 + $0x1230] sm:$0xff]
  %v1197 = vld [vmem:[%s3 + $0x1238] sm:$0xff]
  %v1198 = vld [vmem:[%s3 + $0x1240] sm:$0xff]
  %v1199 = vld [vmem:[%s3 + $0x1248] sm:$0xff]
  %v1200 = vld [vmem:[%s3 + $0x1250] sm:$0xff]
  %v1201 = vld [vmem:[%s3 + $0x1258] sm:$0xff]
  %v1202 = vld [vmem:[%s3 + $0x1260] sm:$0xff]
  %v1203 = vld [vmem:[%s3 + $0x1268] sm:$0xff]
  %v1204 = vld [vmem:[%s3 + $0x1270] sm:$0xff]
  %v1205 = vld [vmem:[%s3 + $0x1278] sm:$0xff]
  %v1206 = vld [vmem:[%s3 + $0x1280] sm:$0xff]
  %v1207 = vld [vmem:[%s3 + $0x1288] sm:$0xff]
  %v1208 = vld [vmem:[%s3 + $0x1290] sm:$0xff]
  %v1209 = vld [vmem:[%s3 + $0x1298] sm:$0xff]
  %v1210 = vld [vmem:[%s3 + $0x12a0] sm:$0xff]
  %v1211 = vld [vmem:[%s3 + $0x12a8] sm:$0xff]
  %v1212 = vld [vmem:[%s3 + $0x12b0] sm:$0xff]
  %v1213 = vld [vmem:[%s3 + $0x12b8] sm:$0xff]
  %v1214 = vld [vmem:[%s3 + $0x12c0] sm:$0xff]
  %v1215 = vld [vmem:[%s3 + $0x12c8] sm:$0xff]
  %v1216 = vld [vmem:[%s3 + $0x12d0] sm:$0xff]
  %v1217 = vld [vmem:[%s3 + $0x12d8] sm:$0xff]
  %v1218 = vld [vmem:[%s3 + $0x12e0] sm:$0xff]
  %v1219 = vld [vmem:[%s3 + $0x12e8] sm:$0xff]
  %v1220 = vld [vmem:[%s3 + $0x12f0] sm:$0xff]
  %v1221 = vld [vmem:[%s3 + $0x12f8] sm:$0xff]
  %v1222 = vld [vmem:[%s3 + $0x1300] sm:$0xff]
  %v1223 = vld [vmem:[%s3 + $0x1308] sm:$0xff]
  %v1224 = vld [vmem:[%s3 + $0x1310] sm:$0xff]
  %v1225 = vld [vmem:[%s3 + $0x1318] sm:$0xff]
  %v1226 = vld [vmem:[%s3 + $0x1320] sm:$0xff]
  %v1227 = vld [vmem:[%s3 + $0x1328] sm:$0xff]
  %v1228 = vld [vmem:[%s3 + $0x1330] sm:$0xff]
  %v1229 = vld [vmem:[%s3 + $0x1338] sm:$0xff]
  %v1230 = vld [vmem:[%s3 + $0x1340] sm:$0xff]
  %v1231 = vld [vmem:[%s3 + $0x1348] sm:$0xff]
  %v1232 = vld [vmem:[%s3 + $0x1350] sm:$0xff]
  %v1233 = vld [vmem:[%s3 + $0x1358] sm:$0xff]
  %v1234 = vld [vmem:[%s3 + $0x1360] sm:$0xff]
  %v1235 = vld [vmem:[%s3 + $0x1368] sm:$0xff]
  %v1236 = vld [vmem:[%s3 + $0x1370] sm:$0xff]
  %v1237 = vld [vmem:[%s3 + $0x1378] sm:$0xff]
  %v1238 = vld [vmem:[%s3 + $0x1380] sm:$0xff]
  %v1239 = vld [vmem:[%s3 + $0x1388] sm:$0xff]
  %v1240 = vld [vmem:[%s3 + $0x1390] sm:$0xff]
  %v1241 = vld [vmem:[%s3 + $0x1398] sm:$0xff]
  %v1242 = vld [vmem:[%s3 + $0x13a0] sm:$0xff]
  %v1243 = vld [vmem:[%s3 + $0x13a8] sm:$0xff]
  %v1244 = vld [vmem:[%s3 + $0x13b0] sm:$0xff]
  %v1245 = vld [vmem:[%s3 + $0x13b8] sm:$0xff]
  %v1246 = vld [vmem:[%s3 + $0x13c0] sm:$0xff]
  %v1247 = vld [vmem:[%s3 + $0x13c8] sm:$0xff]
  %v1248 = vld [vmem:[%s3 + $0x13d0] sm:$0xff]
  %v1249 = vld [vmem:[%s3 + $0x13d8] sm:$0xff]
  %v1250 = vld [vmem:[%s3 + $0x13e0] sm:$0xff]
  %v1251 = vld [vmem:[%s3 + $0x13e8] sm:$0xff]
  %v1252 = vld [vmem:[%s3 + $0x13f0] sm:$0xff]
  %v1253 = vld [vmem:[%s3 + $0x13f8] sm:$0xff]
  %v1254 = vld [vmem:[%s3 + $0x1400] sm:$0xff]
  %v1255 = vld [vmem:[%s3 + $0x1408] sm:$0xff]
  %v1256 = vld [vmem:[%s3 + $0x1410] sm:$0xff]
  %v1257 = vld [vmem:[%s3 + $0x1418] sm:$0xff]
  %v1258 = vld [vmem:[%s3 + $0x1420] sm:$0xff]
  %v1259 = vld [vmem:[%s3 + $0x1428] sm:$0xff]
  %v1260 = vld [vmem:[%s3 + $0x1430] sm:$0xff]
  %v1261 = vld [vmem:[%s3 + $0x1438] sm:$0xff]
  %v1262 = vld [vmem:[%s3 + $0x1440] sm:$0xff]
  %v1263 = vld [vmem:[%s3 + $0x1448] sm:$0xff]
  %v1264 = vld [vmem:[%s3 + $0x1450] sm:$0xff]
  %v1265 = vld [vmem:[%s3 + $0x1458] sm:$0xff]
  %v1266 = vld [vmem:[%s3 + $0x1460] sm:$0xff]
  %v1267 = vld [vmem:[%s3 + $0x1468] sm:$0xff]
  %v1268 = vld [vmem:[%s3 + $0x1470] sm:$0xff]
  %v1269 = vld [vmem:[%s3 + $0x1478] sm:$0xff]
  %v1270 = vld [vmem:[%s3 + $0x1480] sm:$0xff]
  %v1271 = vld [vmem:[%s3 + $0x1488] sm:$0xff]
  %v1272 = vld [vmem:[%s3 + $0x1490] sm:$0xff]
  %v1273 = vld [vmem:[%s3 + $0x1498] sm:$0xff]
  %v1274 = vld [vmem:[%s3 + $0x14a0] sm:$0xff]
  %v1275 = vld [vmem:[%s3 + $0x14a8] sm:$0xff]
  %v1276 = vld [vmem:[%s3 + $0x14b0] sm:$0xff]
  %v1277 = vld [vmem:[%s3 + $0x14b8] sm:$0xff]
  %v1278 = vld [vmem:[%s3 + $0x14c0] sm:$0xff]
  %v1279 = vld [vmem:[%s3 + $0x14c8] sm:$0xff]
  %v1280 = vld [vmem:[%s3 + $0x14d0] sm:$0xff]
  %v1281 = vld [vmem:[%s3 + $0x14d8] sm:$0xff]
  %v1282 = vld [vmem:[%s3 + $0x14e0] sm:$0xff]
  %v1283 = vld [vmem:[%s3 + $0x14e8] sm:$0xff]
  %v1284 = vld [vmem:[%s3 + $0x14f0] sm:$0xff]
  %v1285 = vld [vmem:[%s3 + $0x14f8] sm:$0xff]
  %v1286 = vld [vmem:[%s3 + $0x1500] sm:$0xff]
  %v1287 = vld [vmem:[%s3 + $0x1508] sm:$0xff]
  %v1288 = vld [vmem:[%s3 + $0x1510] sm:$0xff]
  %v1289 = vld [vmem:[%s3 + $0x1518] sm:$0xff]
  %v1290 = vld [vmem:[%s3 + $0x1520] sm:$0xff]
  %v1291 = vld [vmem:[%s3 + $0x1528] sm:$0xff]
  %v1292 = vld [vmem:[%s3 + $0x1530] sm:$0xff]
  %v1293 = vld [vmem:[%s3 + $0x1538] sm:$0xff]
  %v1294 = vld [vmem:[%s3 + $0x1540] sm:$0xff]
  %v1295 = vld [vmem:[%s3 + $0x1548] sm:$0xff]
  %v1296 = vld [vmem:[%s3 + $0x1550] sm:$0xff]
  %v1297 = vld [vmem:[%s3 + $0x1558] sm:$0xff]
  %v1298 = vld [vmem:[%s3 + $0x1560] sm:$0xff]
  %v1299 = vld [vmem:[%s3 + $0x1568] sm:$0xff]
  %v1300 = vld [vmem:[%s3 + $0x1570] sm:$0xff]
  %v1301 = vld [vmem:[%s3 + $0x1578] sm:$0xff]
  %v1302 = vld [vmem:[%s3 + $0x1580] sm:$0xff]
  %v1303 = vld [vmem:[%s3 + $0x1588] sm:$0xff]
  %v1304 = vld [vmem:[%s3 + $0x1590] sm:$0xff]
  %v1305 = vld [vmem:[%s3 + $0x1598] sm:$0xff]
  %v1306 = vld [vmem:[%s3 + $0x15a0] sm:$0xff]
  %v1307 = vld [vmem:[%s3 + $0x15a8] sm:$0xff]
  %v1308 = vld [vmem:[%s3 + $0x15b0] sm:$0xff]
  %v1309 = vld [vmem:[%s3 + $0x15b8] sm:$0xff]
  %v1310 = vld [vmem:[%s3 + $0x15c0] sm:$0xff]
  %v1311 = vld [vmem:[%s3 + $0x15c8] sm:$0xff]
  %v1312 = vld [vmem:[%s3 + $0x15d0] sm:$0xff]
  %v1313 = vld [vmem:[%s3 + $0x15d8] sm:$0xff]
  %v1314 = vld [vmem:[%s3 + $0x15e0] sm:$0xff]
  %v1315 = vld [vmem:[%s3 + $0x15e8] sm:$0xff]
  %v1316 = vld [vmem:[%s3 + $0x15f0] sm:$0xff]
  %v1317 = vld [vmem:[%s3 + $0x15f8] sm:$0xff]
  %v1318 = vld [vmem:[%s3 + $0x1600] sm:$0xff]
  %v1319 = vld [vmem:[%s3 + $0x1608] sm:$0xff]
  %v1320 = vld [vmem:[%s3 + $0x1610] sm:$0xff]
  %v1321 = vld [vmem:[%s3 + $0x1618] sm:$0xff]
  %v1322 = vld [vmem:[%s3 + $0x1620] sm:$0xff]
  %v1323 = vld [vmem:[%s3 + $0x1628] sm:$0xff]
  %v1324 = vld [vmem:[%s3 + $0x1630] sm:$0xff]
  %v1325 = vld [vmem:[%s3 + $0x1638] sm:$0xff]
  %v1326 = vld [vmem:[%s3 + $0x1640] sm:$0xff]
  %v1327 = vld [vmem:[%s3 + $0x1648] sm:$0xff]
  %v1328 = vld [vmem:[%s3 + $0x1650] sm:$0xff]
  %v1329 = vld [vmem:[%s3 + $0x1658] sm:$0xff]
  %v1330 = vld [vmem:[%s3 + $0x1660] sm:$0xff]
  %v1331 = vld [vmem:[%s3 + $0x1668] sm:$0xff]
  %v1332 = vld [vmem:[%s3 + $0x1670] sm:$0xff]
  %v1333 = vld [vmem:[%s3 + $0x1678] sm:$0xff]
  %v1334 = vld [vmem:[%s3 + $0x1680] sm:$0xff]
  %v1335 = vld [vmem:[%s3 + $0x1688] sm:$0xff]
  %v1336 = vld [vmem:[%s3 + $0x1690] sm:$0xff]
  %v1337 = vld [vmem:[%s3 + $0x1698] sm:$0xff]
  %v1338 = vld [vmem:[%s3 + $0x16a0] sm:$0xff]
  %v1339 = vld [vmem:[%s3 + $0x16a8] sm:$0xff]
  %v1340 = vld [vmem:[%s3 + $0x16b0] sm:$0xff]
  %v1341 = vld [vmem:[%s3 + $0x16b8] sm:$0xff]
  %v1342 = vld [vmem:[%s3 + $0x16c0] sm:$0xff]
  %v1343 = vld [vmem:[%s3 + $0x16c8] sm:$0xff]
  %v1344 = vld [vmem:[%s3 + $0x16d0] sm:$0xff]
  %v1345 = vld [vmem:[%s3 + $0x16d8] sm:$0xff]
  %v1346 = vld [vmem:[%s3 + $0x16e0] sm:$0xff]
  %v1347 = vld [vmem:[%s3 + $0x16e8] sm:$0xff]
  %v1348 = vld [vmem:[%s3 + $0x16f0] sm:$0xff]
  %v1349 = vld [vmem:[%s3 + $0x16f8] sm:$0xff]
  %v1350 = vld [vmem:[%s3 + $0x1700] sm:$0xff]
  %v1351 = vld [vmem:[%s3 + $0x1708] sm:$0xff]
  %v1352 = vld [vmem:[%s3 + $0x1710] sm:$0xff]
  %v1353 = vld [vmem:[%s3 + $0x1718] sm:$0xff]
  %v1354 = vld [vmem:[%s3 + $0x1720] sm:$0xff]
  %v1355 = vld [vmem:[%s3 + $0x1728] sm:$0xff]
  %v1356 = vld [vmem:[%s3 + $0x1730] sm:$0xff]
  %v1357 = vld [vmem:[%s3 + $0x1738] sm:$0xff]
  %v1358 = vld [vmem:[%s3 + $0x1740] sm:$0xff]
  %v1359 = vld [vmem:[%s3 + $0x1748] sm:$0xff]
  %v1360 = vld [vmem:[%s3 + $0x1750] sm:$0xff]
  %v1361 = vld [vmem:[%s3 + $0x1758] sm:$0xff]
  %v1362 = vld [vmem:[%s3 + $0x1760] sm:$0xff]
  %v1363 = vld [vmem:[%s3 + $0x1768] sm:$0xff]
  %v1364 = vld [vmem:[%s3 + $0x1770] sm:$0xff]
  %v1365 = vld [vmem:[%s3 + $0x1778] sm:$0xff]
  %v1366 = vld [vmem:[%s3 + $0x1780] sm:$0xff]
  %v1367 = vld [vmem:[%s3 + $0x1788] sm:$0xff]
  %v1368 = vld [vmem:[%s3 + $0x1790] sm:$0xff]
  %v1369 = vld [vmem:[%s3 + $0x1798] sm:$0xff]
  %v1370 = vld [vmem:[%s3 + $0x17a0] sm:$0xff]
  %v1371 = vld [vmem:[%s3 + $0x17a8] sm:$0xff]
  %v1372 = vld [vmem:[%s3 + $0x17b0] sm:$0xff]
  %v1373 = vld [vmem:[%s3 + $0x17b8] sm:$0xff]
  %v1374 = vld [vmem:[%s3 + $0x17c0] sm:$0xff]
  %v1375 = vld [vmem:[%s3 + $0x17c8] sm:$0xff]
  %v1376 = vld [vmem:[%s3 + $0x17d0] sm:$0xff]
  %v1377 = vld [vmem:[%s3 + $0x17d8] sm:$0xff]
  %v1378 = vld [vmem:[%s3 + $0x17e0] sm:$0xff]
  %v1379 = vld [vmem:[%s3 + $0x17e8] sm:$0xff]
  %v1380 = vld [vmem:[%s3 + $0x17f0] sm:$0xff]
  %v1381 = vld [vmem:[%s3 + $0x17f8] sm:$0xff]
  %v1382 = vld [vmem:[%s3 + $0x1800] sm:$0xff]
  %v1383 = vld [vmem:[%s3 + $0x1808] sm:$0xff]
  %v1384 = vld [vmem:[%s3 + $0x1810] sm:$0xff]
  %v1385 = vld [vmem:[%s3 + $0x1818] sm:$0xff]
  %v1386 = vld [vmem:[%s3 + $0x1820] sm:$0xff]
  %v1387 = vld [vmem:[%s3 + $0x1828] sm:$0xff]
  %v1388 = vld [vmem:[%s3 + $0x1830] sm:$0xff]
  %v1389 = vld [vmem:[%s3 + $0x1838] sm:$0xff]
  %v1390 = vld [vmem:[%s3 + $0x1840] sm:$0xff]
  %v1391 = vld [vmem:[%s3 + $0x1848] sm:$0xff]
  %v1392 = vld [vmem:[%s3 + $0x1850] sm:$0xff]
  %v1393 = vld [vmem:[%s3 + $0x1858] sm:$0xff]
  %v1394 = vld [vmem:[%s3 + $0x1860] sm:$0xff]
  %v1395 = vld [vmem:[%s3 + $0x1868] sm:$0xff]
  %v1396 = vld [vmem:[%s3 + $0x1870] sm:$0xff]
  %v1397 = vld [vmem:[%s3 + $0x1878] sm:$0xff]
  %v1398 = vld [vmem:[%s3 + $0x1880] sm:$0xff]
  %v1399 = vld [vmem:[%s3 + $0x1888] sm:$0xff]
  %v1400 = vld [vmem:[%s3 + $0x1890] sm:$0xff]
  %v1401 = vld [vmem:[%s3 + $0x1898] sm:$0xff]
  %v1402 = vld [vmem:[%s3 + $0x18a0] sm:$0xff]
  %v1403 = vld [vmem:[%s3 + $0x18a8] sm:$0xff]
  %v1404 = vld [vmem:[%s3 + $0x18b0] sm:$0xff]
  %v1405 = vld [vmem:[%s3 + $0x18b8] sm:$0xff]
  %v1406 = vld [vmem:[%s3 + $0x18c0] sm:$0xff]
  %v1407 = vld [vmem:[%s3 + $0x18c8] sm:$0xff]
  %v1408 = vld [vmem:[%s3 + $0x18d0] sm:$0xff]
  %v1409 = vld [vmem:[%s3 + $0x18d8] sm:$0xff]
  %v1410 = vld [vmem:[%s3 + $0x18e0] sm:$0xff]
  %v1411 = vld [vmem:[%s3 + $0x18e8] sm:$0xff]
  %v1412 = vld [vmem:[%s3 + $0x18f0] sm:$0xff]
  %v1413 = vld [vmem:[%s3 + $0x18f8] sm:$0xff]
  %v1414 = vld [vmem:[%s3 + $0x1900] sm:$0xff]
  %v1415 = vld [vmem:[%s3 + $0x1908] sm:$0xff]
  %v1416 = vld [vmem:[%s3 + $0x1910] sm:$0xff]
  %v1417 = vld [vmem:[%s3 + $0x1918] sm:$0xff]
  %v1418 = vld [vmem:[%s3 + $0x1920] sm:$0xff]
  %v1419 = vld [vmem:[%s3 + $0x1928] sm:$0xff]
  %v1420 = vld [vmem:[%s3 + $0x1930] sm:$0xff]
  %v1421 = vld [vmem:[%s3 + $0x1938] sm:$0xff]
  %v1422 = vld [vmem:[%s3 + $0x1940] sm:$0xff]
  %v1423 = vld [vmem:[%s3 + $0x1948] sm:$0xff]
  %v1424 = vld [vmem:[%s3 + $0x1950] sm:$0xff]
  %v1425 = vld [vmem:[%s3 + $0x1958] sm:$0xff]
  %v1426 = vld [vmem:[%s3 + $0x1960] sm:$0xff]
  %v1427 = vld [vmem:[%s3 + $0x1968] sm:$0xff]
  %v1428 = vld [vmem:[%s3 + $0x1970] sm:$0xff]
  %v1429 = vld [vmem:[%s3 + $0x1978] sm:$0xff]
  %v1430 = vld [vmem:[%s3 + $0x1980] sm:$0xff]
  %v1431 = vld [vmem:[%s3 + $0x1988] sm:$0xff]
  %v1432 = vld [vmem:[%s3 + $0x1990] sm:$0xff]
  %v1433 = vld [vmem:[%s3 + $0x1998] sm:$0xff]
  %v1434 = vld [vmem:[%s3 + $0x19a0] sm:$0xff]
  %v1435 = vld [vmem:[%s3 + $0x19a8] sm:$0xff]
  %v1436 = vld [vmem:[%s3 + $0x19b0] sm:$0xff]
  %v1437 = vld [vmem:[%s3 + $0x19b8] sm:$0xff]
  %v1438 = vld [vmem:[%s3 + $0x19c0] sm:$0xff]
  %v1439 = vld [vmem:[%s3 + $0x19c8] sm:$0xff]
  %v1440 = vld [vmem:[%s3 + $0x19d0] sm:$0xff]
  %v1441 = vld [vmem:[%s3 + $0x19d8] sm:$0xff]
  %v1442 = vld [vmem:[%s3 + $0x19e0] sm:$0xff]
  %v1443 = vld [vmem:[%s3 + $0x19e8] sm:$0xff]
  %v1444 = vld [vmem:[%s3 + $0x19f0] sm:$0xff]
  %v1445 = vld [vmem:[%s3 + $0x19f8] sm:$0xff]
  %v1446 = vld [vmem:[%s3 + $0x1a00] sm:$0xff]
  %v1447 = vld [vmem:[%s3 + $0x1a08] sm:$0xff]
  %v1448 = vld [vmem:[%s3 + $0x1a10] sm:$0xff]
  %v1449 = vld [vmem:[%s3 + $0x1a18] sm:$0xff]
  %v1450 = vld [vmem:[%s3 + $0x1a20] sm:$0xff]
  %v1451 = vld [vmem:[%s3 + $0x1a28] sm:$0xff]
  %v1452 = vld [vmem:[%s3 + $0x1a30] sm:$0xff]
  %v1453 = vld [vmem:[%s3 + $0x1a38] sm:$0xff]
  %v1454 = vld [vmem:[%s3 + $0x1a40] sm:$0xff]
  %v1455 = vld [vmem:[%s3 + $0x1a48] sm:$0xff]
  %v1456 = vld [vmem:[%s3 + $0x1a50] sm:$0xff]
  %v1457 = vld [vmem:[%s3 + $0x1a58] sm:$0xff]
  %v1458 = vld [vmem:[%s3 + $0x1a60] sm:$0xff]
  %v1459 = vld [vmem:[%s3 + $0x1a68] sm:$0xff]
  %v1460 = vld [vmem:[%s3 + $0x1a70] sm:$0xff]
  %v1461 = vld [vmem:[%s3 + $0x1a78] sm:$0xff]
  %v1462 = vld [vmem:[%s3 + $0x1a80] sm:$0xff]
  %v1463 = vld [vmem:[%s3 + $0x1a88] sm:$0xff]
  %v1464 = vld [vmem:[%s3 + $0x1a90] sm:$0xff]
  %v1465 = vld [vmem:[%s3 + $0x1a98] sm:$0xff]
  %v1466 = vld [vmem:[%s3 + $0x1aa0] sm:$0xff]
  %v1467 = vld [vmem:[%s3 + $0x1aa8] sm:$0xff]
  %v1468 = vld [vmem:[%s3 + $0x1ab0] sm:$0xff]
  %v1469 = vld [vmem:[%s3 + $0x1ab8] sm:$0xff]
  %v1470 = vld [vmem:[%s3 + $0x1ac0] sm:$0xff]
  %v1471 = vld [vmem:[%s3 + $0x1ac8] sm:$0xff]
  %v1472 = vld [vmem:[%s3 + $0x1ad0] sm:$0xff]
  %v1473 = vld [vmem:[%s3 + $0x1ad8] sm:$0xff]
  %v1474 = vld [vmem:[%s3 + $0x1ae0] sm:$0xff]
  %v1475 = vld [vmem:[%s3 + $0x1ae8] sm:$0xff]
  %v1476 = vld [vmem:[%s3 + $0x1af0] sm:$0xff]
  %v1477 = vld [vmem:[%s3 + $0x1af8] sm:$0xff]
  %v1478 = vld [vmem:[%s3 + $0x1b00] sm:$0xff]
  %v1479 = vld [vmem:[%s3 + $0x1b08] sm:$0xff]
  %v1480 = vld [vmem:[%s3 + $0x1b10] sm:$0xff]
  %v1481 = vld [vmem:[%s3 + $0x1b18] sm:$0xff]
  %v1482 = vld [vmem:[%s3 + $0x1b20] sm:$0xff]
  %v1483 = vld [vmem:[%s3 + $0x1b28] sm:$0xff]
  %v1484 = vld [vmem:[%s3 + $0x1b30] sm:$0xff]
  %v1485 = vld [vmem:[%s3 + $0x1b38] sm:$0xff]
  %v1486 = vld [vmem:[%s3 + $0x1b40] sm:$0xff]
  %v1487 = vld [vmem:[%s3 + $0x1b48] sm:$0xff]
  %v1488 = vld [vmem:[%s3 + $0x1b50] sm:$0xff]
  %v1489 = vld [vmem:[%s3 + $0x1b58] sm:$0xff]
  %v1490 = vld [vmem:[%s3 + $0x1b60] sm:$0xff]
  %v1491 = vld [vmem:[%s3 + $0x1b68] sm:$0xff]
  %v1492 = vld [vmem:[%s3 + $0x1b70] sm:$0xff]
  %v1493 = vld [vmem:[%s3 + $0x1b78] sm:$0xff]
  %v1494 = vld [vmem:[%s3 + $0x1b80] sm:$0xff]
  %v1495 = vld [vmem:[%s3 + $0x1b88] sm:$0xff]
  %v1496 = vld [vmem:[%s3 + $0x1b90] sm:$0xff]
  %v1497 = vld [vmem:[%s3 + $0x1b98] sm:$0xff]
  %v1498 = vld [vmem:[%s3 + $0x1ba0] sm:$0xff]
  %v1499 = vld [vmem:[%s3 + $0x1ba8] sm:$0xff]
  %v1500 = vld [vmem:[%s3 + $0x1bb0] sm:$0xff]
  %v1501 = vld [vmem:[%s3 + $0x1bb8] sm:$0xff]
  %v1502 = vld [vmem:[%s3 + $0x1bc0] sm:$0xff]
  %v1503 = vld [vmem:[%s3 + $0x1bc8] sm:$0xff]
  %v1504 = vld [vmem:[%s3 + $0x1bd0] sm:$0xff]
  %v1505 = vld [vmem:[%s3 + $0x1bd8] sm:$0xff]
  %v1506 = vld [vmem:[%s3 + $0x1be0] sm:$0xff]
  %v1507 = vld [vmem:[%s3 + $0x1be8] sm:$0xff]
  %v1508 = vld [vmem:[%s3 + $0x1bf0] sm:$0xff]
  %v1509 = vld [vmem:[%s3 + $0x1bf8] sm:$0xff]
  %v1510 = vld [vmem:[%s3 + $0x1c00] sm:$0xff]
  %v1511 = vld [vmem:[%s3 + $0x1c08] sm:$0xff]
  %v1512 = vld [vmem:[%s3 + $0x1c10] sm:$0xff]
  %v1513 = vld [vmem:[%s3 + $0x1c18] sm:$0xff]
  %v1514 = vld [vmem:[%s3 + $0x1c20] sm:$0xff]
  %v1515 = vld [vmem:[%s3 + $0x1c28] sm:$0xff]
  %v1516 = vld [vmem:[%s3 + $0x1c30] sm:$0xff]
  %v1517 = vld [vmem:[%s3 + $0x1c38] sm:$0xff]
  %v1518 = vld [vmem:[%s3 + $0x1c40] sm:$0xff]
  %v1519 = vld [vmem:[%s3 + $0x1c48] sm:$0xff]
  %v1520 = vld [vmem:[%s3 + $0x1c50] sm:$0xff]
  %v1521 = vld [vmem:[%s3 + $0x1c58] sm:$0xff]
  %v1522 = vld [vmem:[%s3 + $0x1c60] sm:$0xff]
  %v1523 = vld [vmem:[%s3 + $0x1c68] sm:$0xff]
  %v1524 = vld [vmem:[%s3 + $0x1c70] sm:$0xff]
  %v1525 = vld [vmem:[%s3 + $0x1c78] sm:$0xff]
  %v1526 = vld [vmem:[%s3 + $0x1c80] sm:$0xff]
  %v1527 = vld [vmem:[%s3 + $0x1c88] sm:$0xff]
  %v1528 = vld [vmem:[%s3 + $0x1c90] sm:$0xff]
  %v1529 = vld [vmem:[%s3 + $0x1c98] sm:$0xff]
  %v1530 = vld [vmem:[%s3 + $0x1ca0] sm:$0xff]
  %v1531 = vld [vmem:[%s3 + $0x1ca8] sm:$0xff]
  %v1532 = vld [vmem:[%s3 + $0x1cb0] sm:$0xff]
  %v1533 = vld [vmem:[%s3 + $0x1cb8] sm:$0xff]
  %v1534 = vld [vmem:[%s3 + $0x1cc0] sm:$0xff]
  %v1535 = vld [vmem:[%s3 + $0x1cc8] sm:$0xff]
  %v1536 = vld [vmem:[%s3 + $0x1cd0] sm:$0xff]
  %v1537 = vld [vmem:[%s3 + $0x1cd8] sm:$0xff]
  %v1538 = vld [vmem:[%s3 + $0x1ce0] sm:$0xff]
  %v1539 = vld [vmem:[%s3 + $0x1ce8] sm:$0xff]
  %v1540 = vld [vmem:[%s3 + $0x1cf0] sm:$0xff]
  %v1541 = vld [vmem:[%s3 + $0x1cf8] sm:$0xff]
  %v1542 = vld [vmem:[%s3 + $0x1d00] sm:$0xff]
  %v1543 = vld [vmem:[%s3 + $0x1d08] sm:$0xff]
  %v1544 = vld [vmem:[%s3 + $0x1d10] sm:$0xff]
  %v1545 = vld [vmem:[%s3 + $0x1d18] sm:$0xff]
  %v1546 = vld [vmem:[%s3 + $0x1d20] sm:$0xff]
  %v1547 = vld [vmem:[%s3 + $0x1d28] sm:$0xff]
  %v1548 = vld [vmem:[%s3 + $0x1d30] sm:$0xff]
  %v1549 = vld [vmem:[%s3 + $0x1d38] sm:$0xff]
  %v1550 = vld [vmem:[%s3 + $0x1d40] sm:$0xff]
  %v1551 = vld [vmem:[%s3 + $0x1d48] sm:$0xff]
  %v1552 = vld [vmem:[%s3 + $0x1d50] sm:$0xff]
  %v1553 = vld [vmem:[%s3 + $0x1d58] sm:$0xff]
  %v1554 = vld [vmem:[%s3 + $0x1d60] sm:$0xff]
  %v1555 = vld [vmem:[%s3 + $0x1d68] sm:$0xff]
  %v1556 = vld [vmem:[%s3 + $0x1d70] sm:$0xff]
  %v1557 = vld [vmem:[%s3 + $0x1d78] sm:$0xff]
  %v1558 = vld [vmem:[%s3 + $0x1d80] sm:$0xff]
  %v1559 = vld [vmem:[%s3 + $0x1d88] sm:$0xff]
  %v1560 = vld [vmem:[%s3 + $0x1d90] sm:$0xff]
  %v1561 = vld [vmem:[%s3 + $0x1d98] sm:$0xff]
  %v1562 = vld [vmem:[%s3 + $0x1da0] sm:$0xff]
  %v1563 = vld [vmem:[%s3 + $0x1da8] sm:$0xff]
  %v1564 = vld [vmem:[%s3 + $0x1db0] sm:$0xff]
  %v1565 = vld [vmem:[%s3 + $0x1db8] sm:$0xff]
  %v1566 = vld [vmem:[%s3 + $0x1dc0] sm:$0xff]
  %v1567 = vld [vmem:[%s3 + $0x1dc8] sm:$0xff]
  %v1568 = vld [vmem:[%s3 + $0x1dd0] sm:$0xff]
  %v1569 = vld [vmem:[%s3 + $0x1dd8] sm:$0xff]
  %v1570 = vld [vmem:[%s3 + $0x1de0] sm:$0xff]
  %v1571 = vld [vmem:[%s3 + $0x1de8] sm:$0xff]
  %v1572 = vld [vmem:[%s3 + $0x1df0] sm:$0xff]
  %v1573 = vld [vmem:[%s3 + $0x1df8] sm:$0xff]
  %v1574 = vld [vmem:[%s3 + $0x1e00] sm:$0xff]
  %v1575 = vld [vmem:[%s3 + $0x1e08] sm:$0xff]
  %v1576 = vld [vmem:[%s3 + $0x1e10] sm:$0xff]
  %v1577 = vld [vmem:[%s3 + $0x1e18] sm:$0xff]
  %v1578 = vld [vmem:[%s3 + $0x1e20] sm:$0xff]
  %v1579 = vld [vmem:[%s3 + $0x1e28] sm:$0xff]
  %v1580 = vld [vmem:[%s3 + $0x1e30] sm:$0xff]
  %v1581 = vld [vmem:[%s3 + $0x1e38] sm:$0xff]
  %v1582 = vld [vmem:[%s3 + $0x1e40] sm:$0xff]
  %v1583 = vld [vmem:[%s3 + $0x1e48] sm:$0xff]
  %v1584 = vld [vmem:[%s3 + $0x1e50] sm:$0xff]
  %v1585 = vld [vmem:[%s3 + $0x1e58] sm:$0xff]
  %v1586 = vld [vmem:[%s3 + $0x1e60] sm:$0xff]
  %v1587 = vld [vmem:[%s3 + $0x1e68] sm:$0xff]
  %v1588 = vld [vmem:[%s3 + $0x1e70] sm:$0xff]
  %v1589 = vld [vmem:[%s3 + $0x1e78] sm:$0xff]
  %v1590 = vld [vmem:[%s3 + $0x1e80] sm:$0xff]
  %v1591 = vld [vmem:[%s3 + $0x1e88] sm:$0xff]
  %v1592 = vld [vmem:[%s3 + $0x1e90] sm:$0xff]
  %v1593 = vld [vmem:[%s3 + $0x1e98] sm:$0xff]
  %v1594 = vld [vmem:[%s3 + $0x1ea0] sm:$0xff]
  %v1595 = vld [vmem:[%s3 + $0x1ea8] sm:$0xff]
  %v1596 = vld [vmem:[%s3 + $0x1eb0] sm:$0xff]
  %v1597 = vld [vmem:[%s3 + $0x1eb8] sm:$0xff]
  %v1598 = vld [vmem:[%s3 + $0x1ec0] sm:$0xff]
  %v1599 = vld [vmem:[%s3 + $0x1ec8] sm:$0xff]
  %v1600 = vld [vmem:[%s3 + $0x1ed0] sm:$0xff]
  %v1601 = vld [vmem:[%s3 + $0x1ed8] sm:$0xff]
  %v1602 = vld [vmem:[%s3 + $0x1ee0] sm:$0xff]
  %v1603 = vld [vmem:[%s3 + $0x1ee8] sm:$0xff]
  %v1604 = vld [vmem:[%s3 + $0x1ef0] sm:$0xff]
  %v1605 = vld [vmem:[%s3 + $0x1ef8] sm:$0xff]
  %v1606 = vld [vmem:[%s3 + $0x1f00] sm:$0xff]
  %v1607 = vld [vmem:[%s3 + $0x1f08] sm:$0xff]
  %v1608 = vld [vmem:[%s3 + $0x1f10] sm:$0xff]
  %v1609 = vld [vmem:[%s3 + $0x1f18] sm:$0xff]
  %v1610 = vld [vmem:[%s3 + $0x1f20] sm:$0xff]
  %v1611 = vld [vmem:[%s3 + $0x1f28] sm:$0xff]
  %v1612 = vld [vmem:[%s3 + $0x1f30] sm:$0xff]
  %v1613 = vld [vmem:[%s3 + $0x1f38] sm:$0xff]
  %v1614 = vld [vmem:[%s3 + $0x1f40] sm:$0xff]
  %v1615 = vld [vmem:[%s3 + $0x1f48] sm:$0xff]
  %v1616 = vld [vmem:[%s3 + $0x1f50] sm:$0xff]
  %v1617 = vld [vmem:[%s3 + $0x1f58] sm:$0xff]
  %v1618 = vld [vmem:[%s3 + $0x1f60] sm:$0xff]
  %v1619 = vld [vmem:[%s3 + $0x1f68] sm:$0xff]
  %v1620 = vld [vmem:[%s3 + $0x1f70] sm:$0xff]
  %v1621 = vld [vmem:[%s3 + $0x1f78] sm:$0xff]
  %v1622 = vld [vmem:[%s3 + $0x1f80] sm:$0xff]
  %v1623 = vld [vmem:[%s3 + $0x1f88] sm:$0xff]
  %v1624 = vld [vmem:[%s3 + $0x1f90] sm:$0xff]
  %v1625 = vld [vmem:[%s3 + $0x1f98] sm:$0xff]
  %v1626 = vld [vmem:[%s3 + $0x1fa0] sm:$0xff]
  %v1627 = vld [vmem:[%s3 + $0x1fa8] sm:$0xff]
  %v1628 = vld [vmem:[%s3 + $0x1fb0] sm:$0xff]
  %v1629 = vld [vmem:[%s3 + $0x1fb8] sm:$0xff]
  %v1630 = vld [vmem:[%s3 + $0x1fc0] sm:$0xff]
  %v1631 = vld [vmem:[%s3 + $0x1fc8] sm:$0xff]
  %v1632 = vld [vmem:[%s3 + $0x1fd0] sm:$0xff]
  %v1633 = vld [vmem:[%s3 + $0x1fd8] sm:$0xff]
  %v1634 = vld [vmem:[%s3 + $0x1fe0] sm:$0xff]
  %v1635 = vld [vmem:[%s3 + $0x1fe8] sm:$0xff]
  %v1636 = vld [vmem:[%s3 + $0x1ff0] sm:$0xff]
  %v1637 = vld [vmem:[%s3 + $0x1ff8] sm:$0xff]
  %v1638 = vld [vmem:[%s4] sm:$0xff]
  %v1640 = vlaneseq
  %v1641 = vshrl.u32 %v1640, 7
  %v1642 = vsub.s32 0, %v1641
  %v1643 = vrot.slane %v1638, %v1642
  %v1644 = vlaneseq
  %v1645 = vshrl.u32 %v1644, 7
  %v1646 = vsub.s32 1, %v1645
  %v1647 = vrot.slane %v1638, %v1646
  %v1648 = vlaneseq
  %v1649 = vshrl.u32 %v1648, 7
  %v1650 = vsub.s32 2, %v1649
  %v1651 = vrot.slane %v1638, %v1650
  %v1652 = vlaneseq
  %v1653 = vshrl.u32 %v1652, 7
  %v1654 = vsub.s32 3, %v1653
  %v1655 = vrot.slane %v1638, %v1654
  %v1656 = vlaneseq
  %v1657 = vshrl.u32 %v1656, 7
  %v1658 = vsub.s32 4, %v1657
  %v1659 = vrot.slane %v1638, %v1658
  %v1660 = vlaneseq
  %v1661 = vshrl.u32 %v1660, 7
  %v1662 = vsub.s32 5, %v1661
  %v1663 = vrot.slane %v1638, %v1662
  %v1664 = vlaneseq
  %v1665 = vshrl.u32 %v1664, 7
  %v1666 = vsub.s32 6, %v1665
  %v1667 = vrot.slane %v1638, %v1666
  %v1668 = vlaneseq
  %v1669 = vshrl.u32 %v1668, 7
  %v1670 = vsub.s32 7, %v1669
  %v1671 = vrot.slane %v1638, %v1670
  %v2704 = vunpack.c.l.b16 %v614
  %v2705 = vunpack.c.h.b16 %v614
  %v2706 = vunpack.c.l.b16 %v615
  %v2707 = vunpack.c.h.b16 %v615
  %v2708 = vunpack.c.l.b16 %v616
  %v2709 = vunpack.c.h.b16 %v616
  %v2710 = vunpack.c.l.b16 %v617
  %v2711 = vunpack.c.h.b16 %v617
  %v2712 = vunpack.c.l.b16 %v618
  %v2713 = vunpack.c.h.b16 %v618
  %v2714 = vunpack.c.l.b16 %v619
  %v2715 = vunpack.c.h.b16 %v619
  %v2716 = vunpack.c.l.b16 %v620
  %v2717 = vunpack.c.h.b16 %v620
  %v2718 = vunpack.c.l.b16 %v621
  %v2719 = vunpack.c.h.b16 %v621
  %v2720 = vunpack.c.l.b16 %v622
  %v2721 = vunpack.c.h.b16 %v622
  %v2722 = vunpack.c.l.b16 %v623
  %v2723 = vunpack.c.h.b16 %v623
  %v2724 = vunpack.c.l.b16 %v624
  %v2725 = vunpack.c.h.b16 %v624
  %v2726 = vunpack.c.l.b16 %v625
  %v2727 = vunpack.c.h.b16 %v625
  %v2728 = vunpack.c.l.b16 %v626
  %v2729 = vunpack.c.h.b16 %v626
  %v2730 = vunpack.c.l.b16 %v627
  %v2731 = vunpack.c.h.b16 %v627
  %v2732 = vunpack.c.l.b16 %v628
  %v2733 = vunpack.c.h.b16 %v628
  %v2734 = vunpack.c.l.b16 %v629
  %v2735 = vunpack.c.h.b16 %v629
  %v2736 = vunpack.c.l.b16 %v630
  %v2737 = vunpack.c.h.b16 %v630
  %v2738 = vunpack.c.l.b16 %v631
  %v2739 = vunpack.c.h.b16 %v631
  %v2740 = vunpack.c.l.b16 %v632
  %v2741 = vunpack.c.h.b16 %v632
  %v2742 = vunpack.c.l.b16 %v633
  %v2743 = vunpack.c.h.b16 %v633
  %v2744 = vunpack.c.l.b16 %v634
  %v2745 = vunpack.c.h.b16 %v634
  %v2746 = vunpack.c.l.b16 %v635
  %v2747 = vunpack.c.h.b16 %v635
  %v2748 = vunpack.c.l.b16 %v636
  %v2749 = vunpack.c.h.b16 %v636
  %v2750 = vunpack.c.l.b16 %v637
  %v2751 = vunpack.c.h.b16 %v637
  %v2752 = vunpack.c.l.b16 %v638
  %v2753 = vunpack.c.h.b16 %v638
  %v2754 = vunpack.c.l.b16 %v639
  %v2755 = vunpack.c.h.b16 %v639
  %v2756 = vunpack.c.l.b16 %v640
  %v2757 = vunpack.c.h.b16 %v640
  %v2758 = vunpack.c.l.b16 %v641
  %v2759 = vunpack.c.h.b16 %v641
  %v2760 = vunpack.c.l.b16 %v642
  %v2761 = vunpack.c.h.b16 %v642
  %v2762 = vunpack.c.l.b16 %v643
  %v2763 = vunpack.c.h.b16 %v643
  %v2764 = vunpack.c.l.b16 %v644
  %v2765 = vunpack.c.h.b16 %v644
  %v2766 = vunpack.c.l.b16 %v645
  %v2767 = vunpack.c.h.b16 %v645
  %v2768 = vunpack.c.l.b16 %v646
  %v2769 = vunpack.c.h.b16 %v646
  %v2770 = vunpack.c.l.b16 %v647
  %v2771 = vunpack.c.h.b16 %v647
  %v2772 = vunpack.c.l.b16 %v648
  %v2773 = vunpack.c.h.b16 %v648
  %v2774 = vunpack.c.l.b16 %v649
  %v2775 = vunpack.c.h.b16 %v649
  %v2776 = vunpack.c.l.b16 %v650
  %v2777 = vunpack.c.h.b16 %v650
  %v2778 = vunpack.c.l.b16 %v651
  %v2779 = vunpack.c.h.b16 %v651
  %v2780 = vunpack.c.l.b16 %v652
  %v2781 = vunpack.c.h.b16 %v652
  %v2782 = vunpack.c.l.b16 %v653
  %v2783 = vunpack.c.h.b16 %v653
  %v2784 = vunpack.c.l.b16 %v654
  %v2785 = vunpack.c.h.b16 %v654
  %v2786 = vunpack.c.l.b16 %v655
  %v2787 = vunpack.c.h.b16 %v655
  %v2788 = vunpack.c.l.b16 %v656
  %v2789 = vunpack.c.h.b16 %v656
  %v2790 = vunpack.c.l.b16 %v657
  %v2791 = vunpack.c.h.b16 %v657
  %v2792 = vunpack.c.l.b16 %v658
  %v2793 = vunpack.c.h.b16 %v658
  %v2794 = vunpack.c.l.b16 %v659
  %v2795 = vunpack.c.h.b16 %v659
  %v2796 = vunpack.c.l.b16 %v660
  %v2797 = vunpack.c.h.b16 %v660
  %v2798 = vunpack.c.l.b16 %v661
  %v2799 = vunpack.c.h.b16 %v661
  %v2800 = vunpack.c.l.b16 %v662
  %v2801 = vunpack.c.h.b16 %v662
  %v2802 = vunpack.c.l.b16 %v663
  %v2803 = vunpack.c.h.b16 %v663
  %v2804 = vunpack.c.l.b16 %v664
  %v2805 = vunpack.c.h.b16 %v664
  %v2806 = vunpack.c.l.b16 %v665
  %v2807 = vunpack.c.h.b16 %v665
  %v2808 = vunpack.c.l.b16 %v666
  %v2809 = vunpack.c.h.b16 %v666
  %v2810 = vunpack.c.l.b16 %v667
  %v2811 = vunpack.c.h.b16 %v667
  %v2812 = vunpack.c.l.b16 %v668
  %v2813 = vunpack.c.h.b16 %v668
  %v2814 = vunpack.c.l.b16 %v669
  %v2815 = vunpack.c.h.b16 %v669
  %v2816 = vunpack.c.l.b16 %v670
  %v2817 = vunpack.c.h.b16 %v670
  %v2818 = vunpack.c.l.b16 %v671
  %v2819 = vunpack.c.h.b16 %v671
  %v2820 = vunpack.c.l.b16 %v672
  %v2821 = vunpack.c.h.b16 %v672
  %v2822 = vunpack.c.l.b16 %v673
  %v2823 = vunpack.c.h.b16 %v673
  %v2824 = vunpack.c.l.b16 %v674
  %v2825 = vunpack.c.h.b16 %v674
  %v2826 = vunpack.c.l.b16 %v675
  %v2827 = vunpack.c.h.b16 %v675
  %v2828 = vunpack.c.l.b16 %v676
  %v2829 = vunpack.c.h.b16 %v676
  %v2830 = vunpack.c.l.b16 %v677
  %v2831 = vunpack.c.h.b16 %v677
  %v2832 = vunpack.c.l.b16 %v678
  %v2833 = vunpack.c.h.b16 %v678
  %v2834 = vunpack.c.l.b16 %v679
  %v2835 = vunpack.c.h.b16 %v679
  %v2836 = vunpack.c.l.b16 %v680
  %v2837 = vunpack.c.h.b16 %v680
  %v2838 = vunpack.c.l.b16 %v681
  %v2839 = vunpack.c.h.b16 %v681
  %v2840 = vunpack.c.l.b16 %v682
  %v2841 = vunpack.c.h.b16 %v682
  %v2842 = vunpack.c.l.b16 %v683
  %v2843 = vunpack.c.h.b16 %v683
  %v2844 = vunpack.c.l.b16 %v684
  %v2845 = vunpack.c.h.b16 %v684
  %v2846 = vunpack.c.l.b16 %v685
  %v2847 = vunpack.c.h.b16 %v685
  %v2848 = vunpack.c.l.b16 %v686
  %v2849 = vunpack.c.h.b16 %v686
  %v2850 = vunpack.c.l.b16 %v687
  %v2851 = vunpack.c.h.b16 %v687
  %v2852 = vunpack.c.l.b16 %v688
  %v2853 = vunpack.c.h.b16 %v688
  %v2854 = vunpack.c.l.b16 %v689
  %v2855 = vunpack.c.h.b16 %v689
  %v2856 = vunpack.c.l.b16 %v690
  %v2857 = vunpack.c.h.b16 %v690
  %v2858 = vunpack.c.l.b16 %v691
  %v2859 = vunpack.c.h.b16 %v691
  %v2860 = vunpack.c.l.b16 %v692
  %v2861 = vunpack.c.h.b16 %v692
  %v2862 = vunpack.c.l.b16 %v693
  %v2863 = vunpack.c.h.b16 %v693
  %v2864 = vunpack.c.l.b16 %v694
  %v2865 = vunpack.c.h.b16 %v694
  %v2866 = vunpack.c.l.b16 %v695
  %v2867 = vunpack.c.h.b16 %v695
  %v2868 = vunpack.c.l.b16 %v696
  %v2869 = vunpack.c.h.b16 %v696
  %v2870 = vunpack.c.l.b16 %v697
  %v2871 = vunpack.c.h.b16 %v697
  %v2872 = vunpack.c.l.b16 %v698
  %v2873 = vunpack.c.h.b16 %v698
  %v2874 = vunpack.c.l.b16 %v699
  %v2875 = vunpack.c.h.b16 %v699
  %v2876 = vunpack.c.l.b16 %v700
  %v2877 = vunpack.c.h.b16 %v700
  %v2878 = vunpack.c.l.b16 %v701
  %v2879 = vunpack.c.h.b16 %v701
  %v2880 = vunpack.c.l.b16 %v702
  %v2881 = vunpack.c.h.b16 %v702
  %v2882 = vunpack.c.l.b16 %v703
  %v2883 = vunpack.c.h.b16 %v703
  %v2884 = vunpack.c.l.b16 %v704
  %v2885 = vunpack.c.h.b16 %v704
  %v2886 = vunpack.c.l.b16 %v705
  %v2887 = vunpack.c.h.b16 %v705
  %v2888 = vunpack.c.l.b16 %v706
  %v2889 = vunpack.c.h.b16 %v706
  %v2890 = vunpack.c.l.b16 %v707
  %v2891 = vunpack.c.h.b16 %v707
  %v2892 = vunpack.c.l.b16 %v708
  %v2893 = vunpack.c.h.b16 %v708
  %v2894 = vunpack.c.l.b16 %v709
  %v2895 = vunpack.c.h.b16 %v709
  %v2896 = vunpack.c.l.b16 %v710
  %v2897 = vunpack.c.h.b16 %v710
  %v2898 = vunpack.c.l.b16 %v711
  %v2899 = vunpack.c.h.b16 %v711
  %v2900 = vunpack.c.l.b16 %v712
  %v2901 = vunpack.c.h.b16 %v712
  %v2902 = vunpack.c.l.b16 %v713
  %v2903 = vunpack.c.h.b16 %v713
  %v2904 = vunpack.c.l.b16 %v714
  %v2905 = vunpack.c.h.b16 %v714
  %v2906 = vunpack.c.l.b16 %v715
  %v2907 = vunpack.c.h.b16 %v715
  %v2908 = vunpack.c.l.b16 %v716
  %v2909 = vunpack.c.h.b16 %v716
  %v2910 = vunpack.c.l.b16 %v717
  %v2911 = vunpack.c.h.b16 %v717
  %v2912 = vunpack.c.l.b16 %v718
  %v2913 = vunpack.c.h.b16 %v718
  %v2914 = vunpack.c.l.b16 %v719
  %v2915 = vunpack.c.h.b16 %v719
  %v2916 = vunpack.c.l.b16 %v720
  %v2917 = vunpack.c.h.b16 %v720
  %v2918 = vunpack.c.l.b16 %v721
  %v2919 = vunpack.c.h.b16 %v721
  %v2920 = vunpack.c.l.b16 %v722
  %v2921 = vunpack.c.h.b16 %v722
  %v2922 = vunpack.c.l.b16 %v723
  %v2923 = vunpack.c.h.b16 %v723
  %v2924 = vunpack.c.l.b16 %v724
  %v2925 = vunpack.c.h.b16 %v724
  %v2926 = vunpack.c.l.b16 %v725
  %v2927 = vunpack.c.h.b16 %v725
  %v2928 = vunpack.c.l.b16 %v726
  %v2929 = vunpack.c.h.b16 %v726
  %v2930 = vunpack.c.l.b16 %v727
  %v2931 = vunpack.c.h.b16 %v727
  %v2932 = vunpack.c.l.b16 %v728
  %v2933 = vunpack.c.h.b16 %v728
  %v2934 = vunpack.c.l.b16 %v729
  %v2935 = vunpack.c.h.b16 %v729
  %v2936 = vunpack.c.l.b16 %v730
  %v2937 = vunpack.c.h.b16 %v730
  %v2938 = vunpack.c.l.b16 %v731
  %v2939 = vunpack.c.h.b16 %v731
  %v2940 = vunpack.c.l.b16 %v732
  %v2941 = vunpack.c.h.b16 %v732
  %v2942 = vunpack.c.l.b16 %v733
  %v2943 = vunpack.c.h.b16 %v733
  %v2944 = vunpack.c.l.b16 %v734
  %v2945 = vunpack.c.h.b16 %v734
  %v2946 = vunpack.c.l.b16 %v735
  %v2947 = vunpack.c.h.b16 %v735
  %v2948 = vunpack.c.l.b16 %v736
  %v2949 = vunpack.c.h.b16 %v736
  %v2950 = vunpack.c.l.b16 %v737
  %v2951 = vunpack.c.h.b16 %v737
  %v2952 = vunpack.c.l.b16 %v738
  %v2953 = vunpack.c.h.b16 %v738
  %v2954 = vunpack.c.l.b16 %v739
  %v2955 = vunpack.c.h.b16 %v739
  %v2956 = vunpack.c.l.b16 %v740
  %v2957 = vunpack.c.h.b16 %v740
  %v2958 = vunpack.c.l.b16 %v741
  %v2959 = vunpack.c.h.b16 %v741
  %v2960 = vunpack.c.l.b16 %v742
  %v2961 = vunpack.c.h.b16 %v742
  %v2962 = vunpack.c.l.b16 %v743
  %v2963 = vunpack.c.h.b16 %v743
  %v2964 = vunpack.c.l.b16 %v744
  %v2965 = vunpack.c.h.b16 %v744
  %v2966 = vunpack.c.l.b16 %v745
  %v2967 = vunpack.c.h.b16 %v745
  %v2968 = vunpack.c.l.b16 %v746
  %v2969 = vunpack.c.h.b16 %v746
  %v2970 = vunpack.c.l.b16 %v747
  %v2971 = vunpack.c.h.b16 %v747
  %v2972 = vunpack.c.l.b16 %v748
  %v2973 = vunpack.c.h.b16 %v748
  %v2974 = vunpack.c.l.b16 %v749
  %v2975 = vunpack.c.h.b16 %v749
  %v2976 = vunpack.c.l.b16 %v750
  %v2977 = vunpack.c.h.b16 %v750
  %v2978 = vunpack.c.l.b16 %v751
  %v2979 = vunpack.c.h.b16 %v751
  %v2980 = vunpack.c.l.b16 %v752
  %v2981 = vunpack.c.h.b16 %v752
  %v2982 = vunpack.c.l.b16 %v753
  %v2983 = vunpack.c.h.b16 %v753
  %v2984 = vunpack.c.l.b16 %v754
  %v2985 = vunpack.c.h.b16 %v754
  %v2986 = vunpack.c.l.b16 %v755
  %v2987 = vunpack.c.h.b16 %v755
  %v2988 = vunpack.c.l.b16 %v756
  %v2989 = vunpack.c.h.b16 %v756
  %v2990 = vunpack.c.l.b16 %v757
  %v2991 = vunpack.c.h.b16 %v757
  %v2992 = vunpack.c.l.b16 %v758
  %v2993 = vunpack.c.h.b16 %v758
  %v2994 = vunpack.c.l.b16 %v759
  %v2995 = vunpack.c.h.b16 %v759
  %v2996 = vunpack.c.l.b16 %v760
  %v2997 = vunpack.c.h.b16 %v760
  %v2998 = vunpack.c.l.b16 %v761
  %v2999 = vunpack.c.h.b16 %v761
  %v3000 = vunpack.c.l.b16 %v762
  %v3001 = vunpack.c.h.b16 %v762
  %v3002 = vunpack.c.l.b16 %v763
  %v3003 = vunpack.c.h.b16 %v763
  %v3004 = vunpack.c.l.b16 %v764
  %v3005 = vunpack.c.h.b16 %v764
  %v3006 = vunpack.c.l.b16 %v765
  %v3007 = vunpack.c.h.b16 %v765
  %v3008 = vunpack.c.l.b16 %v766
  %v3009 = vunpack.c.h.b16 %v766
  %v3010 = vunpack.c.l.b16 %v767
  %v3011 = vunpack.c.h.b16 %v767
  %v3012 = vunpack.c.l.b16 %v768
  %v3013 = vunpack.c.h.b16 %v768
  %v3014 = vunpack.c.l.b16 %v769
  %v3015 = vunpack.c.h.b16 %v769
  %v3016 = vunpack.c.l.b16 %v770
  %v3017 = vunpack.c.h.b16 %v770
  %v3018 = vunpack.c.l.b16 %v771
  %v3019 = vunpack.c.h.b16 %v771
  %v3020 = vunpack.c.l.b16 %v772
  %v3021 = vunpack.c.h.b16 %v772
  %v3022 = vunpack.c.l.b16 %v773
  %v3023 = vunpack.c.h.b16 %v773
  %v3024 = vunpack.c.l.b16 %v774
  %v3025 = vunpack.c.h.b16 %v774
  %v3026 = vunpack.c.l.b16 %v775
  %v3027 = vunpack.c.h.b16 %v775
  %v3028 = vunpack.c.l.b16 %v776
  %v3029 = vunpack.c.h.b16 %v776
  %v3030 = vunpack.c.l.b16 %v777
  %v3031 = vunpack.c.h.b16 %v777
  %v3032 = vunpack.c.l.b16 %v778
  %v3033 = vunpack.c.h.b16 %v778
  %v3034 = vunpack.c.l.b16 %v779
  %v3035 = vunpack.c.h.b16 %v779
  %v3036 = vunpack.c.l.b16 %v780
  %v3037 = vunpack.c.h.b16 %v780
  %v3038 = vunpack.c.l.b16 %v781
  %v3039 = vunpack.c.h.b16 %v781
  %v3040 = vunpack.c.l.b16 %v782
  %v3041 = vunpack.c.h.b16 %v782
  %v3042 = vunpack.c.l.b16 %v783
  %v3043 = vunpack.c.h.b16 %v783
  %v3044 = vunpack.c.l.b16 %v784
  %v3045 = vunpack.c.h.b16 %v784
  %v3046 = vunpack.c.l.b16 %v785
  %v3047 = vunpack.c.h.b16 %v785
  %v3048 = vunpack.c.l.b16 %v786
  %v3049 = vunpack.c.h.b16 %v786
  %v3050 = vunpack.c.l.b16 %v787
  %v3051 = vunpack.c.h.b16 %v787
  %v3052 = vunpack.c.l.b16 %v788
  %v3053 = vunpack.c.h.b16 %v788
  %v3054 = vunpack.c.l.b16 %v789
  %v3055 = vunpack.c.h.b16 %v789
  %v3056 = vunpack.c.l.b16 %v790
  %v3057 = vunpack.c.h.b16 %v790
  %v3058 = vunpack.c.l.b16 %v791
  %v3059 = vunpack.c.h.b16 %v791
  %v3060 = vunpack.c.l.b16 %v792
  %v3061 = vunpack.c.h.b16 %v792
  %v3062 = vunpack.c.l.b16 %v793
  %v3063 = vunpack.c.h.b16 %v793
  %v3064 = vunpack.c.l.b16 %v794
  %v3065 = vunpack.c.h.b16 %v794
  %v3066 = vunpack.c.l.b16 %v795
  %v3067 = vunpack.c.h.b16 %v795
  %v3068 = vunpack.c.l.b16 %v796
  %v3069 = vunpack.c.h.b16 %v796
  %v3070 = vunpack.c.l.b16 %v797
  %v3071 = vunpack.c.h.b16 %v797
  %v3072 = vunpack.c.l.b16 %v798
  %v3073 = vunpack.c.h.b16 %v798
  %v3074 = vunpack.c.l.b16 %v799
  %v3075 = vunpack.c.h.b16 %v799
  %v3076 = vunpack.c.l.b16 %v800
  %v3077 = vunpack.c.h.b16 %v800
  %v3078 = vunpack.c.l.b16 %v801
  %v3079 = vunpack.c.h.b16 %v801
  %v3080 = vunpack.c.l.b16 %v802
  %v3081 = vunpack.c.h.b16 %v802
  %v3082 = vunpack.c.l.b16 %v803
  %v3083 = vunpack.c.h.b16 %v803
  %v3084 = vunpack.c.l.b16 %v804
  %v3085 = vunpack.c.h.b16 %v804
  %v3086 = vunpack.c.l.b16 %v805
  %v3087 = vunpack.c.h.b16 %v805
  %v3088 = vunpack.c.l.b16 %v806
  %v3089 = vunpack.c.h.b16 %v806
  %v3090 = vunpack.c.l.b16 %v807
  %v3091 = vunpack.c.h.b16 %v807
  %v3092 = vunpack.c.l.b16 %v808
  %v3093 = vunpack.c.h.b16 %v808
  %v3094 = vunpack.c.l.b16 %v809
  %v3095 = vunpack.c.h.b16 %v809
  %v3096 = vunpack.c.l.b16 %v810
  %v3097 = vunpack.c.h.b16 %v810
  %v3098 = vunpack.c.l.b16 %v811
  %v3099 = vunpack.c.h.b16 %v811
  %v3100 = vunpack.c.l.b16 %v812
  %v3101 = vunpack.c.h.b16 %v812
  %v3102 = vunpack.c.l.b16 %v813
  %v3103 = vunpack.c.h.b16 %v813
  %v3104 = vunpack.c.l.b16 %v814
  %v3105 = vunpack.c.h.b16 %v814
  %v3106 = vunpack.c.l.b16 %v815
  %v3107 = vunpack.c.h.b16 %v815
  %v3108 = vunpack.c.l.b16 %v816
  %v3109 = vunpack.c.h.b16 %v816
  %v3110 = vunpack.c.l.b16 %v817
  %v3111 = vunpack.c.h.b16 %v817
  %v3112 = vunpack.c.l.b16 %v818
  %v3113 = vunpack.c.h.b16 %v818
  %v3114 = vunpack.c.l.b16 %v819
  %v3115 = vunpack.c.h.b16 %v819
  %v3116 = vunpack.c.l.b16 %v820
  %v3117 = vunpack.c.h.b16 %v820
  %v3118 = vunpack.c.l.b16 %v821
  %v3119 = vunpack.c.h.b16 %v821
  %v3120 = vunpack.c.l.b16 %v822
  %v3121 = vunpack.c.h.b16 %v822
  %v3122 = vunpack.c.l.b16 %v823
  %v3123 = vunpack.c.h.b16 %v823
  %v3124 = vunpack.c.l.b16 %v824
  %v3125 = vunpack.c.h.b16 %v824
  %v3126 = vunpack.c.l.b16 %v825
  %v3127 = vunpack.c.h.b16 %v825
  %v3128 = vunpack.c.l.b16 %v826
  %v3129 = vunpack.c.h.b16 %v826
  %v3130 = vunpack.c.l.b16 %v827
  %v3131 = vunpack.c.h.b16 %v827
  %v3132 = vunpack.c.l.b16 %v828
  %v3133 = vunpack.c.h.b16 %v828
  %v3134 = vunpack.c.l.b16 %v829
  %v3135 = vunpack.c.h.b16 %v829
  %v3136 = vunpack.c.l.b16 %v830
  %v3137 = vunpack.c.h.b16 %v830
  %v3138 = vunpack.c.l.b16 %v831
  %v3139 = vunpack.c.h.b16 %v831
  %v3140 = vunpack.c.l.b16 %v832
  %v3141 = vunpack.c.h.b16 %v832
  %v3142 = vunpack.c.l.b16 %v833
  %v3143 = vunpack.c.h.b16 %v833
  %v3144 = vunpack.c.l.b16 %v834
  %v3145 = vunpack.c.h.b16 %v834
  %v3146 = vunpack.c.l.b16 %v835
  %v3147 = vunpack.c.h.b16 %v835
  %v3148 = vunpack.c.l.b16 %v836
  %v3149 = vunpack.c.h.b16 %v836
  %v3150 = vunpack.c.l.b16 %v837
  %v3151 = vunpack.c.h.b16 %v837
  %v3152 = vunpack.c.l.b16 %v838
  %v3153 = vunpack.c.h.b16 %v838
  %v3154 = vunpack.c.l.b16 %v839
  %v3155 = vunpack.c.h.b16 %v839
  %v3156 = vunpack.c.l.b16 %v840
  %v3157 = vunpack.c.h.b16 %v840
  %v3158 = vunpack.c.l.b16 %v841
  %v3159 = vunpack.c.h.b16 %v841
  %v3160 = vunpack.c.l.b16 %v842
  %v3161 = vunpack.c.h.b16 %v842
  %v3162 = vunpack.c.l.b16 %v843
  %v3163 = vunpack.c.h.b16 %v843
  %v3164 = vunpack.c.l.b16 %v844
  %v3165 = vunpack.c.h.b16 %v844
  %v3166 = vunpack.c.l.b16 %v845
  %v3167 = vunpack.c.h.b16 %v845
  %v3168 = vunpack.c.l.b16 %v846
  %v3169 = vunpack.c.h.b16 %v846
  %v3170 = vunpack.c.l.b16 %v847
  %v3171 = vunpack.c.h.b16 %v847
  %v3172 = vunpack.c.l.b16 %v848
  %v3173 = vunpack.c.h.b16 %v848
  %v3174 = vunpack.c.l.b16 %v849
  %v3175 = vunpack.c.h.b16 %v849
  %v3176 = vunpack.c.l.b16 %v850
  %v3177 = vunpack.c.h.b16 %v850
  %v3178 = vunpack.c.l.b16 %v851
  %v3179 = vunpack.c.h.b16 %v851
  %v3180 = vunpack.c.l.b16 %v852
  %v3181 = vunpack.c.h.b16 %v852
  %v3182 = vunpack.c.l.b16 %v853
  %v3183 = vunpack.c.h.b16 %v853
  %v3184 = vunpack.c.l.b16 %v854
  %v3185 = vunpack.c.h.b16 %v854
  %v3186 = vunpack.c.l.b16 %v855
  %v3187 = vunpack.c.h.b16 %v855
  %v3188 = vunpack.c.l.b16 %v856
  %v3189 = vunpack.c.h.b16 %v856
  %v3190 = vunpack.c.l.b16 %v857
  %v3191 = vunpack.c.h.b16 %v857
  %v3192 = vunpack.c.l.b16 %v858
  %v3193 = vunpack.c.h.b16 %v858
  %v3194 = vunpack.c.l.b16 %v859
  %v3195 = vunpack.c.h.b16 %v859
  %v3196 = vunpack.c.l.b16 %v860
  %v3197 = vunpack.c.h.b16 %v860
  %v3198 = vunpack.c.l.b16 %v861
  %v3199 = vunpack.c.h.b16 %v861
  %v3200 = vunpack.c.l.b16 %v862
  %v3201 = vunpack.c.h.b16 %v862
  %v3202 = vunpack.c.l.b16 %v863
  %v3203 = vunpack.c.h.b16 %v863
  %v3204 = vunpack.c.l.b16 %v864
  %v3205 = vunpack.c.h.b16 %v864
  %v3206 = vunpack.c.l.b16 %v865
  %v3207 = vunpack.c.h.b16 %v865
  %v3208 = vunpack.c.l.b16 %v866
  %v3209 = vunpack.c.h.b16 %v866
  %v3210 = vunpack.c.l.b16 %v867
  %v3211 = vunpack.c.h.b16 %v867
  %v3212 = vunpack.c.l.b16 %v868
  %v3213 = vunpack.c.h.b16 %v868
  %v3214 = vunpack.c.l.b16 %v869
  %v3215 = vunpack.c.h.b16 %v869
  %v3216 = vunpack.c.l.b16 %v870
  %v3217 = vunpack.c.h.b16 %v870
  %v3218 = vunpack.c.l.b16 %v871
  %v3219 = vunpack.c.h.b16 %v871
  %v3220 = vunpack.c.l.b16 %v872
  %v3221 = vunpack.c.h.b16 %v872
  %v3222 = vunpack.c.l.b16 %v873
  %v3223 = vunpack.c.h.b16 %v873
  %v3224 = vunpack.c.l.b16 %v874
  %v3225 = vunpack.c.h.b16 %v874
  %v3226 = vunpack.c.l.b16 %v875
  %v3227 = vunpack.c.h.b16 %v875
  %v3228 = vunpack.c.l.b16 %v876
  %v3229 = vunpack.c.h.b16 %v876
  %v3230 = vunpack.c.l.b16 %v877
  %v3231 = vunpack.c.h.b16 %v877
  %v3232 = vunpack.c.l.b16 %v878
  %v3233 = vunpack.c.h.b16 %v878
  %v3234 = vunpack.c.l.b16 %v879
  %v3235 = vunpack.c.h.b16 %v879
  %v3236 = vunpack.c.l.b16 %v880
  %v3237 = vunpack.c.h.b16 %v880
  %v3238 = vunpack.c.l.b16 %v881
  %v3239 = vunpack.c.h.b16 %v881
  %v3240 = vunpack.c.l.b16 %v882
  %v3241 = vunpack.c.h.b16 %v882
  %v3242 = vunpack.c.l.b16 %v883
  %v3243 = vunpack.c.h.b16 %v883
  %v3244 = vunpack.c.l.b16 %v884
  %v3245 = vunpack.c.h.b16 %v884
  %v3246 = vunpack.c.l.b16 %v885
  %v3247 = vunpack.c.h.b16 %v885
  %v3248 = vunpack.c.l.b16 %v886
  %v3249 = vunpack.c.h.b16 %v886
  %v3250 = vunpack.c.l.b16 %v887
  %v3251 = vunpack.c.h.b16 %v887
  %v3252 = vunpack.c.l.b16 %v888
  %v3253 = vunpack.c.h.b16 %v888
  %v3254 = vunpack.c.l.b16 %v889
  %v3255 = vunpack.c.h.b16 %v889
  %v3256 = vunpack.c.l.b16 %v890
  %v3257 = vunpack.c.h.b16 %v890
  %v3258 = vunpack.c.l.b16 %v891
  %v3259 = vunpack.c.h.b16 %v891
  %v3260 = vunpack.c.l.b16 %v892
  %v3261 = vunpack.c.h.b16 %v892
  %v3262 = vunpack.c.l.b16 %v893
  %v3263 = vunpack.c.h.b16 %v893
  %v3264 = vunpack.c.l.b16 %v894
  %v3265 = vunpack.c.h.b16 %v894
  %v3266 = vunpack.c.l.b16 %v895
  %v3267 = vunpack.c.h.b16 %v895
  %v3268 = vunpack.c.l.b16 %v896
  %v3269 = vunpack.c.h.b16 %v896
  %v3270 = vunpack.c.l.b16 %v897
  %v3271 = vunpack.c.h.b16 %v897
  %v3272 = vunpack.c.l.b16 %v898
  %v3273 = vunpack.c.h.b16 %v898
  %v3274 = vunpack.c.l.b16 %v899
  %v3275 = vunpack.c.h.b16 %v899
  %v3276 = vunpack.c.l.b16 %v900
  %v3277 = vunpack.c.h.b16 %v900
  %v3278 = vunpack.c.l.b16 %v901
  %v3279 = vunpack.c.h.b16 %v901
  %v3280 = vunpack.c.l.b16 %v902
  %v3281 = vunpack.c.h.b16 %v902
  %v3282 = vunpack.c.l.b16 %v903
  %v3283 = vunpack.c.h.b16 %v903
  %v3284 = vunpack.c.l.b16 %v904
  %v3285 = vunpack.c.h.b16 %v904
  %v3286 = vunpack.c.l.b16 %v905
  %v3287 = vunpack.c.h.b16 %v905
  %v3288 = vunpack.c.l.b16 %v906
  %v3289 = vunpack.c.h.b16 %v906
  %v3290 = vunpack.c.l.b16 %v907
  %v3291 = vunpack.c.h.b16 %v907
  %v3292 = vunpack.c.l.b16 %v908
  %v3293 = vunpack.c.h.b16 %v908
  %v3294 = vunpack.c.l.b16 %v909
  %v3295 = vunpack.c.h.b16 %v909
  %v3296 = vunpack.c.l.b16 %v910
  %v3297 = vunpack.c.h.b16 %v910
  %v3298 = vunpack.c.l.b16 %v911
  %v3299 = vunpack.c.h.b16 %v911
  %v3300 = vunpack.c.l.b16 %v912
  %v3301 = vunpack.c.h.b16 %v912
  %v3302 = vunpack.c.l.b16 %v913
  %v3303 = vunpack.c.h.b16 %v913
  %v3304 = vunpack.c.l.b16 %v914
  %v3305 = vunpack.c.h.b16 %v914
  %v3306 = vunpack.c.l.b16 %v915
  %v3307 = vunpack.c.h.b16 %v915
  %v3308 = vunpack.c.l.b16 %v916
  %v3309 = vunpack.c.h.b16 %v916
  %v3310 = vunpack.c.l.b16 %v917
  %v3311 = vunpack.c.h.b16 %v917
  %v3312 = vunpack.c.l.b16 %v918
  %v3313 = vunpack.c.h.b16 %v918
  %v3314 = vunpack.c.l.b16 %v919
  %v3315 = vunpack.c.h.b16 %v919
  %v3316 = vunpack.c.l.b16 %v920
  %v3317 = vunpack.c.h.b16 %v920
  %v3318 = vunpack.c.l.b16 %v921
  %v3319 = vunpack.c.h.b16 %v921
  %v3320 = vunpack.c.l.b16 %v922
  %v3321 = vunpack.c.h.b16 %v922
  %v3322 = vunpack.c.l.b16 %v923
  %v3323 = vunpack.c.h.b16 %v923
  %v3324 = vunpack.c.l.b16 %v924
  %v3325 = vunpack.c.h.b16 %v924
  %v3326 = vunpack.c.l.b16 %v925
  %v3327 = vunpack.c.h.b16 %v925
  %v3328 = vunpack.c.l.b16 %v926
  %v3329 = vunpack.c.h.b16 %v926
  %v3330 = vunpack.c.l.b16 %v927
  %v3331 = vunpack.c.h.b16 %v927
  %v3332 = vunpack.c.l.b16 %v928
  %v3333 = vunpack.c.h.b16 %v928
  %v3334 = vunpack.c.l.b16 %v929
  %v3335 = vunpack.c.h.b16 %v929
  %v3336 = vunpack.c.l.b16 %v930
  %v3337 = vunpack.c.h.b16 %v930
  %v3338 = vunpack.c.l.b16 %v931
  %v3339 = vunpack.c.h.b16 %v931
  %v3340 = vunpack.c.l.b16 %v932
  %v3341 = vunpack.c.h.b16 %v932
  %v3342 = vunpack.c.l.b16 %v933
  %v3343 = vunpack.c.h.b16 %v933
  %v3344 = vunpack.c.l.b16 %v934
  %v3345 = vunpack.c.h.b16 %v934
  %v3346 = vunpack.c.l.b16 %v935
  %v3347 = vunpack.c.h.b16 %v935
  %v3348 = vunpack.c.l.b16 %v936
  %v3349 = vunpack.c.h.b16 %v936
  %v3350 = vunpack.c.l.b16 %v937
  %v3351 = vunpack.c.h.b16 %v937
  %v3352 = vunpack.c.l.b16 %v938
  %v3353 = vunpack.c.h.b16 %v938
  %v3354 = vunpack.c.l.b16 %v939
  %v3355 = vunpack.c.h.b16 %v939
  %v3356 = vunpack.c.l.b16 %v940
  %v3357 = vunpack.c.h.b16 %v940
  %v3358 = vunpack.c.l.b16 %v941
  %v3359 = vunpack.c.h.b16 %v941
  %v3360 = vunpack.c.l.b16 %v942
  %v3361 = vunpack.c.h.b16 %v942
  %v3362 = vunpack.c.l.b16 %v943
  %v3363 = vunpack.c.h.b16 %v943
  %v3364 = vunpack.c.l.b16 %v944
  %v3365 = vunpack.c.h.b16 %v944
  %v3366 = vunpack.c.l.b16 %v945
  %v3367 = vunpack.c.h.b16 %v945
  %v3368 = vunpack.c.l.b16 %v946
  %v3369 = vunpack.c.h.b16 %v946
  %v3370 = vunpack.c.l.b16 %v947
  %v3371 = vunpack.c.h.b16 %v947
  %v3372 = vunpack.c.l.b16 %v948
  %v3373 = vunpack.c.h.b16 %v948
  %v3374 = vunpack.c.l.b16 %v949
  %v3375 = vunpack.c.h.b16 %v949
  %v3376 = vunpack.c.l.b16 %v950
  %v3377 = vunpack.c.h.b16 %v950
  %v3378 = vunpack.c.l.b16 %v951
  %v3379 = vunpack.c.h.b16 %v951
  %v3380 = vunpack.c.l.b16 %v952
  %v3381 = vunpack.c.h.b16 %v952
  %v3382 = vunpack.c.l.b16 %v953
  %v3383 = vunpack.c.h.b16 %v953
  %v3384 = vunpack.c.l.b16 %v954
  %v3385 = vunpack.c.h.b16 %v954
  %v3386 = vunpack.c.l.b16 %v955
  %v3387 = vunpack.c.h.b16 %v955
  %v3388 = vunpack.c.l.b16 %v956
  %v3389 = vunpack.c.h.b16 %v956
  %v3390 = vunpack.c.l.b16 %v957
  %v3391 = vunpack.c.h.b16 %v957
  %v3392 = vunpack.c.l.b16 %v958
  %v3393 = vunpack.c.h.b16 %v958
  %v3394 = vunpack.c.l.b16 %v959
  %v3395 = vunpack.c.h.b16 %v959
  %v3396 = vunpack.c.l.b16 %v960
  %v3397 = vunpack.c.h.b16 %v960
  %v3398 = vunpack.c.l.b16 %v961
  %v3399 = vunpack.c.h.b16 %v961
  %v3400 = vunpack.c.l.b16 %v962
  %v3401 = vunpack.c.h.b16 %v962
  %v3402 = vunpack.c.l.b16 %v963
  %v3403 = vunpack.c.h.b16 %v963
  %v3404 = vunpack.c.l.b16 %v964
  %v3405 = vunpack.c.h.b16 %v964
  %v3406 = vunpack.c.l.b16 %v965
  %v3407 = vunpack.c.h.b16 %v965
  %v3408 = vunpack.c.l.b16 %v966
  %v3409 = vunpack.c.h.b16 %v966
  %v3410 = vunpack.c.l.b16 %v967
  %v3411 = vunpack.c.h.b16 %v967
  %v3412 = vunpack.c.l.b16 %v968
  %v3413 = vunpack.c.h.b16 %v968
  %v3414 = vunpack.c.l.b16 %v969
  %v3415 = vunpack.c.h.b16 %v969
  %v3416 = vunpack.c.l.b16 %v970
  %v3417 = vunpack.c.h.b16 %v970
  %v3418 = vunpack.c.l.b16 %v971
  %v3419 = vunpack.c.h.b16 %v971
  %v3420 = vunpack.c.l.b16 %v972
  %v3421 = vunpack.c.h.b16 %v972
  %v3422 = vunpack.c.l.b16 %v973
  %v3423 = vunpack.c.h.b16 %v973
  %v3424 = vunpack.c.l.b16 %v974
  %v3425 = vunpack.c.h.b16 %v974
  %v3426 = vunpack.c.l.b16 %v975
  %v3427 = vunpack.c.h.b16 %v975
  %v3428 = vunpack.c.l.b16 %v976
  %v3429 = vunpack.c.h.b16 %v976
  %v3430 = vunpack.c.l.b16 %v977
  %v3431 = vunpack.c.h.b16 %v977
  %v3432 = vunpack.c.l.b16 %v978
  %v3433 = vunpack.c.h.b16 %v978
  %v3434 = vunpack.c.l.b16 %v979
  %v3435 = vunpack.c.h.b16 %v979
  %v3436 = vunpack.c.l.b16 %v980
  %v3437 = vunpack.c.h.b16 %v980
  %v3438 = vunpack.c.l.b16 %v981
  %v3439 = vunpack.c.h.b16 %v981
  %v3440 = vunpack.c.l.b16 %v982
  %v3441 = vunpack.c.h.b16 %v982
  %v3442 = vunpack.c.l.b16 %v983
  %v3443 = vunpack.c.h.b16 %v983
  %v3444 = vunpack.c.l.b16 %v984
  %v3445 = vunpack.c.h.b16 %v984
  %v3446 = vunpack.c.l.b16 %v985
  %v3447 = vunpack.c.h.b16 %v985
  %v3448 = vunpack.c.l.b16 %v986
  %v3449 = vunpack.c.h.b16 %v986
  %v3450 = vunpack.c.l.b16 %v987
  %v3451 = vunpack.c.h.b16 %v987
  %v3452 = vunpack.c.l.b16 %v988
  %v3453 = vunpack.c.h.b16 %v988
  %v3454 = vunpack.c.l.b16 %v989
  %v3455 = vunpack.c.h.b16 %v989
  %v3456 = vunpack.c.l.b16 %v990
  %v3457 = vunpack.c.h.b16 %v990
  %v3458 = vunpack.c.l.b16 %v991
  %v3459 = vunpack.c.h.b16 %v991
  %v3460 = vunpack.c.l.b16 %v992
  %v3461 = vunpack.c.h.b16 %v992
  %v3462 = vunpack.c.l.b16 %v993
  %v3463 = vunpack.c.h.b16 %v993
  %v3464 = vunpack.c.l.b16 %v994
  %v3465 = vunpack.c.h.b16 %v994
  %v3466 = vunpack.c.l.b16 %v995
  %v3467 = vunpack.c.h.b16 %v995
  %v3468 = vunpack.c.l.b16 %v996
  %v3469 = vunpack.c.h.b16 %v996
  %v3470 = vunpack.c.l.b16 %v997
  %v3471 = vunpack.c.h.b16 %v997
  %v3472 = vunpack.c.l.b16 %v998
  %v3473 = vunpack.c.h.b16 %v998
  %v3474 = vunpack.c.l.b16 %v999
  %v3475 = vunpack.c.h.b16 %v999
  %v3476 = vunpack.c.l.b16 %v1000
  %v3477 = vunpack.c.h.b16 %v1000
  %v3478 = vunpack.c.l.b16 %v1001
  %v3479 = vunpack.c.h.b16 %v1001
  %v3480 = vunpack.c.l.b16 %v1002
  %v3481 = vunpack.c.h.b16 %v1002
  %v3482 = vunpack.c.l.b16 %v1003
  %v3483 = vunpack.c.h.b16 %v1003
  %v3484 = vunpack.c.l.b16 %v1004
  %v3485 = vunpack.c.h.b16 %v1004
  %v3486 = vunpack.c.l.b16 %v1005
  %v3487 = vunpack.c.h.b16 %v1005
  %v3488 = vunpack.c.l.b16 %v1006
  %v3489 = vunpack.c.h.b16 %v1006
  %v3490 = vunpack.c.l.b16 %v1007
  %v3491 = vunpack.c.h.b16 %v1007
  %v3492 = vunpack.c.l.b16 %v1008
  %v3493 = vunpack.c.h.b16 %v1008
  %v3494 = vunpack.c.l.b16 %v1009
  %v3495 = vunpack.c.h.b16 %v1009
  %v3496 = vunpack.c.l.b16 %v1010
  %v3497 = vunpack.c.h.b16 %v1010
  %v3498 = vunpack.c.l.b16 %v1011
  %v3499 = vunpack.c.h.b16 %v1011
  %v3500 = vunpack.c.l.b16 %v1012
  %v3501 = vunpack.c.h.b16 %v1012
  %v3502 = vunpack.c.l.b16 %v1013
  %v3503 = vunpack.c.h.b16 %v1013
  %v3504 = vunpack.c.l.b16 %v1014
  %v3505 = vunpack.c.h.b16 %v1014
  %v3506 = vunpack.c.l.b16 %v1015
  %v3507 = vunpack.c.h.b16 %v1015
  %v3508 = vunpack.c.l.b16 %v1016
  %v3509 = vunpack.c.h.b16 %v1016
  %v3510 = vunpack.c.l.b16 %v1017
  %v3511 = vunpack.c.h.b16 %v1017
  %v3512 = vunpack.c.l.b16 %v1018
  %v3513 = vunpack.c.h.b16 %v1018
  %v3514 = vunpack.c.l.b16 %v1019
  %v3515 = vunpack.c.h.b16 %v1019
  %v3516 = vunpack.c.l.b16 %v1020
  %v3517 = vunpack.c.h.b16 %v1020
  %v3518 = vunpack.c.l.b16 %v1021
  %v3519 = vunpack.c.h.b16 %v1021
  %v3520 = vunpack.c.l.b16 %v1022
  %v3521 = vunpack.c.h.b16 %v1022
  %v3522 = vunpack.c.l.b16 %v1023
  %v3523 = vunpack.c.h.b16 %v1023
  %v3524 = vunpack.c.l.b16 %v1024
  %v3525 = vunpack.c.h.b16 %v1024
  %v3526 = vunpack.c.l.b16 %v1025
  %v3527 = vunpack.c.h.b16 %v1025
  %v3528 = vunpack.c.l.b16 %v1026
  %v3529 = vunpack.c.h.b16 %v1026
  %v3530 = vunpack.c.l.b16 %v1027
  %v3531 = vunpack.c.h.b16 %v1027
  %v3532 = vunpack.c.l.b16 %v1028
  %v3533 = vunpack.c.h.b16 %v1028
  %v3534 = vunpack.c.l.b16 %v1029
  %v3535 = vunpack.c.h.b16 %v1029
  %v3536 = vunpack.c.l.b16 %v1030
  %v3537 = vunpack.c.h.b16 %v1030
  %v3538 = vunpack.c.l.b16 %v1031
  %v3539 = vunpack.c.h.b16 %v1031
  %v3540 = vunpack.c.l.b16 %v1032
  %v3541 = vunpack.c.h.b16 %v1032
  %v3542 = vunpack.c.l.b16 %v1033
  %v3543 = vunpack.c.h.b16 %v1033
  %v3544 = vunpack.c.l.b16 %v1034
  %v3545 = vunpack.c.h.b16 %v1034
  %v3546 = vunpack.c.l.b16 %v1035
  %v3547 = vunpack.c.h.b16 %v1035
  %v3548 = vunpack.c.l.b16 %v1036
  %v3549 = vunpack.c.h.b16 %v1036
  %v3550 = vunpack.c.l.b16 %v1037
  %v3551 = vunpack.c.h.b16 %v1037
  %v3552 = vunpack.c.l.b16 %v1038
  %v3553 = vunpack.c.h.b16 %v1038
  %v3554 = vunpack.c.l.b16 %v1039
  %v3555 = vunpack.c.h.b16 %v1039
  %v3556 = vunpack.c.l.b16 %v1040
  %v3557 = vunpack.c.h.b16 %v1040
  %v3558 = vunpack.c.l.b16 %v1041
  %v3559 = vunpack.c.h.b16 %v1041
  %v3560 = vunpack.c.l.b16 %v1042
  %v3561 = vunpack.c.h.b16 %v1042
  %v3562 = vunpack.c.l.b16 %v1043
  %v3563 = vunpack.c.h.b16 %v1043
  %v3564 = vunpack.c.l.b16 %v1044
  %v3565 = vunpack.c.h.b16 %v1044
  %v3566 = vunpack.c.l.b16 %v1045
  %v3567 = vunpack.c.h.b16 %v1045
  %v3568 = vunpack.c.l.b16 %v1046
  %v3569 = vunpack.c.h.b16 %v1046
  %v3570 = vunpack.c.l.b16 %v1047
  %v3571 = vunpack.c.h.b16 %v1047
  %v3572 = vunpack.c.l.b16 %v1048
  %v3573 = vunpack.c.h.b16 %v1048
  %v3574 = vunpack.c.l.b16 %v1049
  %v3575 = vunpack.c.h.b16 %v1049
  %v3576 = vunpack.c.l.b16 %v1050
  %v3577 = vunpack.c.h.b16 %v1050
  %v3578 = vunpack.c.l.b16 %v1051
  %v3579 = vunpack.c.h.b16 %v1051
  %v3580 = vunpack.c.l.b16 %v1052
  %v3581 = vunpack.c.h.b16 %v1052
  %v3582 = vunpack.c.l.b16 %v1053
  %v3583 = vunpack.c.h.b16 %v1053
  %v3584 = vunpack.c.l.b16 %v1054
  %v3585 = vunpack.c.h.b16 %v1054
  %v3586 = vunpack.c.l.b16 %v1055
  %v3587 = vunpack.c.h.b16 %v1055
  %v3588 = vunpack.c.l.b16 %v1056
  %v3589 = vunpack.c.h.b16 %v1056
  %v3590 = vunpack.c.l.b16 %v1057
  %v3591 = vunpack.c.h.b16 %v1057
  %v3592 = vunpack.c.l.b16 %v1058
  %v3593 = vunpack.c.h.b16 %v1058
  %v3594 = vunpack.c.l.b16 %v1059
  %v3595 = vunpack.c.h.b16 %v1059
  %v3596 = vunpack.c.l.b16 %v1060
  %v3597 = vunpack.c.h.b16 %v1060
  %v3598 = vunpack.c.l.b16 %v1061
  %v3599 = vunpack.c.h.b16 %v1061
  %v3600 = vunpack.c.l.b16 %v1062
  %v3601 = vunpack.c.h.b16 %v1062
  %v3602 = vunpack.c.l.b16 %v1063
  %v3603 = vunpack.c.h.b16 %v1063
  %v3604 = vunpack.c.l.b16 %v1064
  %v3605 = vunpack.c.h.b16 %v1064
  %v3606 = vunpack.c.l.b16 %v1065
  %v3607 = vunpack.c.h.b16 %v1065
  %v3608 = vunpack.c.l.b16 %v1066
  %v3609 = vunpack.c.h.b16 %v1066
  %v3610 = vunpack.c.l.b16 %v1067
  %v3611 = vunpack.c.h.b16 %v1067
  %v3612 = vunpack.c.l.b16 %v1068
  %v3613 = vunpack.c.h.b16 %v1068
  %v3614 = vunpack.c.l.b16 %v1069
  %v3615 = vunpack.c.h.b16 %v1069
  %v3616 = vunpack.c.l.b16 %v1070
  %v3617 = vunpack.c.h.b16 %v1070
  %v3618 = vunpack.c.l.b16 %v1071
  %v3619 = vunpack.c.h.b16 %v1071
  %v3620 = vunpack.c.l.b16 %v1072
  %v3621 = vunpack.c.h.b16 %v1072
  %v3622 = vunpack.c.l.b16 %v1073
  %v3623 = vunpack.c.h.b16 %v1073
  %v3624 = vunpack.c.l.b16 %v1074
  %v3625 = vunpack.c.h.b16 %v1074
  %v3626 = vunpack.c.l.b16 %v1075
  %v3627 = vunpack.c.h.b16 %v1075
  %v3628 = vunpack.c.l.b16 %v1076
  %v3629 = vunpack.c.h.b16 %v1076
  %v3630 = vunpack.c.l.b16 %v1077
  %v3631 = vunpack.c.h.b16 %v1077
  %v3632 = vunpack.c.l.b16 %v1078
  %v3633 = vunpack.c.h.b16 %v1078
  %v3634 = vunpack.c.l.b16 %v1079
  %v3635 = vunpack.c.h.b16 %v1079
  %v3636 = vunpack.c.l.b16 %v1080
  %v3637 = vunpack.c.h.b16 %v1080
  %v3638 = vunpack.c.l.b16 %v1081
  %v3639 = vunpack.c.h.b16 %v1081
  %v3640 = vunpack.c.l.b16 %v1082
  %v3641 = vunpack.c.h.b16 %v1082
  %v3642 = vunpack.c.l.b16 %v1083
  %v3643 = vunpack.c.h.b16 %v1083
  %v3644 = vunpack.c.l.b16 %v1084
  %v3645 = vunpack.c.h.b16 %v1084
  %v3646 = vunpack.c.l.b16 %v1085
  %v3647 = vunpack.c.h.b16 %v1085
  %v3648 = vunpack.c.l.b16 %v1086
  %v3649 = vunpack.c.h.b16 %v1086
  %v3650 = vunpack.c.l.b16 %v1087
  %v3651 = vunpack.c.h.b16 %v1087
  %v3652 = vunpack.c.l.b16 %v1088
  %v3653 = vunpack.c.h.b16 %v1088
  %v3654 = vunpack.c.l.b16 %v1089
  %v3655 = vunpack.c.h.b16 %v1089
  %v3656 = vunpack.c.l.b16 %v1090
  %v3657 = vunpack.c.h.b16 %v1090
  %v3658 = vunpack.c.l.b16 %v1091
  %v3659 = vunpack.c.h.b16 %v1091
  %v3660 = vunpack.c.l.b16 %v1092
  %v3661 = vunpack.c.h.b16 %v1092
  %v3662 = vunpack.c.l.b16 %v1093
  %v3663 = vunpack.c.h.b16 %v1093
  %v3664 = vunpack.c.l.b16 %v1094
  %v3665 = vunpack.c.h.b16 %v1094
  %v3666 = vunpack.c.l.b16 %v1095
  %v3667 = vunpack.c.h.b16 %v1095
  %v3668 = vunpack.c.l.b16 %v1096
  %v3669 = vunpack.c.h.b16 %v1096
  %v3670 = vunpack.c.l.b16 %v1097
  %v3671 = vunpack.c.h.b16 %v1097
  %v3672 = vunpack.c.l.b16 %v1098
  %v3673 = vunpack.c.h.b16 %v1098
  %v3674 = vunpack.c.l.b16 %v1099
  %v3675 = vunpack.c.h.b16 %v1099
  %v3676 = vunpack.c.l.b16 %v1100
  %v3677 = vunpack.c.h.b16 %v1100
  %v3678 = vunpack.c.l.b16 %v1101
  %v3679 = vunpack.c.h.b16 %v1101
  %v3680 = vunpack.c.l.b16 %v1102
  %v3681 = vunpack.c.h.b16 %v1102
  %v3682 = vunpack.c.l.b16 %v1103
  %v3683 = vunpack.c.h.b16 %v1103
  %v3684 = vunpack.c.l.b16 %v1104
  %v3685 = vunpack.c.h.b16 %v1104
  %v3686 = vunpack.c.l.b16 %v1105
  %v3687 = vunpack.c.h.b16 %v1105
  %v3688 = vunpack.c.l.b16 %v1106
  %v3689 = vunpack.c.h.b16 %v1106
  %v3690 = vunpack.c.l.b16 %v1107
  %v3691 = vunpack.c.h.b16 %v1107
  %v3692 = vunpack.c.l.b16 %v1108
  %v3693 = vunpack.c.h.b16 %v1108
  %v3694 = vunpack.c.l.b16 %v1109
  %v3695 = vunpack.c.h.b16 %v1109
  %v3696 = vunpack.c.l.b16 %v1110
  %v3697 = vunpack.c.h.b16 %v1110
  %v3698 = vunpack.c.l.b16 %v1111
  %v3699 = vunpack.c.h.b16 %v1111
  %v3700 = vunpack.c.l.b16 %v1112
  %v3701 = vunpack.c.h.b16 %v1112
  %v3702 = vunpack.c.l.b16 %v1113
  %v3703 = vunpack.c.h.b16 %v1113
  %v3704 = vunpack.c.l.b16 %v1114
  %v3705 = vunpack.c.h.b16 %v1114
  %v3706 = vunpack.c.l.b16 %v1115
  %v3707 = vunpack.c.h.b16 %v1115
  %v3708 = vunpack.c.l.b16 %v1116
  %v3709 = vunpack.c.h.b16 %v1116
  %v3710 = vunpack.c.l.b16 %v1117
  %v3711 = vunpack.c.h.b16 %v1117
  %v3712 = vunpack.c.l.b16 %v1118
  %v3713 = vunpack.c.h.b16 %v1118
  %v3714 = vunpack.c.l.b16 %v1119
  %v3715 = vunpack.c.h.b16 %v1119
  %v3716 = vunpack.c.l.b16 %v1120
  %v3717 = vunpack.c.h.b16 %v1120
  %v3718 = vunpack.c.l.b16 %v1121
  %v3719 = vunpack.c.h.b16 %v1121
  %v3720 = vunpack.c.l.b16 %v1122
  %v3721 = vunpack.c.h.b16 %v1122
  %v3722 = vunpack.c.l.b16 %v1123
  %v3723 = vunpack.c.h.b16 %v1123
  %v3724 = vunpack.c.l.b16 %v1124
  %v3725 = vunpack.c.h.b16 %v1124
  %v3726 = vunpack.c.l.b16 %v1125
  %v3727 = vunpack.c.h.b16 %v1125
  %v3728 = vunpack.c.l.b16 %v1126
  %v3729 = vunpack.c.h.b16 %v1126
  %v3730 = vunpack.c.l.b16 %v1127
  %v3731 = vunpack.c.h.b16 %v1127
  %v3732 = vunpack.c.l.b16 %v1128
  %v3733 = vunpack.c.h.b16 %v1128
  %v3734 = vunpack.c.l.b16 %v1129
  %v3735 = vunpack.c.h.b16 %v1129
  %v3736 = vunpack.c.l.b16 %v1130
  %v3737 = vunpack.c.h.b16 %v1130
  %v3738 = vunpack.c.l.b16 %v1131
  %v3739 = vunpack.c.h.b16 %v1131
  %v3740 = vunpack.c.l.b16 %v1132
  %v3741 = vunpack.c.h.b16 %v1132
  %v3742 = vunpack.c.l.b16 %v1133
  %v3743 = vunpack.c.h.b16 %v1133
  %v3744 = vunpack.c.l.b16 %v1134
  %v3745 = vunpack.c.h.b16 %v1134
  %v3746 = vunpack.c.l.b16 %v1135
  %v3747 = vunpack.c.h.b16 %v1135
  %v3748 = vunpack.c.l.b16 %v1136
  %v3749 = vunpack.c.h.b16 %v1136
  %v3750 = vunpack.c.l.b16 %v1137
  %v3751 = vunpack.c.h.b16 %v1137
  %v3752 = vunpack.c.l.b16 %v1138
  %v3753 = vunpack.c.h.b16 %v1138
  %v3754 = vunpack.c.l.b16 %v1139
  %v3755 = vunpack.c.h.b16 %v1139
  %v3756 = vunpack.c.l.b16 %v1140
  %v3757 = vunpack.c.h.b16 %v1140
  %v3758 = vunpack.c.l.b16 %v1141
  %v3759 = vunpack.c.h.b16 %v1141
  %v3760 = vunpack.c.l.b16 %v1142
  %v3761 = vunpack.c.h.b16 %v1142
  %v3762 = vunpack.c.l.b16 %v1143
  %v3763 = vunpack.c.h.b16 %v1143
  %v3764 = vunpack.c.l.b16 %v1144
  %v3765 = vunpack.c.h.b16 %v1144
  %v3766 = vunpack.c.l.b16 %v1145
  %v3767 = vunpack.c.h.b16 %v1145
  %v3768 = vunpack.c.l.b16 %v1146
  %v3769 = vunpack.c.h.b16 %v1146
  %v3770 = vunpack.c.l.b16 %v1147
  %v3771 = vunpack.c.h.b16 %v1147
  %v3772 = vunpack.c.l.b16 %v1148
  %v3773 = vunpack.c.h.b16 %v1148
  %v3774 = vunpack.c.l.b16 %v1149
  %v3775 = vunpack.c.h.b16 %v1149
  %v3776 = vunpack.c.l.b16 %v1150
  %v3777 = vunpack.c.h.b16 %v1150
  %v3778 = vunpack.c.l.b16 %v1151
  %v3779 = vunpack.c.h.b16 %v1151
  %v3780 = vunpack.c.l.b16 %v1152
  %v3781 = vunpack.c.h.b16 %v1152
  %v3782 = vunpack.c.l.b16 %v1153
  %v3783 = vunpack.c.h.b16 %v1153
  %v3784 = vunpack.c.l.b16 %v1154
  %v3785 = vunpack.c.h.b16 %v1154
  %v3786 = vunpack.c.l.b16 %v1155
  %v3787 = vunpack.c.h.b16 %v1155
  %v3788 = vunpack.c.l.b16 %v1156
  %v3789 = vunpack.c.h.b16 %v1156
  %v3790 = vunpack.c.l.b16 %v1157
  %v3791 = vunpack.c.h.b16 %v1157
  %v3792 = vunpack.c.l.b16 %v1158
  %v3793 = vunpack.c.h.b16 %v1158
  %v3794 = vunpack.c.l.b16 %v1159
  %v3795 = vunpack.c.h.b16 %v1159
  %v3796 = vunpack.c.l.b16 %v1160
  %v3797 = vunpack.c.h.b16 %v1160
  %v3798 = vunpack.c.l.b16 %v1161
  %v3799 = vunpack.c.h.b16 %v1161
  %v3800 = vunpack.c.l.b16 %v1162
  %v3801 = vunpack.c.h.b16 %v1162
  %v3802 = vunpack.c.l.b16 %v1163
  %v3803 = vunpack.c.h.b16 %v1163
  %v3804 = vunpack.c.l.b16 %v1164
  %v3805 = vunpack.c.h.b16 %v1164
  %v3806 = vunpack.c.l.b16 %v1165
  %v3807 = vunpack.c.h.b16 %v1165
  %v3808 = vunpack.c.l.b16 %v1166
  %v3809 = vunpack.c.h.b16 %v1166
  %v3810 = vunpack.c.l.b16 %v1167
  %v3811 = vunpack.c.h.b16 %v1167
  %v3812 = vunpack.c.l.b16 %v1168
  %v3813 = vunpack.c.h.b16 %v1168
  %v3814 = vunpack.c.l.b16 %v1169
  %v3815 = vunpack.c.h.b16 %v1169
  %v3816 = vunpack.c.l.b16 %v1170
  %v3817 = vunpack.c.h.b16 %v1170
  %v3818 = vunpack.c.l.b16 %v1171
  %v3819 = vunpack.c.h.b16 %v1171
  %v3820 = vunpack.c.l.b16 %v1172
  %v3821 = vunpack.c.h.b16 %v1172
  %v3822 = vunpack.c.l.b16 %v1173
  %v3823 = vunpack.c.h.b16 %v1173
  %v3824 = vunpack.c.l.b16 %v1174
  %v3825 = vunpack.c.h.b16 %v1174
  %v3826 = vunpack.c.l.b16 %v1175
  %v3827 = vunpack.c.h.b16 %v1175
  %v3828 = vunpack.c.l.b16 %v1176
  %v3829 = vunpack.c.h.b16 %v1176
  %v3830 = vunpack.c.l.b16 %v1177
  %v3831 = vunpack.c.h.b16 %v1177
  %v3832 = vunpack.c.l.b16 %v1178
  %v3833 = vunpack.c.h.b16 %v1178
  %v3834 = vunpack.c.l.b16 %v1179
  %v3835 = vunpack.c.h.b16 %v1179
  %v3836 = vunpack.c.l.b16 %v1180
  %v3837 = vunpack.c.h.b16 %v1180
  %v3838 = vunpack.c.l.b16 %v1181
  %v3839 = vunpack.c.h.b16 %v1181
  %v3840 = vunpack.c.l.b16 %v1182
  %v3841 = vunpack.c.h.b16 %v1182
  %v3842 = vunpack.c.l.b16 %v1183
  %v3843 = vunpack.c.h.b16 %v1183
  %v3844 = vunpack.c.l.b16 %v1184
  %v3845 = vunpack.c.h.b16 %v1184
  %v3846 = vunpack.c.l.b16 %v1185
  %v3847 = vunpack.c.h.b16 %v1185
  %v3848 = vunpack.c.l.b16 %v1186
  %v3849 = vunpack.c.h.b16 %v1186
  %v3850 = vunpack.c.l.b16 %v1187
  %v3851 = vunpack.c.h.b16 %v1187
  %v3852 = vunpack.c.l.b16 %v1188
  %v3853 = vunpack.c.h.b16 %v1188
  %v3854 = vunpack.c.l.b16 %v1189
  %v3855 = vunpack.c.h.b16 %v1189
  %v3856 = vunpack.c.l.b16 %v1190
  %v3857 = vunpack.c.h.b16 %v1190
  %v3858 = vunpack.c.l.b16 %v1191
  %v3859 = vunpack.c.h.b16 %v1191
  %v3860 = vunpack.c.l.b16 %v1192
  %v3861 = vunpack.c.h.b16 %v1192
  %v3862 = vunpack.c.l.b16 %v1193
  %v3863 = vunpack.c.h.b16 %v1193
  %v3864 = vunpack.c.l.b16 %v1194
  %v3865 = vunpack.c.h.b16 %v1194
  %v3866 = vunpack.c.l.b16 %v1195
  %v3867 = vunpack.c.h.b16 %v1195
  %v3868 = vunpack.c.l.b16 %v1196
  %v3869 = vunpack.c.h.b16 %v1196
  %v3870 = vunpack.c.l.b16 %v1197
  %v3871 = vunpack.c.h.b16 %v1197
  %v3872 = vunpack.c.l.b16 %v1198
  %v3873 = vunpack.c.h.b16 %v1198
  %v3874 = vunpack.c.l.b16 %v1199
  %v3875 = vunpack.c.h.b16 %v1199
  %v3876 = vunpack.c.l.b16 %v1200
  %v3877 = vunpack.c.h.b16 %v1200
  %v3878 = vunpack.c.l.b16 %v1201
  %v3879 = vunpack.c.h.b16 %v1201
  %v3880 = vunpack.c.l.b16 %v1202
  %v3881 = vunpack.c.h.b16 %v1202
  %v3882 = vunpack.c.l.b16 %v1203
  %v3883 = vunpack.c.h.b16 %v1203
  %v3884 = vunpack.c.l.b16 %v1204
  %v3885 = vunpack.c.h.b16 %v1204
  %v3886 = vunpack.c.l.b16 %v1205
  %v3887 = vunpack.c.h.b16 %v1205
  %v3888 = vunpack.c.l.b16 %v1206
  %v3889 = vunpack.c.h.b16 %v1206
  %v3890 = vunpack.c.l.b16 %v1207
  %v3891 = vunpack.c.h.b16 %v1207
  %v3892 = vunpack.c.l.b16 %v1208
  %v3893 = vunpack.c.h.b16 %v1208
  %v3894 = vunpack.c.l.b16 %v1209
  %v3895 = vunpack.c.h.b16 %v1209
  %v3896 = vunpack.c.l.b16 %v1210
  %v3897 = vunpack.c.h.b16 %v1210
  %v3898 = vunpack.c.l.b16 %v1211
  %v3899 = vunpack.c.h.b16 %v1211
  %v3900 = vunpack.c.l.b16 %v1212
  %v3901 = vunpack.c.h.b16 %v1212
  %v3902 = vunpack.c.l.b16 %v1213
  %v3903 = vunpack.c.h.b16 %v1213
  %v3904 = vunpack.c.l.b16 %v1214
  %v3905 = vunpack.c.h.b16 %v1214
  %v3906 = vunpack.c.l.b16 %v1215
  %v3907 = vunpack.c.h.b16 %v1215
  %v3908 = vunpack.c.l.b16 %v1216
  %v3909 = vunpack.c.h.b16 %v1216
  %v3910 = vunpack.c.l.b16 %v1217
  %v3911 = vunpack.c.h.b16 %v1217
  %v3912 = vunpack.c.l.b16 %v1218
  %v3913 = vunpack.c.h.b16 %v1218
  %v3914 = vunpack.c.l.b16 %v1219
  %v3915 = vunpack.c.h.b16 %v1219
  %v3916 = vunpack.c.l.b16 %v1220
  %v3917 = vunpack.c.h.b16 %v1220
  %v3918 = vunpack.c.l.b16 %v1221
  %v3919 = vunpack.c.h.b16 %v1221
  %v3920 = vunpack.c.l.b16 %v1222
  %v3921 = vunpack.c.h.b16 %v1222
  %v3922 = vunpack.c.l.b16 %v1223
  %v3923 = vunpack.c.h.b16 %v1223
  %v3924 = vunpack.c.l.b16 %v1224
  %v3925 = vunpack.c.h.b16 %v1224
  %v3926 = vunpack.c.l.b16 %v1225
  %v3927 = vunpack.c.h.b16 %v1225
  %v3928 = vunpack.c.l.b16 %v1226
  %v3929 = vunpack.c.h.b16 %v1226
  %v3930 = vunpack.c.l.b16 %v1227
  %v3931 = vunpack.c.h.b16 %v1227
  %v3932 = vunpack.c.l.b16 %v1228
  %v3933 = vunpack.c.h.b16 %v1228
  %v3934 = vunpack.c.l.b16 %v1229
  %v3935 = vunpack.c.h.b16 %v1229
  %v3936 = vunpack.c.l.b16 %v1230
  %v3937 = vunpack.c.h.b16 %v1230
  %v3938 = vunpack.c.l.b16 %v1231
  %v3939 = vunpack.c.h.b16 %v1231
  %v3940 = vunpack.c.l.b16 %v1232
  %v3941 = vunpack.c.h.b16 %v1232
  %v3942 = vunpack.c.l.b16 %v1233
  %v3943 = vunpack.c.h.b16 %v1233
  %v3944 = vunpack.c.l.b16 %v1234
  %v3945 = vunpack.c.h.b16 %v1234
  %v3946 = vunpack.c.l.b16 %v1235
  %v3947 = vunpack.c.h.b16 %v1235
  %v3948 = vunpack.c.l.b16 %v1236
  %v3949 = vunpack.c.h.b16 %v1236
  %v3950 = vunpack.c.l.b16 %v1237
  %v3951 = vunpack.c.h.b16 %v1237
  %v3952 = vunpack.c.l.b16 %v1238
  %v3953 = vunpack.c.h.b16 %v1238
  %v3954 = vunpack.c.l.b16 %v1239
  %v3955 = vunpack.c.h.b16 %v1239
  %v3956 = vunpack.c.l.b16 %v1240
  %v3957 = vunpack.c.h.b16 %v1240
  %v3958 = vunpack.c.l.b16 %v1241
  %v3959 = vunpack.c.h.b16 %v1241
  %v3960 = vunpack.c.l.b16 %v1242
  %v3961 = vunpack.c.h.b16 %v1242
  %v3962 = vunpack.c.l.b16 %v1243
  %v3963 = vunpack.c.h.b16 %v1243
  %v3964 = vunpack.c.l.b16 %v1244
  %v3965 = vunpack.c.h.b16 %v1244
  %v3966 = vunpack.c.l.b16 %v1245
  %v3967 = vunpack.c.h.b16 %v1245
  %v3968 = vunpack.c.l.b16 %v1246
  %v3969 = vunpack.c.h.b16 %v1246
  %v3970 = vunpack.c.l.b16 %v1247
  %v3971 = vunpack.c.h.b16 %v1247
  %v3972 = vunpack.c.l.b16 %v1248
  %v3973 = vunpack.c.h.b16 %v1248
  %v3974 = vunpack.c.l.b16 %v1249
  %v3975 = vunpack.c.h.b16 %v1249
  %v3976 = vunpack.c.l.b16 %v1250
  %v3977 = vunpack.c.h.b16 %v1250
  %v3978 = vunpack.c.l.b16 %v1251
  %v3979 = vunpack.c.h.b16 %v1251
  %v3980 = vunpack.c.l.b16 %v1252
  %v3981 = vunpack.c.h.b16 %v1252
  %v3982 = vunpack.c.l.b16 %v1253
  %v3983 = vunpack.c.h.b16 %v1253
  %v3984 = vunpack.c.l.b16 %v1254
  %v3985 = vunpack.c.h.b16 %v1254
  %v3986 = vunpack.c.l.b16 %v1255
  %v3987 = vunpack.c.h.b16 %v1255
  %v3988 = vunpack.c.l.b16 %v1256
  %v3989 = vunpack.c.h.b16 %v1256
  %v3990 = vunpack.c.l.b16 %v1257
  %v3991 = vunpack.c.h.b16 %v1257
  %v3992 = vunpack.c.l.b16 %v1258
  %v3993 = vunpack.c.h.b16 %v1258
  %v3994 = vunpack.c.l.b16 %v1259
  %v3995 = vunpack.c.h.b16 %v1259
  %v3996 = vunpack.c.l.b16 %v1260
  %v3997 = vunpack.c.h.b16 %v1260
  %v3998 = vunpack.c.l.b16 %v1261
  %v3999 = vunpack.c.h.b16 %v1261
  %v4000 = vunpack.c.l.b16 %v1262
  %v4001 = vunpack.c.h.b16 %v1262
  %v4002 = vunpack.c.l.b16 %v1263
  %v4003 = vunpack.c.h.b16 %v1263
  %v4004 = vunpack.c.l.b16 %v1264
  %v4005 = vunpack.c.h.b16 %v1264
  %v4006 = vunpack.c.l.b16 %v1265
  %v4007 = vunpack.c.h.b16 %v1265
  %v4008 = vunpack.c.l.b16 %v1266
  %v4009 = vunpack.c.h.b16 %v1266
  %v4010 = vunpack.c.l.b16 %v1267
  %v4011 = vunpack.c.h.b16 %v1267
  %v4012 = vunpack.c.l.b16 %v1268
  %v4013 = vunpack.c.h.b16 %v1268
  %v4014 = vunpack.c.l.b16 %v1269
  %v4015 = vunpack.c.h.b16 %v1269
  %v4016 = vunpack.c.l.b16 %v1270
  %v4017 = vunpack.c.h.b16 %v1270
  %v4018 = vunpack.c.l.b16 %v1271
  %v4019 = vunpack.c.h.b16 %v1271
  %v4020 = vunpack.c.l.b16 %v1272
  %v4021 = vunpack.c.h.b16 %v1272
  %v4022 = vunpack.c.l.b16 %v1273
  %v4023 = vunpack.c.h.b16 %v1273
  %v4024 = vunpack.c.l.b16 %v1274
  %v4025 = vunpack.c.h.b16 %v1274
  %v4026 = vunpack.c.l.b16 %v1275
  %v4027 = vunpack.c.h.b16 %v1275
  %v4028 = vunpack.c.l.b16 %v1276
  %v4029 = vunpack.c.h.b16 %v1276
  %v4030 = vunpack.c.l.b16 %v1277
  %v4031 = vunpack.c.h.b16 %v1277
  %v4032 = vunpack.c.l.b16 %v1278
  %v4033 = vunpack.c.h.b16 %v1278
  %v4034 = vunpack.c.l.b16 %v1279
  %v4035 = vunpack.c.h.b16 %v1279
  %v4036 = vunpack.c.l.b16 %v1280
  %v4037 = vunpack.c.h.b16 %v1280
  %v4038 = vunpack.c.l.b16 %v1281
  %v4039 = vunpack.c.h.b16 %v1281
  %v4040 = vunpack.c.l.b16 %v1282
  %v4041 = vunpack.c.h.b16 %v1282
  %v4042 = vunpack.c.l.b16 %v1283
  %v4043 = vunpack.c.h.b16 %v1283
  %v4044 = vunpack.c.l.b16 %v1284
  %v4045 = vunpack.c.h.b16 %v1284
  %v4046 = vunpack.c.l.b16 %v1285
  %v4047 = vunpack.c.h.b16 %v1285
  %v4048 = vunpack.c.l.b16 %v1286
  %v4049 = vunpack.c.h.b16 %v1286
  %v4050 = vunpack.c.l.b16 %v1287
  %v4051 = vunpack.c.h.b16 %v1287
  %v4052 = vunpack.c.l.b16 %v1288
  %v4053 = vunpack.c.h.b16 %v1288
  %v4054 = vunpack.c.l.b16 %v1289
  %v4055 = vunpack.c.h.b16 %v1289
  %v4056 = vunpack.c.l.b16 %v1290
  %v4057 = vunpack.c.h.b16 %v1290
  %v4058 = vunpack.c.l.b16 %v1291
  %v4059 = vunpack.c.h.b16 %v1291
  %v4060 = vunpack.c.l.b16 %v1292
  %v4061 = vunpack.c.h.b16 %v1292
  %v4062 = vunpack.c.l.b16 %v1293
  %v4063 = vunpack.c.h.b16 %v1293
  %v4064 = vunpack.c.l.b16 %v1294
  %v4065 = vunpack.c.h.b16 %v1294
  %v4066 = vunpack.c.l.b16 %v1295
  %v4067 = vunpack.c.h.b16 %v1295
  %v4068 = vunpack.c.l.b16 %v1296
  %v4069 = vunpack.c.h.b16 %v1296
  %v4070 = vunpack.c.l.b16 %v1297
  %v4071 = vunpack.c.h.b16 %v1297
  %v4072 = vunpack.c.l.b16 %v1298
  %v4073 = vunpack.c.h.b16 %v1298
  %v4074 = vunpack.c.l.b16 %v1299
  %v4075 = vunpack.c.h.b16 %v1299
  %v4076 = vunpack.c.l.b16 %v1300
  %v4077 = vunpack.c.h.b16 %v1300
  %v4078 = vunpack.c.l.b16 %v1301
  %v4079 = vunpack.c.h.b16 %v1301
  %v4080 = vunpack.c.l.b16 %v1302
  %v4081 = vunpack.c.h.b16 %v1302
  %v4082 = vunpack.c.l.b16 %v1303
  %v4083 = vunpack.c.h.b16 %v1303
  %v4084 = vunpack.c.l.b16 %v1304
  %v4085 = vunpack.c.h.b16 %v1304
  %v4086 = vunpack.c.l.b16 %v1305
  %v4087 = vunpack.c.h.b16 %v1305
  %v4088 = vunpack.c.l.b16 %v1306
  %v4089 = vunpack.c.h.b16 %v1306
  %v4090 = vunpack.c.l.b16 %v1307
  %v4091 = vunpack.c.h.b16 %v1307
  %v4092 = vunpack.c.l.b16 %v1308
  %v4093 = vunpack.c.h.b16 %v1308
  %v4094 = vunpack.c.l.b16 %v1309
  %v4095 = vunpack.c.h.b16 %v1309
  %v4096 = vunpack.c.l.b16 %v1310
  %v4097 = vunpack.c.h.b16 %v1310
  %v4098 = vunpack.c.l.b16 %v1311
  %v4099 = vunpack.c.h.b16 %v1311
  %v4100 = vunpack.c.l.b16 %v1312
  %v4101 = vunpack.c.h.b16 %v1312
  %v4102 = vunpack.c.l.b16 %v1313
  %v4103 = vunpack.c.h.b16 %v1313
  %v4104 = vunpack.c.l.b16 %v1314
  %v4105 = vunpack.c.h.b16 %v1314
  %v4106 = vunpack.c.l.b16 %v1315
  %v4107 = vunpack.c.h.b16 %v1315
  %v4108 = vunpack.c.l.b16 %v1316
  %v4109 = vunpack.c.h.b16 %v1316
  %v4110 = vunpack.c.l.b16 %v1317
  %v4111 = vunpack.c.h.b16 %v1317
  %v4112 = vunpack.c.l.b16 %v1318
  %v4113 = vunpack.c.h.b16 %v1318
  %v4114 = vunpack.c.l.b16 %v1319
  %v4115 = vunpack.c.h.b16 %v1319
  %v4116 = vunpack.c.l.b16 %v1320
  %v4117 = vunpack.c.h.b16 %v1320
  %v4118 = vunpack.c.l.b16 %v1321
  %v4119 = vunpack.c.h.b16 %v1321
  %v4120 = vunpack.c.l.b16 %v1322
  %v4121 = vunpack.c.h.b16 %v1322
  %v4122 = vunpack.c.l.b16 %v1323
  %v4123 = vunpack.c.h.b16 %v1323
  %v4124 = vunpack.c.l.b16 %v1324
  %v4125 = vunpack.c.h.b16 %v1324
  %v4126 = vunpack.c.l.b16 %v1325
  %v4127 = vunpack.c.h.b16 %v1325
  %v4128 = vunpack.c.l.b16 %v1326
  %v4129 = vunpack.c.h.b16 %v1326
  %v4130 = vunpack.c.l.b16 %v1327
  %v4131 = vunpack.c.h.b16 %v1327
  %v4132 = vunpack.c.l.b16 %v1328
  %v4133 = vunpack.c.h.b16 %v1328
  %v4134 = vunpack.c.l.b16 %v1329
  %v4135 = vunpack.c.h.b16 %v1329
  %v4136 = vunpack.c.l.b16 %v1330
  %v4137 = vunpack.c.h.b16 %v1330
  %v4138 = vunpack.c.l.b16 %v1331
  %v4139 = vunpack.c.h.b16 %v1331
  %v4140 = vunpack.c.l.b16 %v1332
  %v4141 = vunpack.c.h.b16 %v1332
  %v4142 = vunpack.c.l.b16 %v1333
  %v4143 = vunpack.c.h.b16 %v1333
  %v4144 = vunpack.c.l.b16 %v1334
  %v4145 = vunpack.c.h.b16 %v1334
  %v4146 = vunpack.c.l.b16 %v1335
  %v4147 = vunpack.c.h.b16 %v1335
  %v4148 = vunpack.c.l.b16 %v1336
  %v4149 = vunpack.c.h.b16 %v1336
  %v4150 = vunpack.c.l.b16 %v1337
  %v4151 = vunpack.c.h.b16 %v1337
  %v4152 = vunpack.c.l.b16 %v1338
  %v4153 = vunpack.c.h.b16 %v1338
  %v4154 = vunpack.c.l.b16 %v1339
  %v4155 = vunpack.c.h.b16 %v1339
  %v4156 = vunpack.c.l.b16 %v1340
  %v4157 = vunpack.c.h.b16 %v1340
  %v4158 = vunpack.c.l.b16 %v1341
  %v4159 = vunpack.c.h.b16 %v1341
  %v4160 = vunpack.c.l.b16 %v1342
  %v4161 = vunpack.c.h.b16 %v1342
  %v4162 = vunpack.c.l.b16 %v1343
  %v4163 = vunpack.c.h.b16 %v1343
  %v4164 = vunpack.c.l.b16 %v1344
  %v4165 = vunpack.c.h.b16 %v1344
  %v4166 = vunpack.c.l.b16 %v1345
  %v4167 = vunpack.c.h.b16 %v1345
  %v4168 = vunpack.c.l.b16 %v1346
  %v4169 = vunpack.c.h.b16 %v1346
  %v4170 = vunpack.c.l.b16 %v1347
  %v4171 = vunpack.c.h.b16 %v1347
  %v4172 = vunpack.c.l.b16 %v1348
  %v4173 = vunpack.c.h.b16 %v1348
  %v4174 = vunpack.c.l.b16 %v1349
  %v4175 = vunpack.c.h.b16 %v1349
  %v4176 = vunpack.c.l.b16 %v1350
  %v4177 = vunpack.c.h.b16 %v1350
  %v4178 = vunpack.c.l.b16 %v1351
  %v4179 = vunpack.c.h.b16 %v1351
  %v4180 = vunpack.c.l.b16 %v1352
  %v4181 = vunpack.c.h.b16 %v1352
  %v4182 = vunpack.c.l.b16 %v1353
  %v4183 = vunpack.c.h.b16 %v1353
  %v4184 = vunpack.c.l.b16 %v1354
  %v4185 = vunpack.c.h.b16 %v1354
  %v4186 = vunpack.c.l.b16 %v1355
  %v4187 = vunpack.c.h.b16 %v1355
  %v4188 = vunpack.c.l.b16 %v1356
  %v4189 = vunpack.c.h.b16 %v1356
  %v4190 = vunpack.c.l.b16 %v1357
  %v4191 = vunpack.c.h.b16 %v1357
  %v4192 = vunpack.c.l.b16 %v1358
  %v4193 = vunpack.c.h.b16 %v1358
  %v4194 = vunpack.c.l.b16 %v1359
  %v4195 = vunpack.c.h.b16 %v1359
  %v4196 = vunpack.c.l.b16 %v1360
  %v4197 = vunpack.c.h.b16 %v1360
  %v4198 = vunpack.c.l.b16 %v1361
  %v4199 = vunpack.c.h.b16 %v1361
  %v4200 = vunpack.c.l.b16 %v1362
  %v4201 = vunpack.c.h.b16 %v1362
  %v4202 = vunpack.c.l.b16 %v1363
  %v4203 = vunpack.c.h.b16 %v1363
  %v4204 = vunpack.c.l.b16 %v1364
  %v4205 = vunpack.c.h.b16 %v1364
  %v4206 = vunpack.c.l.b16 %v1365
  %v4207 = vunpack.c.h.b16 %v1365
  %v4208 = vunpack.c.l.b16 %v1366
  %v4209 = vunpack.c.h.b16 %v1366
  %v4210 = vunpack.c.l.b16 %v1367
  %v4211 = vunpack.c.h.b16 %v1367
  %v4212 = vunpack.c.l.b16 %v1368
  %v4213 = vunpack.c.h.b16 %v1368
  %v4214 = vunpack.c.l.b16 %v1369
  %v4215 = vunpack.c.h.b16 %v1369
  %v4216 = vunpack.c.l.b16 %v1370
  %v4217 = vunpack.c.h.b16 %v1370
  %v4218 = vunpack.c.l.b16 %v1371
  %v4219 = vunpack.c.h.b16 %v1371
  %v4220 = vunpack.c.l.b16 %v1372
  %v4221 = vunpack.c.h.b16 %v1372
  %v4222 = vunpack.c.l.b16 %v1373
  %v4223 = vunpack.c.h.b16 %v1373
  %v4224 = vunpack.c.l.b16 %v1374
  %v4225 = vunpack.c.h.b16 %v1374
  %v4226 = vunpack.c.l.b16 %v1375
  %v4227 = vunpack.c.h.b16 %v1375
  %v4228 = vunpack.c.l.b16 %v1376
  %v4229 = vunpack.c.h.b16 %v1376
  %v4230 = vunpack.c.l.b16 %v1377
  %v4231 = vunpack.c.h.b16 %v1377
  %v4232 = vunpack.c.l.b16 %v1378
  %v4233 = vunpack.c.h.b16 %v1378
  %v4234 = vunpack.c.l.b16 %v1379
  %v4235 = vunpack.c.h.b16 %v1379
  %v4236 = vunpack.c.l.b16 %v1380
  %v4237 = vunpack.c.h.b16 %v1380
  %v4238 = vunpack.c.l.b16 %v1381
  %v4239 = vunpack.c.h.b16 %v1381
  %v4240 = vunpack.c.l.b16 %v1382
  %v4241 = vunpack.c.h.b16 %v1382
  %v4242 = vunpack.c.l.b16 %v1383
  %v4243 = vunpack.c.h.b16 %v1383
  %v4244 = vunpack.c.l.b16 %v1384
  %v4245 = vunpack.c.h.b16 %v1384
  %v4246 = vunpack.c.l.b16 %v1385
  %v4247 = vunpack.c.h.b16 %v1385
  %v4248 = vunpack.c.l.b16 %v1386
  %v4249 = vunpack.c.h.b16 %v1386
  %v4250 = vunpack.c.l.b16 %v1387
  %v4251 = vunpack.c.h.b16 %v1387
  %v4252 = vunpack.c.l.b16 %v1388
  %v4253 = vunpack.c.h.b16 %v1388
  %v4254 = vunpack.c.l.b16 %v1389
  %v4255 = vunpack.c.h.b16 %v1389
  %v4256 = vunpack.c.l.b16 %v1390
  %v4257 = vunpack.c.h.b16 %v1390
  %v4258 = vunpack.c.l.b16 %v1391
  %v4259 = vunpack.c.h.b16 %v1391
  %v4260 = vunpack.c.l.b16 %v1392
  %v4261 = vunpack.c.h.b16 %v1392
  %v4262 = vunpack.c.l.b16 %v1393
  %v4263 = vunpack.c.h.b16 %v1393
  %v4264 = vunpack.c.l.b16 %v1394
  %v4265 = vunpack.c.h.b16 %v1394
  %v4266 = vunpack.c.l.b16 %v1395
  %v4267 = vunpack.c.h.b16 %v1395
  %v4268 = vunpack.c.l.b16 %v1396
  %v4269 = vunpack.c.h.b16 %v1396
  %v4270 = vunpack.c.l.b16 %v1397
  %v4271 = vunpack.c.h.b16 %v1397
  %v4272 = vunpack.c.l.b16 %v1398
  %v4273 = vunpack.c.h.b16 %v1398
  %v4274 = vunpack.c.l.b16 %v1399
  %v4275 = vunpack.c.h.b16 %v1399
  %v4276 = vunpack.c.l.b16 %v1400
  %v4277 = vunpack.c.h.b16 %v1400
  %v4278 = vunpack.c.l.b16 %v1401
  %v4279 = vunpack.c.h.b16 %v1401
  %v4280 = vunpack.c.l.b16 %v1402
  %v4281 = vunpack.c.h.b16 %v1402
  %v4282 = vunpack.c.l.b16 %v1403
  %v4283 = vunpack.c.h.b16 %v1403
  %v4284 = vunpack.c.l.b16 %v1404
  %v4285 = vunpack.c.h.b16 %v1404
  %v4286 = vunpack.c.l.b16 %v1405
  %v4287 = vunpack.c.h.b16 %v1405
  %v4288 = vunpack.c.l.b16 %v1406
  %v4289 = vunpack.c.h.b16 %v1406
  %v4290 = vunpack.c.l.b16 %v1407
  %v4291 = vunpack.c.h.b16 %v1407
  %v4292 = vunpack.c.l.b16 %v1408
  %v4293 = vunpack.c.h.b16 %v1408
  %v4294 = vunpack.c.l.b16 %v1409
  %v4295 = vunpack.c.h.b16 %v1409
  %v4296 = vunpack.c.l.b16 %v1410
  %v4297 = vunpack.c.h.b16 %v1410
  %v4298 = vunpack.c.l.b16 %v1411
  %v4299 = vunpack.c.h.b16 %v1411
  %v4300 = vunpack.c.l.b16 %v1412
  %v4301 = vunpack.c.h.b16 %v1412
  %v4302 = vunpack.c.l.b16 %v1413
  %v4303 = vunpack.c.h.b16 %v1413
  %v4304 = vunpack.c.l.b16 %v1414
  %v4305 = vunpack.c.h.b16 %v1414
  %v4306 = vunpack.c.l.b16 %v1415
  %v4307 = vunpack.c.h.b16 %v1415
  %v4308 = vunpack.c.l.b16 %v1416
  %v4309 = vunpack.c.h.b16 %v1416
  %v4310 = vunpack.c.l.b16 %v1417
  %v4311 = vunpack.c.h.b16 %v1417
  %v4312 = vunpack.c.l.b16 %v1418
  %v4313 = vunpack.c.h.b16 %v1418
  %v4314 = vunpack.c.l.b16 %v1419
  %v4315 = vunpack.c.h.b16 %v1419
  %v4316 = vunpack.c.l.b16 %v1420
  %v4317 = vunpack.c.h.b16 %v1420
  %v4318 = vunpack.c.l.b16 %v1421
  %v4319 = vunpack.c.h.b16 %v1421
  %v4320 = vunpack.c.l.b16 %v1422
  %v4321 = vunpack.c.h.b16 %v1422
  %v4322 = vunpack.c.l.b16 %v1423
  %v4323 = vunpack.c.h.b16 %v1423
  %v4324 = vunpack.c.l.b16 %v1424
  %v4325 = vunpack.c.h.b16 %v1424
  %v4326 = vunpack.c.l.b16 %v1425
  %v4327 = vunpack.c.h.b16 %v1425
  %v4328 = vunpack.c.l.b16 %v1426
  %v4329 = vunpack.c.h.b16 %v1426
  %v4330 = vunpack.c.l.b16 %v1427
  %v4331 = vunpack.c.h.b16 %v1427
  %v4332 = vunpack.c.l.b16 %v1428
  %v4333 = vunpack.c.h.b16 %v1428
  %v4334 = vunpack.c.l.b16 %v1429
  %v4335 = vunpack.c.h.b16 %v1429
  %v4336 = vunpack.c.l.b16 %v1430
  %v4337 = vunpack.c.h.b16 %v1430
  %v4338 = vunpack.c.l.b16 %v1431
  %v4339 = vunpack.c.h.b16 %v1431
  %v4340 = vunpack.c.l.b16 %v1432
  %v4341 = vunpack.c.h.b16 %v1432
  %v4342 = vunpack.c.l.b16 %v1433
  %v4343 = vunpack.c.h.b16 %v1433
  %v4344 = vunpack.c.l.b16 %v1434
  %v4345 = vunpack.c.h.b16 %v1434
  %v4346 = vunpack.c.l.b16 %v1435
  %v4347 = vunpack.c.h.b16 %v1435
  %v4348 = vunpack.c.l.b16 %v1436
  %v4349 = vunpack.c.h.b16 %v1436
  %v4350 = vunpack.c.l.b16 %v1437
  %v4351 = vunpack.c.h.b16 %v1437
  %v4352 = vunpack.c.l.b16 %v1438
  %v4353 = vunpack.c.h.b16 %v1438
  %v4354 = vunpack.c.l.b16 %v1439
  %v4355 = vunpack.c.h.b16 %v1439
  %v4356 = vunpack.c.l.b16 %v1440
  %v4357 = vunpack.c.h.b16 %v1440
  %v4358 = vunpack.c.l.b16 %v1441
  %v4359 = vunpack.c.h.b16 %v1441
  %v4360 = vunpack.c.l.b16 %v1442
  %v4361 = vunpack.c.h.b16 %v1442
  %v4362 = vunpack.c.l.b16 %v1443
  %v4363 = vunpack.c.h.b16 %v1443
  %v4364 = vunpack.c.l.b16 %v1444
  %v4365 = vunpack.c.h.b16 %v1444
  %v4366 = vunpack.c.l.b16 %v1445
  %v4367 = vunpack.c.h.b16 %v1445
  %v4368 = vunpack.c.l.b16 %v1446
  %v4369 = vunpack.c.h.b16 %v1446
  %v4370 = vunpack.c.l.b16 %v1447
  %v4371 = vunpack.c.h.b16 %v1447
  %v4372 = vunpack.c.l.b16 %v1448
  %v4373 = vunpack.c.h.b16 %v1448
  %v4374 = vunpack.c.l.b16 %v1449
  %v4375 = vunpack.c.h.b16 %v1449
  %v4376 = vunpack.c.l.b16 %v1450
  %v4377 = vunpack.c.h.b16 %v1450
  %v4378 = vunpack.c.l.b16 %v1451
  %v4379 = vunpack.c.h.b16 %v1451
  %v4380 = vunpack.c.l.b16 %v1452
  %v4381 = vunpack.c.h.b16 %v1452
  %v4382 = vunpack.c.l.b16 %v1453
  %v4383 = vunpack.c.h.b16 %v1453
  %v4384 = vunpack.c.l.b16 %v1454
  %v4385 = vunpack.c.h.b16 %v1454
  %v4386 = vunpack.c.l.b16 %v1455
  %v4387 = vunpack.c.h.b16 %v1455
  %v4388 = vunpack.c.l.b16 %v1456
  %v4389 = vunpack.c.h.b16 %v1456
  %v4390 = vunpack.c.l.b16 %v1457
  %v4391 = vunpack.c.h.b16 %v1457
  %v4392 = vunpack.c.l.b16 %v1458
  %v4393 = vunpack.c.h.b16 %v1458
  %v4394 = vunpack.c.l.b16 %v1459
  %v4395 = vunpack.c.h.b16 %v1459
  %v4396 = vunpack.c.l.b16 %v1460
  %v4397 = vunpack.c.h.b16 %v1460
  %v4398 = vunpack.c.l.b16 %v1461
  %v4399 = vunpack.c.h.b16 %v1461
  %v4400 = vunpack.c.l.b16 %v1462
  %v4401 = vunpack.c.h.b16 %v1462
  %v4402 = vunpack.c.l.b16 %v1463
  %v4403 = vunpack.c.h.b16 %v1463
  %v4404 = vunpack.c.l.b16 %v1464
  %v4405 = vunpack.c.h.b16 %v1464
  %v4406 = vunpack.c.l.b16 %v1465
  %v4407 = vunpack.c.h.b16 %v1465
  %v4408 = vunpack.c.l.b16 %v1466
  %v4409 = vunpack.c.h.b16 %v1466
  %v4410 = vunpack.c.l.b16 %v1467
  %v4411 = vunpack.c.h.b16 %v1467
  %v4412 = vunpack.c.l.b16 %v1468
  %v4413 = vunpack.c.h.b16 %v1468
  %v4414 = vunpack.c.l.b16 %v1469
  %v4415 = vunpack.c.h.b16 %v1469
  %v4416 = vunpack.c.l.b16 %v1470
  %v4417 = vunpack.c.h.b16 %v1470
  %v4418 = vunpack.c.l.b16 %v1471
  %v4419 = vunpack.c.h.b16 %v1471
  %v4420 = vunpack.c.l.b16 %v1472
  %v4421 = vunpack.c.h.b16 %v1472
  %v4422 = vunpack.c.l.b16 %v1473
  %v4423 = vunpack.c.h.b16 %v1473
  %v4424 = vunpack.c.l.b16 %v1474
  %v4425 = vunpack.c.h.b16 %v1474
  %v4426 = vunpack.c.l.b16 %v1475
  %v4427 = vunpack.c.h.b16 %v1475
  %v4428 = vunpack.c.l.b16 %v1476
  %v4429 = vunpack.c.h.b16 %v1476
  %v4430 = vunpack.c.l.b16 %v1477
  %v4431 = vunpack.c.h.b16 %v1477
  %v4432 = vunpack.c.l.b16 %v1478
  %v4433 = vunpack.c.h.b16 %v1478
  %v4434 = vunpack.c.l.b16 %v1479
  %v4435 = vunpack.c.h.b16 %v1479
  %v4436 = vunpack.c.l.b16 %v1480
  %v4437 = vunpack.c.h.b16 %v1480
  %v4438 = vunpack.c.l.b16 %v1481
  %v4439 = vunpack.c.h.b16 %v1481
  %v4440 = vunpack.c.l.b16 %v1482
  %v4441 = vunpack.c.h.b16 %v1482
  %v4442 = vunpack.c.l.b16 %v1483
  %v4443 = vunpack.c.h.b16 %v1483
  %v4444 = vunpack.c.l.b16 %v1484
  %v4445 = vunpack.c.h.b16 %v1484
  %v4446 = vunpack.c.l.b16 %v1485
  %v4447 = vunpack.c.h.b16 %v1485
  %v4448 = vunpack.c.l.b16 %v1486
  %v4449 = vunpack.c.h.b16 %v1486
  %v4450 = vunpack.c.l.b16 %v1487
  %v4451 = vunpack.c.h.b16 %v1487
  %v4452 = vunpack.c.l.b16 %v1488
  %v4453 = vunpack.c.h.b16 %v1488
  %v4454 = vunpack.c.l.b16 %v1489
  %v4455 = vunpack.c.h.b16 %v1489
  %v4456 = vunpack.c.l.b16 %v1490
  %v4457 = vunpack.c.h.b16 %v1490
  %v4458 = vunpack.c.l.b16 %v1491
  %v4459 = vunpack.c.h.b16 %v1491
  %v4460 = vunpack.c.l.b16 %v1492
  %v4461 = vunpack.c.h.b16 %v1492
  %v4462 = vunpack.c.l.b16 %v1493
  %v4463 = vunpack.c.h.b16 %v1493
  %v4464 = vunpack.c.l.b16 %v1494
  %v4465 = vunpack.c.h.b16 %v1494
  %v4466 = vunpack.c.l.b16 %v1495
  %v4467 = vunpack.c.h.b16 %v1495
  %v4468 = vunpack.c.l.b16 %v1496
  %v4469 = vunpack.c.h.b16 %v1496
  %v4470 = vunpack.c.l.b16 %v1497
  %v4471 = vunpack.c.h.b16 %v1497
  %v4472 = vunpack.c.l.b16 %v1498
  %v4473 = vunpack.c.h.b16 %v1498
  %v4474 = vunpack.c.l.b16 %v1499
  %v4475 = vunpack.c.h.b16 %v1499
  %v4476 = vunpack.c.l.b16 %v1500
  %v4477 = vunpack.c.h.b16 %v1500
  %v4478 = vunpack.c.l.b16 %v1501
  %v4479 = vunpack.c.h.b16 %v1501
  %v4480 = vunpack.c.l.b16 %v1502
  %v4481 = vunpack.c.h.b16 %v1502
  %v4482 = vunpack.c.l.b16 %v1503
  %v4483 = vunpack.c.h.b16 %v1503
  %v4484 = vunpack.c.l.b16 %v1504
  %v4485 = vunpack.c.h.b16 %v1504
  %v4486 = vunpack.c.l.b16 %v1505
  %v4487 = vunpack.c.h.b16 %v1505
  %v4488 = vunpack.c.l.b16 %v1506
  %v4489 = vunpack.c.h.b16 %v1506
  %v4490 = vunpack.c.l.b16 %v1507
  %v4491 = vunpack.c.h.b16 %v1507
  %v4492 = vunpack.c.l.b16 %v1508
  %v4493 = vunpack.c.h.b16 %v1508
  %v4494 = vunpack.c.l.b16 %v1509
  %v4495 = vunpack.c.h.b16 %v1509
  %v4496 = vunpack.c.l.b16 %v1510
  %v4497 = vunpack.c.h.b16 %v1510
  %v4498 = vunpack.c.l.b16 %v1511
  %v4499 = vunpack.c.h.b16 %v1511
  %v4500 = vunpack.c.l.b16 %v1512
  %v4501 = vunpack.c.h.b16 %v1512
  %v4502 = vunpack.c.l.b16 %v1513
  %v4503 = vunpack.c.h.b16 %v1513
  %v4504 = vunpack.c.l.b16 %v1514
  %v4505 = vunpack.c.h.b16 %v1514
  %v4506 = vunpack.c.l.b16 %v1515
  %v4507 = vunpack.c.h.b16 %v1515
  %v4508 = vunpack.c.l.b16 %v1516
  %v4509 = vunpack.c.h.b16 %v1516
  %v4510 = vunpack.c.l.b16 %v1517
  %v4511 = vunpack.c.h.b16 %v1517
  %v4512 = vunpack.c.l.b16 %v1518
  %v4513 = vunpack.c.h.b16 %v1518
  %v4514 = vunpack.c.l.b16 %v1519
  %v4515 = vunpack.c.h.b16 %v1519
  %v4516 = vunpack.c.l.b16 %v1520
  %v4517 = vunpack.c.h.b16 %v1520
  %v4518 = vunpack.c.l.b16 %v1521
  %v4519 = vunpack.c.h.b16 %v1521
  %v4520 = vunpack.c.l.b16 %v1522
  %v4521 = vunpack.c.h.b16 %v1522
  %v4522 = vunpack.c.l.b16 %v1523
  %v4523 = vunpack.c.h.b16 %v1523
  %v4524 = vunpack.c.l.b16 %v1524
  %v4525 = vunpack.c.h.b16 %v1524
  %v4526 = vunpack.c.l.b16 %v1525
  %v4527 = vunpack.c.h.b16 %v1525
  %v4528 = vunpack.c.l.b16 %v1526
  %v4529 = vunpack.c.h.b16 %v1526
  %v4530 = vunpack.c.l.b16 %v1527
  %v4531 = vunpack.c.h.b16 %v1527
  %v4532 = vunpack.c.l.b16 %v1528
  %v4533 = vunpack.c.h.b16 %v1528
  %v4534 = vunpack.c.l.b16 %v1529
  %v4535 = vunpack.c.h.b16 %v1529
  %v4536 = vunpack.c.l.b16 %v1530
  %v4537 = vunpack.c.h.b16 %v1530
  %v4538 = vunpack.c.l.b16 %v1531
  %v4539 = vunpack.c.h.b16 %v1531
  %v4540 = vunpack.c.l.b16 %v1532
  %v4541 = vunpack.c.h.b16 %v1532
  %v4542 = vunpack.c.l.b16 %v1533
  %v4543 = vunpack.c.h.b16 %v1533
  %v4544 = vunpack.c.l.b16 %v1534
  %v4545 = vunpack.c.h.b16 %v1534
  %v4546 = vunpack.c.l.b16 %v1535
  %v4547 = vunpack.c.h.b16 %v1535
  %v4548 = vunpack.c.l.b16 %v1536
  %v4549 = vunpack.c.h.b16 %v1536
  %v4550 = vunpack.c.l.b16 %v1537
  %v4551 = vunpack.c.h.b16 %v1537
  %v4552 = vunpack.c.l.b16 %v1538
  %v4553 = vunpack.c.h.b16 %v1538
  %v4554 = vunpack.c.l.b16 %v1539
  %v4555 = vunpack.c.h.b16 %v1539
  %v4556 = vunpack.c.l.b16 %v1540
  %v4557 = vunpack.c.h.b16 %v1540
  %v4558 = vunpack.c.l.b16 %v1541
  %v4559 = vunpack.c.h.b16 %v1541
  %v4560 = vunpack.c.l.b16 %v1542
  %v4561 = vunpack.c.h.b16 %v1542
  %v4562 = vunpack.c.l.b16 %v1543
  %v4563 = vunpack.c.h.b16 %v1543
  %v4564 = vunpack.c.l.b16 %v1544
  %v4565 = vunpack.c.h.b16 %v1544
  %v4566 = vunpack.c.l.b16 %v1545
  %v4567 = vunpack.c.h.b16 %v1545
  %v4568 = vunpack.c.l.b16 %v1546
  %v4569 = vunpack.c.h.b16 %v1546
  %v4570 = vunpack.c.l.b16 %v1547
  %v4571 = vunpack.c.h.b16 %v1547
  %v4572 = vunpack.c.l.b16 %v1548
  %v4573 = vunpack.c.h.b16 %v1548
  %v4574 = vunpack.c.l.b16 %v1549
  %v4575 = vunpack.c.h.b16 %v1549
  %v4576 = vunpack.c.l.b16 %v1550
  %v4577 = vunpack.c.h.b16 %v1550
  %v4578 = vunpack.c.l.b16 %v1551
  %v4579 = vunpack.c.h.b16 %v1551
  %v4580 = vunpack.c.l.b16 %v1552
  %v4581 = vunpack.c.h.b16 %v1552
  %v4582 = vunpack.c.l.b16 %v1553
  %v4583 = vunpack.c.h.b16 %v1553
  %v4584 = vunpack.c.l.b16 %v1554
  %v4585 = vunpack.c.h.b16 %v1554
  %v4586 = vunpack.c.l.b16 %v1555
  %v4587 = vunpack.c.h.b16 %v1555
  %v4588 = vunpack.c.l.b16 %v1556
  %v4589 = vunpack.c.h.b16 %v1556
  %v4590 = vunpack.c.l.b16 %v1557
  %v4591 = vunpack.c.h.b16 %v1557
  %v4592 = vunpack.c.l.b16 %v1558
  %v4593 = vunpack.c.h.b16 %v1558
  %v4594 = vunpack.c.l.b16 %v1559
  %v4595 = vunpack.c.h.b16 %v1559
  %v4596 = vunpack.c.l.b16 %v1560
  %v4597 = vunpack.c.h.b16 %v1560
  %v4598 = vunpack.c.l.b16 %v1561
  %v4599 = vunpack.c.h.b16 %v1561
  %v4600 = vunpack.c.l.b16 %v1562
  %v4601 = vunpack.c.h.b16 %v1562
  %v4602 = vunpack.c.l.b16 %v1563
  %v4603 = vunpack.c.h.b16 %v1563
  %v4604 = vunpack.c.l.b16 %v1564
  %v4605 = vunpack.c.h.b16 %v1564
  %v4606 = vunpack.c.l.b16 %v1565
  %v4607 = vunpack.c.h.b16 %v1565
  %v4608 = vunpack.c.l.b16 %v1566
  %v4609 = vunpack.c.h.b16 %v1566
  %v4610 = vunpack.c.l.b16 %v1567
  %v4611 = vunpack.c.h.b16 %v1567
  %v4612 = vunpack.c.l.b16 %v1568
  %v4613 = vunpack.c.h.b16 %v1568
  %v4614 = vunpack.c.l.b16 %v1569
  %v4615 = vunpack.c.h.b16 %v1569
  %v4616 = vunpack.c.l.b16 %v1570
  %v4617 = vunpack.c.h.b16 %v1570
  %v4618 = vunpack.c.l.b16 %v1571
  %v4619 = vunpack.c.h.b16 %v1571
  %v4620 = vunpack.c.l.b16 %v1572
  %v4621 = vunpack.c.h.b16 %v1572
  %v4622 = vunpack.c.l.b16 %v1573
  %v4623 = vunpack.c.h.b16 %v1573
  %v4624 = vunpack.c.l.b16 %v1574
  %v4625 = vunpack.c.h.b16 %v1574
  %v4626 = vunpack.c.l.b16 %v1575
  %v4627 = vunpack.c.h.b16 %v1575
  %v4628 = vunpack.c.l.b16 %v1576
  %v4629 = vunpack.c.h.b16 %v1576
  %v4630 = vunpack.c.l.b16 %v1577
  %v4631 = vunpack.c.h.b16 %v1577
  %v4632 = vunpack.c.l.b16 %v1578
  %v4633 = vunpack.c.h.b16 %v1578
  %v4634 = vunpack.c.l.b16 %v1579
  %v4635 = vunpack.c.h.b16 %v1579
  %v4636 = vunpack.c.l.b16 %v1580
  %v4637 = vunpack.c.h.b16 %v1580
  %v4638 = vunpack.c.l.b16 %v1581
  %v4639 = vunpack.c.h.b16 %v1581
  %v4640 = vunpack.c.l.b16 %v1582
  %v4641 = vunpack.c.h.b16 %v1582
  %v4642 = vunpack.c.l.b16 %v1583
  %v4643 = vunpack.c.h.b16 %v1583
  %v4644 = vunpack.c.l.b16 %v1584
  %v4645 = vunpack.c.h.b16 %v1584
  %v4646 = vunpack.c.l.b16 %v1585
  %v4647 = vunpack.c.h.b16 %v1585
  %v4648 = vunpack.c.l.b16 %v1586
  %v4649 = vunpack.c.h.b16 %v1586
  %v4650 = vunpack.c.l.b16 %v1587
  %v4651 = vunpack.c.h.b16 %v1587
  %v4652 = vunpack.c.l.b16 %v1588
  %v4653 = vunpack.c.h.b16 %v1588
  %v4654 = vunpack.c.l.b16 %v1589
  %v4655 = vunpack.c.h.b16 %v1589
  %v4656 = vunpack.c.l.b16 %v1590
  %v4657 = vunpack.c.h.b16 %v1590
  %v4658 = vunpack.c.l.b16 %v1591
  %v4659 = vunpack.c.h.b16 %v1591
  %v4660 = vunpack.c.l.b16 %v1592
  %v4661 = vunpack.c.h.b16 %v1592
  %v4662 = vunpack.c.l.b16 %v1593
  %v4663 = vunpack.c.h.b16 %v1593
  %v4664 = vunpack.c.l.b16 %v1594
  %v4665 = vunpack.c.h.b16 %v1594
  %v4666 = vunpack.c.l.b16 %v1595
  %v4667 = vunpack.c.h.b16 %v1595
  %v4668 = vunpack.c.l.b16 %v1596
  %v4669 = vunpack.c.h.b16 %v1596
  %v4670 = vunpack.c.l.b16 %v1597
  %v4671 = vunpack.c.h.b16 %v1597
  %v4672 = vunpack.c.l.b16 %v1598
  %v4673 = vunpack.c.h.b16 %v1598
  %v4674 = vunpack.c.l.b16 %v1599
  %v4675 = vunpack.c.h.b16 %v1599
  %v4676 = vunpack.c.l.b16 %v1600
  %v4677 = vunpack.c.h.b16 %v1600
  %v4678 = vunpack.c.l.b16 %v1601
  %v4679 = vunpack.c.h.b16 %v1601
  %v4680 = vunpack.c.l.b16 %v1602
  %v4681 = vunpack.c.h.b16 %v1602
  %v4682 = vunpack.c.l.b16 %v1603
  %v4683 = vunpack.c.h.b16 %v1603
  %v4684 = vunpack.c.l.b16 %v1604
  %v4685 = vunpack.c.h.b16 %v1604
  %v4686 = vunpack.c.l.b16 %v1605
  %v4687 = vunpack.c.h.b16 %v1605
  %v4688 = vunpack.c.l.b16 %v1606
  %v4689 = vunpack.c.h.b16 %v1606
  %v4690 = vunpack.c.l.b16 %v1607
  %v4691 = vunpack.c.h.b16 %v1607
  %v4692 = vunpack.c.l.b16 %v1608
  %v4693 = vunpack.c.h.b16 %v1608
  %v4694 = vunpack.c.l.b16 %v1609
  %v4695 = vunpack.c.h.b16 %v1609
  %v4696 = vunpack.c.l.b16 %v1610
  %v4697 = vunpack.c.h.b16 %v1610
  %v4698 = vunpack.c.l.b16 %v1611
  %v4699 = vunpack.c.h.b16 %v1611
  %v4700 = vunpack.c.l.b16 %v1612
  %v4701 = vunpack.c.h.b16 %v1612
  %v4702 = vunpack.c.l.b16 %v1613
  %v4703 = vunpack.c.h.b16 %v1613
  %v4704 = vunpack.c.l.b16 %v1614
  %v4705 = vunpack.c.h.b16 %v1614
  %v4706 = vunpack.c.l.b16 %v1615
  %v4707 = vunpack.c.h.b16 %v1615
  %v4708 = vunpack.c.l.b16 %v1616
  %v4709 = vunpack.c.h.b16 %v1616
  %v4710 = vunpack.c.l.b16 %v1617
  %v4711 = vunpack.c.h.b16 %v1617
  %v4712 = vunpack.c.l.b16 %v1618
  %v4713 = vunpack.c.h.b16 %v1618
  %v4714 = vunpack.c.l.b16 %v1619
  %v4715 = vunpack.c.h.b16 %v1619
  %v4716 = vunpack.c.l.b16 %v1620
  %v4717 = vunpack.c.h.b16 %v1620
  %v4718 = vunpack.c.l.b16 %v1621
  %v4719 = vunpack.c.h.b16 %v1621
  %v4720 = vunpack.c.l.b16 %v1622
  %v4721 = vunpack.c.h.b16 %v1622
  %v4722 = vunpack.c.l.b16 %v1623
  %v4723 = vunpack.c.h.b16 %v1623
  %v4724 = vunpack.c.l.b16 %v1624
  %v4725 = vunpack.c.h.b16 %v1624
  %v4726 = vunpack.c.l.b16 %v1625
  %v4727 = vunpack.c.h.b16 %v1625
  %v4728 = vunpack.c.l.b16 %v1626
  %v4729 = vunpack.c.h.b16 %v1626
  %v4730 = vunpack.c.l.b16 %v1627
  %v4731 = vunpack.c.h.b16 %v1627
  %v4732 = vunpack.c.l.b16 %v1628
  %v4733 = vunpack.c.h.b16 %v1628
  %v4734 = vunpack.c.l.b16 %v1629
  %v4735 = vunpack.c.h.b16 %v1629
  %v4736 = vunpack.c.l.b16 %v1630
  %v4737 = vunpack.c.h.b16 %v1630
  %v4738 = vunpack.c.l.b16 %v1631
  %v4739 = vunpack.c.h.b16 %v1631
  %v4740 = vunpack.c.l.b16 %v1632
  %v4741 = vunpack.c.h.b16 %v1632
  %v4742 = vunpack.c.l.b16 %v1633
  %v4743 = vunpack.c.h.b16 %v1633
  %v4744 = vunpack.c.l.b16 %v1634
  %v4745 = vunpack.c.h.b16 %v1634
  %v4746 = vunpack.c.l.b16 %v1635
  %v4747 = vunpack.c.h.b16 %v1635
  %v4748 = vunpack.c.l.b16 %v1636
  %v4749 = vunpack.c.h.b16 %v1636
  %v4750 = vunpack.c.l.b16 %v1637
  %v4751 = vunpack.c.h.b16 %v1637
  %v4752 = vpack.c.b16 %v2712, %v2704
  %v4753 = vpack.c.b16 %v2713, %v2705
  %v4754 = vpack.c.b16 %v2714, %v2706
  %v4755 = vpack.c.b16 %v2715, %v2707
  %v4756 = vpack.c.b16 %v2716, %v2708
  %v4757 = vpack.c.b16 %v2717, %v2709
  %v4758 = vpack.c.b16 %v2718, %v2710
  %v4759 = vpack.c.b16 %v2719, %v2711
  %v4760 = vpack.c.b16 %v2728, %v2720
  %v4761 = vpack.c.b16 %v2729, %v2721
  %v4762 = vpack.c.b16 %v2730, %v2722
  %v4763 = vpack.c.b16 %v2731, %v2723
  %v4764 = vpack.c.b16 %v2732, %v2724
  %v4765 = vpack.c.b16 %v2733, %v2725
  %v4766 = vpack.c.b16 %v2734, %v2726
  %v4767 = vpack.c.b16 %v2735, %v2727
  %v4768 = vpack.c.b16 %v2744, %v2736
  %v4769 = vpack.c.b16 %v2745, %v2737
  %v4770 = vpack.c.b16 %v2746, %v2738
  %v4771 = vpack.c.b16 %v2747, %v2739
  %v4772 = vpack.c.b16 %v2748, %v2740
  %v4773 = vpack.c.b16 %v2749, %v2741
  %v4774 = vpack.c.b16 %v2750, %v2742
  %v4775 = vpack.c.b16 %v2751, %v2743
  %v4776 = vpack.c.b16 %v2760, %v2752
  %v4777 = vpack.c.b16 %v2761, %v2753
  %v4778 = vpack.c.b16 %v2762, %v2754
  %v4779 = vpack.c.b16 %v2763, %v2755
  %v4780 = vpack.c.b16 %v2764, %v2756
  %v4781 = vpack.c.b16 %v2765, %v2757
  %v4782 = vpack.c.b16 %v2766, %v2758
  %v4783 = vpack.c.b16 %v2767, %v2759
  %v4784 = vpack.c.b16 %v2776, %v2768
  %v4785 = vpack.c.b16 %v2777, %v2769
  %v4786 = vpack.c.b16 %v2778, %v2770
  %v4787 = vpack.c.b16 %v2779, %v2771
  %v4788 = vpack.c.b16 %v2780, %v2772
  %v4789 = vpack.c.b16 %v2781, %v2773
  %v4790 = vpack.c.b16 %v2782, %v2774
  %v4791 = vpack.c.b16 %v2783, %v2775
  %v4792 = vpack.c.b16 %v2792, %v2784
  %v4793 = vpack.c.b16 %v2793, %v2785
  %v4794 = vpack.c.b16 %v2794, %v2786
  %v4795 = vpack.c.b16 %v2795, %v2787
  %v4796 = vpack.c.b16 %v2796, %v2788
  %v4797 = vpack.c.b16 %v2797, %v2789
  %v4798 = vpack.c.b16 %v2798, %v2790
  %v4799 = vpack.c.b16 %v2799, %v2791
  %v4800 = vpack.c.b16 %v2808, %v2800
  %v4801 = vpack.c.b16 %v2809, %v2801
  %v4802 = vpack.c.b16 %v2810, %v2802
  %v4803 = vpack.c.b16 %v2811, %v2803
  %v4804 = vpack.c.b16 %v2812, %v2804
  %v4805 = vpack.c.b16 %v2813, %v2805
  %v4806 = vpack.c.b16 %v2814, %v2806
  %v4807 = vpack.c.b16 %v2815, %v2807
  %v4808 = vpack.c.b16 %v2824, %v2816
  %v4809 = vpack.c.b16 %v2825, %v2817
  %v4810 = vpack.c.b16 %v2826, %v2818
  %v4811 = vpack.c.b16 %v2827, %v2819
  %v4812 = vpack.c.b16 %v2828, %v2820
  %v4813 = vpack.c.b16 %v2829, %v2821
  %v4814 = vpack.c.b16 %v2830, %v2822
  %v4815 = vpack.c.b16 %v2831, %v2823
  %v4816 = vpack.c.b16 %v2840, %v2832
  %v4817 = vpack.c.b16 %v2841, %v2833
  %v4818 = vpack.c.b16 %v2842, %v2834
  %v4819 = vpack.c.b16 %v2843, %v2835
  %v4820 = vpack.c.b16 %v2844, %v2836
  %v4821 = vpack.c.b16 %v2845, %v2837
  %v4822 = vpack.c.b16 %v2846, %v2838
  %v4823 = vpack.c.b16 %v2847, %v2839
  %v4824 = vpack.c.b16 %v2856, %v2848
  %v4825 = vpack.c.b16 %v2857, %v2849
  %v4826 = vpack.c.b16 %v2858, %v2850
  %v4827 = vpack.c.b16 %v2859, %v2851
  %v4828 = vpack.c.b16 %v2860, %v2852
  %v4829 = vpack.c.b16 %v2861, %v2853
  %v4830 = vpack.c.b16 %v2862, %v2854
  %v4831 = vpack.c.b16 %v2863, %v2855
  %v4832 = vpack.c.b16 %v2872, %v2864
  %v4833 = vpack.c.b16 %v2873, %v2865
  %v4834 = vpack.c.b16 %v2874, %v2866
  %v4835 = vpack.c.b16 %v2875, %v2867
  %v4836 = vpack.c.b16 %v2876, %v2868
  %v4837 = vpack.c.b16 %v2877, %v2869
  %v4838 = vpack.c.b16 %v2878, %v2870
  %v4839 = vpack.c.b16 %v2879, %v2871
  %v4840 = vpack.c.b16 %v2888, %v2880
  %v4841 = vpack.c.b16 %v2889, %v2881
  %v4842 = vpack.c.b16 %v2890, %v2882
  %v4843 = vpack.c.b16 %v2891, %v2883
  %v4844 = vpack.c.b16 %v2892, %v2884
  %v4845 = vpack.c.b16 %v2893, %v2885
  %v4846 = vpack.c.b16 %v2894, %v2886
  %v4847 = vpack.c.b16 %v2895, %v2887
  %v4848 = vpack.c.b16 %v2904, %v2896
  %v4849 = vpack.c.b16 %v2905, %v2897
  %v4850 = vpack.c.b16 %v2906, %v2898
  %v4851 = vpack.c.b16 %v2907, %v2899
  %v4852 = vpack.c.b16 %v2908, %v2900
  %v4853 = vpack.c.b16 %v2909, %v2901
  %v4854 = vpack.c.b16 %v2910, %v2902
  %v4855 = vpack.c.b16 %v2911, %v2903
  %v4856 = vpack.c.b16 %v2920, %v2912
  %v4857 = vpack.c.b16 %v2921, %v2913
  %v4858 = vpack.c.b16 %v2922, %v2914
  %v4859 = vpack.c.b16 %v2923, %v2915
  %v4860 = vpack.c.b16 %v2924, %v2916
  %v4861 = vpack.c.b16 %v2925, %v2917
  %v4862 = vpack.c.b16 %v2926, %v2918
  %v4863 = vpack.c.b16 %v2927, %v2919
  %v4864 = vpack.c.b16 %v2936, %v2928
  %v4865 = vpack.c.b16 %v2937, %v2929
  %v4866 = vpack.c.b16 %v2938, %v2930
  %v4867 = vpack.c.b16 %v2939, %v2931
  %v4868 = vpack.c.b16 %v2940, %v2932
  %v4869 = vpack.c.b16 %v2941, %v2933
  %v4870 = vpack.c.b16 %v2942, %v2934
  %v4871 = vpack.c.b16 %v2943, %v2935
  %v4872 = vpack.c.b16 %v2952, %v2944
  %v4873 = vpack.c.b16 %v2953, %v2945
  %v4874 = vpack.c.b16 %v2954, %v2946
  %v4875 = vpack.c.b16 %v2955, %v2947
  %v4876 = vpack.c.b16 %v2956, %v2948
  %v4877 = vpack.c.b16 %v2957, %v2949
  %v4878 = vpack.c.b16 %v2958, %v2950
  %v4879 = vpack.c.b16 %v2959, %v2951
  %v4880 = vpack.c.b16 %v2968, %v2960
  %v4881 = vpack.c.b16 %v2969, %v2961
  %v4882 = vpack.c.b16 %v2970, %v2962
  %v4883 = vpack.c.b16 %v2971, %v2963
  %v4884 = vpack.c.b16 %v2972, %v2964
  %v4885 = vpack.c.b16 %v2973, %v2965
  %v4886 = vpack.c.b16 %v2974, %v2966
  %v4887 = vpack.c.b16 %v2975, %v2967
  %v4888 = vpack.c.b16 %v2984, %v2976
  %v4889 = vpack.c.b16 %v2985, %v2977
  %v4890 = vpack.c.b16 %v2986, %v2978
  %v4891 = vpack.c.b16 %v2987, %v2979
  %v4892 = vpack.c.b16 %v2988, %v2980
  %v4893 = vpack.c.b16 %v2989, %v2981
  %v4894 = vpack.c.b16 %v2990, %v2982
  %v4895 = vpack.c.b16 %v2991, %v2983
  %v4896 = vpack.c.b16 %v3000, %v2992
  %v4897 = vpack.c.b16 %v3001, %v2993
  %v4898 = vpack.c.b16 %v3002, %v2994
  %v4899 = vpack.c.b16 %v3003, %v2995
  %v4900 = vpack.c.b16 %v3004, %v2996
  %v4901 = vpack.c.b16 %v3005, %v2997
  %v4902 = vpack.c.b16 %v3006, %v2998
  %v4903 = vpack.c.b16 %v3007, %v2999
  %v4904 = vpack.c.b16 %v3016, %v3008
  %v4905 = vpack.c.b16 %v3017, %v3009
  %v4906 = vpack.c.b16 %v3018, %v3010
  %v4907 = vpack.c.b16 %v3019, %v3011
  %v4908 = vpack.c.b16 %v3020, %v3012
  %v4909 = vpack.c.b16 %v3021, %v3013
  %v4910 = vpack.c.b16 %v3022, %v3014
  %v4911 = vpack.c.b16 %v3023, %v3015
  %v4912 = vpack.c.b16 %v3032, %v3024
  %v4913 = vpack.c.b16 %v3033, %v3025
  %v4914 = vpack.c.b16 %v3034, %v3026
  %v4915 = vpack.c.b16 %v3035, %v3027
  %v4916 = vpack.c.b16 %v3036, %v3028
  %v4917 = vpack.c.b16 %v3037, %v3029
  %v4918 = vpack.c.b16 %v3038, %v3030
  %v4919 = vpack.c.b16 %v3039, %v3031
  %v4920 = vpack.c.b16 %v3048, %v3040
  %v4921 = vpack.c.b16 %v3049, %v3041
  %v4922 = vpack.c.b16 %v3050, %v3042
  %v4923 = vpack.c.b16 %v3051, %v3043
  %v4924 = vpack.c.b16 %v3052, %v3044
  %v4925 = vpack.c.b16 %v3053, %v3045
  %v4926 = vpack.c.b16 %v3054, %v3046
  %v4927 = vpack.c.b16 %v3055, %v3047
  %v4928 = vpack.c.b16 %v3064, %v3056
  %v4929 = vpack.c.b16 %v3065, %v3057
  %v4930 = vpack.c.b16 %v3066, %v3058
  %v4931 = vpack.c.b16 %v3067, %v3059
  %v4932 = vpack.c.b16 %v3068, %v3060
  %v4933 = vpack.c.b16 %v3069, %v3061
  %v4934 = vpack.c.b16 %v3070, %v3062
  %v4935 = vpack.c.b16 %v3071, %v3063
  %v4936 = vpack.c.b16 %v3080, %v3072
  %v4937 = vpack.c.b16 %v3081, %v3073
  %v4938 = vpack.c.b16 %v3082, %v3074
  %v4939 = vpack.c.b16 %v3083, %v3075
  %v4940 = vpack.c.b16 %v3084, %v3076
  %v4941 = vpack.c.b16 %v3085, %v3077
  %v4942 = vpack.c.b16 %v3086, %v3078
  %v4943 = vpack.c.b16 %v3087, %v3079
  %v4944 = vpack.c.b16 %v3096, %v3088
  %v4945 = vpack.c.b16 %v3097, %v3089
  %v4946 = vpack.c.b16 %v3098, %v3090
  %v4947 = vpack.c.b16 %v3099, %v3091
  %v4948 = vpack.c.b16 %v3100, %v3092
  %v4949 = vpack.c.b16 %v3101, %v3093
  %v4950 = vpack.c.b16 %v3102, %v3094
  %v4951 = vpack.c.b16 %v3103, %v3095
  %v4952 = vpack.c.b16 %v3112, %v3104
  %v4953 = vpack.c.b16 %v3113, %v3105
  %v4954 = vpack.c.b16 %v3114, %v3106
  %v4955 = vpack.c.b16 %v3115, %v3107
  %v4956 = vpack.c.b16 %v3116, %v3108
  %v4957 = vpack.c.b16 %v3117, %v3109
  %v4958 = vpack.c.b16 %v3118, %v3110
  %v4959 = vpack.c.b16 %v3119, %v3111
  %v4960 = vpack.c.b16 %v3128, %v3120
  %v4961 = vpack.c.b16 %v3129, %v3121
  %v4962 = vpack.c.b16 %v3130, %v3122
  %v4963 = vpack.c.b16 %v3131, %v3123
  %v4964 = vpack.c.b16 %v3132, %v3124
  %v4965 = vpack.c.b16 %v3133, %v3125
  %v4966 = vpack.c.b16 %v3134, %v3126
  %v4967 = vpack.c.b16 %v3135, %v3127
  %v4968 = vpack.c.b16 %v3144, %v3136
  %v4969 = vpack.c.b16 %v3145, %v3137
  %v4970 = vpack.c.b16 %v3146, %v3138
  %v4971 = vpack.c.b16 %v3147, %v3139
  %v4972 = vpack.c.b16 %v3148, %v3140
  %v4973 = vpack.c.b16 %v3149, %v3141
  %v4974 = vpack.c.b16 %v3150, %v3142
  %v4975 = vpack.c.b16 %v3151, %v3143
  %v4976 = vpack.c.b16 %v3160, %v3152
  %v4977 = vpack.c.b16 %v3161, %v3153
  %v4978 = vpack.c.b16 %v3162, %v3154
  %v4979 = vpack.c.b16 %v3163, %v3155
  %v4980 = vpack.c.b16 %v3164, %v3156
  %v4981 = vpack.c.b16 %v3165, %v3157
  %v4982 = vpack.c.b16 %v3166, %v3158
  %v4983 = vpack.c.b16 %v3167, %v3159
  %v4984 = vpack.c.b16 %v3176, %v3168
  %v4985 = vpack.c.b16 %v3177, %v3169
  %v4986 = vpack.c.b16 %v3178, %v3170
  %v4987 = vpack.c.b16 %v3179, %v3171
  %v4988 = vpack.c.b16 %v3180, %v3172
  %v4989 = vpack.c.b16 %v3181, %v3173
  %v4990 = vpack.c.b16 %v3182, %v3174
  %v4991 = vpack.c.b16 %v3183, %v3175
  %v4992 = vpack.c.b16 %v3192, %v3184
  %v4993 = vpack.c.b16 %v3193, %v3185
  %v4994 = vpack.c.b16 %v3194, %v3186
  %v4995 = vpack.c.b16 %v3195, %v3187
  %v4996 = vpack.c.b16 %v3196, %v3188
  %v4997 = vpack.c.b16 %v3197, %v3189
  %v4998 = vpack.c.b16 %v3198, %v3190
  %v4999 = vpack.c.b16 %v3199, %v3191
  %v5000 = vpack.c.b16 %v3208, %v3200
  %v5001 = vpack.c.b16 %v3209, %v3201
  %v5002 = vpack.c.b16 %v3210, %v3202
  %v5003 = vpack.c.b16 %v3211, %v3203
  %v5004 = vpack.c.b16 %v3212, %v3204
  %v5005 = vpack.c.b16 %v3213, %v3205
  %v5006 = vpack.c.b16 %v3214, %v3206
  %v5007 = vpack.c.b16 %v3215, %v3207
  %v5008 = vpack.c.b16 %v3224, %v3216
  %v5009 = vpack.c.b16 %v3225, %v3217
  %v5010 = vpack.c.b16 %v3226, %v3218
  %v5011 = vpack.c.b16 %v3227, %v3219
  %v5012 = vpack.c.b16 %v3228, %v3220
  %v5013 = vpack.c.b16 %v3229, %v3221
  %v5014 = vpack.c.b16 %v3230, %v3222
  %v5015 = vpack.c.b16 %v3231, %v3223
  %v5016 = vpack.c.b16 %v3240, %v3232
  %v5017 = vpack.c.b16 %v3241, %v3233
  %v5018 = vpack.c.b16 %v3242, %v3234
  %v5019 = vpack.c.b16 %v3243, %v3235
  %v5020 = vpack.c.b16 %v3244, %v3236
  %v5021 = vpack.c.b16 %v3245, %v3237
  %v5022 = vpack.c.b16 %v3246, %v3238
  %v5023 = vpack.c.b16 %v3247, %v3239
  %v5024 = vpack.c.b16 %v3256, %v3248
  %v5025 = vpack.c.b16 %v3257, %v3249
  %v5026 = vpack.c.b16 %v3258, %v3250
  %v5027 = vpack.c.b16 %v3259, %v3251
  %v5028 = vpack.c.b16 %v3260, %v3252
  %v5029 = vpack.c.b16 %v3261, %v3253
  %v5030 = vpack.c.b16 %v3262, %v3254
  %v5031 = vpack.c.b16 %v3263, %v3255
  %v5032 = vpack.c.b16 %v3272, %v3264
  %v5033 = vpack.c.b16 %v3273, %v3265
  %v5034 = vpack.c.b16 %v3274, %v3266
  %v5035 = vpack.c.b16 %v3275, %v3267
  %v5036 = vpack.c.b16 %v3276, %v3268
  %v5037 = vpack.c.b16 %v3277, %v3269
  %v5038 = vpack.c.b16 %v3278, %v3270
  %v5039 = vpack.c.b16 %v3279, %v3271
  %v5040 = vpack.c.b16 %v3288, %v3280
  %v5041 = vpack.c.b16 %v3289, %v3281
  %v5042 = vpack.c.b16 %v3290, %v3282
  %v5043 = vpack.c.b16 %v3291, %v3283
  %v5044 = vpack.c.b16 %v3292, %v3284
  %v5045 = vpack.c.b16 %v3293, %v3285
  %v5046 = vpack.c.b16 %v3294, %v3286
  %v5047 = vpack.c.b16 %v3295, %v3287
  %v5048 = vpack.c.b16 %v3304, %v3296
  %v5049 = vpack.c.b16 %v3305, %v3297
  %v5050 = vpack.c.b16 %v3306, %v3298
  %v5051 = vpack.c.b16 %v3307, %v3299
  %v5052 = vpack.c.b16 %v3308, %v3300
  %v5053 = vpack.c.b16 %v3309, %v3301
  %v5054 = vpack.c.b16 %v3310, %v3302
  %v5055 = vpack.c.b16 %v3311, %v3303
  %v5056 = vpack.c.b16 %v3320, %v3312
  %v5057 = vpack.c.b16 %v3321, %v3313
  %v5058 = vpack.c.b16 %v3322, %v3314
  %v5059 = vpack.c.b16 %v3323, %v3315
  %v5060 = vpack.c.b16 %v3324, %v3316
  %v5061 = vpack.c.b16 %v3325, %v3317
  %v5062 = vpack.c.b16 %v3326, %v3318
  %v5063 = vpack.c.b16 %v3327, %v3319
  %v5064 = vpack.c.b16 %v3336, %v3328
  %v5065 = vpack.c.b16 %v3337, %v3329
  %v5066 = vpack.c.b16 %v3338, %v3330
  %v5067 = vpack.c.b16 %v3339, %v3331
  %v5068 = vpack.c.b16 %v3340, %v3332
  %v5069 = vpack.c.b16 %v3341, %v3333
  %v5070 = vpack.c.b16 %v3342, %v3334
  %v5071 = vpack.c.b16 %v3343, %v3335
  %v5072 = vpack.c.b16 %v3352, %v3344
  %v5073 = vpack.c.b16 %v3353, %v3345
  %v5074 = vpack.c.b16 %v3354, %v3346
  %v5075 = vpack.c.b16 %v3355, %v3347
  %v5076 = vpack.c.b16 %v3356, %v3348
  %v5077 = vpack.c.b16 %v3357, %v3349
  %v5078 = vpack.c.b16 %v3358, %v3350
  %v5079 = vpack.c.b16 %v3359, %v3351
  %v5080 = vpack.c.b16 %v3368, %v3360
  %v5081 = vpack.c.b16 %v3369, %v3361
  %v5082 = vpack.c.b16 %v3370, %v3362
  %v5083 = vpack.c.b16 %v3371, %v3363
  %v5084 = vpack.c.b16 %v3372, %v3364
  %v5085 = vpack.c.b16 %v3373, %v3365
  %v5086 = vpack.c.b16 %v3374, %v3366
  %v5087 = vpack.c.b16 %v3375, %v3367
  %v5088 = vpack.c.b16 %v3384, %v3376
  %v5089 = vpack.c.b16 %v3385, %v3377
  %v5090 = vpack.c.b16 %v3386, %v3378
  %v5091 = vpack.c.b16 %v3387, %v3379
  %v5092 = vpack.c.b16 %v3388, %v3380
  %v5093 = vpack.c.b16 %v3389, %v3381
  %v5094 = vpack.c.b16 %v3390, %v3382
  %v5095 = vpack.c.b16 %v3391, %v3383
  %v5096 = vpack.c.b16 %v3400, %v3392
  %v5097 = vpack.c.b16 %v3401, %v3393
  %v5098 = vpack.c.b16 %v3402, %v3394
  %v5099 = vpack.c.b16 %v3403, %v3395
  %v5100 = vpack.c.b16 %v3404, %v3396
  %v5101 = vpack.c.b16 %v3405, %v3397
  %v5102 = vpack.c.b16 %v3406, %v3398
  %v5103 = vpack.c.b16 %v3407, %v3399
  %v5104 = vpack.c.b16 %v3416, %v3408
  %v5105 = vpack.c.b16 %v3417, %v3409
  %v5106 = vpack.c.b16 %v3418, %v3410
  %v5107 = vpack.c.b16 %v3419, %v3411
  %v5108 = vpack.c.b16 %v3420, %v3412
  %v5109 = vpack.c.b16 %v3421, %v3413
  %v5110 = vpack.c.b16 %v3422, %v3414
  %v5111 = vpack.c.b16 %v3423, %v3415
  %v5112 = vpack.c.b16 %v3432, %v3424
  %v5113 = vpack.c.b16 %v3433, %v3425
  %v5114 = vpack.c.b16 %v3434, %v3426
  %v5115 = vpack.c.b16 %v3435, %v3427
  %v5116 = vpack.c.b16 %v3436, %v3428
  %v5117 = vpack.c.b16 %v3437, %v3429
  %v5118 = vpack.c.b16 %v3438, %v3430
  %v5119 = vpack.c.b16 %v3439, %v3431
  %v5120 = vpack.c.b16 %v3448, %v3440
  %v5121 = vpack.c.b16 %v3449, %v3441
  %v5122 = vpack.c.b16 %v3450, %v3442
  %v5123 = vpack.c.b16 %v3451, %v3443
  %v5124 = vpack.c.b16 %v3452, %v3444
  %v5125 = vpack.c.b16 %v3453, %v3445
  %v5126 = vpack.c.b16 %v3454, %v3446
  %v5127 = vpack.c.b16 %v3455, %v3447
  %v5128 = vpack.c.b16 %v3464, %v3456
  %v5129 = vpack.c.b16 %v3465, %v3457
  %v5130 = vpack.c.b16 %v3466, %v3458
  %v5131 = vpack.c.b16 %v3467, %v3459
  %v5132 = vpack.c.b16 %v3468, %v3460
  %v5133 = vpack.c.b16 %v3469, %v3461
  %v5134 = vpack.c.b16 %v3470, %v3462
  %v5135 = vpack.c.b16 %v3471, %v3463
  %v5136 = vpack.c.b16 %v3480, %v3472
  %v5137 = vpack.c.b16 %v3481, %v3473
  %v5138 = vpack.c.b16 %v3482, %v3474
  %v5139 = vpack.c.b16 %v3483, %v3475
  %v5140 = vpack.c.b16 %v3484, %v3476
  %v5141 = vpack.c.b16 %v3485, %v3477
  %v5142 = vpack.c.b16 %v3486, %v3478
  %v5143 = vpack.c.b16 %v3487, %v3479
  %v5144 = vpack.c.b16 %v3496, %v3488
  %v5145 = vpack.c.b16 %v3497, %v3489
  %v5146 = vpack.c.b16 %v3498, %v3490
  %v5147 = vpack.c.b16 %v3499, %v3491
  %v5148 = vpack.c.b16 %v3500, %v3492
  %v5149 = vpack.c.b16 %v3501, %v3493
  %v5150 = vpack.c.b16 %v3502, %v3494
  %v5151 = vpack.c.b16 %v3503, %v3495
  %v5152 = vpack.c.b16 %v3512, %v3504
  %v5153 = vpack.c.b16 %v3513, %v3505
  %v5154 = vpack.c.b16 %v3514, %v3506
  %v5155 = vpack.c.b16 %v3515, %v3507
  %v5156 = vpack.c.b16 %v3516, %v3508
  %v5157 = vpack.c.b16 %v3517, %v3509
  %v5158 = vpack.c.b16 %v3518, %v3510
  %v5159 = vpack.c.b16 %v3519, %v3511
  %v5160 = vpack.c.b16 %v3528, %v3520
  %v5161 = vpack.c.b16 %v3529, %v3521
  %v5162 = vpack.c.b16 %v3530, %v3522
  %v5163 = vpack.c.b16 %v3531, %v3523
  %v5164 = vpack.c.b16 %v3532, %v3524
  %v5165 = vpack.c.b16 %v3533, %v3525
  %v5166 = vpack.c.b16 %v3534, %v3526
  %v5167 = vpack.c.b16 %v3535, %v3527
  %v5168 = vpack.c.b16 %v3544, %v3536
  %v5169 = vpack.c.b16 %v3545, %v3537
  %v5170 = vpack.c.b16 %v3546, %v3538
  %v5171 = vpack.c.b16 %v3547, %v3539
  %v5172 = vpack.c.b16 %v3548, %v3540
  %v5173 = vpack.c.b16 %v3549, %v3541
  %v5174 = vpack.c.b16 %v3550, %v3542
  %v5175 = vpack.c.b16 %v3551, %v3543
  %v5176 = vpack.c.b16 %v3560, %v3552
  %v5177 = vpack.c.b16 %v3561, %v3553
  %v5178 = vpack.c.b16 %v3562, %v3554
  %v5179 = vpack.c.b16 %v3563, %v3555
  %v5180 = vpack.c.b16 %v3564, %v3556
  %v5181 = vpack.c.b16 %v3565, %v3557
  %v5182 = vpack.c.b16 %v3566, %v3558
  %v5183 = vpack.c.b16 %v3567, %v3559
  %v5184 = vpack.c.b16 %v3576, %v3568
  %v5185 = vpack.c.b16 %v3577, %v3569
  %v5186 = vpack.c.b16 %v3578, %v3570
  %v5187 = vpack.c.b16 %v3579, %v3571
  %v5188 = vpack.c.b16 %v3580, %v3572
  %v5189 = vpack.c.b16 %v3581, %v3573
  %v5190 = vpack.c.b16 %v3582, %v3574
  %v5191 = vpack.c.b16 %v3583, %v3575
  %v5192 = vpack.c.b16 %v3592, %v3584
  %v5193 = vpack.c.b16 %v3593, %v3585
  %v5194 = vpack.c.b16 %v3594, %v3586
  %v5195 = vpack.c.b16 %v3595, %v3587
  %v5196 = vpack.c.b16 %v3596, %v3588
  %v5197 = vpack.c.b16 %v3597, %v3589
  %v5198 = vpack.c.b16 %v3598, %v3590
  %v5199 = vpack.c.b16 %v3599, %v3591
  %v5200 = vpack.c.b16 %v3608, %v3600
  %v5201 = vpack.c.b16 %v3609, %v3601
  %v5202 = vpack.c.b16 %v3610, %v3602
  %v5203 = vpack.c.b16 %v3611, %v3603
  %v5204 = vpack.c.b16 %v3612, %v3604
  %v5205 = vpack.c.b16 %v3613, %v3605
  %v5206 = vpack.c.b16 %v3614, %v3606
  %v5207 = vpack.c.b16 %v3615, %v3607
  %v5208 = vpack.c.b16 %v3624, %v3616
  %v5209 = vpack.c.b16 %v3625, %v3617
  %v5210 = vpack.c.b16 %v3626, %v3618
  %v5211 = vpack.c.b16 %v3627, %v3619
  %v5212 = vpack.c.b16 %v3628, %v3620
  %v5213 = vpack.c.b16 %v3629, %v3621
  %v5214 = vpack.c.b16 %v3630, %v3622
  %v5215 = vpack.c.b16 %v3631, %v3623
  %v5216 = vpack.c.b16 %v3640, %v3632
  %v5217 = vpack.c.b16 %v3641, %v3633
  %v5218 = vpack.c.b16 %v3642, %v3634
  %v5219 = vpack.c.b16 %v3643, %v3635
  %v5220 = vpack.c.b16 %v3644, %v3636
  %v5221 = vpack.c.b16 %v3645, %v3637
  %v5222 = vpack.c.b16 %v3646, %v3638
  %v5223 = vpack.c.b16 %v3647, %v3639
  %v5224 = vpack.c.b16 %v3656, %v3648
  %v5225 = vpack.c.b16 %v3657, %v3649
  %v5226 = vpack.c.b16 %v3658, %v3650
  %v5227 = vpack.c.b16 %v3659, %v3651
  %v5228 = vpack.c.b16 %v3660, %v3652
  %v5229 = vpack.c.b16 %v3661, %v3653
  %v5230 = vpack.c.b16 %v3662, %v3654
  %v5231 = vpack.c.b16 %v3663, %v3655
  %v5232 = vpack.c.b16 %v3672, %v3664
  %v5233 = vpack.c.b16 %v3673, %v3665
  %v5234 = vpack.c.b16 %v3674, %v3666
  %v5235 = vpack.c.b16 %v3675, %v3667
  %v5236 = vpack.c.b16 %v3676, %v3668
  %v5237 = vpack.c.b16 %v3677, %v3669
  %v5238 = vpack.c.b16 %v3678, %v3670
  %v5239 = vpack.c.b16 %v3679, %v3671
  %v5240 = vpack.c.b16 %v3688, %v3680
  %v5241 = vpack.c.b16 %v3689, %v3681
  %v5242 = vpack.c.b16 %v3690, %v3682
  %v5243 = vpack.c.b16 %v3691, %v3683
  %v5244 = vpack.c.b16 %v3692, %v3684
  %v5245 = vpack.c.b16 %v3693, %v3685
  %v5246 = vpack.c.b16 %v3694, %v3686
  %v5247 = vpack.c.b16 %v3695, %v3687
  %v5248 = vpack.c.b16 %v3704, %v3696
  %v5249 = vpack.c.b16 %v3705, %v3697
  %v5250 = vpack.c.b16 %v3706, %v3698
  %v5251 = vpack.c.b16 %v3707, %v3699
  %v5252 = vpack.c.b16 %v3708, %v3700
  %v5253 = vpack.c.b16 %v3709, %v3701
  %v5254 = vpack.c.b16 %v3710, %v3702
  %v5255 = vpack.c.b16 %v3711, %v3703
  %v5256 = vpack.c.b16 %v3720, %v3712
  %v5257 = vpack.c.b16 %v3721, %v3713
  %v5258 = vpack.c.b16 %v3722, %v3714
  %v5259 = vpack.c.b16 %v3723, %v3715
  %v5260 = vpack.c.b16 %v3724, %v3716
  %v5261 = vpack.c.b16 %v3725, %v3717
  %v5262 = vpack.c.b16 %v3726, %v3718
  %v5263 = vpack.c.b16 %v3727, %v3719
  %v5264 = vpack.c.b16 %v3736, %v3728
  %v5265 = vpack.c.b16 %v3737, %v3729
  %v5266 = vpack.c.b16 %v3738, %v3730
  %v5267 = vpack.c.b16 %v3739, %v3731
  %v5268 = vpack.c.b16 %v3740, %v3732
  %v5269 = vpack.c.b16 %v3741, %v3733
  %v5270 = vpack.c.b16 %v3742, %v3734
  %v5271 = vpack.c.b16 %v3743, %v3735
  %v5272 = vpack.c.b16 %v3752, %v3744
  %v5273 = vpack.c.b16 %v3753, %v3745
  %v5274 = vpack.c.b16 %v3754, %v3746
  %v5275 = vpack.c.b16 %v3755, %v3747
  %v5276 = vpack.c.b16 %v3756, %v3748
  %v5277 = vpack.c.b16 %v3757, %v3749
  %v5278 = vpack.c.b16 %v3758, %v3750
  %v5279 = vpack.c.b16 %v3759, %v3751
  %v5280 = vpack.c.b16 %v3768, %v3760
  %v5281 = vpack.c.b16 %v3769, %v3761
  %v5282 = vpack.c.b16 %v3770, %v3762
  %v5283 = vpack.c.b16 %v3771, %v3763
  %v5284 = vpack.c.b16 %v3772, %v3764
  %v5285 = vpack.c.b16 %v3773, %v3765
  %v5286 = vpack.c.b16 %v3774, %v3766
  %v5287 = vpack.c.b16 %v3775, %v3767
  %v5288 = vpack.c.b16 %v3784, %v3776
  %v5289 = vpack.c.b16 %v3785, %v3777
  %v5290 = vpack.c.b16 %v3786, %v3778
  %v5291 = vpack.c.b16 %v3787, %v3779
  %v5292 = vpack.c.b16 %v3788, %v3780
  %v5293 = vpack.c.b16 %v3789, %v3781
  %v5294 = vpack.c.b16 %v3790, %v3782
  %v5295 = vpack.c.b16 %v3791, %v3783
  %v5296 = vpack.c.b16 %v3800, %v3792
  %v5297 = vpack.c.b16 %v3801, %v3793
  %v5298 = vpack.c.b16 %v3802, %v3794
  %v5299 = vpack.c.b16 %v3803, %v3795
  %v5300 = vpack.c.b16 %v3804, %v3796
  %v5301 = vpack.c.b16 %v3805, %v3797
  %v5302 = vpack.c.b16 %v3806, %v3798
  %v5303 = vpack.c.b16 %v3807, %v3799
  %v5304 = vpack.c.b16 %v3816, %v3808
  %v5305 = vpack.c.b16 %v3817, %v3809
  %v5306 = vpack.c.b16 %v3818, %v3810
  %v5307 = vpack.c.b16 %v3819, %v3811
  %v5308 = vpack.c.b16 %v3820, %v3812
  %v5309 = vpack.c.b16 %v3821, %v3813
  %v5310 = vpack.c.b16 %v3822, %v3814
  %v5311 = vpack.c.b16 %v3823, %v3815
  %v5312 = vpack.c.b16 %v3832, %v3824
  %v5313 = vpack.c.b16 %v3833, %v3825
  %v5314 = vpack.c.b16 %v3834, %v3826
  %v5315 = vpack.c.b16 %v3835, %v3827
  %v5316 = vpack.c.b16 %v3836, %v3828
  %v5317 = vpack.c.b16 %v3837, %v3829
  %v5318 = vpack.c.b16 %v3838, %v3830
  %v5319 = vpack.c.b16 %v3839, %v3831
  %v5320 = vpack.c.b16 %v3848, %v3840
  %v5321 = vpack.c.b16 %v3849, %v3841
  %v5322 = vpack.c.b16 %v3850, %v3842
  %v5323 = vpack.c.b16 %v3851, %v3843
  %v5324 = vpack.c.b16 %v3852, %v3844
  %v5325 = vpack.c.b16 %v3853, %v3845
  %v5326 = vpack.c.b16 %v3854, %v3846
  %v5327 = vpack.c.b16 %v3855, %v3847
  %v5328 = vpack.c.b16 %v3864, %v3856
  %v5329 = vpack.c.b16 %v3865, %v3857
  %v5330 = vpack.c.b16 %v3866, %v3858
  %v5331 = vpack.c.b16 %v3867, %v3859
  %v5332 = vpack.c.b16 %v3868, %v3860
  %v5333 = vpack.c.b16 %v3869, %v3861
  %v5334 = vpack.c.b16 %v3870, %v3862
  %v5335 = vpack.c.b16 %v3871, %v3863
  %v5336 = vpack.c.b16 %v3880, %v3872
  %v5337 = vpack.c.b16 %v3881, %v3873
  %v5338 = vpack.c.b16 %v3882, %v3874
  %v5339 = vpack.c.b16 %v3883, %v3875
  %v5340 = vpack.c.b16 %v3884, %v3876
  %v5341 = vpack.c.b16 %v3885, %v3877
  %v5342 = vpack.c.b16 %v3886, %v3878
  %v5343 = vpack.c.b16 %v3887, %v3879
  %v5344 = vpack.c.b16 %v3896, %v3888
  %v5345 = vpack.c.b16 %v3897, %v3889
  %v5346 = vpack.c.b16 %v3898, %v3890
  %v5347 = vpack.c.b16 %v3899, %v3891
  %v5348 = vpack.c.b16 %v3900, %v3892
  %v5349 = vpack.c.b16 %v3901, %v3893
  %v5350 = vpack.c.b16 %v3902, %v3894
  %v5351 = vpack.c.b16 %v3903, %v3895
  %v5352 = vpack.c.b16 %v3912, %v3904
  %v5353 = vpack.c.b16 %v3913, %v3905
  %v5354 = vpack.c.b16 %v3914, %v3906
  %v5355 = vpack.c.b16 %v3915, %v3907
  %v5356 = vpack.c.b16 %v3916, %v3908
  %v5357 = vpack.c.b16 %v3917, %v3909
  %v5358 = vpack.c.b16 %v3918, %v3910
  %v5359 = vpack.c.b16 %v3919, %v3911
  %v5360 = vpack.c.b16 %v3928, %v3920
  %v5361 = vpack.c.b16 %v3929, %v3921
  %v5362 = vpack.c.b16 %v3930, %v3922
  %v5363 = vpack.c.b16 %v3931, %v3923
  %v5364 = vpack.c.b16 %v3932, %v3924
  %v5365 = vpack.c.b16 %v3933, %v3925
  %v5366 = vpack.c.b16 %v3934, %v3926
  %v5367 = vpack.c.b16 %v3935, %v3927
  %v5368 = vpack.c.b16 %v3944, %v3936
  %v5369 = vpack.c.b16 %v3945, %v3937
  %v5370 = vpack.c.b16 %v3946, %v3938
  %v5371 = vpack.c.b16 %v3947, %v3939
  %v5372 = vpack.c.b16 %v3948, %v3940
  %v5373 = vpack.c.b16 %v3949, %v3941
  %v5374 = vpack.c.b16 %v3950, %v3942
  %v5375 = vpack.c.b16 %v3951, %v3943
  %v5376 = vpack.c.b16 %v3960, %v3952
  %v5377 = vpack.c.b16 %v3961, %v3953
  %v5378 = vpack.c.b16 %v3962, %v3954
  %v5379 = vpack.c.b16 %v3963, %v3955
  %v5380 = vpack.c.b16 %v3964, %v3956
  %v5381 = vpack.c.b16 %v3965, %v3957
  %v5382 = vpack.c.b16 %v3966, %v3958
  %v5383 = vpack.c.b16 %v3967, %v3959
  %v5384 = vpack.c.b16 %v3976, %v3968
  %v5385 = vpack.c.b16 %v3977, %v3969
  %v5386 = vpack.c.b16 %v3978, %v3970
  %v5387 = vpack.c.b16 %v3979, %v3971
  %v5388 = vpack.c.b16 %v3980, %v3972
  %v5389 = vpack.c.b16 %v3981, %v3973
  %v5390 = vpack.c.b16 %v3982, %v3974
  %v5391 = vpack.c.b16 %v3983, %v3975
  %v5392 = vpack.c.b16 %v3992, %v3984
  %v5393 = vpack.c.b16 %v3993, %v3985
  %v5394 = vpack.c.b16 %v3994, %v3986
  %v5395 = vpack.c.b16 %v3995, %v3987
  %v5396 = vpack.c.b16 %v3996, %v3988
  %v5397 = vpack.c.b16 %v3997, %v3989
  %v5398 = vpack.c.b16 %v3998, %v3990
  %v5399 = vpack.c.b16 %v3999, %v3991
  %v5400 = vpack.c.b16 %v4008, %v4000
  %v5401 = vpack.c.b16 %v4009, %v4001
  %v5402 = vpack.c.b16 %v4010, %v4002
  %v5403 = vpack.c.b16 %v4011, %v4003
  %v5404 = vpack.c.b16 %v4012, %v4004
  %v5405 = vpack.c.b16 %v4013, %v4005
  %v5406 = vpack.c.b16 %v4014, %v4006
  %v5407 = vpack.c.b16 %v4015, %v4007
  %v5408 = vpack.c.b16 %v4024, %v4016
  %v5409 = vpack.c.b16 %v4025, %v4017
  %v5410 = vpack.c.b16 %v4026, %v4018
  %v5411 = vpack.c.b16 %v4027, %v4019
  %v5412 = vpack.c.b16 %v4028, %v4020
  %v5413 = vpack.c.b16 %v4029, %v4021
  %v5414 = vpack.c.b16 %v4030, %v4022
  %v5415 = vpack.c.b16 %v4031, %v4023
  %v5416 = vpack.c.b16 %v4040, %v4032
  %v5417 = vpack.c.b16 %v4041, %v4033
  %v5418 = vpack.c.b16 %v4042, %v4034
  %v5419 = vpack.c.b16 %v4043, %v4035
  %v5420 = vpack.c.b16 %v4044, %v4036
  %v5421 = vpack.c.b16 %v4045, %v4037
  %v5422 = vpack.c.b16 %v4046, %v4038
  %v5423 = vpack.c.b16 %v4047, %v4039
  %v5424 = vpack.c.b16 %v4056, %v4048
  %v5425 = vpack.c.b16 %v4057, %v4049
  %v5426 = vpack.c.b16 %v4058, %v4050
  %v5427 = vpack.c.b16 %v4059, %v4051
  %v5428 = vpack.c.b16 %v4060, %v4052
  %v5429 = vpack.c.b16 %v4061, %v4053
  %v5430 = vpack.c.b16 %v4062, %v4054
  %v5431 = vpack.c.b16 %v4063, %v4055
  %v5432 = vpack.c.b16 %v4072, %v4064
  %v5433 = vpack.c.b16 %v4073, %v4065
  %v5434 = vpack.c.b16 %v4074, %v4066
  %v5435 = vpack.c.b16 %v4075, %v4067
  %v5436 = vpack.c.b16 %v4076, %v4068
  %v5437 = vpack.c.b16 %v4077, %v4069
  %v5438 = vpack.c.b16 %v4078, %v4070
  %v5439 = vpack.c.b16 %v4079, %v4071
  %v5440 = vpack.c.b16 %v4088, %v4080
  %v5441 = vpack.c.b16 %v4089, %v4081
  %v5442 = vpack.c.b16 %v4090, %v4082
  %v5443 = vpack.c.b16 %v4091, %v4083
  %v5444 = vpack.c.b16 %v4092, %v4084
  %v5445 = vpack.c.b16 %v4093, %v4085
  %v5446 = vpack.c.b16 %v4094, %v4086
  %v5447 = vpack.c.b16 %v4095, %v4087
  %v5448 = vpack.c.b16 %v4104, %v4096
  %v5449 = vpack.c.b16 %v4105, %v4097
  %v5450 = vpack.c.b16 %v4106, %v4098
  %v5451 = vpack.c.b16 %v4107, %v4099
  %v5452 = vpack.c.b16 %v4108, %v4100
  %v5453 = vpack.c.b16 %v4109, %v4101
  %v5454 = vpack.c.b16 %v4110, %v4102
  %v5455 = vpack.c.b16 %v4111, %v4103
  %v5456 = vpack.c.b16 %v4120, %v4112
  %v5457 = vpack.c.b16 %v4121, %v4113
  %v5458 = vpack.c.b16 %v4122, %v4114
  %v5459 = vpack.c.b16 %v4123, %v4115
  %v5460 = vpack.c.b16 %v4124, %v4116
  %v5461 = vpack.c.b16 %v4125, %v4117
  %v5462 = vpack.c.b16 %v4126, %v4118
  %v5463 = vpack.c.b16 %v4127, %v4119
  %v5464 = vpack.c.b16 %v4136, %v4128
  %v5465 = vpack.c.b16 %v4137, %v4129
  %v5466 = vpack.c.b16 %v4138, %v4130
  %v5467 = vpack.c.b16 %v4139, %v4131
  %v5468 = vpack.c.b16 %v4140, %v4132
  %v5469 = vpack.c.b16 %v4141, %v4133
  %v5470 = vpack.c.b16 %v4142, %v4134
  %v5471 = vpack.c.b16 %v4143, %v4135
  %v5472 = vpack.c.b16 %v4152, %v4144
  %v5473 = vpack.c.b16 %v4153, %v4145
  %v5474 = vpack.c.b16 %v4154, %v4146
  %v5475 = vpack.c.b16 %v4155, %v4147
  %v5476 = vpack.c.b16 %v4156, %v4148
  %v5477 = vpack.c.b16 %v4157, %v4149
  %v5478 = vpack.c.b16 %v4158, %v4150
  %v5479 = vpack.c.b16 %v4159, %v4151
  %v5480 = vpack.c.b16 %v4168, %v4160
  %v5481 = vpack.c.b16 %v4169, %v4161
  %v5482 = vpack.c.b16 %v4170, %v4162
  %v5483 = vpack.c.b16 %v4171, %v4163
  %v5484 = vpack.c.b16 %v4172, %v4164
  %v5485 = vpack.c.b16 %v4173, %v4165
  %v5486 = vpack.c.b16 %v4174, %v4166
  %v5487 = vpack.c.b16 %v4175, %v4167
  %v5488 = vpack.c.b16 %v4184, %v4176
  %v5489 = vpack.c.b16 %v4185, %v4177
  %v5490 = vpack.c.b16 %v4186, %v4178
  %v5491 = vpack.c.b16 %v4187, %v4179
  %v5492 = vpack.c.b16 %v4188, %v4180
  %v5493 = vpack.c.b16 %v4189, %v4181
  %v5494 = vpack.c.b16 %v4190, %v4182
  %v5495 = vpack.c.b16 %v4191, %v4183
  %v5496 = vpack.c.b16 %v4200, %v4192
  %v5497 = vpack.c.b16 %v4201, %v4193
  %v5498 = vpack.c.b16 %v4202, %v4194
  %v5499 = vpack.c.b16 %v4203, %v4195
  %v5500 = vpack.c.b16 %v4204, %v4196
  %v5501 = vpack.c.b16 %v4205, %v4197
  %v5502 = vpack.c.b16 %v4206, %v4198
  %v5503 = vpack.c.b16 %v4207, %v4199
  %v5504 = vpack.c.b16 %v4216, %v4208
  %v5505 = vpack.c.b16 %v4217, %v4209
  %v5506 = vpack.c.b16 %v4218, %v4210
  %v5507 = vpack.c.b16 %v4219, %v4211
  %v5508 = vpack.c.b16 %v4220, %v4212
  %v5509 = vpack.c.b16 %v4221, %v4213
  %v5510 = vpack.c.b16 %v4222, %v4214
  %v5511 = vpack.c.b16 %v4223, %v4215
  %v5512 = vpack.c.b16 %v4232, %v4224
  %v5513 = vpack.c.b16 %v4233, %v4225
  %v5514 = vpack.c.b16 %v4234, %v4226
  %v5515 = vpack.c.b16 %v4235, %v4227
  %v5516 = vpack.c.b16 %v4236, %v4228
  %v5517 = vpack.c.b16 %v4237, %v4229
  %v5518 = vpack.c.b16 %v4238, %v4230
  %v5519 = vpack.c.b16 %v4239, %v4231
  %v5520 = vpack.c.b16 %v4248, %v4240
  %v5521 = vpack.c.b16 %v4249, %v4241
  %v5522 = vpack.c.b16 %v4250, %v4242
  %v5523 = vpack.c.b16 %v4251, %v4243
  %v5524 = vpack.c.b16 %v4252, %v4244
  %v5525 = vpack.c.b16 %v4253, %v4245
  %v5526 = vpack.c.b16 %v4254, %v4246
  %v5527 = vpack.c.b16 %v4255, %v4247
  %v5528 = vpack.c.b16 %v4264, %v4256
  %v5529 = vpack.c.b16 %v4265, %v4257
  %v5530 = vpack.c.b16 %v4266, %v4258
  %v5531 = vpack.c.b16 %v4267, %v4259
  %v5532 = vpack.c.b16 %v4268, %v4260
  %v5533 = vpack.c.b16 %v4269, %v4261
  %v5534 = vpack.c.b16 %v4270, %v4262
  %v5535 = vpack.c.b16 %v4271, %v4263
  %v5536 = vpack.c.b16 %v4280, %v4272
  %v5537 = vpack.c.b16 %v4281, %v4273
  %v5538 = vpack.c.b16 %v4282, %v4274
  %v5539 = vpack.c.b16 %v4283, %v4275
  %v5540 = vpack.c.b16 %v4284, %v4276
  %v5541 = vpack.c.b16 %v4285, %v4277
  %v5542 = vpack.c.b16 %v4286, %v4278
  %v5543 = vpack.c.b16 %v4287, %v4279
  %v5544 = vpack.c.b16 %v4296, %v4288
  %v5545 = vpack.c.b16 %v4297, %v4289
  %v5546 = vpack.c.b16 %v4298, %v4290
  %v5547 = vpack.c.b16 %v4299, %v4291
  %v5548 = vpack.c.b16 %v4300, %v4292
  %v5549 = vpack.c.b16 %v4301, %v4293
  %v5550 = vpack.c.b16 %v4302, %v4294
  %v5551 = vpack.c.b16 %v4303, %v4295
  %v5552 = vpack.c.b16 %v4312, %v4304
  %v5553 = vpack.c.b16 %v4313, %v4305
  %v5554 = vpack.c.b16 %v4314, %v4306
  %v5555 = vpack.c.b16 %v4315, %v4307
  %v5556 = vpack.c.b16 %v4316, %v4308
  %v5557 = vpack.c.b16 %v4317, %v4309
  %v5558 = vpack.c.b16 %v4318, %v4310
  %v5559 = vpack.c.b16 %v4319, %v4311
  %v5560 = vpack.c.b16 %v4328, %v4320
  %v5561 = vpack.c.b16 %v4329, %v4321
  %v5562 = vpack.c.b16 %v4330, %v4322
  %v5563 = vpack.c.b16 %v4331, %v4323
  %v5564 = vpack.c.b16 %v4332, %v4324
  %v5565 = vpack.c.b16 %v4333, %v4325
  %v5566 = vpack.c.b16 %v4334, %v4326
  %v5567 = vpack.c.b16 %v4335, %v4327
  %v5568 = vpack.c.b16 %v4344, %v4336
  %v5569 = vpack.c.b16 %v4345, %v4337
  %v5570 = vpack.c.b16 %v4346, %v4338
  %v5571 = vpack.c.b16 %v4347, %v4339
  %v5572 = vpack.c.b16 %v4348, %v4340
  %v5573 = vpack.c.b16 %v4349, %v4341
  %v5574 = vpack.c.b16 %v4350, %v4342
  %v5575 = vpack.c.b16 %v4351, %v4343
  %v5576 = vpack.c.b16 %v4360, %v4352
  %v5577 = vpack.c.b16 %v4361, %v4353
  %v5578 = vpack.c.b16 %v4362, %v4354
  %v5579 = vpack.c.b16 %v4363, %v4355
  %v5580 = vpack.c.b16 %v4364, %v4356
  %v5581 = vpack.c.b16 %v4365, %v4357
  %v5582 = vpack.c.b16 %v4366, %v4358
  %v5583 = vpack.c.b16 %v4367, %v4359
  %v5584 = vpack.c.b16 %v4376, %v4368
  %v5585 = vpack.c.b16 %v4377, %v4369
  %v5586 = vpack.c.b16 %v4378, %v4370
  %v5587 = vpack.c.b16 %v4379, %v4371
  %v5588 = vpack.c.b16 %v4380, %v4372
  %v5589 = vpack.c.b16 %v4381, %v4373
  %v5590 = vpack.c.b16 %v4382, %v4374
  %v5591 = vpack.c.b16 %v4383, %v4375
  %v5592 = vpack.c.b16 %v4392, %v4384
  %v5593 = vpack.c.b16 %v4393, %v4385
  %v5594 = vpack.c.b16 %v4394, %v4386
  %v5595 = vpack.c.b16 %v4395, %v4387
  %v5596 = vpack.c.b16 %v4396, %v4388
  %v5597 = vpack.c.b16 %v4397, %v4389
  %v5598 = vpack.c.b16 %v4398, %v4390
  %v5599 = vpack.c.b16 %v4399, %v4391
  %v5600 = vpack.c.b16 %v4408, %v4400
  %v5601 = vpack.c.b16 %v4409, %v4401
  %v5602 = vpack.c.b16 %v4410, %v4402
  %v5603 = vpack.c.b16 %v4411, %v4403
  %v5604 = vpack.c.b16 %v4412, %v4404
  %v5605 = vpack.c.b16 %v4413, %v4405
  %v5606 = vpack.c.b16 %v4414, %v4406
  %v5607 = vpack.c.b16 %v4415, %v4407
  %v5608 = vpack.c.b16 %v4424, %v4416
  %v5609 = vpack.c.b16 %v4425, %v4417
  %v5610 = vpack.c.b16 %v4426, %v4418
  %v5611 = vpack.c.b16 %v4427, %v4419
  %v5612 = vpack.c.b16 %v4428, %v4420
  %v5613 = vpack.c.b16 %v4429, %v4421
  %v5614 = vpack.c.b16 %v4430, %v4422
  %v5615 = vpack.c.b16 %v4431, %v4423
  %v5616 = vpack.c.b16 %v4440, %v4432
  %v5617 = vpack.c.b16 %v4441, %v4433
  %v5618 = vpack.c.b16 %v4442, %v4434
  %v5619 = vpack.c.b16 %v4443, %v4435
  %v5620 = vpack.c.b16 %v4444, %v4436
  %v5621 = vpack.c.b16 %v4445, %v4437
  %v5622 = vpack.c.b16 %v4446, %v4438
  %v5623 = vpack.c.b16 %v4447, %v4439
  %v5624 = vpack.c.b16 %v4456, %v4448
  %v5625 = vpack.c.b16 %v4457, %v4449
  %v5626 = vpack.c.b16 %v4458, %v4450
  %v5627 = vpack.c.b16 %v4459, %v4451
  %v5628 = vpack.c.b16 %v4460, %v4452
  %v5629 = vpack.c.b16 %v4461, %v4453
  %v5630 = vpack.c.b16 %v4462, %v4454
  %v5631 = vpack.c.b16 %v4463, %v4455
  %v5632 = vpack.c.b16 %v4472, %v4464
  %v5633 = vpack.c.b16 %v4473, %v4465
  %v5634 = vpack.c.b16 %v4474, %v4466
  %v5635 = vpack.c.b16 %v4475, %v4467
  %v5636 = vpack.c.b16 %v4476, %v4468
  %v5637 = vpack.c.b16 %v4477, %v4469
  %v5638 = vpack.c.b16 %v4478, %v4470
  %v5639 = vpack.c.b16 %v4479, %v4471
  %v5640 = vpack.c.b16 %v4488, %v4480
  %v5641 = vpack.c.b16 %v4489, %v4481
  %v5642 = vpack.c.b16 %v4490, %v4482
  %v5643 = vpack.c.b16 %v4491, %v4483
  %v5644 = vpack.c.b16 %v4492, %v4484
  %v5645 = vpack.c.b16 %v4493, %v4485
  %v5646 = vpack.c.b16 %v4494, %v4486
  %v5647 = vpack.c.b16 %v4495, %v4487
  %v5648 = vpack.c.b16 %v4504, %v4496
  %v5649 = vpack.c.b16 %v4505, %v4497
  %v5650 = vpack.c.b16 %v4506, %v4498
  %v5651 = vpack.c.b16 %v4507, %v4499
  %v5652 = vpack.c.b16 %v4508, %v4500
  %v5653 = vpack.c.b16 %v4509, %v4501
  %v5654 = vpack.c.b16 %v4510, %v4502
  %v5655 = vpack.c.b16 %v4511, %v4503
  %v5656 = vpack.c.b16 %v4520, %v4512
  %v5657 = vpack.c.b16 %v4521, %v4513
  %v5658 = vpack.c.b16 %v4522, %v4514
  %v5659 = vpack.c.b16 %v4523, %v4515
  %v5660 = vpack.c.b16 %v4524, %v4516
  %v5661 = vpack.c.b16 %v4525, %v4517
  %v5662 = vpack.c.b16 %v4526, %v4518
  %v5663 = vpack.c.b16 %v4527, %v4519
  %v5664 = vpack.c.b16 %v4536, %v4528
  %v5665 = vpack.c.b16 %v4537, %v4529
  %v5666 = vpack.c.b16 %v4538, %v4530
  %v5667 = vpack.c.b16 %v4539, %v4531
  %v5668 = vpack.c.b16 %v4540, %v4532
  %v5669 = vpack.c.b16 %v4541, %v4533
  %v5670 = vpack.c.b16 %v4542, %v4534
  %v5671 = vpack.c.b16 %v4543, %v4535
  %v5672 = vpack.c.b16 %v4552, %v4544
  %v5673 = vpack.c.b16 %v4553, %v4545
  %v5674 = vpack.c.b16 %v4554, %v4546
  %v5675 = vpack.c.b16 %v4555, %v4547
  %v5676 = vpack.c.b16 %v4556, %v4548
  %v5677 = vpack.c.b16 %v4557, %v4549
  %v5678 = vpack.c.b16 %v4558, %v4550
  %v5679 = vpack.c.b16 %v4559, %v4551
  %v5680 = vpack.c.b16 %v4568, %v4560
  %v5681 = vpack.c.b16 %v4569, %v4561
  %v5682 = vpack.c.b16 %v4570, %v4562
  %v5683 = vpack.c.b16 %v4571, %v4563
  %v5684 = vpack.c.b16 %v4572, %v4564
  %v5685 = vpack.c.b16 %v4573, %v4565
  %v5686 = vpack.c.b16 %v4574, %v4566
  %v5687 = vpack.c.b16 %v4575, %v4567
  %v5688 = vpack.c.b16 %v4584, %v4576
  %v5689 = vpack.c.b16 %v4585, %v4577
  %v5690 = vpack.c.b16 %v4586, %v4578
  %v5691 = vpack.c.b16 %v4587, %v4579
  %v5692 = vpack.c.b16 %v4588, %v4580
  %v5693 = vpack.c.b16 %v4589, %v4581
  %v5694 = vpack.c.b16 %v4590, %v4582
  %v5695 = vpack.c.b16 %v4591, %v4583
  %v5696 = vpack.c.b16 %v4600, %v4592
  %v5697 = vpack.c.b16 %v4601, %v4593
  %v5698 = vpack.c.b16 %v4602, %v4594
  %v5699 = vpack.c.b16 %v4603, %v4595
  %v5700 = vpack.c.b16 %v4604, %v4596
  %v5701 = vpack.c.b16 %v4605, %v4597
  %v5702 = vpack.c.b16 %v4606, %v4598
  %v5703 = vpack.c.b16 %v4607, %v4599
  %v5704 = vpack.c.b16 %v4616, %v4608
  %v5705 = vpack.c.b16 %v4617, %v4609
  %v5706 = vpack.c.b16 %v4618, %v4610
  %v5707 = vpack.c.b16 %v4619, %v4611
  %v5708 = vpack.c.b16 %v4620, %v4612
  %v5709 = vpack.c.b16 %v4621, %v4613
  %v5710 = vpack.c.b16 %v4622, %v4614
  %v5711 = vpack.c.b16 %v4623, %v4615
  %v5712 = vpack.c.b16 %v4632, %v4624
  %v5713 = vpack.c.b16 %v4633, %v4625
  %v5714 = vpack.c.b16 %v4634, %v4626
  %v5715 = vpack.c.b16 %v4635, %v4627
  %v5716 = vpack.c.b16 %v4636, %v4628
  %v5717 = vpack.c.b16 %v4637, %v4629
  %v5718 = vpack.c.b16 %v4638, %v4630
  %v5719 = vpack.c.b16 %v4639, %v4631
  %v5720 = vpack.c.b16 %v4648, %v4640
  %v5721 = vpack.c.b16 %v4649, %v4641
  %v5722 = vpack.c.b16 %v4650, %v4642
  %v5723 = vpack.c.b16 %v4651, %v4643
  %v5724 = vpack.c.b16 %v4652, %v4644
  %v5725 = vpack.c.b16 %v4653, %v4645
  %v5726 = vpack.c.b16 %v4654, %v4646
  %v5727 = vpack.c.b16 %v4655, %v4647
  %v5728 = vpack.c.b16 %v4664, %v4656
  %v5729 = vpack.c.b16 %v4665, %v4657
  %v5730 = vpack.c.b16 %v4666, %v4658
  %v5731 = vpack.c.b16 %v4667, %v4659
  %v5732 = vpack.c.b16 %v4668, %v4660
  %v5733 = vpack.c.b16 %v4669, %v4661
  %v5734 = vpack.c.b16 %v4670, %v4662
  %v5735 = vpack.c.b16 %v4671, %v4663
  %v5736 = vpack.c.b16 %v4680, %v4672
  %v5737 = vpack.c.b16 %v4681, %v4673
  %v5738 = vpack.c.b16 %v4682, %v4674
  %v5739 = vpack.c.b16 %v4683, %v4675
  %v5740 = vpack.c.b16 %v4684, %v4676
  %v5741 = vpack.c.b16 %v4685, %v4677
  %v5742 = vpack.c.b16 %v4686, %v4678
  %v5743 = vpack.c.b16 %v4687, %v4679
  %v5744 = vpack.c.b16 %v4696, %v4688
  %v5745 = vpack.c.b16 %v4697, %v4689
  %v5746 = vpack.c.b16 %v4698, %v4690
  %v5747 = vpack.c.b16 %v4699, %v4691
  %v5748 = vpack.c.b16 %v4700, %v4692
  %v5749 = vpack.c.b16 %v4701, %v4693
  %v5750 = vpack.c.b16 %v4702, %v4694
  %v5751 = vpack.c.b16 %v4703, %v4695
  %v5752 = vpack.c.b16 %v4712, %v4704
  %v5753 = vpack.c.b16 %v4713, %v4705
  %v5754 = vpack.c.b16 %v4714, %v4706
  %v5755 = vpack.c.b16 %v4715, %v4707
  %v5756 = vpack.c.b16 %v4716, %v4708
  %v5757 = vpack.c.b16 %v4717, %v4709
  %v5758 = vpack.c.b16 %v4718, %v4710
  %v5759 = vpack.c.b16 %v4719, %v4711
  %v5760 = vpack.c.b16 %v4728, %v4720
  %v5761 = vpack.c.b16 %v4729, %v4721
  %v5762 = vpack.c.b16 %v4730, %v4722
  %v5763 = vpack.c.b16 %v4731, %v4723
  %v5764 = vpack.c.b16 %v4732, %v4724
  %v5765 = vpack.c.b16 %v4733, %v4725
  %v5766 = vpack.c.b16 %v4734, %v4726
  %v5767 = vpack.c.b16 %v4735, %v4727
  %v5768 = vpack.c.b16 %v4744, %v4736
  %v5769 = vpack.c.b16 %v4745, %v4737
  %v5770 = vpack.c.b16 %v4746, %v4738
  %v5771 = vpack.c.b16 %v4747, %v4739
  %v5772 = vpack.c.b16 %v4748, %v4740
  %v5773 = vpack.c.b16 %v4749, %v4741
  %v5774 = vpack.c.b16 %v4750, %v4742
  %v5775 = vpack.c.b16 %v4751, %v4743
  %6800 = vmatprep.subr.bf16.mxu0 %v4753
  %6801 = vmatpush1.bf16.msra.mxu0 %v4752
  %6802 = vmatprep.subr.bf16.mxu0 %v4761
  %6803 = vmatpush1.bf16.msra.mxu0 %v4760
  %6804 = vmatprep.subr.bf16.mxu0 %v4769
  %6805 = vmatpush1.bf16.msra.mxu0 %v4768
  %6806 = vmatprep.subr.bf16.mxu0 %v4777
  %6807 = vmatpush1.bf16.msra.mxu0 %v4776
  %6808 = vmatprep.subr.bf16.mxu0 %v4785
  %6809 = vmatpush1.bf16.msra.mxu0 %v4784
  %6810 = vmatprep.subr.bf16.mxu0 %v4793
  %6811 = vmatpush1.bf16.msra.mxu0 %v4792
  %6812 = vmatprep.subr.bf16.mxu0 %v4801
  %6813 = vmatpush1.bf16.msra.mxu0 %v4800
  %6814 = vmatprep.subr.bf16.mxu0 %v4809
  %6815 = vmatpush1.bf16.msra.mxu0 %v4808
  %6816 = vmatprep.subr.bf16.mxu0 %v4817
  %6817 = vmatpush1.bf16.msra.mxu0 %v4816
  %6818 = vmatprep.subr.bf16.mxu0 %v4825
  %6819 = vmatpush1.bf16.msra.mxu0 %v4824
  %6820 = vmatprep.subr.bf16.mxu0 %v4833
  %6821 = vmatpush1.bf16.msra.mxu0 %v4832
  %6822 = vmatprep.subr.bf16.mxu0 %v4841
  %6823 = vmatpush1.bf16.msra.mxu0 %v4840
  %6824 = vmatprep.subr.bf16.mxu0 %v4849
  %6825 = vmatpush1.bf16.msra.mxu0 %v4848
  %6826 = vmatprep.subr.bf16.mxu0 %v4857
  %6827 = vmatpush1.bf16.msra.mxu0 %v4856
  %6828 = vmatprep.subr.bf16.mxu0 %v4865
  %6829 = vmatpush1.bf16.msra.mxu0 %v4864
  %6830 = vmatprep.subr.bf16.mxu0 %v4873
  %6831 = vmatpush1.bf16.msra.mxu0 %v4872
  %6832 = vmatprep.mubr.bf16.mxu0 %v599
  %6833 = vmatmul.mubr.bf16.gmra.mrb[0].mxu0 %v598
  %v6834 = vpop.f32.mrb[0].mxu0
  %v6835 = vadd.f32 %v1643, %v6834
  %v6836 = vpop.f32.mrb[0].mxu0
  %v6837 = vadd.f32 %v1647, %v6836
  %v6838 = vpop.f32.mrb[0].mxu0
  %v6839 = vpop.f32.mrb[0].mxu0
  %6840 = vdwg.mxu0
  %6841 = vmatprep.subr.bf16.mxu0 %v4881
  %6842 = vmatpush1.bf16.msra.mxu0 %v4880
  %6843 = vmatprep.subr.bf16.mxu0 %v4889
  %6844 = vmatpush1.bf16.msra.mxu0 %v4888
  %6845 = vmatprep.subr.bf16.mxu0 %v4897
  %6846 = vmatpush1.bf16.msra.mxu0 %v4896
  %6847 = vmatprep.subr.bf16.mxu0 %v4905
  %6848 = vmatpush1.bf16.msra.mxu0 %v4904
  %6849 = vmatprep.subr.bf16.mxu0 %v4913
  %6850 = vmatpush1.bf16.msra.mxu0 %v4912
  %6851 = vmatprep.subr.bf16.mxu0 %v4921
  %6852 = vmatpush1.bf16.msra.mxu0 %v4920
  %6853 = vmatprep.subr.bf16.mxu0 %v4929
  %6854 = vmatpush1.bf16.msra.mxu0 %v4928
  %6855 = vmatprep.subr.bf16.mxu0 %v4937
  %6856 = vmatpush1.bf16.msra.mxu0 %v4936
  %6857 = vmatprep.subr.bf16.mxu0 %v4945
  %6858 = vmatpush1.bf16.msra.mxu0 %v4944
  %6859 = vmatprep.subr.bf16.mxu0 %v4953
  %6860 = vmatpush1.bf16.msra.mxu0 %v4952
  %6861 = vmatprep.subr.bf16.mxu0 %v4961
  %6862 = vmatpush1.bf16.msra.mxu0 %v4960
  %6863 = vmatprep.subr.bf16.mxu0 %v4969
  %6864 = vmatpush1.bf16.msra.mxu0 %v4968
  %6865 = vmatprep.subr.bf16.mxu0 %v4977
  %6866 = vmatpush1.bf16.msra.mxu0 %v4976
  %6867 = vmatprep.subr.bf16.mxu0 %v4985
  %6868 = vmatpush1.bf16.msra.mxu0 %v4984
  %6869 = vmatprep.subr.bf16.mxu0 %v4993
  %6870 = vmatpush1.bf16.msra.mxu0 %v4992
  %6871 = vmatprep.subr.bf16.mxu0 %v5001
  %6872 = vmatpush1.bf16.msra.mxu0 %v5000
  %6873 = vmatprep.mubr.bf16.mxu0 %v601
  %6874 = vmatmul.mubr.bf16.gmra.mrb[0].mxu0 %v600
  %v6875 = vpop.f32.mrb[0].mxu0
  %v6876 = vadd.f32 %v6835, %v6875
  %v6877 = vpop.f32.mrb[0].mxu0
  %v6878 = vadd.f32 %v6837, %v6877
  %v6879 = vpop.f32.mrb[0].mxu0
  %v6880 = vpop.f32.mrb[0].mxu0
  %6881 = vdwg.mxu0
  %6882 = vmatprep.subr.bf16.mxu0 %v5009
  %6883 = vmatpush1.bf16.msra.mxu0 %v5008
  %6884 = vmatprep.subr.bf16.mxu0 %v5017
  %6885 = vmatpush1.bf16.msra.mxu0 %v5016
  %6886 = vmatprep.subr.bf16.mxu0 %v5025
  %6887 = vmatpush1.bf16.msra.mxu0 %v5024
  %6888 = vmatprep.subr.bf16.mxu0 %v5033
  %6889 = vmatpush1.bf16.msra.mxu0 %v5032
  %6890 = vmatprep.subr.bf16.mxu0 %v5041
  %6891 = vmatpush1.bf16.msra.mxu0 %v5040
  %6892 = vmatprep.subr.bf16.mxu0 %v5049
  %6893 = vmatpush1.bf16.msra.mxu0 %v5048
  %6894 = vmatprep.subr.bf16.mxu0 %v5057
  %6895 = vmatpush1.bf16.msra.mxu0 %v5056
  %6896 = vmatprep.subr.bf16.mxu0 %v5065
  %6897 = vmatpush1.bf16.msra.mxu0 %v5064
  %6898 = vmatprep.subr.bf16.mxu0 %v5073
  %6899 = vmatpush1.bf16.msra.mxu0 %v5072
  %6900 = vmatprep.subr.bf16.mxu0 %v5081
  %6901 = vmatpush1.bf16.msra.mxu0 %v5080
  %6902 = vmatprep.subr.bf16.mxu0 %v5089
  %6903 = vmatpush1.bf16.msra.mxu0 %v5088
  %6904 = vmatprep.subr.bf16.mxu0 %v5097
  %6905 = vmatpush1.bf16.msra.mxu0 %v5096
  %6906 = vmatprep.subr.bf16.mxu0 %v5105
  %6907 = vmatpush1.bf16.msra.mxu0 %v5104
  %6908 = vmatprep.subr.bf16.mxu0 %v5113
  %6909 = vmatpush1.bf16.msra.mxu0 %v5112
  %6910 = vmatprep.subr.bf16.mxu0 %v5121
  %6911 = vmatpush1.bf16.msra.mxu0 %v5120
  %6912 = vmatprep.subr.bf16.mxu0 %v5129
  %6913 = vmatpush1.bf16.msra.mxu0 %v5128
  %6914 = vmatprep.mubr.bf16.mxu0 %v603
  %6915 = vmatmul.mubr.bf16.gmra.mrb[0].mxu0 %v602
  %v6916 = vpop.f32.mrb[0].mxu0
  %v6917 = vadd.f32 %v6876, %v6916
  %v6918 = vpop.f32.mrb[0].mxu0
  %v6919 = vadd.f32 %v6878, %v6918
  %v6920 = vpop.f32.mrb[0].mxu0
  %v6921 = vpop.f32.mrb[0].mxu0
  %6922 = vdwg.mxu0
  %6923 = vmatprep.subr.bf16.mxu0 %v5137
  %6924 = vmatpush1.bf16.msra.mxu0 %v5136
  %6925 = vmatprep.subr.bf16.mxu0 %v5145
  %6926 = vmatpush1.bf16.msra.mxu0 %v5144
  %6927 = vmatprep.subr.bf16.mxu0 %v5153
  %6928 = vmatpush1.bf16.msra.mxu0 %v5152
  %6929 = vmatprep.subr.bf16.mxu0 %v5161
  %6930 = vmatpush1.bf16.msra.mxu0 %v5160
  %6931 = vmatprep.subr.bf16.mxu0 %v5169
  %6932 = vmatpush1.bf16.msra.mxu0 %v5168
  %6933 = vmatprep.subr.bf16.mxu0 %v5177
  %6934 = vmatpush1.bf16.msra.mxu0 %v5176
  %6935 = vmatprep.subr.bf16.mxu0 %v5185
  %6936 = vmatpush1.bf16.msra.mxu0 %v5184
  %6937 = vmatprep.subr.bf16.mxu0 %v5193
  %6938 = vmatpush1.bf16.msra.mxu0 %v5192
  %6939 = vmatprep.subr.bf16.mxu0 %v5201
  %6940 = vmatpush1.bf16.msra.mxu0 %v5200
  %6941 = vmatprep.subr.bf16.mxu0 %v5209
  %6942 = vmatpush1.bf16.msra.mxu0 %v5208
  %6943 = vmatprep.subr.bf16.mxu0 %v5217
  %6944 = vmatpush1.bf16.msra.mxu0 %v5216
  %6945 = vmatprep.subr.bf16.mxu0 %v5225
  %6946 = vmatpush1.bf16.msra.mxu0 %v5224
  %6947 = vmatprep.subr.bf16.mxu0 %v5233
  %6948 = vmatpush1.bf16.msra.mxu0 %v5232
  %6949 = vmatprep.subr.bf16.mxu0 %v5241
  %6950 = vmatpush1.bf16.msra.mxu0 %v5240
  %6951 = vmatprep.subr.bf16.mxu0 %v5249
  %6952 = vmatpush1.bf16.msra.mxu0 %v5248
  %6953 = vmatprep.subr.bf16.mxu0 %v5257
  %6954 = vmatpush1.bf16.msra.mxu0 %v5256
  %6955 = vmatprep.mubr.bf16.mxu0 %v605
  %6956 = vmatmul.mubr.bf16.gmra.mrb[0].mxu0 %v604
  %v6957 = vpop.f32.mrb[0].mxu0
  %v6958 = vadd.f32 %v6917, %v6957
  %v6959 = vpop.f32.mrb[0].mxu0
  %v6960 = vadd.f32 %v6919, %v6959
  %v6961 = vpop.f32.mrb[0].mxu0
  %v6962 = vpop.f32.mrb[0].mxu0
  %6963 = vdwg.mxu0
  %6964 = vmatprep.subr.bf16.mxu0 %v5265
  %6965 = vmatpush1.bf16.msra.mxu0 %v5264
  %6966 = vmatprep.subr.bf16.mxu0 %v5273
  %6967 = vmatpush1.bf16.msra.mxu0 %v5272
  %6968 = vmatprep.subr.bf16.mxu0 %v5281
  %6969 = vmatpush1.bf16.msra.mxu0 %v5280
  %6970 = vmatprep.subr.bf16.mxu0 %v5289
  %6971 = vmatpush1.bf16.msra.mxu0 %v5288
  %6972 = vmatprep.subr.bf16.mxu0 %v5297
  %6973 = vmatpush1.bf16.msra.mxu0 %v5296
  %6974 = vmatprep.subr.bf16.mxu0 %v5305
  %6975 = vmatpush1.bf16.msra.mxu0 %v5304
  %6976 = vmatprep.subr.bf16.mxu0 %v5313
  %6977 = vmatpush1.bf16.msra.mxu0 %v5312
  %6978 = vmatprep.subr.bf16.mxu0 %v5321
  %6979 = vmatpush1.bf16.msra.mxu0 %v5320
  %6980 = vmatprep.subr.bf16.mxu0 %v5329
  %6981 = vmatpush1.bf16.msra.mxu0 %v5328
  %6982 = vmatprep.subr.bf16.mxu0 %v5337
  %6983 = vmatpush1.bf16.msra.mxu0 %v5336
  %6984 = vmatprep.subr.bf16.mxu0 %v5345
  %6985 = vmatpush1.bf16.msra.mxu0 %v5344
  %6986 = vmatprep.subr.bf16.mxu0 %v5353
  %6987 = vmatpush1.bf16.msra.mxu0 %v5352
  %6988 = vmatprep.subr.bf16.mxu0 %v5361
  %6989 = vmatpush1.bf16.msra.mxu0 %v5360
  %6990 = vmatprep.subr.bf16.mxu0 %v5369
  %6991 = vmatpush1.bf16.msra.mxu0 %v5368
  %6992 = vmatprep.subr.bf16.mxu0 %v5377
  %6993 = vmatpush1.bf16.msra.mxu0 %v5376
  %6994 = vmatprep.subr.bf16.mxu0 %v5385
  %6995 = vmatpush1.bf16.msra.mxu0 %v5384
  %6996 = vmatprep.mubr.bf16.mxu0 %v607
  %6997 = vmatmul.mubr.bf16.gmra.mrb[0].mxu0 %v606
  %v6998 = vpop.f32.mrb[0].mxu0
  %v6999 = vadd.f32 %v6958, %v6998
  %v7000 = vpop.f32.mrb[0].mxu0
  %v7001 = vadd.f32 %v6960, %v7000
  %v7002 = vpop.f32.mrb[0].mxu0
  %v7003 = vpop.f32.mrb[0].mxu0
  %7004 = vdwg.mxu0
  %7005 = vmatprep.subr.bf16.mxu0 %v5393
  %7006 = vmatpush1.bf16.msra.mxu0 %v5392
  %7007 = vmatprep.subr.bf16.mxu0 %v5401
  %7008 = vmatpush1.bf16.msra.mxu0 %v5400
  %7009 = vmatprep.subr.bf16.mxu0 %v5409
  %7010 = vmatpush1.bf16.msra.mxu0 %v5408
  %7011 = vmatprep.subr.bf16.mxu0 %v5417
  %7012 = vmatpush1.bf16.msra.mxu0 %v5416
  %7013 = vmatprep.subr.bf16.mxu0 %v5425
  %7014 = vmatpush1.bf16.msra.mxu0 %v5424
  %7015 = vmatprep.subr.bf16.mxu0 %v5433
  %7016 = vmatpush1.bf16.msra.mxu0 %v5432
  %7017 = vmatprep.subr.bf16.mxu0 %v5441
  %7018 = vmatpush1.bf16.msra.mxu0 %v5440
  %7019 = vmatprep.subr.bf16.mxu0 %v5449
  %7020 = vmatpush1.bf16.msra.mxu0 %v5448
  %7021 = vmatprep.subr.bf16.mxu0 %v5457
  %7022 = vmatpush1.bf16.msra.mxu0 %v5456
  %7023 = vmatprep.subr.bf16.mxu0 %v5465
  %7024 = vmatpush1.bf16.msra.mxu0 %v5464
  %7025 = vmatprep.subr.bf16.mxu0 %v5473
  %7026 = vmatpush1.bf16.msra.mxu0 %v5472
  %7027 = vmatprep.subr.bf16.mxu0 %v5481
  %7028 = vmatpush1.bf16.msra.mxu0 %v5480
  %7029 = vmatprep.subr.bf16.mxu0 %v5489
  %7030 = vmatpush1.bf16.msra.mxu0 %v5488
  %7031 = vmatprep.subr.bf16.mxu0 %v5497
  %7032 = vmatpush1.bf16.msra.mxu0 %v5496
  %7033 = vmatprep.subr.bf16.mxu0 %v5505
  %7034 = vmatpush1.bf16.msra.mxu0 %v5504
  %7035 = vmatprep.subr.bf16.mxu0 %v5513
  %7036 = vmatpush1.bf16.msra.mxu0 %v5512
  %7037 = vmatprep.mubr.bf16.mxu0 %v609
  %7038 = vmatmul.mubr.bf16.gmra.mrb[0].mxu0 %v608
  %v7039 = vpop.f32.mrb[0].mxu0
  %v7040 = vadd.f32 %v6999, %v7039
  %v7041 = vpop.f32.mrb[0].mxu0
  %v7042 = vadd.f32 %v7001, %v7041
  %v7043 = vpop.f32.mrb[0].mxu0
  %v7044 = vpop.f32.mrb[0].mxu0
  %7045 = vdwg.mxu0
  %7046 = vmatprep.subr.bf16.mxu0 %v5521
  %7047 = vmatpush1.bf16.msra.mxu0 %v5520
  %7048 = vmatprep.subr.bf16.mxu0 %v5529
  %7049 = vmatpush1.bf16.msra.mxu0 %v5528
  %7050 = vmatprep.subr.bf16.mxu0 %v5537
  %7051 = vmatpush1.bf16.msra.mxu0 %v5536
  %7052 = vmatprep.subr.bf16.mxu0 %v5545
  %7053 = vmatpush1.bf16.msra.mxu0 %v5544
  %7054 = vmatprep.subr.bf16.mxu0 %v5553
  %7055 = vmatpush1.bf16.msra.mxu0 %v5552
  %7056 = vmatprep.subr.bf16.mxu0 %v5561
  %7057 = vmatpush1.bf16.msra.mxu0 %v5560
  %7058 = vmatprep.subr.bf16.mxu0 %v5569
  %7059 = vmatpush1.bf16.msra.mxu0 %v5568
  %7060 = vmatprep.subr.bf16.mxu0 %v5577
  %7061 = vmatpush1.bf16.msra.mxu0 %v5576
  %7062 = vmatprep.subr.bf16.mxu0 %v5585
  %7063 = vmatpush1.bf16.msra.mxu0 %v5584
  %7064 = vmatprep.subr.bf16.mxu0 %v5593
  %7065 = vmatpush1.bf16.msra.mxu0 %v5592
  %7066 = vmatprep.subr.bf16.mxu0 %v5601
  %7067 = vmatpush1.bf16.msra.mxu0 %v5600
  %7068 = vmatprep.subr.bf16.mxu0 %v5609
  %7069 = vmatpush1.bf16.msra.mxu0 %v5608
  %7070 = vmatprep.subr.bf16.mxu0 %v5617
  %7071 = vmatpush1.bf16.msra.mxu0 %v5616
  %7072 = vmatprep.subr.bf16.mxu0 %v5625
  %7073 = vmatpush1.bf16.msra.mxu0 %v5624
  %7074 = vmatprep.subr.bf16.mxu0 %v5633
  %7075 = vmatpush1.bf16.msra.mxu0 %v5632
  %7076 = vmatprep.subr.bf16.mxu0 %v5641
  %7077 = vmatpush1.bf16.msra.mxu0 %v5640
  %7078 = vmatprep.mubr.bf16.mxu0 %v611
  %7079 = vmatmul.mubr.bf16.gmra.mrb[0].mxu0 %v610
  %v7080 = vpop.f32.mrb[0].mxu0
  %v7081 = vadd.f32 %v7040, %v7080
  %v7082 = vpop.f32.mrb[0].mxu0
  %v7083 = vadd.f32 %v7042, %v7082
  %v7084 = vpop.f32.mrb[0].mxu0
  %v7085 = vpop.f32.mrb[0].mxu0
  %7086 = vdwg.mxu0
  %7087 = vmatprep.subr.bf16.mxu0 %v5649
  %7088 = vmatpush1.bf16.msra.mxu0 %v5648
  %7089 = vmatprep.subr.bf16.mxu0 %v5657
  %7090 = vmatpush1.bf16.msra.mxu0 %v5656
  %7091 = vmatprep.subr.bf16.mxu0 %v5665
  %7092 = vmatpush1.bf16.msra.mxu0 %v5664
  %7093 = vmatprep.subr.bf16.mxu0 %v5673
  %7094 = vmatpush1.bf16.msra.mxu0 %v5672
  %7095 = vmatprep.subr.bf16.mxu0 %v5681
  %7096 = vmatpush1.bf16.msra.mxu0 %v5680
  %7097 = vmatprep.subr.bf16.mxu0 %v5689
  %7098 = vmatpush1.bf16.msra.mxu0 %v5688
  %7099 = vmatprep.subr.bf16.mxu0 %v5697
  %7100 = vmatpush1.bf16.msra.mxu0 %v5696
  %7101 = vmatprep.subr.bf16.mxu0 %v5705
  %7102 = vmatpush1.bf16.msra.mxu0 %v5704
  %7103 = vmatprep.subr.bf16.mxu0 %v5713
  %7104 = vmatpush1.bf16.msra.mxu0 %v5712
  %7105 = vmatprep.subr.bf16.mxu0 %v5721
  %7106 = vmatpush1.bf16.msra.mxu0 %v5720
  %7107 = vmatprep.subr.bf16.mxu0 %v5729
  %7108 = vmatpush1.bf16.msra.mxu0 %v5728
  %7109 = vmatprep.subr.bf16.mxu0 %v5737
  %7110 = vmatpush1.bf16.msra.mxu0 %v5736
  %7111 = vmatprep.subr.bf16.mxu0 %v5745
  %7112 = vmatpush1.bf16.msra.mxu0 %v5744
  %7113 = vmatprep.subr.bf16.mxu0 %v5753
  %7114 = vmatpush1.bf16.msra.mxu0 %v5752
  %7115 = vmatprep.subr.bf16.mxu0 %v5761
  %7116 = vmatpush1.bf16.msra.mxu0 %v5760
  %7117 = vmatprep.subr.bf16.mxu0 %v5769
  %7118 = vmatpush1.bf16.msra.mxu0 %v5768
  %7119 = vmatprep.mubr.bf16.mxu0 %v613
  %7120 = vmatmul.mubr.bf16.gmra.mrb[0].mxu0 %v612
  %v7121 = vpop.f32.mrb[0].mxu0
  %v7122 = vadd.f32 %v7081, %v7121
  %v7123 = vpop.f32.mrb[0].mxu0
  %v7124 = vadd.f32 %v7083, %v7123
  %v7125 = vpop.f32.mrb[0].mxu0
  %v7126 = vpop.f32.mrb[0].mxu0
  %7127 = vdwg.mxu0
  %7128 = vmatprep.subr.bf16.mxu0 %v4755
  %7129 = vmatpush1.bf16.msra.mxu0 %v4754
  %7130 = vmatprep.subr.bf16.mxu0 %v4763
  %7131 = vmatpush1.bf16.msra.mxu0 %v4762
  %7132 = vmatprep.subr.bf16.mxu0 %v4771
  %7133 = vmatpush1.bf16.msra.mxu0 %v4770
  %7134 = vmatprep.subr.bf16.mxu0 %v4779
  %7135 = vmatpush1.bf16.msra.mxu0 %v4778
  %7136 = vmatprep.subr.bf16.mxu0 %v4787
  %7137 = vmatpush1.bf16.msra.mxu0 %v4786
  %7138 = vmatprep.subr.bf16.mxu0 %v4795
  %7139 = vmatpush1.bf16.msra.mxu0 %v4794
  %7140 = vmatprep.subr.bf16.mxu0 %v4803
  %7141 = vmatpush1.bf16.msra.mxu0 %v4802
  %7142 = vmatprep.subr.bf16.mxu0 %v4811
  %7143 = vmatpush1.bf16.msra.mxu0 %v4810
  %7144 = vmatprep.subr.bf16.mxu0 %v4819
  %7145 = vmatpush1.bf16.msra.mxu0 %v4818
  %7146 = vmatprep.subr.bf16.mxu0 %v4827
  %7147 = vmatpush1.bf16.msra.mxu0 %v4826
  %7148 = vmatprep.subr.bf16.mxu0 %v4835
  %7149 = vmatpush1.bf16.msra.mxu0 %v4834
  %7150 = vmatprep.subr.bf16.mxu0 %v4843
  %7151 = vmatpush1.bf16.msra.mxu0 %v4842
  %7152 = vmatprep.subr.bf16.mxu0 %v4851
  %7153 = vmatpush1.bf16.msra.mxu0 %v4850
  %7154 = vmatprep.subr.bf16.mxu0 %v4859
  %7155 = vmatpush1.bf16.msra.mxu0 %v4858
  %7156 = vmatprep.subr.bf16.mxu0 %v4867
  %7157 = vmatpush1.bf16.msra.mxu0 %v4866
  %7158 = vmatprep.subr.bf16.mxu0 %v4875
  %7159 = vmatpush1.bf16.msra.mxu0 %v4874
  %7160 = vmatprep.mubr.bf16.mxu0 %v599
  %7161 = vmatmul.mubr.bf16.gmra.mrb[0].mxu0 %v598
  %v7162 = vpop.f32.mrb[0].mxu0
  %v7163 = vadd.f32 %v1651, %v7162
  %v7164 = vpop.f32.mrb[0].mxu0
  %v7165 = vadd.f32 %v1655, %v7164
  %v7166 = vpop.f32.mrb[0].mxu0
  %v7167 = vpop.f32.mrb[0].mxu0
  %7168 = vdwg.mxu0
  %7169 = vmatprep.subr.bf16.mxu0 %v4883
  %7170 = vmatpush1.bf16.msra.mxu0 %v4882
  %7171 = vmatprep.subr.bf16.mxu0 %v4891
  %7172 = vmatpush1.bf16.msra.mxu0 %v4890
  %7173 = vmatprep.subr.bf16.mxu0 %v4899
  %7174 = vmatpush1.bf16.msra.mxu0 %v4898
  %7175 = vmatprep.subr.bf16.mxu0 %v4907
  %7176 = vmatpush1.bf16.msra.mxu0 %v4906
  %7177 = vmatprep.subr.bf16.mxu0 %v4915
  %7178 = vmatpush1.bf16.msra.mxu0 %v4914
  %7179 = vmatprep.subr.bf16.mxu0 %v4923
  %7180 = vmatpush1.bf16.msra.mxu0 %v4922
  %7181 = vmatprep.subr.bf16.mxu0 %v4931
  %7182 = vmatpush1.bf16.msra.mxu0 %v4930
  %7183 = vmatprep.subr.bf16.mxu0 %v4939
  %7184 = vmatpush1.bf16.msra.mxu0 %v4938
  %7185 = vmatprep.subr.bf16.mxu0 %v4947
  %7186 = vmatpush1.bf16.msra.mxu0 %v4946
  %7187 = vmatprep.subr.bf16.mxu0 %v4955
  %7188 = vmatpush1.bf16.msra.mxu0 %v4954
  %7189 = vmatprep.subr.bf16.mxu0 %v4963
  %7190 = vmatpush1.bf16.msra.mxu0 %v4962
  %7191 = vmatprep.subr.bf16.mxu0 %v4971
  %7192 = vmatpush1.bf16.msra.mxu0 %v4970
  %7193 = vmatprep.subr.bf16.mxu0 %v4979
  %7194 = vmatpush1.bf16.msra.mxu0 %v4978
  %7195 = vmatprep.subr.bf16.mxu0 %v4987
  %7196 = vmatpush1.bf16.msra.mxu0 %v4986
  %7197 = vmatprep.subr.bf16.mxu0 %v4995
  %7198 = vmatpush1.bf16.msra.mxu0 %v4994
  %7199 = vmatprep.subr.bf16.mxu0 %v5003
  %7200 = vmatpush1.bf16.msra.mxu0 %v5002
  %7201 = vmatprep.mubr.bf16.mxu0 %v601
  %7202 = vmatmul.mubr.bf16.gmra.mrb[0].mxu0 %v600
  %v7203 = vpop.f32.mrb[0].mxu0
  %v7204 = vadd.f32 %v7163, %v7203
  %v7205 = vpop.f32.mrb[0].mxu0
  %v7206 = vadd.f32 %v7165, %v7205
  %v7207 = vpop.f32.mrb[0].mxu0
  %v7208 = vpop.f32.mrb[0].mxu0
  %7209 = vdwg.mxu0
  %7210 = vmatprep.subr.bf16.mxu0 %v5011
  %7211 = vmatpush1.bf16.msra.mxu0 %v5010
  %7212 = vmatprep.subr.bf16.mxu0 %v5019
  %7213 = vmatpush1.bf16.msra.mxu0 %v5018
  %7214 = vmatprep.subr.bf16.mxu0 %v5027
  %7215 = vmatpush1.bf16.msra.mxu0 %v5026
  %7216 = vmatprep.subr.bf16.mxu0 %v5035
  %7217 = vmatpush1.bf16.msra.mxu0 %v5034
  %7218 = vmatprep.subr.bf16.mxu0 %v5043
  %7219 = vmatpush1.bf16.msra.mxu0 %v5042
  %7220 = vmatprep.subr.bf16.mxu0 %v5051
  %7221 = vmatpush1.bf16.msra.mxu0 %v5050
  %7222 = vmatprep.subr.bf16.mxu0 %v5059
  %7223 = vmatpush1.bf16.msra.mxu0 %v5058
  %7224 = vmatprep.subr.bf16.mxu0 %v5067
  %7225 = vmatpush1.bf16.msra.mxu0 %v5066
  %7226 = vmatprep.subr.bf16.mxu0 %v5075
  %7227 = vmatpush1.bf16.msra.mxu0 %v5074
  %7228 = vmatprep.subr.bf16.mxu0 %v5083
  %7229 = vmatpush1.bf16.msra.mxu0 %v5082
  %7230 = vmatprep.subr.bf16.mxu0 %v5091
  %7231 = vmatpush1.bf16.msra.mxu0 %v5090
  %7232 = vmatprep.subr.bf16.mxu0 %v5099
  %7233 = vmatpush1.bf16.msra.mxu0 %v5098
  %7234 = vmatprep.subr.bf16.mxu0 %v5107
  %7235 = vmatpush1.bf16.msra.mxu0 %v5106
  %7236 = vmatprep.subr.bf16.mxu0 %v5115
  %7237 = vmatpush1.bf16.msra.mxu0 %v5114
  %7238 = vmatprep.subr.bf16.mxu0 %v5123
  %7239 = vmatpush1.bf16.msra.mxu0 %v5122
  %7240 = vmatprep.subr.bf16.mxu0 %v5131
  %7241 = vmatpush1.bf16.msra.mxu0 %v5130
  %7242 = vmatprep.mubr.bf16.mxu0 %v603
  %7243 = vmatmul.mubr.bf16.gmra.mrb[0].mxu0 %v602
  %v7244 = vpop.f32.mrb[0].mxu0
  %v7245 = vadd.f32 %v7204, %v7244
  %v7246 = vpop.f32.mrb[0].mxu0
  %v7247 = vadd.f32 %v7206, %v7246
  %v7248 = vpop.f32.mrb[0].mxu0
  %v7249 = vpop.f32.mrb[0].mxu0
  %7250 = vdwg.mxu0
  %7251 = vmatprep.subr.bf16.mxu0 %v5139
  %7252 = vmatpush1.bf16.msra.mxu0 %v5138
  %7253 = vmatprep.subr.bf16.mxu0 %v5147
  %7254 = vmatpush1.bf16.msra.mxu0 %v5146
  %7255 = vmatprep.subr.bf16.mxu0 %v5155
  %7256 = vmatpush1.bf16.msra.mxu0 %v5154
  %7257 = vmatprep.subr.bf16.mxu0 %v5163
  %7258 = vmatpush1.bf16.msra.mxu0 %v5162
  %7259 = vmatprep.subr.bf16.mxu0 %v5171
  %7260 = vmatpush1.bf16.msra.mxu0 %v5170
  %7261 = vmatprep.subr.bf16.mxu0 %v5179
  %7262 = vmatpush1.bf16.msra.mxu0 %v5178
  %7263 = vmatprep.subr.bf16.mxu0 %v5187
  %7264 = vmatpush1.bf16.msra.mxu0 %v5186
  %7265 = vmatprep.subr.bf16.mxu0 %v5195
  %7266 = vmatpush1.bf16.msra.mxu0 %v5194
  %7267 = vmatprep.subr.bf16.mxu0 %v5203
  %7268 = vmatpush1.bf16.msra.mxu0 %v5202
  %7269 = vmatprep.subr.bf16.mxu0 %v5211
  %7270 = vmatpush1.bf16.msra.mxu0 %v5210
  %7271 = vmatprep.subr.bf16.mxu0 %v5219
  %7272 = vmatpush1.bf16.msra.mxu0 %v5218
  %7273 = vmatprep.subr.bf16.mxu0 %v5227
  %7274 = vmatpush1.bf16.msra.mxu0 %v5226
  %7275 = vmatprep.subr.bf16.mxu0 %v5235
  %7276 = vmatpush1.bf16.msra.mxu0 %v5234
  %7277 = vmatprep.subr.bf16.mxu0 %v5243
  %7278 = vmatpush1.bf16.msra.mxu0 %v5242
  %7279 = vmatprep.subr.bf16.mxu0 %v5251
  %7280 = vmatpush1.bf16.msra.mxu0 %v5250
  %7281 = vmatprep.subr.bf16.mxu0 %v5259
  %7282 = vmatpush1.bf16.msra.mxu0 %v5258
  %7283 = vmatprep.mubr.bf16.mxu0 %v605
  %7284 = vmatmul.mubr.bf16.gmra.mrb[0].mxu0 %v604
  %v7285 = vpop.f32.mrb[0].mxu0
  %v7286 = vadd.f32 %v7245, %v7285
  %v7287 = vpop.f32.mrb[0].mxu0
  %v7288 = vadd.f32 %v7247, %v7287
  %v7289 = vpop.f32.mrb[0].mxu0
  %v7290 = vpop.f32.mrb[0].mxu0
  %7291 = vdwg.mxu0
  %7292 = vmatprep.subr.bf16.mxu0 %v5267
  %7293 = vmatpush1.bf16.msra.mxu0 %v5266
  %7294 = vmatprep.subr.bf16.mxu0 %v5275
  %7295 = vmatpush1.bf16.msra.mxu0 %v5274
  %7296 = vmatprep.subr.bf16.mxu0 %v5283
  %7297 = vmatpush1.bf16.msra.mxu0 %v5282
  %7298 = vmatprep.subr.bf16.mxu0 %v5291
  %7299 = vmatpush1.bf16.msra.mxu0 %v5290
  %7300 = vmatprep.subr.bf16.mxu0 %v5299
  %7301 = vmatpush1.bf16.msra.mxu0 %v5298
  %7302 = vmatprep.subr.bf16.mxu0 %v5307
  %7303 = vmatpush1.bf16.msra.mxu0 %v5306
  %7304 = vmatprep.subr.bf16.mxu0 %v5315
  %7305 = vmatpush1.bf16.msra.mxu0 %v5314
  %7306 = vmatprep.subr.bf16.mxu0 %v5323
  %7307 = vmatpush1.bf16.msra.mxu0 %v5322
  %7308 = vmatprep.subr.bf16.mxu0 %v5331
  %7309 = vmatpush1.bf16.msra.mxu0 %v5330
  %7310 = vmatprep.subr.bf16.mxu0 %v5339
  %7311 = vmatpush1.bf16.msra.mxu0 %v5338
  %7312 = vmatprep.subr.bf16.mxu0 %v5347
  %7313 = vmatpush1.bf16.msra.mxu0 %v5346
  %7314 = vmatprep.subr.bf16.mxu0 %v5355
  %7315 = vmatpush1.bf16.msra.mxu0 %v5354
  %7316 = vmatprep.subr.bf16.mxu0 %v5363
  %7317 = vmatpush1.bf16.msra.mxu0 %v5362
  %7318 = vmatprep.subr.bf16.mxu0 %v5371
  %7319 = vmatpush1.bf16.msra.mxu0 %v5370
  %7320 = vmatprep.subr.bf16.mxu0 %v5379
  %7321 = vmatpush1.bf16.msra.mxu0 %v5378
  %7322 = vmatprep.subr.bf16.mxu0 %v5387
  %7323 = vmatpush1.bf16.msra.mxu0 %v5386
  %7324 = vmatprep.mubr.bf16.mxu0 %v607
  %7325 = vmatmul.mubr.bf16.gmra.mrb[0].mxu0 %v606
  %v7326 = vpop.f32.mrb[0].mxu0
  %v7327 = vadd.f32 %v7286, %v7326
  %v7328 = vpop.f32.mrb[0].mxu0
  %v7329 = vadd.f32 %v7288, %v7328
  %v7330 = vpop.f32.mrb[0].mxu0
  %v7331 = vpop.f32.mrb[0].mxu0
  %7332 = vdwg.mxu0
  %7333 = vmatprep.subr.bf16.mxu0 %v5395
  %7334 = vmatpush1.bf16.msra.mxu0 %v5394
  %7335 = vmatprep.subr.bf16.mxu0 %v5403
  %7336 = vmatpush1.bf16.msra.mxu0 %v5402
  %7337 = vmatprep.subr.bf16.mxu0 %v5411
  %7338 = vmatpush1.bf16.msra.mxu0 %v5410
  %7339 = vmatprep.subr.bf16.mxu0 %v5419
  %7340 = vmatpush1.bf16.msra.mxu0 %v5418
  %7341 = vmatprep.subr.bf16.mxu0 %v5427
  %7342 = vmatpush1.bf16.msra.mxu0 %v5426
  %7343 = vmatprep.subr.bf16.mxu0 %v5435
  %7344 = vmatpush1.bf16.msra.mxu0 %v5434
  %7345 = vmatprep.subr.bf16.mxu0 %v5443
  %7346 = vmatpush1.bf16.msra.mxu0 %v5442
  %7347 = vmatprep.subr.bf16.mxu0 %v5451
  %7348 = vmatpush1.bf16.msra.mxu0 %v5450
  %7349 = vmatprep.subr.bf16.mxu0 %v5459
  %7350 = vmatpush1.bf16.msra.mxu0 %v5458
  %7351 = vmatprep.subr.bf16.mxu0 %v5467
  %7352 = vmatpush1.bf16.msra.mxu0 %v5466
  %7353 = vmatprep.subr.bf16.mxu0 %v5475
  %7354 = vmatpush1.bf16.msra.mxu0 %v5474
  %7355 = vmatprep.subr.bf16.mxu0 %v5483
  %7356 = vmatpush1.bf16.msra.mxu0 %v5482
  %7357 = vmatprep.subr.bf16.mxu0 %v5491
  %7358 = vmatpush1.bf16.msra.mxu0 %v5490
  %7359 = vmatprep.subr.bf16.mxu0 %v5499
  %7360 = vmatpush1.bf16.msra.mxu0 %v5498
  %7361 = vmatprep.subr.bf16.mxu0 %v5507
  %7362 = vmatpush1.bf16.msra.mxu0 %v5506
  %7363 = vmatprep.subr.bf16.mxu0 %v5515
  %7364 = vmatpush1.bf16.msra.mxu0 %v5514
  %7365 = vmatprep.mubr.bf16.mxu0 %v609
  %7366 = vmatmul.mubr.bf16.gmra.mrb[0].mxu0 %v608
  %v7367 = vpop.f32.mrb[0].mxu0
  %v7368 = vadd.f32 %v7327, %v7367
  %v7369 = vpop.f32.mrb[0].mxu0
  %v7370 = vadd.f32 %v7329, %v7369
  %v7371 = vpop.f32.mrb[0].mxu0
  %v7372 = vpop.f32.mrb[0].mxu0
  %7373 = vdwg.mxu0
  %7374 = vmatprep.subr.bf16.mxu0 %v5523
  %7375 = vmatpush1.bf16.msra.mxu0 %v5522
  %7376 = vmatprep.subr.bf16.mxu0 %v5531
  %7377 = vmatpush1.bf16.msra.mxu0 %v5530
  %7378 = vmatprep.subr.bf16.mxu0 %v5539
  %7379 = vmatpush1.bf16.msra.mxu0 %v5538
  %7380 = vmatprep.subr.bf16.mxu0 %v5547
  %7381 = vmatpush1.bf16.msra.mxu0 %v5546
  %7382 = vmatprep.subr.bf16.mxu0 %v5555
  %7383 = vmatpush1.bf16.msra.mxu0 %v5554
  %7384 = vmatprep.subr.bf16.mxu0 %v5563
  %7385 = vmatpush1.bf16.msra.mxu0 %v5562
  %7386 = vmatprep.subr.bf16.mxu0 %v5571
  %7387 = vmatpush1.bf16.msra.mxu0 %v5570
  %7388 = vmatprep.subr.bf16.mxu0 %v5579
  %7389 = vmatpush1.bf16.msra.mxu0 %v5578
  %7390 = vmatprep.subr.bf16.mxu0 %v5587
  %7391 = vmatpush1.bf16.msra.mxu0 %v5586
  %7392 = vmatprep.subr.bf16.mxu0 %v5595
  %7393 = vmatpush1.bf16.msra.mxu0 %v5594
  %7394 = vmatprep.subr.bf16.mxu0 %v5603
  %7395 = vmatpush1.bf16.msra.mxu0 %v5602
  %7396 = vmatprep.subr.bf16.mxu0 %v5611
  %7397 = vmatpush1.bf16.msra.mxu0 %v5610
  %7398 = vmatprep.subr.bf16.mxu0 %v5619
  %7399 = vmatpush1.bf16.msra.mxu0 %v5618
  %7400 = vmatprep.subr.bf16.mxu0 %v5627
  %7401 = vmatpush1.bf16.msra.mxu0 %v5626
  %7402 = vmatprep.subr.bf16.mxu0 %v5635
  %7403 = vmatpush1.bf16.msra.mxu0 %v5634
  %7404 = vmatprep.subr.bf16.mxu0 %v5643
  %7405 = vmatpush1.bf16.msra.mxu0 %v5642
  %7406 = vmatprep.mubr.bf16.mxu0 %v611
  %7407 = vmatmul.mubr.bf16.gmra.mrb[0].mxu0 %v610
  %v7408 = vpop.f32.mrb[0].mxu0
  %v7409 = vadd.f32 %v7368, %v7408
  %v7410 = vpop.f32.mrb[0].mxu0
  %v7411 = vadd.f32 %v7370, %v7410
  %v7412 = vpop.f32.mrb[0].mxu0
  %v7413 = vpop.f32.mrb[0].mxu0
  %7414 = vdwg.mxu0
  %7415 = vmatprep.subr.bf16.mxu0 %v5651
  %7416 = vmatpush1.bf16.msra.mxu0 %v5650
  %7417 = vmatprep.subr.bf16.mxu0 %v5659
  %7418 = vmatpush1.bf16.msra.mxu0 %v5658
  %7419 = vmatprep.subr.bf16.mxu0 %v5667
  %7420 = vmatpush1.bf16.msra.mxu0 %v5666
  %7421 = vmatprep.subr.bf16.mxu0 %v5675
  %7422 = vmatpush1.bf16.msra.mxu0 %v5674
  %7423 = vmatprep.subr.bf16.mxu0 %v5683
  %7424 = vmatpush1.bf16.msra.mxu0 %v5682
  %7425 = vmatprep.subr.bf16.mxu0 %v5691
  %7426 = vmatpush1.bf16.msra.mxu0 %v5690
  %7427 = vmatprep.subr.bf16.mxu0 %v5699
  %7428 = vmatpush1.bf16.msra.mxu0 %v5698
  %7429 = vmatprep.subr.bf16.mxu0 %v5707
  %7430 = vmatpush1.bf16.msra.mxu0 %v5706
  %7431 = vmatprep.subr.bf16.mxu0 %v5715
  %7432 = vmatpush1.bf16.msra.mxu0 %v5714
  %7433 = vmatprep.subr.bf16.mxu0 %v5723
  %7434 = vmatpush1.bf16.msra.mxu0 %v5722
  %7435 = vmatprep.subr.bf16.mxu0 %v5731
  %7436 = vmatpush1.bf16.msra.mxu0 %v5730
  %7437 = vmatprep.subr.bf16.mxu0 %v5739
  %7438 = vmatpush1.bf16.msra.mxu0 %v5738
  %7439 = vmatprep.subr.bf16.mxu0 %v5747
  %7440 = vmatpush1.bf16.msra.mxu0 %v5746
  %7441 = vmatprep.subr.bf16.mxu0 %v5755
  %7442 = vmatpush1.bf16.msra.mxu0 %v5754
  %7443 = vmatprep.subr.bf16.mxu0 %v5763
  %7444 = vmatpush1.bf16.msra.mxu0 %v5762
  %7445 = vmatprep.subr.bf16.mxu0 %v5771
  %7446 = vmatpush1.bf16.msra.mxu0 %v5770
  %7447 = vmatprep.mubr.bf16.mxu0 %v613
  %7448 = vmatmul.mubr.bf16.gmra.mrb[0].mxu0 %v612
  %v7449 = vpop.f32.mrb[0].mxu0
  %v7450 = vadd.f32 %v7409, %v7449
  %v7451 = vpop.f32.mrb[0].mxu0
  %v7452 = vadd.f32 %v7411, %v7451
  %v7453 = vpop.f32.mrb[0].mxu0
  %v7454 = vpop.f32.mrb[0].mxu0
  %7455 = vdwg.mxu0
  %7456 = vmatprep.subr.bf16.mxu0 %v4757
  %7457 = vmatpush1.bf16.msra.mxu0 %v4756
  %7458 = vmatprep.subr.bf16.mxu0 %v4765
  %7459 = vmatpush1.bf16.msra.mxu0 %v4764
  %7460 = vmatprep.subr.bf16.mxu0 %v4773
  %7461 = vmatpush1.bf16.msra.mxu0 %v4772
  %7462 = vmatprep.subr.bf16.mxu0 %v4781
  %7463 = vmatpush1.bf16.msra.mxu0 %v4780
  %7464 = vmatprep.subr.bf16.mxu0 %v4789
  %7465 = vmatpush1.bf16.msra.mxu0 %v4788
  %7466 = vmatprep.subr.bf16.mxu0 %v4797
  %7467 = vmatpush1.bf16.msra.mxu0 %v4796
  %7468 = vmatprep.subr.bf16.mxu0 %v4805
  %7469 = vmatpush1.bf16.msra.mxu0 %v4804
  %7470 = vmatprep.subr.bf16.mxu0 %v4813
  %7471 = vmatpush1.bf16.msra.mxu0 %v4812
  %7472 = vmatprep.subr.bf16.mxu0 %v4821
  %7473 = vmatpush1.bf16.msra.mxu0 %v4820
  %7474 = vmatprep.subr.bf16.mxu0 %v4829
  %7475 = vmatpush1.bf16.msra.mxu0 %v4828
  %7476 = vmatprep.subr.bf16.mxu0 %v4837
  %7477 = vmatpush1.bf16.msra.mxu0 %v4836
  %7478 = vmatprep.subr.bf16.mxu0 %v4845
  %7479 = vmatpush1.bf16.msra.mxu0 %v4844
  %7480 = vmatprep.subr.bf16.mxu0 %v4853
  %7481 = vmatpush1.bf16.msra.mxu0 %v4852
  %7482 = vmatprep.subr.bf16.mxu0 %v4861
  %7483 = vmatpush1.bf16.msra.mxu0 %v4860
  %7484 = vmatprep.subr.bf16.mxu0 %v4869
  %7485 = vmatpush1.bf16.msra.mxu0 %v4868
  %7486 = vmatprep.subr.bf16.mxu0 %v4877
  %7487 = vmatpush1.bf16.msra.mxu0 %v4876
  %7488 = vmatprep.mubr.bf16.mxu0 %v599
  %7489 = vmatmul.mubr.bf16.gmra.mrb[0].mxu0 %v598
  %v7490 = vpop.f32.mrb[0].mxu0
  %v7491 = vadd.f32 %v1659, %v7490
  %v7492 = vpop.f32.mrb[0].mxu0
  %v7493 = vadd.f32 %v1663, %v7492
  %v7494 = vpop.f32.mrb[0].mxu0
  %v7495 = vpop.f32.mrb[0].mxu0
  %7496 = vdwg.mxu0
  %7497 = vmatprep.subr.bf16.mxu0 %v4885
  %7498 = vmatpush1.bf16.msra.mxu0 %v4884
  %7499 = vmatprep.subr.bf16.mxu0 %v4893
  %7500 = vmatpush1.bf16.msra.mxu0 %v4892
  %7501 = vmatprep.subr.bf16.mxu0 %v4901
  %7502 = vmatpush1.bf16.msra.mxu0 %v4900
  %7503 = vmatprep.subr.bf16.mxu0 %v4909
  %7504 = vmatpush1.bf16.msra.mxu0 %v4908
  %7505 = vmatprep.subr.bf16.mxu0 %v4917
  %7506 = vmatpush1.bf16.msra.mxu0 %v4916
  %7507 = vmatprep.subr.bf16.mxu0 %v4925
  %7508 = vmatpush1.bf16.msra.mxu0 %v4924
  %7509 = vmatprep.subr.bf16.mxu0 %v4933
  %7510 = vmatpush1.bf16.msra.mxu0 %v4932
  %7511 = vmatprep.subr.bf16.mxu0 %v4941
  %7512 = vmatpush1.bf16.msra.mxu0 %v4940
  %7513 = vmatprep.subr.bf16.mxu0 %v4949
  %7514 = vmatpush1.bf16.msra.mxu0 %v4948
  %7515 = vmatprep.subr.bf16.mxu0 %v4957
  %7516 = vmatpush1.bf16.msra.mxu0 %v4956
  %7517 = vmatprep.subr.bf16.mxu0 %v4965
  %7518 = vmatpush1.bf16.msra.mxu0 %v4964
  %7519 = vmatprep.subr.bf16.mxu0 %v4973
  %7520 = vmatpush1.bf16.msra.mxu0 %v4972
  %7521 = vmatprep.subr.bf16.mxu0 %v4981
  %7522 = vmatpush1.bf16.msra.mxu0 %v4980
  %7523 = vmatprep.subr.bf16.mxu0 %v4989
  %7524 = vmatpush1.bf16.msra.mxu0 %v4988
  %7525 = vmatprep.subr.bf16.mxu0 %v4997
  %7526 = vmatpush1.bf16.msra.mxu0 %v4996
  %7527 = vmatprep.subr.bf16.mxu0 %v5005
  %7528 = vmatpush1.bf16.msra.mxu0 %v5004
  %7529 = vmatprep.mubr.bf16.mxu0 %v601
  %7530 = vmatmul.mubr.bf16.gmra.mrb[0].mxu0 %v600
  %v7531 = vpop.f32.mrb[0].mxu0
  %v7532 = vadd.f32 %v7491, %v7531
  %v7533 = vpop.f32.mrb[0].mxu0
  %v7534 = vadd.f32 %v7493, %v7533
  %v7535 = vpop.f32.mrb[0].mxu0
  %v7536 = vpop.f32.mrb[0].mxu0
  %7537 = vdwg.mxu0
  %7538 = vmatprep.subr.bf16.mxu0 %v5013
  %7539 = vmatpush1.bf16.msra.mxu0 %v5012
  %7540 = vmatprep.subr.bf16.mxu0 %v5021
  %7541 = vmatpush1.bf16.msra.mxu0 %v5020
  %7542 = vmatprep.subr.bf16.mxu0 %v5029
  %7543 = vmatpush1.bf16.msra.mxu0 %v5028
  %7544 = vmatprep.subr.bf16.mxu0 %v5037
  %7545 = vmatpush1.bf16.msra.mxu0 %v5036
  %7546 = vmatprep.subr.bf16.mxu0 %v5045
  %7547 = vmatpush1.bf16.msra.mxu0 %v5044
  %7548 = vmatprep.subr.bf16.mxu0 %v5053
  %7549 = vmatpush1.bf16.msra.mxu0 %v5052
  %7550 = vmatprep.subr.bf16.mxu0 %v5061
  %7551 = vmatpush1.bf16.msra.mxu0 %v5060
  %7552 = vmatprep.subr.bf16.mxu0 %v5069
  %7553 = vmatpush1.bf16.msra.mxu0 %v5068
  %7554 = vmatprep.subr.bf16.mxu0 %v5077
  %7555 = vmatpush1.bf16.msra.mxu0 %v5076
  %7556 = vmatprep.subr.bf16.mxu0 %v5085
  %7557 = vmatpush1.bf16.msra.mxu0 %v5084
  %7558 = vmatprep.subr.bf16.mxu0 %v5093
  %7559 = vmatpush1.bf16.msra.mxu0 %v5092
  %7560 = vmatprep.subr.bf16.mxu0 %v5101
  %7561 = vmatpush1.bf16.msra.mxu0 %v5100
  %7562 = vmatprep.subr.bf16.mxu0 %v5109
  %7563 = vmatpush1.bf16.msra.mxu0 %v5108
  %7564 = vmatprep.subr.bf16.mxu0 %v5117
  %7565 = vmatpush1.bf16.msra.mxu0 %v5116
  %7566 = vmatprep.subr.bf16.mxu0 %v5125
  %7567 = vmatpush1.bf16.msra.mxu0 %v5124
  %7568 = vmatprep.subr.bf16.mxu0 %v5133
  %7569 = vmatpush1.bf16.msra.mxu0 %v5132
  %7570 = vmatprep.mubr.bf16.mxu0 %v603
  %7571 = vmatmul.mubr.bf16.gmra.mrb[0].mxu0 %v602
  %v7572 = vpop.f32.mrb[0].mxu0
  %v7573 = vadd.f32 %v7532, %v7572
  %v7574 = vpop.f32.mrb[0].mxu0
  %v7575 = vadd.f32 %v7534, %v7574
  %v7576 = vpop.f32.mrb[0].mxu0
  %v7577 = vpop.f32.mrb[0].mxu0
  %7578 = vdwg.mxu0
  %7579 = vmatprep.subr.bf16.mxu0 %v5141
  %7580 = vmatpush1.bf16.msra.mxu0 %v5140
  %7581 = vmatprep.subr.bf16.mxu0 %v5149
  %7582 = vmatpush1.bf16.msra.mxu0 %v5148
  %7583 = vmatprep.subr.bf16.mxu0 %v5157
  %7584 = vmatpush1.bf16.msra.mxu0 %v5156
  %7585 = vmatprep.subr.bf16.mxu0 %v5165
  %7586 = vmatpush1.bf16.msra.mxu0 %v5164
  %7587 = vmatprep.subr.bf16.mxu0 %v5173
  %7588 = vmatpush1.bf16.msra.mxu0 %v5172
  %7589 = vmatprep.subr.bf16.mxu0 %v5181
  %7590 = vmatpush1.bf16.msra.mxu0 %v5180
  %7591 = vmatprep.subr.bf16.mxu0 %v5189
  %7592 = vmatpush1.bf16.msra.mxu0 %v5188
  %7593 = vmatprep.subr.bf16.mxu0 %v5197
  %7594 = vmatpush1.bf16.msra.mxu0 %v5196
  %7595 = vmatprep.subr.bf16.mxu0 %v5205
  %7596 = vmatpush1.bf16.msra.mxu0 %v5204
  %7597 = vmatprep.subr.bf16.mxu0 %v5213
  %7598 = vmatpush1.bf16.msra.mxu0 %v5212
  %7599 = vmatprep.subr.bf16.mxu0 %v5221
  %7600 = vmatpush1.bf16.msra.mxu0 %v5220
  %7601 = vmatprep.subr.bf16.mxu0 %v5229
  %7602 = vmatpush1.bf16.msra.mxu0 %v5228
  %7603 = vmatprep.subr.bf16.mxu0 %v5237
  %7604 = vmatpush1.bf16.msra.mxu0 %v5236
  %7605 = vmatprep.subr.bf16.mxu0 %v5245
  %7606 = vmatpush1.bf16.msra.mxu0 %v5244
  %7607 = vmatprep.subr.bf16.mxu0 %v5253
  %7608 = vmatpush1.bf16.msra.mxu0 %v5252
  %7609 = vmatprep.subr.bf16.mxu0 %v5261
  %7610 = vmatpush1.bf16.msra.mxu0 %v5260
  %7611 = vmatprep.mubr.bf16.mxu0 %v605
  %7612 = vmatmul.mubr.bf16.gmra.mrb[0].mxu0 %v604
  %v7613 = vpop.f32.mrb[0].mxu0
  %v7614 = vadd.f32 %v7573, %v7613
  %v7615 = vpop.f32.mrb[0].mxu0
  %v7616 = vadd.f32 %v7575, %v7615
  %v7617 = vpop.f32.mrb[0].mxu0
  %v7618 = vpop.f32.mrb[0].mxu0
  %7619 = vdwg.mxu0
  %7620 = vmatprep.subr.bf16.mxu0 %v5269
  %7621 = vmatpush1.bf16.msra.mxu0 %v5268
  %7622 = vmatprep.subr.bf16.mxu0 %v5277
  %7623 = vmatpush1.bf16.msra.mxu0 %v5276
  %7624 = vmatprep.subr.bf16.mxu0 %v5285
  %7625 = vmatpush1.bf16.msra.mxu0 %v5284
  %7626 = vmatprep.subr.bf16.mxu0 %v5293
  %7627 = vmatpush1.bf16.msra.mxu0 %v5292
  %7628 = vmatprep.subr.bf16.mxu0 %v5301
  %7629 = vmatpush1.bf16.msra.mxu0 %v5300
  %7630 = vmatprep.subr.bf16.mxu0 %v5309
  %7631 = vmatpush1.bf16.msra.mxu0 %v5308
  %7632 = vmatprep.subr.bf16.mxu0 %v5317
  %7633 = vmatpush1.bf16.msra.mxu0 %v5316
  %7634 = vmatprep.subr.bf16.mxu0 %v5325
  %7635 = vmatpush1.bf16.msra.mxu0 %v5324
  %7636 = vmatprep.subr.bf16.mxu0 %v5333
  %7637 = vmatpush1.bf16.msra.mxu0 %v5332
  %7638 = vmatprep.subr.bf16.mxu0 %v5341
  %7639 = vmatpush1.bf16.msra.mxu0 %v5340
  %7640 = vmatprep.subr.bf16.mxu0 %v5349
  %7641 = vmatpush1.bf16.msra.mxu0 %v5348
  %7642 = vmatprep.subr.bf16.mxu0 %v5357
  %7643 = vmatpush1.bf16.msra.mxu0 %v5356
  %7644 = vmatprep.subr.bf16.mxu0 %v5365
  %7645 = vmatpush1.bf16.msra.mxu0 %v5364
  %7646 = vmatprep.subr.bf16.mxu0 %v5373
  %7647 = vmatpush1.bf16.msra.mxu0 %v5372
  %7648 = vmatprep.subr.bf16.mxu0 %v5381
  %7649 = vmatpush1.bf16.msra.mxu0 %v5380
  %7650 = vmatprep.subr.bf16.mxu0 %v5389
  %7651 = vmatpush1.bf16.msra.mxu0 %v5388
  %7652 = vmatprep.mubr.bf16.mxu0 %v607
  %7653 = vmatmul.mubr.bf16.gmra.mrb[0].mxu0 %v606
  %v7654 = vpop.f32.mrb[0].mxu0
  %v7655 = vadd.f32 %v7614, %v7654
  %v7656 = vpop.f32.mrb[0].mxu0
  %v7657 = vadd.f32 %v7616, %v7656
  %v7658 = vpop.f32.mrb[0].mxu0
  %v7659 = vpop.f32.mrb[0].mxu0
  %7660 = vdwg.mxu0
  %7661 = vmatprep.subr.bf16.mxu0 %v5397
  %7662 = vmatpush1.bf16.msra.mxu0 %v5396
  %7663 = vmatprep.subr.bf16.mxu0 %v5405
  %7664 = vmatpush1.bf16.msra.mxu0 %v5404
  %7665 = vmatprep.subr.bf16.mxu0 %v5413
  %7666 = vmatpush1.bf16.msra.mxu0 %v5412
  %7667 = vmatprep.subr.bf16.mxu0 %v5421
  %7668 = vmatpush1.bf16.msra.mxu0 %v5420
  %7669 = vmatprep.subr.bf16.mxu0 %v5429
  %7670 = vmatpush1.bf16.msra.mxu0 %v5428
  %7671 = vmatprep.subr.bf16.mxu0 %v5437
  %7672 = vmatpush1.bf16.msra.mxu0 %v5436
  %7673 = vmatprep.subr.bf16.mxu0 %v5445
  %7674 = vmatpush1.bf16.msra.mxu0 %v5444
  %7675 = vmatprep.subr.bf16.mxu0 %v5453
  %7676 = vmatpush1.bf16.msra.mxu0 %v5452
  %7677 = vmatprep.subr.bf16.mxu0 %v5461
  %7678 = vmatpush1.bf16.msra.mxu0 %v5460
  %7679 = vmatprep.subr.bf16.mxu0 %v5469
  %7680 = vmatpush1.bf16.msra.mxu0 %v5468
  %7681 = vmatprep.subr.bf16.mxu0 %v5477
  %7682 = vmatpush1.bf16.msra.mxu0 %v5476
  %7683 = vmatprep.subr.bf16.mxu0 %v5485
  %7684 = vmatpush1.bf16.msra.mxu0 %v5484
  %7685 = vmatprep.subr.bf16.mxu0 %v5493
  %7686 = vmatpush1.bf16.msra.mxu0 %v5492
  %7687 = vmatprep.subr.bf16.mxu0 %v5501
  %7688 = vmatpush1.bf16.msra.mxu0 %v5500
  %7689 = vmatprep.subr.bf16.mxu0 %v5509
  %7690 = vmatpush1.bf16.msra.mxu0 %v5508
  %7691 = vmatprep.subr.bf16.mxu0 %v5517
  %7692 = vmatpush1.bf16.msra.mxu0 %v5516
  %7693 = vmatprep.mubr.bf16.mxu0 %v609
  %7694 = vmatmul.mubr.bf16.gmra.mrb[0].mxu0 %v608
  %v7695 = vpop.f32.mrb[0].mxu0
  %v7696 = vadd.f32 %v7655, %v7695
  %v7697 = vpop.f32.mrb[0].mxu0
  %v7698 = vadd.f32 %v7657, %v7697
  %v7699 = vpop.f32.mrb[0].mxu0
  %v7700 = vpop.f32.mrb[0].mxu0
  %7701 = vdwg.mxu0
  %7702 = vmatprep.subr.bf16.mxu0 %v5525
  %7703 = vmatpush1.bf16.msra.mxu0 %v5524
  %7704 = vmatprep.subr.bf16.mxu0 %v5533
  %7705 = vmatpush1.bf16.msra.mxu0 %v5532
  %7706 = vmatprep.subr.bf16.mxu0 %v5541
  %7707 = vmatpush1.bf16.msra.mxu0 %v5540
  %7708 = vmatprep.subr.bf16.mxu0 %v5549
  %7709 = vmatpush1.bf16.msra.mxu0 %v5548
  %7710 = vmatprep.subr.bf16.mxu0 %v5557
  %7711 = vmatpush1.bf16.msra.mxu0 %v5556
  %7712 = vmatprep.subr.bf16.mxu0 %v5565
  %7713 = vmatpush1.bf16.msra.mxu0 %v5564
  %7714 = vmatprep.subr.bf16.mxu0 %v5573
  %7715 = vmatpush1.bf16.msra.mxu0 %v5572
  %7716 = vmatprep.subr.bf16.mxu0 %v5581
  %7717 = vmatpush1.bf16.msra.mxu0 %v5580
  %7718 = vmatprep.subr.bf16.mxu0 %v5589
  %7719 = vmatpush1.bf16.msra.mxu0 %v5588
  %7720 = vmatprep.subr.bf16.mxu0 %v5597
  %7721 = vmatpush1.bf16.msra.mxu0 %v5596
  %7722 = vmatprep.subr.bf16.mxu0 %v5605
  %7723 = vmatpush1.bf16.msra.mxu0 %v5604
  %7724 = vmatprep.subr.bf16.mxu0 %v5613
  %7725 = vmatpush1.bf16.msra.mxu0 %v5612
  %7726 = vmatprep.subr.bf16.mxu0 %v5621
  %7727 = vmatpush1.bf16.msra.mxu0 %v5620
  %7728 = vmatprep.subr.bf16.mxu0 %v5629
  %7729 = vmatpush1.bf16.msra.mxu0 %v5628
  %7730 = vmatprep.subr.bf16.mxu0 %v5637
  %7731 = vmatpush1.bf16.msra.mxu0 %v5636
  %7732 = vmatprep.subr.bf16.mxu0 %v5645
  %7733 = vmatpush1.bf16.msra.mxu0 %v5644
  %7734 = vmatprep.mubr.bf16.mxu0 %v611
  %7735 = vmatmul.mubr.bf16.gmra.mrb[0].mxu0 %v610
  %v7736 = vpop.f32.mrb[0].mxu0
  %v7737 = vadd.f32 %v7696, %v7736
  %v7738 = vpop.f32.mrb[0].mxu0
  %v7739 = vadd.f32 %v7698, %v7738
  %v7740 = vpop.f32.mrb[0].mxu0
  %v7741 = vpop.f32.mrb[0].mxu0
  %7742 = vdwg.mxu0
  %7743 = vmatprep.subr.bf16.mxu0 %v5653
  %7744 = vmatpush1.bf16.msra.mxu0 %v5652
  %7745 = vmatprep.subr.bf16.mxu0 %v5661
  %7746 = vmatpush1.bf16.msra.mxu0 %v5660
  %7747 = vmatprep.subr.bf16.mxu0 %v5669
  %7748 = vmatpush1.bf16.msra.mxu0 %v5668
  %7749 = vmatprep.subr.bf16.mxu0 %v5677
  %7750 = vmatpush1.bf16.msra.mxu0 %v5676
  %7751 = vmatprep.subr.bf16.mxu0 %v5685
  %7752 = vmatpush1.bf16.msra.mxu0 %v5684
  %7753 = vmatprep.subr.bf16.mxu0 %v5693
  %7754 = vmatpush1.bf16.msra.mxu0 %v5692
  %7755 = vmatprep.subr.bf16.mxu0 %v5701
  %7756 = vmatpush1.bf16.msra.mxu0 %v5700
  %7757 = vmatprep.subr.bf16.mxu0 %v5709
  %7758 = vmatpush1.bf16.msra.mxu0 %v5708
  %7759 = vmatprep.subr.bf16.mxu0 %v5717
  %7760 = vmatpush1.bf16.msra.mxu0 %v5716
  %7761 = vmatprep.subr.bf16.mxu0 %v5725
  %7762 = vmatpush1.bf16.msra.mxu0 %v5724
  %7763 = vmatprep.subr.bf16.mxu0 %v5733
  %7764 = vmatpush1.bf16.msra.mxu0 %v5732
  %7765 = vmatprep.subr.bf16.mxu0 %v5741
  %7766 = vmatpush1.bf16.msra.mxu0 %v5740
  %7767 = vmatprep.subr.bf16.mxu0 %v5749
  %7768 = vmatpush1.bf16.msra.mxu0 %v5748
  %7769 = vmatprep.subr.bf16.mxu0 %v5757
  %7770 = vmatpush1.bf16.msra.mxu0 %v5756
  %7771 = vmatprep.subr.bf16.mxu0 %v5765
  %7772 = vmatpush1.bf16.msra.mxu0 %v5764
  %7773 = vmatprep.subr.bf16.mxu0 %v5773
  %7774 = vmatpush1.bf16.msra.mxu0 %v5772
  %7775 = vmatprep.mubr.bf16.mxu0 %v613
  %7776 = vmatmul.mubr.bf16.gmra.mrb[0].mxu0 %v612
  %v7777 = vpop.f32.mrb[0].mxu0
  %v7778 = vadd.f32 %v7737, %v7777
  %v7779 = vpop.f32.mrb[0].mxu0
  %v7780 = vadd.f32 %v7739, %v7779
  %v7781 = vpop.f32.mrb[0].mxu0
  %v7782 = vpop.f32.mrb[0].mxu0
  %7783 = vdwg.mxu0
  %7784 = vmatprep.subr.bf16.mxu0 %v4759
  %7785 = vmatpush1.bf16.msra.mxu0 %v4758
  %7786 = vmatprep.subr.bf16.mxu0 %v4767
  %7787 = vmatpush1.bf16.msra.mxu0 %v4766
  %7788 = vmatprep.subr.bf16.mxu0 %v4775
  %7789 = vmatpush1.bf16.msra.mxu0 %v4774
  %7790 = vmatprep.subr.bf16.mxu0 %v4783
  %7791 = vmatpush1.bf16.msra.mxu0 %v4782
  %7792 = vmatprep.subr.bf16.mxu0 %v4791
  %7793 = vmatpush1.bf16.msra.mxu0 %v4790
  %7794 = vmatprep.subr.bf16.mxu0 %v4799
  %7795 = vmatpush1.bf16.msra.mxu0 %v4798
  %7796 = vmatprep.subr.bf16.mxu0 %v4807
  %7797 = vmatpush1.bf16.msra.mxu0 %v4806
  %7798 = vmatprep.subr.bf16.mxu0 %v4815
  %7799 = vmatpush1.bf16.msra.mxu0 %v4814
  %7800 = vmatprep.subr.bf16.mxu0 %v4823
  %7801 = vmatpush1.bf16.msra.mxu0 %v4822
  %7802 = vmatprep.subr.bf16.mxu0 %v4831
  %7803 = vmatpush1.bf16.msra.mxu0 %v4830
  %7804 = vmatprep.subr.bf16.mxu0 %v4839
  %7805 = vmatpush1.bf16.msra.mxu0 %v4838
  %7806 = vmatprep.subr.bf16.mxu0 %v4847
  %7807 = vmatpush1.bf16.msra.mxu0 %v4846
  %7808 = vmatprep.subr.bf16.mxu0 %v4855
  %7809 = vmatpush1.bf16.msra.mxu0 %v4854
  %7810 = vmatprep.subr.bf16.mxu0 %v4863
  %7811 = vmatpush1.bf16.msra.mxu0 %v4862
  %7812 = vmatprep.subr.bf16.mxu0 %v4871
  %7813 = vmatpush1.bf16.msra.mxu0 %v4870
  %7814 = vmatprep.subr.bf16.mxu0 %v4879
  %7815 = vmatpush1.bf16.msra.mxu0 %v4878
  %7816 = vmatprep.mubr.bf16.mxu0 %v599
  %7817 = vmatmul.mubr.bf16.gmra.mrb[0].mxu0 %v598
  %v7818 = vpop.f32.mrb[0].mxu0
  %v7819 = vadd.f32 %v1667, %v7818
  %v7820 = vpop.f32.mrb[0].mxu0
  %v7821 = vadd.f32 %v1671, %v7820
  %v7822 = vpop.f32.mrb[0].mxu0
  %v7823 = vpop.f32.mrb[0].mxu0
  %7824 = vdwg.mxu0
  %7825 = vmatprep.subr.bf16.mxu0 %v4887
  %7826 = vmatpush1.bf16.msra.mxu0 %v4886
  %7827 = vmatprep.subr.bf16.mxu0 %v4895
  %7828 = vmatpush1.bf16.msra.mxu0 %v4894
  %7829 = vmatprep.subr.bf16.mxu0 %v4903
  %7830 = vmatpush1.bf16.msra.mxu0 %v4902
  %7831 = vmatprep.subr.bf16.mxu0 %v4911
  %7832 = vmatpush1.bf16.msra.mxu0 %v4910
  %7833 = vmatprep.subr.bf16.mxu0 %v4919
  %7834 = vmatpush1.bf16.msra.mxu0 %v4918
  %7835 = vmatprep.subr.bf16.mxu0 %v4927
  %7836 = vmatpush1.bf16.msra.mxu0 %v4926
  %7837 = vmatprep.subr.bf16.mxu0 %v4935
  %7838 = vmatpush1.bf16.msra.mxu0 %v4934
  %7839 = vmatprep.subr.bf16.mxu0 %v4943
  %7840 = vmatpush1.bf16.msra.mxu0 %v4942
  %7841 = vmatprep.subr.bf16.mxu0 %v4951
  %7842 = vmatpush1.bf16.msra.mxu0 %v4950
  %7843 = vmatprep.subr.bf16.mxu0 %v4959
  %7844 = vmatpush1.bf16.msra.mxu0 %v4958
  %7845 = vmatprep.subr.bf16.mxu0 %v4967
  %7846 = vmatpush1.bf16.msra.mxu0 %v4966
  %7847 = vmatprep.subr.bf16.mxu0 %v4975
  %7848 = vmatpush1.bf16.msra.mxu0 %v4974
  %7849 = vmatprep.subr.bf16.mxu0 %v4983
  %7850 = vmatpush1.bf16.msra.mxu0 %v4982
  %7851 = vmatprep.subr.bf16.mxu0 %v4991
  %7852 = vmatpush1.bf16.msra.mxu0 %v4990
  %7853 = vmatprep.subr.bf16.mxu0 %v4999
  %7854 = vmatpush1.bf16.msra.mxu0 %v4998
  %7855 = vmatprep.subr.bf16.mxu0 %v5007
  %7856 = vmatpush1.bf16.msra.mxu0 %v5006
  %7857 = vmatprep.mubr.bf16.mxu0 %v601
  %7858 = vmatmul.mubr.bf16.gmra.mrb[0].mxu0 %v600
  %v7859 = vpop.f32.mrb[0].mxu0
  %v7860 = vadd.f32 %v7819, %v7859
  %v7861 = vpop.f32.mrb[0].mxu0
  %v7862 = vadd.f32 %v7821, %v7861
  %v7863 = vpop.f32.mrb[0].mxu0
  %v7864 = vpop.f32.mrb[0].mxu0
  %7865 = vdwg.mxu0
  %7866 = vmatprep.subr.bf16.mxu0 %v5015
  %7867 = vmatpush1.bf16.msra.mxu0 %v5014
  %7868 = vmatprep.subr.bf16.mxu0 %v5023
  %7869 = vmatpush1.bf16.msra.mxu0 %v5022
  %7870 = vmatprep.subr.bf16.mxu0 %v5031
  %7871 = vmatpush1.bf16.msra.mxu0 %v5030
  %7872 = vmatprep.subr.bf16.mxu0 %v5039
  %7873 = vmatpush1.bf16.msra.mxu0 %v5038
  %7874 = vmatprep.subr.bf16.mxu0 %v5047
  %7875 = vmatpush1.bf16.msra.mxu0 %v5046
  %7876 = vmatprep.subr.bf16.mxu0 %v5055
  %7877 = vmatpush1.bf16.msra.mxu0 %v5054
  %7878 = vmatprep.subr.bf16.mxu0 %v5063
  %7879 = vmatpush1.bf16.msra.mxu0 %v5062
  %7880 = vmatprep.subr.bf16.mxu0 %v5071
  %7881 = vmatpush1.bf16.msra.mxu0 %v5070
  %7882 = vmatprep.subr.bf16.mxu0 %v5079
  %7883 = vmatpush1.bf16.msra.mxu0 %v5078
  %7884 = vmatprep.subr.bf16.mxu0 %v5087
  %7885 = vmatpush1.bf16.msra.mxu0 %v5086
  %7886 = vmatprep.subr.bf16.mxu0 %v5095
  %7887 = vmatpush1.bf16.msra.mxu0 %v5094
  %7888 = vmatprep.subr.bf16.mxu0 %v5103
  %7889 = vmatpush1.bf16.msra.mxu0 %v5102
  %7890 = vmatprep.subr.bf16.mxu0 %v5111
  %7891 = vmatpush1.bf16.msra.mxu0 %v5110
  %7892 = vmatprep.subr.bf16.mxu0 %v5119
  %7893 = vmatpush1.bf16.msra.mxu0 %v5118
  %7894 = vmatprep.subr.bf16.mxu0 %v5127
  %7895 = vmatpush1.bf16.msra.mxu0 %v5126
  %7896 = vmatprep.subr.bf16.mxu0 %v5135
  %7897 = vmatpush1.bf16.msra.mxu0 %v5134
  %7898 = vmatprep.mubr.bf16.mxu0 %v603
  %7899 = vmatmul.mubr.bf16.gmra.mrb[0].mxu0 %v602
  %v7900 = vpop.f32.mrb[0].mxu0
  %v7901 = vadd.f32 %v7860, %v7900
  %v7902 = vpop.f32.mrb[0].mxu0
  %v7903 = vadd.f32 %v7862, %v7902
  %v7904 = vpop.f32.mrb[0].mxu0
  %v7905 = vpop.f32.mrb[0].mxu0
  %7906 = vdwg.mxu0
  %7907 = vmatprep.subr.bf16.mxu0 %v5143
  %7908 = vmatpush1.bf16.msra.mxu0 %v5142
  %7909 = vmatprep.subr.bf16.mxu0 %v5151
  %7910 = vmatpush1.bf16.msra.mxu0 %v5150
  %7911 = vmatprep.subr.bf16.mxu0 %v5159
  %7912 = vmatpush1.bf16.msra.mxu0 %v5158
  %7913 = vmatprep.subr.bf16.mxu0 %v5167
  %7914 = vmatpush1.bf16.msra.mxu0 %v5166
  %7915 = vmatprep.subr.bf16.mxu0 %v5175
  %7916 = vmatpush1.bf16.msra.mxu0 %v5174
  %7917 = vmatprep.subr.bf16.mxu0 %v5183
  %7918 = vmatpush1.bf16.msra.mxu0 %v5182
  %7919 = vmatprep.subr.bf16.mxu0 %v5191
  %7920 = vmatpush1.bf16.msra.mxu0 %v5190
  %7921 = vmatprep.subr.bf16.mxu0 %v5199
  %7922 = vmatpush1.bf16.msra.mxu0 %v5198
  %7923 = vmatprep.subr.bf16.mxu0 %v5207
  %7924 = vmatpush1.bf16.msra.mxu0 %v5206
  %7925 = vmatprep.subr.bf16.mxu0 %v5215
  %7926 = vmatpush1.bf16.msra.mxu0 %v5214
  %7927 = vmatprep.subr.bf16.mxu0 %v5223
  %7928 = vmatpush1.bf16.msra.mxu0 %v5222
  %7929 = vmatprep.subr.bf16.mxu0 %v5231
  %7930 = vmatpush1.bf16.msra.mxu0 %v5230
  %7931 = vmatprep.subr.bf16.mxu0 %v5239
  %7932 = vmatpush1.bf16.msra.mxu0 %v5238
  %7933 = vmatprep.subr.bf16.mxu0 %v5247
  %7934 = vmatpush1.bf16.msra.mxu0 %v5246
  %7935 = vmatprep.subr.bf16.mxu0 %v5255
  %7936 = vmatpush1.bf16.msra.mxu0 %v5254
  %7937 = vmatprep.subr.bf16.mxu0 %v5263
  %7938 = vmatpush1.bf16.msra.mxu0 %v5262
  %7939 = vmatprep.mubr.bf16.mxu0 %v605
  %7940 = vmatmul.mubr.bf16.gmra.mrb[0].mxu0 %v604
  %v7941 = vpop.f32.mrb[0].mxu0
  %v7942 = vadd.f32 %v7901, %v7941
  %v7943 = vpop.f32.mrb[0].mxu0
  %v7944 = vadd.f32 %v7903, %v7943
  %v7945 = vpop.f32.mrb[0].mxu0
  %v7946 = vpop.f32.mrb[0].mxu0
  %7947 = vdwg.mxu0
  %7948 = vmatprep.subr.bf16.mxu0 %v5271
  %7949 = vmatpush1.bf16.msra.mxu0 %v5270
  %7950 = vmatprep.subr.bf16.mxu0 %v5279
  %7951 = vmatpush1.bf16.msra.mxu0 %v5278
  %7952 = vmatprep.subr.bf16.mxu0 %v5287
  %7953 = vmatpush1.bf16.msra.mxu0 %v5286
  %7954 = vmatprep.subr.bf16.mxu0 %v5295
  %7955 = vmatpush1.bf16.msra.mxu0 %v5294
  %7956 = vmatprep.subr.bf16.mxu0 %v5303
  %7957 = vmatpush1.bf16.msra.mxu0 %v5302
  %7958 = vmatprep.subr.bf16.mxu0 %v5311
  %7959 = vmatpush1.bf16.msra.mxu0 %v5310
  %7960 = vmatprep.subr.bf16.mxu0 %v5319
  %7961 = vmatpush1.bf16.msra.mxu0 %v5318
  %7962 = vmatprep.subr.bf16.mxu0 %v5327
  %7963 = vmatpush1.bf16.msra.mxu0 %v5326
  %7964 = vmatprep.subr.bf16.mxu0 %v5335
  %7965 = vmatpush1.bf16.msra.mxu0 %v5334
  %7966 = vmatprep.subr.bf16.mxu0 %v5343
  %7967 = vmatpush1.bf16.msra.mxu0 %v5342
  %7968 = vmatprep.subr.bf16.mxu0 %v5351
  %7969 = vmatpush1.bf16.msra.mxu0 %v5350
  %7970 = vmatprep.subr.bf16.mxu0 %v5359
  %7971 = vmatpush1.bf16.msra.mxu0 %v5358
  %7972 = vmatprep.subr.bf16.mxu0 %v5367
  %7973 = vmatpush1.bf16.msra.mxu0 %v5366
  %7974 = vmatprep.subr.bf16.mxu0 %v5375
  %7975 = vmatpush1.bf16.msra.mxu0 %v5374
  %7976 = vmatprep.subr.bf16.mxu0 %v5383
  %7977 = vmatpush1.bf16.msra.mxu0 %v5382
  %7978 = vmatprep.subr.bf16.mxu0 %v5391
  %7979 = vmatpush1.bf16.msra.mxu0 %v5390
  %7980 = vmatprep.mubr.bf16.mxu0 %v607
  %7981 = vmatmul.mubr.bf16.gmra.mrb[0].mxu0 %v606
  %v7982 = vpop.f32.mrb[0].mxu0
  %v7983 = vadd.f32 %v7942, %v7982
  %v7984 = vpop.f32.mrb[0].mxu0
  %v7985 = vadd.f32 %v7944, %v7984
  %v7986 = vpop.f32.mrb[0].mxu0
  %v7987 = vpop.f32.mrb[0].mxu0
  %7988 = vdwg.mxu0
  %7989 = vmatprep.subr.bf16.mxu0 %v5399
  %7990 = vmatpush1.bf16.msra.mxu0 %v5398
  %7991 = vmatprep.subr.bf16.mxu0 %v5407
  %7992 = vmatpush1.bf16.msra.mxu0 %v5406
  %7993 = vmatprep.subr.bf16.mxu0 %v5415
  %7994 = vmatpush1.bf16.msra.mxu0 %v5414
  %7995 = vmatprep.subr.bf16.mxu0 %v5423
  %7996 = vmatpush1.bf16.msra.mxu0 %v5422
  %7997 = vmatprep.subr.bf16.mxu0 %v5431
  %7998 = vmatpush1.bf16.msra.mxu0 %v5430
  %7999 = vmatprep.subr.bf16.mxu0 %v5439
  %8000 = vmatpush1.bf16.msra.mxu0 %v5438
  %8001 = vmatprep.subr.bf16.mxu0 %v5447
  %8002 = vmatpush1.bf16.msra.mxu0 %v5446
  %8003 = vmatprep.subr.bf16.mxu0 %v5455
  %8004 = vmatpush1.bf16.msra.mxu0 %v5454
  %8005 = vmatprep.subr.bf16.mxu0 %v5463
  %8006 = vmatpush1.bf16.msra.mxu0 %v5462
  %8007 = vmatprep.subr.bf16.mxu0 %v5471
  %8008 = vmatpush1.bf16.msra.mxu0 %v5470
  %8009 = vmatprep.subr.bf16.mxu0 %v5479
  %8010 = vmatpush1.bf16.msra.mxu0 %v5478
  %8011 = vmatprep.subr.bf16.mxu0 %v5487
  %8012 = vmatpush1.bf16.msra.mxu0 %v5486
  %8013 = vmatprep.subr.bf16.mxu0 %v5495
  %8014 = vmatpush1.bf16.msra.mxu0 %v5494
  %8015 = vmatprep.subr.bf16.mxu0 %v5503
  %8016 = vmatpush1.bf16.msra.mxu0 %v5502
  %8017 = vmatprep.subr.bf16.mxu0 %v5511
  %8018 = vmatpush1.bf16.msra.mxu0 %v5510
  %8019 = vmatprep.subr.bf16.mxu0 %v5519
  %8020 = vmatpush1.bf16.msra.mxu0 %v5518
  %8021 = vmatprep.mubr.bf16.mxu0 %v609
  %8022 = vmatmul.mubr.bf16.gmra.mrb[0].mxu0 %v608
  %v8023 = vpop.f32.mrb[0].mxu0
  %v8024 = vadd.f32 %v7983, %v8023
  %v8025 = vpop.f32.mrb[0].mxu0
  %v8026 = vadd.f32 %v7985, %v8025
  %v8027 = vpop.f32.mrb[0].mxu0
  %v8028 = vpop.f32.mrb[0].mxu0
  %8029 = vdwg.mxu0
  %8030 = vmatprep.subr.bf16.mxu0 %v5527
  %8031 = vmatpush1.bf16.msra.mxu0 %v5526
  %8032 = vmatprep.subr.bf16.mxu0 %v5535
  %8033 = vmatpush1.bf16.msra.mxu0 %v5534
  %8034 = vmatprep.subr.bf16.mxu0 %v5543
  %8035 = vmatpush1.bf16.msra.mxu0 %v5542
  %8036 = vmatprep.subr.bf16.mxu0 %v5551
  %8037 = vmatpush1.bf16.msra.mxu0 %v5550
  %8038 = vmatprep.subr.bf16.mxu0 %v5559
  %8039 = vmatpush1.bf16.msra.mxu0 %v5558
  %8040 = vmatprep.subr.bf16.mxu0 %v5567
  %8041 = vmatpush1.bf16.msra.mxu0 %v5566
  %8042 = vmatprep.subr.bf16.mxu0 %v5575
  %8043 = vmatpush1.bf16.msra.mxu0 %v5574
  %8044 = vmatprep.subr.bf16.mxu0 %v5583
  %8045 = vmatpush1.bf16.msra.mxu0 %v5582
  %8046 = vmatprep.subr.bf16.mxu0 %v5591
  %8047 = vmatpush1.bf16.msra.mxu0 %v5590
  %8048 = vmatprep.subr.bf16.mxu0 %v5599
  %8049 = vmatpush1.bf16.msra.mxu0 %v5598
  %8050 = vmatprep.subr.bf16.mxu0 %v5607
  %8051 = vmatpush1.bf16.msra.mxu0 %v5606
  %8052 = vmatprep.subr.bf16.mxu0 %v5615
  %8053 = vmatpush1.bf16.msra.mxu0 %v5614
  %8054 = vmatprep.subr.bf16.mxu0 %v5623
  %8055 = vmatpush1.bf16.msra.mxu0 %v5622
  %8056 = vmatprep.subr.bf16.mxu0 %v5631
  %8057 = vmatpush1.bf16.msra.mxu0 %v5630
  %8058 = vmatprep.subr.bf16.mxu0 %v5639
  %8059 = vmatpush1.bf16.msra.mxu0 %v5638
  %8060 = vmatprep.subr.bf16.mxu0 %v5647
  %8061 = vmatpush1.bf16.msra.mxu0 %v5646
  %8062 = vmatprep.mubr.bf16.mxu0 %v611
  %8063 = vmatmul.mubr.bf16.gmra.mrb[0].mxu0 %v610
  %v8064 = vpop.f32.mrb[0].mxu0
  %v8065 = vadd.f32 %v8024, %v8064
  %v8066 = vpop.f32.mrb[0].mxu0
  %v8067 = vadd.f32 %v8026, %v8066
  %v8068 = vpop.f32.mrb[0].mxu0
  %v8069 = vpop.f32.mrb[0].mxu0
  %8070 = vdwg.mxu0
  %8071 = vmatprep.subr.bf16.mxu0 %v5655
  %8072 = vmatpush1.bf16.msra.mxu0 %v5654
  %8073 = vmatprep.subr.bf16.mxu0 %v5663
  %8074 = vmatpush1.bf16.msra.mxu0 %v5662
  %8075 = vmatprep.subr.bf16.mxu0 %v5671
  %8076 = vmatpush1.bf16.msra.mxu0 %v5670
  %8077 = vmatprep.subr.bf16.mxu0 %v5679
  %8078 = vmatpush1.bf16.msra.mxu0 %v5678
  %8079 = vmatprep.subr.bf16.mxu0 %v5687
  %8080 = vmatpush1.bf16.msra.mxu0 %v5686
  %8081 = vmatprep.subr.bf16.mxu0 %v5695
  %8082 = vmatpush1.bf16.msra.mxu0 %v5694
  %8083 = vmatprep.subr.bf16.mxu0 %v5703
  %8084 = vmatpush1.bf16.msra.mxu0 %v5702
  %8085 = vmatprep.subr.bf16.mxu0 %v5711
  %8086 = vmatpush1.bf16.msra.mxu0 %v5710
  %8087 = vmatprep.subr.bf16.mxu0 %v5719
  %8088 = vmatpush1.bf16.msra.mxu0 %v5718
  %8089 = vmatprep.subr.bf16.mxu0 %v5727
  %8090 = vmatpush1.bf16.msra.mxu0 %v5726
  %8091 = vmatprep.subr.bf16.mxu0 %v5735
  %8092 = vmatpush1.bf16.msra.mxu0 %v5734
  %8093 = vmatprep.subr.bf16.mxu0 %v5743
  %8094 = vmatpush1.bf16.msra.mxu0 %v5742
  %8095 = vmatprep.subr.bf16.mxu0 %v5751
  %8096 = vmatpush1.bf16.msra.mxu0 %v5750
  %8097 = vmatprep.subr.bf16.mxu0 %v5759
  %8098 = vmatpush1.bf16.msra.mxu0 %v5758
  %8099 = vmatprep.subr.bf16.mxu0 %v5767
  %8100 = vmatpush1.bf16.msra.mxu0 %v5766
  %8101 = vmatprep.subr.bf16.mxu0 %v5775
  %8102 = vmatpush1.bf16.msra.mxu0 %v5774
  %8103 = vmatprep.mubr.bf16.mxu0 %v613
  %8104 = vmatmul.mubr.bf16.gmra.mrb[0].mxu0 %v612
  %v8105 = vpop.f32.mrb[0].mxu0
  %v8106 = vadd.f32 %v8065, %v8105
  %v8107 = vpop.f32.mrb[0].mxu0
  %v8108 = vadd.f32 %v8067, %v8107
  %v8109 = vpop.f32.mrb[0].mxu0
  %v8110 = vpop.f32.mrb[0].mxu0
  %8111 = vdwg.mxu0
  %v8112 = vmax.f32 %v7122, 0.0
  %v8113 = vmax.f32 %v7124, 0.0
  %v8114 = vmax.f32 %v7450, 0.0
  %v8115 = vmax.f32 %v7452, 0.0
  %v8116 = vmax.f32 %v7778, 0.0
  %v8117 = vmax.f32 %v7780, 0.0
  %v8118 = vmax.f32 %v8106, 0.0
  %v8119 = vmax.f32 %v8108, 0.0
  %v8120 = vpack.c.bf16 %v8112, %v8112
  %v8121 = vpack.c.bf16 %v8113, %v8113
  %v8122 = vpack.c.bf16 %v8114, %v8114
  %v8123 = vpack.c.bf16 %v8115, %v8115
  %v8124 = vpack.c.bf16 %v8116, %v8116
  %v8125 = vpack.c.bf16 %v8117, %v8117
  %v8126 = vpack.c.bf16 %v8118, %v8118
  %v8127 = vpack.c.bf16 %v8119, %v8119
  %v8128 = vld [vmem:[%s5] sm:$0xff]
  %v8129 = vld [vmem:[%s5 + $0x8] sm:$0xff]
  %v8130 = vld [vmem:[%s5 + $0x10] sm:$0xff]
  %v8131 = vld [vmem:[%s5 + $0x18] sm:$0xff]
  %v8132 = vld [vmem:[%s5 + $0x20] sm:$0xff]
  %v8133 = vld [vmem:[%s5 + $0x28] sm:$0xff]
  %v8134 = vld [vmem:[%s5 + $0x30] sm:$0xff]
  %v8135 = vld [vmem:[%s5 + $0x38] sm:$0xff]
  %v8136 = vld [vmem:[%s5 + $0x40] sm:$0xff]
  %v8137 = vld [vmem:[%s5 + $0x48] sm:$0xff]
  %v8138 = vld [vmem:[%s5 + $0x50] sm:$0xff]
  %v8139 = vld [vmem:[%s5 + $0x58] sm:$0xff]
  %v8140 = vld [vmem:[%s5 + $0x60] sm:$0xff]
  %v8141 = vld [vmem:[%s5 + $0x68] sm:$0xff]
  %v8142 = vld [vmem:[%s5 + $0x70] sm:$0xff]
  %v8143 = vld [vmem:[%s5 + $0x78] sm:$0xff]
  %v8144 = vld [vmem:[%s5 + $0x80] sm:$0xff]
  %v8145 = vld [vmem:[%s5 + $0x88] sm:$0xff]
  %v8146 = vld [vmem:[%s5 + $0x90] sm:$0xff]
  %v8147 = vld [vmem:[%s5 + $0x98] sm:$0xff]
  %v8148 = vld [vmem:[%s5 + $0xa0] sm:$0xff]
  %v8149 = vld [vmem:[%s5 + $0xa8] sm:$0xff]
  %v8150 = vld [vmem:[%s5 + $0xb0] sm:$0xff]
  %v8151 = vld [vmem:[%s5 + $0xb8] sm:$0xff]
  %v8152 = vld [vmem:[%s5 + $0xc0] sm:$0xff]
  %v8153 = vld [vmem:[%s5 + $0xc8] sm:$0xff]
  %v8154 = vld [vmem:[%s5 + $0xd0] sm:$0xff]
  %v8155 = vld [vmem:[%s5 + $0xd8] sm:$0xff]
  %v8156 = vld [vmem:[%s5 + $0xe0] sm:$0xff]
  %v8157 = vld [vmem:[%s5 + $0xe8] sm:$0xff]
  %v8158 = vld [vmem:[%s5 + $0xf0] sm:$0xff]
  %v8159 = vld [vmem:[%s5 + $0xf8] sm:$0xff]
  %v8160 = vld [vmem:[%s5 + $0x100] sm:$0xff]
  %v8161 = vld [vmem:[%s5 + $0x108] sm:$0xff]
  %v8162 = vld [vmem:[%s5 + $0x110] sm:$0xff]
  %v8163 = vld [vmem:[%s5 + $0x118] sm:$0xff]
  %v8164 = vld [vmem:[%s5 + $0x120] sm:$0xff]
  %v8165 = vld [vmem:[%s5 + $0x128] sm:$0xff]
  %v8166 = vld [vmem:[%s5 + $0x130] sm:$0xff]
  %v8167 = vld [vmem:[%s5 + $0x138] sm:$0xff]
  %v8168 = vld [vmem:[%s5 + $0x140] sm:$0xff]
  %v8169 = vld [vmem:[%s5 + $0x148] sm:$0xff]
  %v8170 = vld [vmem:[%s5 + $0x150] sm:$0xff]
  %v8171 = vld [vmem:[%s5 + $0x158] sm:$0xff]
  %v8172 = vld [vmem:[%s5 + $0x160] sm:$0xff]
  %v8173 = vld [vmem:[%s5 + $0x168] sm:$0xff]
  %v8174 = vld [vmem:[%s5 + $0x170] sm:$0xff]
  %v8175 = vld [vmem:[%s5 + $0x178] sm:$0xff]
  %v8176 = vld [vmem:[%s5 + $0x180] sm:$0xff]
  %v8177 = vld [vmem:[%s5 + $0x188] sm:$0xff]
  %v8178 = vld [vmem:[%s5 + $0x190] sm:$0xff]
  %v8179 = vld [vmem:[%s5 + $0x198] sm:$0xff]
  %v8180 = vld [vmem:[%s5 + $0x1a0] sm:$0xff]
  %v8181 = vld [vmem:[%s5 + $0x1a8] sm:$0xff]
  %v8182 = vld [vmem:[%s5 + $0x1b0] sm:$0xff]
  %v8183 = vld [vmem:[%s5 + $0x1b8] sm:$0xff]
  %v8184 = vld [vmem:[%s5 + $0x1c0] sm:$0xff]
  %v8185 = vld [vmem:[%s5 + $0x1c8] sm:$0xff]
  %v8186 = vld [vmem:[%s5 + $0x1d0] sm:$0xff]
  %v8187 = vld [vmem:[%s5 + $0x1d8] sm:$0xff]
  %v8188 = vld [vmem:[%s5 + $0x1e0] sm:$0xff]
  %v8189 = vld [vmem:[%s5 + $0x1e8] sm:$0xff]
  %v8190 = vld [vmem:[%s5 + $0x1f0] sm:$0xff]
  %v8191 = vld [vmem:[%s5 + $0x1f8] sm:$0xff]
  %v8192 = vld [vmem:[%s5 + $0x200] sm:$0xff]
  %v8193 = vld [vmem:[%s5 + $0x208] sm:$0xff]
  %v8194 = vld [vmem:[%s5 + $0x210] sm:$0xff]
  %v8195 = vld [vmem:[%s5 + $0x218] sm:$0xff]
  %v8196 = vld [vmem:[%s5 + $0x220] sm:$0xff]
  %v8197 = vld [vmem:[%s5 + $0x228] sm:$0xff]
  %v8198 = vld [vmem:[%s5 + $0x230] sm:$0xff]
  %v8199 = vld [vmem:[%s5 + $0x238] sm:$0xff]
  %v8200 = vld [vmem:[%s5 + $0x240] sm:$0xff]
  %v8201 = vld [vmem:[%s5 + $0x248] sm:$0xff]
  %v8202 = vld [vmem:[%s5 + $0x250] sm:$0xff]
  %v8203 = vld [vmem:[%s5 + $0x258] sm:$0xff]
  %v8204 = vld [vmem:[%s5 + $0x260] sm:$0xff]
  %v8205 = vld [vmem:[%s5 + $0x268] sm:$0xff]
  %v8206 = vld [vmem:[%s5 + $0x270] sm:$0xff]
  %v8207 = vld [vmem:[%s5 + $0x278] sm:$0xff]
  %v8208 = vld [vmem:[%s5 + $0x280] sm:$0xff]
  %v8209 = vld [vmem:[%s5 + $0x288] sm:$0xff]
  %v8210 = vld [vmem:[%s5 + $0x290] sm:$0xff]
  %v8211 = vld [vmem:[%s5 + $0x298] sm:$0xff]
  %v8212 = vld [vmem:[%s5 + $0x2a0] sm:$0xff]
  %v8213 = vld [vmem:[%s5 + $0x2a8] sm:$0xff]
  %v8214 = vld [vmem:[%s5 + $0x2b0] sm:$0xff]
  %v8215 = vld [vmem:[%s5 + $0x2b8] sm:$0xff]
  %v8216 = vld [vmem:[%s5 + $0x2c0] sm:$0xff]
  %v8217 = vld [vmem:[%s5 + $0x2c8] sm:$0xff]
  %v8218 = vld [vmem:[%s5 + $0x2d0] sm:$0xff]
  %v8219 = vld [vmem:[%s5 + $0x2d8] sm:$0xff]
  %v8220 = vld [vmem:[%s5 + $0x2e0] sm:$0xff]
  %v8221 = vld [vmem:[%s5 + $0x2e8] sm:$0xff]
  %v8222 = vld [vmem:[%s5 + $0x2f0] sm:$0xff]
  %v8223 = vld [vmem:[%s5 + $0x2f8] sm:$0xff]
  %v8224 = vld [vmem:[%s5 + $0x300] sm:$0xff]
  %v8225 = vld [vmem:[%s5 + $0x308] sm:$0xff]
  %v8226 = vld [vmem:[%s5 + $0x310] sm:$0xff]
  %v8227 = vld [vmem:[%s5 + $0x318] sm:$0xff]
  %v8228 = vld [vmem:[%s5 + $0x320] sm:$0xff]
  %v8229 = vld [vmem:[%s5 + $0x328] sm:$0xff]
  %v8230 = vld [vmem:[%s5 + $0x330] sm:$0xff]
  %v8231 = vld [vmem:[%s5 + $0x338] sm:$0xff]
  %v8232 = vld [vmem:[%s5 + $0x340] sm:$0xff]
  %v8233 = vld [vmem:[%s5 + $0x348] sm:$0xff]
  %v8234 = vld [vmem:[%s5 + $0x350] sm:$0xff]
  %v8235 = vld [vmem:[%s5 + $0x358] sm:$0xff]
  %v8236 = vld [vmem:[%s5 + $0x360] sm:$0xff]
  %v8237 = vld [vmem:[%s5 + $0x368] sm:$0xff]
  %v8238 = vld [vmem:[%s5 + $0x370] sm:$0xff]
  %v8239 = vld [vmem:[%s5 + $0x378] sm:$0xff]
  %v8240 = vld [vmem:[%s5 + $0x380] sm:$0xff]
  %v8241 = vld [vmem:[%s5 + $0x388] sm:$0xff]
  %v8242 = vld [vmem:[%s5 + $0x390] sm:$0xff]
  %v8243 = vld [vmem:[%s5 + $0x398] sm:$0xff]
  %v8244 = vld [vmem:[%s5 + $0x3a0] sm:$0xff]
  %v8245 = vld [vmem:[%s5 + $0x3a8] sm:$0xff]
  %v8246 = vld [vmem:[%s5 + $0x3b0] sm:$0xff]
  %v8247 = vld [vmem:[%s5 + $0x3b8] sm:$0xff]
  %v8248 = vld [vmem:[%s5 + $0x3c0] sm:$0xff]
  %v8249 = vld [vmem:[%s5 + $0x3c8] sm:$0xff]
  %v8250 = vld [vmem:[%s5 + $0x3d0] sm:$0xff]
  %v8251 = vld [vmem:[%s5 + $0x3d8] sm:$0xff]
  %v8252 = vld [vmem:[%s5 + $0x3e0] sm:$0xff]
  %v8253 = vld [vmem:[%s5 + $0x3e8] sm:$0xff]
  %v8254 = vld [vmem:[%s5 + $0x3f0] sm:$0xff]
  %v8255 = vld [vmem:[%s5 + $0x3f8] sm:$0xff]
  %v8256 = vld [vmem:[%s5 + $0x400] sm:$0xff]
  %v8257 = vld [vmem:[%s5 + $0x408] sm:$0xff]
  %v8258 = vld [vmem:[%s5 + $0x410] sm:$0xff]
  %v8259 = vld [vmem:[%s5 + $0x418] sm:$0xff]
  %v8260 = vld [vmem:[%s5 + $0x420] sm:$0xff]
  %v8261 = vld [vmem:[%s5 + $0x428] sm:$0xff]
  %v8262 = vld [vmem:[%s5 + $0x430] sm:$0xff]
  %v8263 = vld [vmem:[%s5 + $0x438] sm:$0xff]
  %v8264 = vld [vmem:[%s5 + $0x440] sm:$0xff]
  %v8265 = vld [vmem:[%s5 + $0x448] sm:$0xff]
  %v8266 = vld [vmem:[%s5 + $0x450] sm:$0xff]
  %v8267 = vld [vmem:[%s5 + $0x458] sm:$0xff]
  %v8268 = vld [vmem:[%s5 + $0x460] sm:$0xff]
  %v8269 = vld [vmem:[%s5 + $0x468] sm:$0xff]
  %v8270 = vld [vmem:[%s5 + $0x470] sm:$0xff]
  %v8271 = vld [vmem:[%s5 + $0x478] sm:$0xff]
  %v8272 = vld [vmem:[%s5 + $0x480] sm:$0xff]
  %v8273 = vld [vmem:[%s5 + $0x488] sm:$0xff]
  %v8274 = vld [vmem:[%s5 + $0x490] sm:$0xff]
  %v8275 = vld [vmem:[%s5 + $0x498] sm:$0xff]
  %v8276 = vld [vmem:[%s5 + $0x4a0] sm:$0xff]
  %v8277 = vld [vmem:[%s5 + $0x4a8] sm:$0xff]
  %v8278 = vld [vmem:[%s5 + $0x4b0] sm:$0xff]
  %v8279 = vld [vmem:[%s5 + $0x4b8] sm:$0xff]
  %v8280 = vld [vmem:[%s5 + $0x4c0] sm:$0xff]
  %v8281 = vld [vmem:[%s5 + $0x4c8] sm:$0xff]
  %v8282 = vld [vmem:[%s5 + $0x4d0] sm:$0xff]
  %v8283 = vld [vmem:[%s5 + $0x4d8] sm:$0xff]
  %v8284 = vld [vmem:[%s5 + $0x4e0] sm:$0xff]
  %v8285 = vld [vmem:[%s5 + $0x4e8] sm:$0xff]
  %v8286 = vld [vmem:[%s5 + $0x4f0] sm:$0xff]
  %v8287 = vld [vmem:[%s5 + $0x4f8] sm:$0xff]
  %v8288 = vld [vmem:[%s5 + $0x500] sm:$0xff]
  %v8289 = vld [vmem:[%s5 + $0x508] sm:$0xff]
  %v8290 = vld [vmem:[%s5 + $0x510] sm:$0xff]
  %v8291 = vld [vmem:[%s5 + $0x518] sm:$0xff]
  %v8292 = vld [vmem:[%s5 + $0x520] sm:$0xff]
  %v8293 = vld [vmem:[%s5 + $0x528] sm:$0xff]
  %v8294 = vld [vmem:[%s5 + $0x530] sm:$0xff]
  %v8295 = vld [vmem:[%s5 + $0x538] sm:$0xff]
  %v8296 = vld [vmem:[%s5 + $0x540] sm:$0xff]
  %v8297 = vld [vmem:[%s5 + $0x548] sm:$0xff]
  %v8298 = vld [vmem:[%s5 + $0x550] sm:$0xff]
  %v8299 = vld [vmem:[%s5 + $0x558] sm:$0xff]
  %v8300 = vld [vmem:[%s5 + $0x560] sm:$0xff]
  %v8301 = vld [vmem:[%s5 + $0x568] sm:$0xff]
  %v8302 = vld [vmem:[%s5 + $0x570] sm:$0xff]
  %v8303 = vld [vmem:[%s5 + $0x578] sm:$0xff]
  %v8304 = vld [vmem:[%s5 + $0x580] sm:$0xff]
  %v8305 = vld [vmem:[%s5 + $0x588] sm:$0xff]
  %v8306 = vld [vmem:[%s5 + $0x590] sm:$0xff]
  %v8307 = vld [vmem:[%s5 + $0x598] sm:$0xff]
  %v8308 = vld [vmem:[%s5 + $0x5a0] sm:$0xff]
  %v8309 = vld [vmem:[%s5 + $0x5a8] sm:$0xff]
  %v8310 = vld [vmem:[%s5 + $0x5b0] sm:$0xff]
  %v8311 = vld [vmem:[%s5 + $0x5b8] sm:$0xff]
  %v8312 = vld [vmem:[%s5 + $0x5c0] sm:$0xff]
  %v8313 = vld [vmem:[%s5 + $0x5c8] sm:$0xff]
  %v8314 = vld [vmem:[%s5 + $0x5d0] sm:$0xff]
  %v8315 = vld [vmem:[%s5 + $0x5d8] sm:$0xff]
  %v8316 = vld [vmem:[%s5 + $0x5e0] sm:$0xff]
  %v8317 = vld [vmem:[%s5 + $0x5e8] sm:$0xff]
  %v8318 = vld [vmem:[%s5 + $0x5f0] sm:$0xff]
  %v8319 = vld [vmem:[%s5 + $0x5f8] sm:$0xff]
  %v8320 = vld [vmem:[%s5 + $0x600] sm:$0xff]
  %v8321 = vld [vmem:[%s5 + $0x608] sm:$0xff]
  %v8322 = vld [vmem:[%s5 + $0x610] sm:$0xff]
  %v8323 = vld [vmem:[%s5 + $0x618] sm:$0xff]
  %v8324 = vld [vmem:[%s5 + $0x620] sm:$0xff]
  %v8325 = vld [vmem:[%s5 + $0x628] sm:$0xff]
  %v8326 = vld [vmem:[%s5 + $0x630] sm:$0xff]
  %v8327 = vld [vmem:[%s5 + $0x638] sm:$0xff]
  %v8328 = vld [vmem:[%s5 + $0x640] sm:$0xff]
  %v8329 = vld [vmem:[%s5 + $0x648] sm:$0xff]
  %v8330 = vld [vmem:[%s5 + $0x650] sm:$0xff]
  %v8331 = vld [vmem:[%s5 + $0x658] sm:$0xff]
  %v8332 = vld [vmem:[%s5 + $0x660] sm:$0xff]
  %v8333 = vld [vmem:[%s5 + $0x668] sm:$0xff]
  %v8334 = vld [vmem:[%s5 + $0x670] sm:$0xff]
  %v8335 = vld [vmem:[%s5 + $0x678] sm:$0xff]
  %v8336 = vld [vmem:[%s5 + $0x680] sm:$0xff]
  %v8337 = vld [vmem:[%s5 + $0x688] sm:$0xff]
  %v8338 = vld [vmem:[%s5 + $0x690] sm:$0xff]
  %v8339 = vld [vmem:[%s5 + $0x698] sm:$0xff]
  %v8340 = vld [vmem:[%s5 + $0x6a0] sm:$0xff]
  %v8341 = vld [vmem:[%s5 + $0x6a8] sm:$0xff]
  %v8342 = vld [vmem:[%s5 + $0x6b0] sm:$0xff]
  %v8343 = vld [vmem:[%s5 + $0x6b8] sm:$0xff]
  %v8344 = vld [vmem:[%s5 + $0x6c0] sm:$0xff]
  %v8345 = vld [vmem:[%s5 + $0x6c8] sm:$0xff]
  %v8346 = vld [vmem:[%s5 + $0x6d0] sm:$0xff]
  %v8347 = vld [vmem:[%s5 + $0x6d8] sm:$0xff]
  %v8348 = vld [vmem:[%s5 + $0x6e0] sm:$0xff]
  %v8349 = vld [vmem:[%s5 + $0x6e8] sm:$0xff]
  %v8350 = vld [vmem:[%s5 + $0x6f0] sm:$0xff]
  %v8351 = vld [vmem:[%s5 + $0x6f8] sm:$0xff]
  %v8352 = vld [vmem:[%s5 + $0x700] sm:$0xff]
  %v8353 = vld [vmem:[%s5 + $0x708] sm:$0xff]
  %v8354 = vld [vmem:[%s5 + $0x710] sm:$0xff]
  %v8355 = vld [vmem:[%s5 + $0x718] sm:$0xff]
  %v8356 = vld [vmem:[%s5 + $0x720] sm:$0xff]
  %v8357 = vld [vmem:[%s5 + $0x728] sm:$0xff]
  %v8358 = vld [vmem:[%s5 + $0x730] sm:$0xff]
  %v8359 = vld [vmem:[%s5 + $0x738] sm:$0xff]
  %v8360 = vld [vmem:[%s5 + $0x740] sm:$0xff]
  %v8361 = vld [vmem:[%s5 + $0x748] sm:$0xff]
  %v8362 = vld [vmem:[%s5 + $0x750] sm:$0xff]
  %v8363 = vld [vmem:[%s5 + $0x758] sm:$0xff]
  %v8364 = vld [vmem:[%s5 + $0x760] sm:$0xff]
  %v8365 = vld [vmem:[%s5 + $0x768] sm:$0xff]
  %v8366 = vld [vmem:[%s5 + $0x770] sm:$0xff]
  %v8367 = vld [vmem:[%s5 + $0x778] sm:$0xff]
  %v8368 = vld [vmem:[%s5 + $0x780] sm:$0xff]
  %v8369 = vld [vmem:[%s5 + $0x788] sm:$0xff]
  %v8370 = vld [vmem:[%s5 + $0x790] sm:$0xff]
  %v8371 = vld [vmem:[%s5 + $0x798] sm:$0xff]
  %v8372 = vld [vmem:[%s5 + $0x7a0] sm:$0xff]
  %v8373 = vld [vmem:[%s5 + $0x7a8] sm:$0xff]
  %v8374 = vld [vmem:[%s5 + $0x7b0] sm:$0xff]
  %v8375 = vld [vmem:[%s5 + $0x7b8] sm:$0xff]
  %v8376 = vld [vmem:[%s5 + $0x7c0] sm:$0xff]
  %v8377 = vld [vmem:[%s5 + $0x7c8] sm:$0xff]
  %v8378 = vld [vmem:[%s5 + $0x7d0] sm:$0xff]
  %v8379 = vld [vmem:[%s5 + $0x7d8] sm:$0xff]
  %v8380 = vld [vmem:[%s5 + $0x7e0] sm:$0xff]
  %v8381 = vld [vmem:[%s5 + $0x7e8] sm:$0xff]
  %v8382 = vld [vmem:[%s5 + $0x7f0] sm:$0xff]
  %v8383 = vld [vmem:[%s5 + $0x7f8] sm:$0xff]
  %v8384 = vld [vmem:[%s6] sm:$0xf]
  %v8386 = vlaneseq
  %v8387 = vshrl.u32 %v8386, 7
  %v8388 = vsub.s32 0, %v8387
  %v8389 = vrot.slane %v8384, %v8388
  %v8390 = vlaneseq
  %v8391 = vshrl.u32 %v8390, 7
  %v8392 = vsub.s32 1, %v8391
  %v8393 = vrot.slane %v8384, %v8392
  %v8394 = vlaneseq
  %v8395 = vshrl.u32 %v8394, 7
  %v8396 = vsub.s32 2, %v8395
  %v8397 = vrot.slane %v8384, %v8396
  %v8398 = vlaneseq
  %v8399 = vshrl.u32 %v8398, 7
  %v8400 = vsub.s32 3, %v8399
  %v8401 = vrot.slane %v8384, %v8400
  %v8662 = vunpack.c.l.b16 %v8128
  %v8663 = vunpack.c.h.b16 %v8128
  %v8664 = vunpack.c.l.b16 %v8129
  %v8665 = vunpack.c.h.b16 %v8129
  %v8666 = vunpack.c.l.b16 %v8130
  %v8667 = vunpack.c.h.b16 %v8130
  %v8668 = vunpack.c.l.b16 %v8131
  %v8669 = vunpack.c.h.b16 %v8131
  %v8670 = vunpack.c.l.b16 %v8132
  %v8671 = vunpack.c.h.b16 %v8132
  %v8672 = vunpack.c.l.b16 %v8133
  %v8673 = vunpack.c.h.b16 %v8133
  %v8674 = vunpack.c.l.b16 %v8134
  %v8675 = vunpack.c.h.b16 %v8134
  %v8676 = vunpack.c.l.b16 %v8135
  %v8677 = vunpack.c.h.b16 %v8135
  %v8678 = vunpack.c.l.b16 %v8136
  %v8679 = vunpack.c.h.b16 %v8136
  %v8680 = vunpack.c.l.b16 %v8137
  %v8681 = vunpack.c.h.b16 %v8137
  %v8682 = vunpack.c.l.b16 %v8138
  %v8683 = vunpack.c.h.b16 %v8138
  %v8684 = vunpack.c.l.b16 %v8139
  %v8685 = vunpack.c.h.b16 %v8139
  %v8686 = vunpack.c.l.b16 %v8140
  %v8687 = vunpack.c.h.b16 %v8140
  %v8688 = vunpack.c.l.b16 %v8141
  %v8689 = vunpack.c.h.b16 %v8141
  %v8690 = vunpack.c.l.b16 %v8142
  %v8691 = vunpack.c.h.b16 %v8142
  %v8692 = vunpack.c.l.b16 %v8143
  %v8693 = vunpack.c.h.b16 %v8143
  %v8694 = vunpack.c.l.b16 %v8144
  %v8695 = vunpack.c.h.b16 %v8144
  %v8696 = vunpack.c.l.b16 %v8145
  %v8697 = vunpack.c.h.b16 %v8145
  %v8698 = vunpack.c.l.b16 %v8146
  %v8699 = vunpack.c.h.b16 %v8146
  %v8700 = vunpack.c.l.b16 %v8147
  %v8701 = vunpack.c.h.b16 %v8147
  %v8702 = vunpack.c.l.b16 %v8148
  %v8703 = vunpack.c.h.b16 %v8148
  %v8704 = vunpack.c.l.b16 %v8149
  %v8705 = vunpack.c.h.b16 %v8149
  %v8706 = vunpack.c.l.b16 %v8150
  %v8707 = vunpack.c.h.b16 %v8150
  %v8708 = vunpack.c.l.b16 %v8151
  %v8709 = vunpack.c.h.b16 %v8151
  %v8710 = vunpack.c.l.b16 %v8152
  %v8711 = vunpack.c.h.b16 %v8152
  %v8712 = vunpack.c.l.b16 %v8153
  %v8713 = vunpack.c.h.b16 %v8153
  %v8714 = vunpack.c.l.b16 %v8154
  %v8715 = vunpack.c.h.b16 %v8154
  %v8716 = vunpack.c.l.b16 %v8155
  %v8717 = vunpack.c.h.b16 %v8155
  %v8718 = vunpack.c.l.b16 %v8156
  %v8719 = vunpack.c.h.b16 %v8156
  %v8720 = vunpack.c.l.b16 %v8157
  %v8721 = vunpack.c.h.b16 %v8157
  %v8722 = vunpack.c.l.b16 %v8158
  %v8723 = vunpack.c.h.b16 %v8158
  %v8724 = vunpack.c.l.b16 %v8159
  %v8725 = vunpack.c.h.b16 %v8159
  %v8726 = vunpack.c.l.b16 %v8160
  %v8727 = vunpack.c.h.b16 %v8160
  %v8728 = vunpack.c.l.b16 %v8161
  %v8729 = vunpack.c.h.b16 %v8161
  %v8730 = vunpack.c.l.b16 %v8162
  %v8731 = vunpack.c.h.b16 %v8162
  %v8732 = vunpack.c.l.b16 %v8163
  %v8733 = vunpack.c.h.b16 %v8163
  %v8734 = vunpack.c.l.b16 %v8164
  %v8735 = vunpack.c.h.b16 %v8164
  %v8736 = vunpack.c.l.b16 %v8165
  %v8737 = vunpack.c.h.b16 %v8165
  %v8738 = vunpack.c.l.b16 %v8166
  %v8739 = vunpack.c.h.b16 %v8166
  %v8740 = vunpack.c.l.b16 %v8167
  %v8741 = vunpack.c.h.b16 %v8167
  %v8742 = vunpack.c.l.b16 %v8168
  %v8743 = vunpack.c.h.b16 %v8168
  %v8744 = vunpack.c.l.b16 %v8169
  %v8745 = vunpack.c.h.b16 %v8169
  %v8746 = vunpack.c.l.b16 %v8170
  %v8747 = vunpack.c.h.b16 %v8170
  %v8748 = vunpack.c.l.b16 %v8171
  %v8749 = vunpack.c.h.b16 %v8171
  %v8750 = vunpack.c.l.b16 %v8172
  %v8751 = vunpack.c.h.b16 %v8172
  %v8752 = vunpack.c.l.b16 %v8173
  %v8753 = vunpack.c.h.b16 %v8173
  %v8754 = vunpack.c.l.b16 %v8174
  %v8755 = vunpack.c.h.b16 %v8174
  %v8756 = vunpack.c.l.b16 %v8175
  %v8757 = vunpack.c.h.b16 %v8175
  %v8758 = vunpack.c.l.b16 %v8176
  %v8759 = vunpack.c.h.b16 %v8176
  %v8760 = vunpack.c.l.b16 %v8177
  %v8761 = vunpack.c.h.b16 %v8177
  %v8762 = vunpack.c.l.b16 %v8178
  %v8763 = vunpack.c.h.b16 %v8178
  %v8764 = vunpack.c.l.b16 %v8179
  %v8765 = vunpack.c.h.b16 %v8179
  %v8766 = vunpack.c.l.b16 %v8180
  %v8767 = vunpack.c.h.b16 %v8180
  %v8768 = vunpack.c.l.b16 %v8181
  %v8769 = vunpack.c.h.b16 %v8181
  %v8770 = vunpack.c.l.b16 %v8182
  %v8771 = vunpack.c.h.b16 %v8182
  %v8772 = vunpack.c.l.b16 %v8183
  %v8773 = vunpack.c.h.b16 %v8183
  %v8774 = vunpack.c.l.b16 %v8184
  %v8775 = vunpack.c.h.b16 %v8184
  %v8776 = vunpack.c.l.b16 %v8185
  %v8777 = vunpack.c.h.b16 %v8185
  %v8778 = vunpack.c.l.b16 %v8186
  %v8779 = vunpack.c.h.b16 %v8186
  %v8780 = vunpack.c.l.b16 %v8187
  %v8781 = vunpack.c.h.b16 %v8187
  %v8782 = vunpack.c.l.b16 %v8188
  %v8783 = vunpack.c.h.b16 %v8188
  %v8784 = vunpack.c.l.b16 %v8189
  %v8785 = vunpack.c.h.b16 %v8189
  %v8786 = vunpack.c.l.b16 %v8190
  %v8787 = vunpack.c.h.b16 %v8190
  %v8788 = vunpack.c.l.b16 %v8191
  %v8789 = vunpack.c.h.b16 %v8191
  %v8790 = vunpack.c.l.b16 %v8192
  %v8791 = vunpack.c.h.b16 %v8192
  %v8792 = vunpack.c.l.b16 %v8193
  %v8793 = vunpack.c.h.b16 %v8193
  %v8794 = vunpack.c.l.b16 %v8194
  %v8795 = vunpack.c.h.b16 %v8194
  %v8796 = vunpack.c.l.b16 %v8195
  %v8797 = vunpack.c.h.b16 %v8195
  %v8798 = vunpack.c.l.b16 %v8196
  %v8799 = vunpack.c.h.b16 %v8196
  %v8800 = vunpack.c.l.b16 %v8197
  %v8801 = vunpack.c.h.b16 %v8197
  %v8802 = vunpack.c.l.b16 %v8198
  %v8803 = vunpack.c.h.b16 %v8198
  %v8804 = vunpack.c.l.b16 %v8199
  %v8805 = vunpack.c.h.b16 %v8199
  %v8806 = vunpack.c.l.b16 %v8200
  %v8807 = vunpack.c.h.b16 %v8200
  %v8808 = vunpack.c.l.b16 %v8201
  %v8809 = vunpack.c.h.b16 %v8201
  %v8810 = vunpack.c.l.b16 %v8202
  %v8811 = vunpack.c.h.b16 %v8202
  %v8812 = vunpack.c.l.b16 %v8203
  %v8813 = vunpack.c.h.b16 %v8203
  %v8814 = vunpack.c.l.b16 %v8204
  %v8815 = vunpack.c.h.b16 %v8204
  %v8816 = vunpack.c.l.b16 %v8205
  %v8817 = vunpack.c.h.b16 %v8205
  %v8818 = vunpack.c.l.b16 %v8206
  %v8819 = vunpack.c.h.b16 %v8206
  %v8820 = vunpack.c.l.b16 %v8207
  %v8821 = vunpack.c.h.b16 %v8207
  %v8822 = vunpack.c.l.b16 %v8208
  %v8823 = vunpack.c.h.b16 %v8208
  %v8824 = vunpack.c.l.b16 %v8209
  %v8825 = vunpack.c.h.b16 %v8209
  %v8826 = vunpack.c.l.b16 %v8210
  %v8827 = vunpack.c.h.b16 %v8210
  %v8828 = vunpack.c.l.b16 %v8211
  %v8829 = vunpack.c.h.b16 %v8211
  %v8830 = vunpack.c.l.b16 %v8212
  %v8831 = vunpack.c.h.b16 %v8212
  %v8832 = vunpack.c.l.b16 %v8213
  %v8833 = vunpack.c.h.b16 %v8213
  %v8834 = vunpack.c.l.b16 %v8214
  %v8835 = vunpack.c.h.b16 %v8214
  %v8836 = vunpack.c.l.b16 %v8215
  %v8837 = vunpack.c.h.b16 %v8215
  %v8838 = vunpack.c.l.b16 %v8216
  %v8839 = vunpack.c.h.b16 %v8216
  %v8840 = vunpack.c.l.b16 %v8217
  %v8841 = vunpack.c.h.b16 %v8217
  %v8842 = vunpack.c.l.b16 %v8218
  %v8843 = vunpack.c.h.b16 %v8218
  %v8844 = vunpack.c.l.b16 %v8219
  %v8845 = vunpack.c.h.b16 %v8219
  %v8846 = vunpack.c.l.b16 %v8220
  %v8847 = vunpack.c.h.b16 %v8220
  %v8848 = vunpack.c.l.b16 %v8221
  %v8849 = vunpack.c.h.b16 %v8221
  %v8850 = vunpack.c.l.b16 %v8222
  %v8851 = vunpack.c.h.b16 %v8222
  %v8852 = vunpack.c.l.b16 %v8223
  %v8853 = vunpack.c.h.b16 %v8223
  %v8854 = vunpack.c.l.b16 %v8224
  %v8855 = vunpack.c.h.b16 %v8224
  %v8856 = vunpack.c.l.b16 %v8225
  %v8857 = vunpack.c.h.b16 %v8225
  %v8858 = vunpack.c.l.b16 %v8226
  %v8859 = vunpack.c.h.b16 %v8226
  %v8860 = vunpack.c.l.b16 %v8227
  %v8861 = vunpack.c.h.b16 %v8227
  %v8862 = vunpack.c.l.b16 %v8228
  %v8863 = vunpack.c.h.b16 %v8228
  %v8864 = vunpack.c.l.b16 %v8229
  %v8865 = vunpack.c.h.b16 %v8229
  %v8866 = vunpack.c.l.b16 %v8230
  %v8867 = vunpack.c.h.b16 %v8230
  %v8868 = vunpack.c.l.b16 %v8231
  %v8869 = vunpack.c.h.b16 %v8231
  %v8870 = vunpack.c.l.b16 %v8232
  %v8871 = vunpack.c.h.b16 %v8232
  %v8872 = vunpack.c.l.b16 %v8233
  %v8873 = vunpack.c.h.b16 %v8233
  %v8874 = vunpack.c.l.b16 %v8234
  %v8875 = vunpack.c.h.b16 %v8234
  %v8876 = vunpack.c.l.b16 %v8235
  %v8877 = vunpack.c.h.b16 %v8235
  %v8878 = vunpack.c.l.b16 %v8236
  %v8879 = vunpack.c.h.b16 %v8236
  %v8880 = vunpack.c.l.b16 %v8237
  %v8881 = vunpack.c.h.b16 %v8237
  %v8882 = vunpack.c.l.b16 %v8238
  %v8883 = vunpack.c.h.b16 %v8238
  %v8884 = vunpack.c.l.b16 %v8239
  %v8885 = vunpack.c.h.b16 %v8239
  %v8886 = vunpack.c.l.b16 %v8240
  %v8887 = vunpack.c.h.b16 %v8240
  %v8888 = vunpack.c.l.b16 %v8241
  %v8889 = vunpack.c.h.b16 %v8241
  %v8890 = vunpack.c.l.b16 %v8242
  %v8891 = vunpack.c.h.b16 %v8242
  %v8892 = vunpack.c.l.b16 %v8243
  %v8893 = vunpack.c.h.b16 %v8243
  %v8894 = vunpack.c.l.b16 %v8244
  %v8895 = vunpack.c.h.b16 %v8244
  %v8896 = vunpack.c.l.b16 %v8245
  %v8897 = vunpack.c.h.b16 %v8245
  %v8898 = vunpack.c.l.b16 %v8246
  %v8899 = vunpack.c.h.b16 %v8246
  %v8900 = vunpack.c.l.b16 %v8247
  %v8901 = vunpack.c.h.b16 %v8247
  %v8902 = vunpack.c.l.b16 %v8248
  %v8903 = vunpack.c.h.b16 %v8248
  %v8904 = vunpack.c.l.b16 %v8249
  %v8905 = vunpack.c.h.b16 %v8249
  %v8906 = vunpack.c.l.b16 %v8250
  %v8907 = vunpack.c.h.b16 %v8250
  %v8908 = vunpack.c.l.b16 %v8251
  %v8909 = vunpack.c.h.b16 %v8251
  %v8910 = vunpack.c.l.b16 %v8252
  %v8911 = vunpack.c.h.b16 %v8252
  %v8912 = vunpack.c.l.b16 %v8253
  %v8913 = vunpack.c.h.b16 %v8253
  %v8914 = vunpack.c.l.b16 %v8254
  %v8915 = vunpack.c.h.b16 %v8254
  %v8916 = vunpack.c.l.b16 %v8255
  %v8917 = vunpack.c.h.b16 %v8255
  %v8918 = vunpack.c.l.b16 %v8256
  %v8919 = vunpack.c.h.b16 %v8256
  %v8920 = vunpack.c.l.b16 %v8257
  %v8921 = vunpack.c.h.b16 %v8257
  %v8922 = vunpack.c.l.b16 %v8258
  %v8923 = vunpack.c.h.b16 %v8258
  %v8924 = vunpack.c.l.b16 %v8259
  %v8925 = vunpack.c.h.b16 %v8259
  %v8926 = vunpack.c.l.b16 %v8260
  %v8927 = vunpack.c.h.b16 %v8260
  %v8928 = vunpack.c.l.b16 %v8261
  %v8929 = vunpack.c.h.b16 %v8261
  %v8930 = vunpack.c.l.b16 %v8262
  %v8931 = vunpack.c.h.b16 %v8262
  %v8932 = vunpack.c.l.b16 %v8263
  %v8933 = vunpack.c.h.b16 %v8263
  %v8934 = vunpack.c.l.b16 %v8264
  %v8935 = vunpack.c.h.b16 %v8264
  %v8936 = vunpack.c.l.b16 %v8265
  %v8937 = vunpack.c.h.b16 %v8265
  %v8938 = vunpack.c.l.b16 %v8266
  %v8939 = vunpack.c.h.b16 %v8266
  %v8940 = vunpack.c.l.b16 %v8267
  %v8941 = vunpack.c.h.b16 %v8267
  %v8942 = vunpack.c.l.b16 %v8268
  %v8943 = vunpack.c.h.b16 %v8268
  %v8944 = vunpack.c.l.b16 %v8269
  %v8945 = vunpack.c.h.b16 %v8269
  %v8946 = vunpack.c.l.b16 %v8270
  %v8947 = vunpack.c.h.b16 %v8270
  %v8948 = vunpack.c.l.b16 %v8271
  %v8949 = vunpack.c.h.b16 %v8271
  %v8950 = vunpack.c.l.b16 %v8272
  %v8951 = vunpack.c.h.b16 %v8272
  %v8952 = vunpack.c.l.b16 %v8273
  %v8953 = vunpack.c.h.b16 %v8273
  %v8954 = vunpack.c.l.b16 %v8274
  %v8955 = vunpack.c.h.b16 %v8274
  %v8956 = vunpack.c.l.b16 %v8275
  %v8957 = vunpack.c.h.b16 %v8275
  %v8958 = vunpack.c.l.b16 %v8276
  %v8959 = vunpack.c.h.b16 %v8276
  %v8960 = vunpack.c.l.b16 %v8277
  %v8961 = vunpack.c.h.b16 %v8277
  %v8962 = vunpack.c.l.b16 %v8278
  %v8963 = vunpack.c.h.b16 %v8278
  %v8964 = vunpack.c.l.b16 %v8279
  %v8965 = vunpack.c.h.b16 %v8279
  %v8966 = vunpack.c.l.b16 %v8280
  %v8967 = vunpack.c.h.b16 %v8280
  %v8968 = vunpack.c.l.b16 %v8281
  %v8969 = vunpack.c.h.b16 %v8281
  %v8970 = vunpack.c.l.b16 %v8282
  %v8971 = vunpack.c.h.b16 %v8282
  %v8972 = vunpack.c.l.b16 %v8283
  %v8973 = vunpack.c.h.b16 %v8283
  %v8974 = vunpack.c.l.b16 %v8284
  %v8975 = vunpack.c.h.b16 %v8284
  %v8976 = vunpack.c.l.b16 %v8285
  %v8977 = vunpack.c.h.b16 %v8285
  %v8978 = vunpack.c.l.b16 %v8286
  %v8979 = vunpack.c.h.b16 %v8286
  %v8980 = vunpack.c.l.b16 %v8287
  %v8981 = vunpack.c.h.b16 %v8287
  %v8982 = vunpack.c.l.b16 %v8288
  %v8983 = vunpack.c.h.b16 %v8288
  %v8984 = vunpack.c.l.b16 %v8289
  %v8985 = vunpack.c.h.b16 %v8289
  %v8986 = vunpack.c.l.b16 %v8290
  %v8987 = vunpack.c.h.b16 %v8290
  %v8988 = vunpack.c.l.b16 %v8291
  %v8989 = vunpack.c.h.b16 %v8291
  %v8990 = vunpack.c.l.b16 %v8292
  %v8991 = vunpack.c.h.b16 %v8292
  %v8992 = vunpack.c.l.b16 %v8293
  %v8993 = vunpack.c.h.b16 %v8293
  %v8994 = vunpack.c.l.b16 %v8294
  %v8995 = vunpack.c.h.b16 %v8294
  %v8996 = vunpack.c.l.b16 %v8295
  %v8997 = vunpack.c.h.b16 %v8295
  %v8998 = vunpack.c.l.b16 %v8296
  %v8999 = vunpack.c.h.b16 %v8296
  %v9000 = vunpack.c.l.b16 %v8297
  %v9001 = vunpack.c.h.b16 %v8297
  %v9002 = vunpack.c.l.b16 %v8298
  %v9003 = vunpack.c.h.b16 %v8298
  %v9004 = vunpack.c.l.b16 %v8299
  %v9005 = vunpack.c.h.b16 %v8299
  %v9006 = vunpack.c.l.b16 %v8300
  %v9007 = vunpack.c.h.b16 %v8300
  %v9008 = vunpack.c.l.b16 %v8301
  %v9009 = vunpack.c.h.b16 %v8301
  %v9010 = vunpack.c.l.b16 %v8302
  %v9011 = vunpack.c.h.b16 %v8302
  %v9012 = vunpack.c.l.b16 %v8303
  %v9013 = vunpack.c.h.b16 %v8303
  %v9014 = vunpack.c.l.b16 %v8304
  %v9015 = vunpack.c.h.b16 %v8304
  %v9016 = vunpack.c.l.b16 %v8305
  %v9017 = vunpack.c.h.b16 %v8305
  %v9018 = vunpack.c.l.b16 %v8306
  %v9019 = vunpack.c.h.b16 %v8306
  %v9020 = vunpack.c.l.b16 %v8307
  %v9021 = vunpack.c.h.b16 %v8307
  %v9022 = vunpack.c.l.b16 %v8308
  %v9023 = vunpack.c.h.b16 %v8308
  %v9024 = vunpack.c.l.b16 %v8309
  %v9025 = vunpack.c.h.b16 %v8309
  %v9026 = vunpack.c.l.b16 %v8310
  %v9027 = vunpack.c.h.b16 %v8310
  %v9028 = vunpack.c.l.b16 %v8311
  %v9029 = vunpack.c.h.b16 %v8311
  %v9030 = vunpack.c.l.b16 %v8312
  %v9031 = vunpack.c.h.b16 %v8312
  %v9032 = vunpack.c.l.b16 %v8313
  %v9033 = vunpack.c.h.b16 %v8313
  %v9034 = vunpack.c.l.b16 %v8314
  %v9035 = vunpack.c.h.b16 %v8314
  %v9036 = vunpack.c.l.b16 %v8315
  %v9037 = vunpack.c.h.b16 %v8315
  %v9038 = vunpack.c.l.b16 %v8316
  %v9039 = vunpack.c.h.b16 %v8316
  %v9040 = vunpack.c.l.b16 %v8317
  %v9041 = vunpack.c.h.b16 %v8317
  %v9042 = vunpack.c.l.b16 %v8318
  %v9043 = vunpack.c.h.b16 %v8318
  %v9044 = vunpack.c.l.b16 %v8319
  %v9045 = vunpack.c.h.b16 %v8319
  %v9046 = vunpack.c.l.b16 %v8320
  %v9047 = vunpack.c.h.b16 %v8320
  %v9048 = vunpack.c.l.b16 %v8321
  %v9049 = vunpack.c.h.b16 %v8321
  %v9050 = vunpack.c.l.b16 %v8322
  %v9051 = vunpack.c.h.b16 %v8322
  %v9052 = vunpack.c.l.b16 %v8323
  %v9053 = vunpack.c.h.b16 %v8323
  %v9054 = vunpack.c.l.b16 %v8324
  %v9055 = vunpack.c.h.b16 %v8324
  %v9056 = vunpack.c.l.b16 %v8325
  %v9057 = vunpack.c.h.b16 %v8325
  %v9058 = vunpack.c.l.b16 %v8326
  %v9059 = vunpack.c.h.b16 %v8326
  %v9060 = vunpack.c.l.b16 %v8327
  %v9061 = vunpack.c.h.b16 %v8327
  %v9062 = vunpack.c.l.b16 %v8328
  %v9063 = vunpack.c.h.b16 %v8328
  %v9064 = vunpack.c.l.b16 %v8329
  %v9065 = vunpack.c.h.b16 %v8329
  %v9066 = vunpack.c.l.b16 %v8330
  %v9067 = vunpack.c.h.b16 %v8330
  %v9068 = vunpack.c.l.b16 %v8331
  %v9069 = vunpack.c.h.b16 %v8331
  %v9070 = vunpack.c.l.b16 %v8332
  %v9071 = vunpack.c.h.b16 %v8332
  %v9072 = vunpack.c.l.b16 %v8333
  %v9073 = vunpack.c.h.b16 %v8333
  %v9074 = vunpack.c.l.b16 %v8334
  %v9075 = vunpack.c.h.b16 %v8334
  %v9076 = vunpack.c.l.b16 %v8335
  %v9077 = vunpack.c.h.b16 %v8335
  %v9078 = vunpack.c.l.b16 %v8336
  %v9079 = vunpack.c.h.b16 %v8336
  %v9080 = vunpack.c.l.b16 %v8337
  %v9081 = vunpack.c.h.b16 %v8337
  %v9082 = vunpack.c.l.b16 %v8338
  %v9083 = vunpack.c.h.b16 %v8338
  %v9084 = vunpack.c.l.b16 %v8339
  %v9085 = vunpack.c.h.b16 %v8339
  %v9086 = vunpack.c.l.b16 %v8340
  %v9087 = vunpack.c.h.b16 %v8340
  %v9088 = vunpack.c.l.b16 %v8341
  %v9089 = vunpack.c.h.b16 %v8341
  %v9090 = vunpack.c.l.b16 %v8342
  %v9091 = vunpack.c.h.b16 %v8342
  %v9092 = vunpack.c.l.b16 %v8343
  %v9093 = vunpack.c.h.b16 %v8343
  %v9094 = vunpack.c.l.b16 %v8344
  %v9095 = vunpack.c.h.b16 %v8344
  %v9096 = vunpack.c.l.b16 %v8345
  %v9097 = vunpack.c.h.b16 %v8345
  %v9098 = vunpack.c.l.b16 %v8346
  %v9099 = vunpack.c.h.b16 %v8346
  %v9100 = vunpack.c.l.b16 %v8347
  %v9101 = vunpack.c.h.b16 %v8347
  %v9102 = vunpack.c.l.b16 %v8348
  %v9103 = vunpack.c.h.b16 %v8348
  %v9104 = vunpack.c.l.b16 %v8349
  %v9105 = vunpack.c.h.b16 %v8349
  %v9106 = vunpack.c.l.b16 %v8350
  %v9107 = vunpack.c.h.b16 %v8350
  %v9108 = vunpack.c.l.b16 %v8351
  %v9109 = vunpack.c.h.b16 %v8351
  %v9110 = vunpack.c.l.b16 %v8352
  %v9111 = vunpack.c.h.b16 %v8352
  %v9112 = vunpack.c.l.b16 %v8353
  %v9113 = vunpack.c.h.b16 %v8353
  %v9114 = vunpack.c.l.b16 %v8354
  %v9115 = vunpack.c.h.b16 %v8354
  %v9116 = vunpack.c.l.b16 %v8355
  %v9117 = vunpack.c.h.b16 %v8355
  %v9118 = vunpack.c.l.b16 %v8356
  %v9119 = vunpack.c.h.b16 %v8356
  %v9120 = vunpack.c.l.b16 %v8357
  %v9121 = vunpack.c.h.b16 %v8357
  %v9122 = vunpack.c.l.b16 %v8358
  %v9123 = vunpack.c.h.b16 %v8358
  %v9124 = vunpack.c.l.b16 %v8359
  %v9125 = vunpack.c.h.b16 %v8359
  %v9126 = vunpack.c.l.b16 %v8360
  %v9127 = vunpack.c.h.b16 %v8360
  %v9128 = vunpack.c.l.b16 %v8361
  %v9129 = vunpack.c.h.b16 %v8361
  %v9130 = vunpack.c.l.b16 %v8362
  %v9131 = vunpack.c.h.b16 %v8362
  %v9132 = vunpack.c.l.b16 %v8363
  %v9133 = vunpack.c.h.b16 %v8363
  %v9134 = vunpack.c.l.b16 %v8364
  %v9135 = vunpack.c.h.b16 %v8364
  %v9136 = vunpack.c.l.b16 %v8365
  %v9137 = vunpack.c.h.b16 %v8365
  %v9138 = vunpack.c.l.b16 %v8366
  %v9139 = vunpack.c.h.b16 %v8366
  %v9140 = vunpack.c.l.b16 %v8367
  %v9141 = vunpack.c.h.b16 %v8367
  %v9142 = vunpack.c.l.b16 %v8368
  %v9143 = vunpack.c.h.b16 %v8368
  %v9144 = vunpack.c.l.b16 %v8369
  %v9145 = vunpack.c.h.b16 %v8369
  %v9146 = vunpack.c.l.b16 %v8370
  %v9147 = vunpack.c.h.b16 %v8370
  %v9148 = vunpack.c.l.b16 %v8371
  %v9149 = vunpack.c.h.b16 %v8371
  %v9150 = vunpack.c.l.b16 %v8372
  %v9151 = vunpack.c.h.b16 %v8372
  %v9152 = vunpack.c.l.b16 %v8373
  %v9153 = vunpack.c.h.b16 %v8373
  %v9154 = vunpack.c.l.b16 %v8374
  %v9155 = vunpack.c.h.b16 %v8374
  %v9156 = vunpack.c.l.b16 %v8375
  %v9157 = vunpack.c.h.b16 %v8375
  %v9158 = vunpack.c.l.b16 %v8376
  %v9159 = vunpack.c.h.b16 %v8376
  %v9160 = vunpack.c.l.b16 %v8377
  %v9161 = vunpack.c.h.b16 %v8377
  %v9162 = vunpack.c.l.b16 %v8378
  %v9163 = vunpack.c.h.b16 %v8378
  %v9164 = vunpack.c.l.b16 %v8379
  %v9165 = vunpack.c.h.b16 %v8379
  %v9166 = vunpack.c.l.b16 %v8380
  %v9167 = vunpack.c.h.b16 %v8380
  %v9168 = vunpack.c.l.b16 %v8381
  %v9169 = vunpack.c.h.b16 %v8381
  %v9170 = vunpack.c.l.b16 %v8382
  %v9171 = vunpack.c.h.b16 %v8382
  %v9172 = vunpack.c.l.b16 %v8383
  %v9173 = vunpack.c.h.b16 %v8383
  %v9174 = vpack.c.b16 %v8666, %v8662
  %v9175 = vpack.c.b16 %v8667, %v8663
  %v9176 = vpack.c.b16 %v8668, %v8664
  %v9177 = vpack.c.b16 %v8669, %v8665
  %v9178 = vpack.c.b16 %v8674, %v8670
  %v9179 = vpack.c.b16 %v8675, %v8671
  %v9180 = vpack.c.b16 %v8676, %v8672
  %v9181 = vpack.c.b16 %v8677, %v8673
  %v9182 = vpack.c.b16 %v8682, %v8678
  %v9183 = vpack.c.b16 %v8683, %v8679
  %v9184 = vpack.c.b16 %v8684, %v8680
  %v9185 = vpack.c.b16 %v8685, %v8681
  %v9186 = vpack.c.b16 %v8690, %v8686
  %v9187 = vpack.c.b16 %v8691, %v8687
  %v9188 = vpack.c.b16 %v8692, %v8688
  %v9189 = vpack.c.b16 %v8693, %v8689
  %v9190 = vpack.c.b16 %v8698, %v8694
  %v9191 = vpack.c.b16 %v8699, %v8695
  %v9192 = vpack.c.b16 %v8700, %v8696
  %v9193 = vpack.c.b16 %v8701, %v8697
  %v9194 = vpack.c.b16 %v8706, %v8702
  %v9195 = vpack.c.b16 %v8707, %v8703
  %v9196 = vpack.c.b16 %v8708, %v8704
  %v9197 = vpack.c.b16 %v8709, %v8705
  %v9198 = vpack.c.b16 %v8714, %v8710
  %v9199 = vpack.c.b16 %v8715, %v8711
  %v9200 = vpack.c.b16 %v8716, %v8712
  %v9201 = vpack.c.b16 %v8717, %v8713
  %v9202 = vpack.c.b16 %v8722, %v8718
  %v9203 = vpack.c.b16 %v8723, %v8719
  %v9204 = vpack.c.b16 %v8724, %v8720
  %v9205 = vpack.c.b16 %v8725, %v8721
  %v9206 = vpack.c.b16 %v8730, %v8726
  %v9207 = vpack.c.b16 %v8731, %v8727
  %v9208 = vpack.c.b16 %v8732, %v8728
  %v9209 = vpack.c.b16 %v8733, %v8729
  %v9210 = vpack.c.b16 %v8738, %v8734
  %v9211 = vpack.c.b16 %v8739, %v8735
  %v9212 = vpack.c.b16 %v8740, %v8736
  %v9213 = vpack.c.b16 %v8741, %v8737
  %v9214 = vpack.c.b16 %v8746, %v8742
  %v9215 = vpack.c.b16 %v8747, %v8743
  %v9216 = vpack.c.b16 %v8748, %v8744
  %v9217 = vpack.c.b16 %v8749, %v8745
  %v9218 = vpack.c.b16 %v8754, %v8750
  %v9219 = vpack.c.b16 %v8755, %v8751
  %v9220 = vpack.c.b16 %v8756, %v8752
  %v9221 = vpack.c.b16 %v8757, %v8753
  %v9222 = vpack.c.b16 %v8762, %v8758
  %v9223 = vpack.c.b16 %v8763, %v8759
  %v9224 = vpack.c.b16 %v8764, %v8760
  %v9225 = vpack.c.b16 %v8765, %v8761
  %v9226 = vpack.c.b16 %v8770, %v8766
  %v9227 = vpack.c.b16 %v8771, %v8767
  %v9228 = vpack.c.b16 %v8772, %v8768
  %v9229 = vpack.c.b16 %v8773, %v8769
  %v9230 = vpack.c.b16 %v8778, %v8774
  %v9231 = vpack.c.b16 %v8779, %v8775
  %v9232 = vpack.c.b16 %v8780, %v8776
  %v9233 = vpack.c.b16 %v8781, %v8777
  %v9234 = vpack.c.b16 %v8786, %v8782
  %v9235 = vpack.c.b16 %v8787, %v8783
  %v9236 = vpack.c.b16 %v8788, %v8784
  %v9237 = vpack.c.b16 %v8789, %v8785
  %v9238 = vpack.c.b16 %v8794, %v8790
  %v9239 = vpack.c.b16 %v8795, %v8791
  %v9240 = vpack.c.b16 %v8796, %v8792
  %v9241 = vpack.c.b16 %v8797, %v8793
  %v9242 = vpack.c.b16 %v8802, %v8798
  %v9243 = vpack.c.b16 %v8803, %v8799
  %v9244 = vpack.c.b16 %v8804, %v8800
  %v9245 = vpack.c.b16 %v8805, %v8801
  %v9246 = vpack.c.b16 %v8810, %v8806
  %v9247 = vpack.c.b16 %v8811, %v8807
  %v9248 = vpack.c.b16 %v8812, %v8808
  %v9249 = vpack.c.b16 %v8813, %v8809
  %v9250 = vpack.c.b16 %v8818, %v8814
  %v9251 = vpack.c.b16 %v8819, %v8815
  %v9252 = vpack.c.b16 %v8820, %v8816
  %v9253 = vpack.c.b16 %v8821, %v8817
  %v9254 = vpack.c.b16 %v8826, %v8822
  %v9255 = vpack.c.b16 %v8827, %v8823
  %v9256 = vpack.c.b16 %v8828, %v8824
  %v9257 = vpack.c.b16 %v8829, %v8825
  %v9258 = vpack.c.b16 %v8834, %v8830
  %v9259 = vpack.c.b16 %v8835, %v8831
  %v9260 = vpack.c.b16 %v8836, %v8832
  %v9261 = vpack.c.b16 %v8837, %v8833
  %v9262 = vpack.c.b16 %v8842, %v8838
  %v9263 = vpack.c.b16 %v8843, %v8839
  %v9264 = vpack.c.b16 %v8844, %v8840
  %v9265 = vpack.c.b16 %v8845, %v8841
  %v9266 = vpack.c.b16 %v8850, %v8846
  %v9267 = vpack.c.b16 %v8851, %v8847
  %v9268 = vpack.c.b16 %v8852, %v8848
  %v9269 = vpack.c.b16 %v8853, %v8849
  %v9270 = vpack.c.b16 %v8858, %v8854
  %v9271 = vpack.c.b16 %v8859, %v8855
  %v9272 = vpack.c.b16 %v8860, %v8856
  %v9273 = vpack.c.b16 %v8861, %v8857
  %v9274 = vpack.c.b16 %v8866, %v8862
  %v9275 = vpack.c.b16 %v8867, %v8863
  %v9276 = vpack.c.b16 %v8868, %v8864
  %v9277 = vpack.c.b16 %v8869, %v8865
  %v9278 = vpack.c.b16 %v8874, %v8870
  %v9279 = vpack.c.b16 %v8875, %v8871
  %v9280 = vpack.c.b16 %v8876, %v8872
  %v9281 = vpack.c.b16 %v8877, %v8873
  %v9282 = vpack.c.b16 %v8882, %v8878
  %v9283 = vpack.c.b16 %v8883, %v8879
  %v9284 = vpack.c.b16 %v8884, %v8880
  %v9285 = vpack.c.b16 %v8885, %v8881
  %v9286 = vpack.c.b16 %v8890, %v8886
  %v9287 = vpack.c.b16 %v8891, %v8887
  %v9288 = vpack.c.b16 %v8892, %v8888
  %v9289 = vpack.c.b16 %v8893, %v8889
  %v9290 = vpack.c.b16 %v8898, %v8894
  %v9291 = vpack.c.b16 %v8899, %v8895
  %v9292 = vpack.c.b16 %v8900, %v8896
  %v9293 = vpack.c.b16 %v8901, %v8897
  %v9294 = vpack.c.b16 %v8906, %v8902
  %v9295 = vpack.c.b16 %v8907, %v8903
  %v9296 = vpack.c.b16 %v8908, %v8904
  %v9297 = vpack.c.b16 %v8909, %v8905
  %v9298 = vpack.c.b16 %v8914, %v8910
  %v9299 = vpack.c.b16 %v8915, %v8911
  %v9300 = vpack.c.b16 %v8916, %v8912
  %v9301 = vpack.c.b16 %v8917, %v8913
  %v9302 = vpack.c.b16 %v8922, %v8918
  %v9303 = vpack.c.b16 %v8923, %v8919
  %v9304 = vpack.c.b16 %v8924, %v8920
  %v9305 = vpack.c.b16 %v8925, %v8921
  %v9306 = vpack.c.b16 %v8930, %v8926
  %v9307 = vpack.c.b16 %v8931, %v8927
  %v9308 = vpack.c.b16 %v8932, %v8928
  %v9309 = vpack.c.b16 %v8933, %v8929
  %v9310 = vpack.c.b16 %v8938, %v8934
  %v9311 = vpack.c.b16 %v8939, %v8935
  %v9312 = vpack.c.b16 %v8940, %v8936
  %v9313 = vpack.c.b16 %v8941, %v8937
  %v9314 = vpack.c.b16 %v8946, %v8942
  %v9315 = vpack.c.b16 %v8947, %v8943
  %v9316 = vpack.c.b16 %v8948, %v8944
  %v9317 = vpack.c.b16 %v8949, %v8945
  %v9318 = vpack.c.b16 %v8954, %v8950
  %v9319 = vpack.c.b16 %v8955, %v8951
  %v9320 = vpack.c.b16 %v8956, %v8952
  %v9321 = vpack.c.b16 %v8957, %v8953
  %v9322 = vpack.c.b16 %v8962, %v8958
  %v9323 = vpack.c.b16 %v8963, %v8959
  %v9324 = vpack.c.b16 %v8964, %v8960
  %v9325 = vpack.c.b16 %v8965, %v8961
  %v9326 = vpack.c.b16 %v8970, %v8966
  %v9327 = vpack.c.b16 %v8971, %v8967
  %v9328 = vpack.c.b16 %v8972, %v8968
  %v9329 = vpack.c.b16 %v8973, %v8969
  %v9330 = vpack.c.b16 %v8978, %v8974
  %v9331 = vpack.c.b16 %v8979, %v8975
  %v9332 = vpack.c.b16 %v8980, %v8976
  %v9333 = vpack.c.b16 %v8981, %v8977
  %v9334 = vpack.c.b16 %v8986, %v8982
  %v9335 = vpack.c.b16 %v8987, %v8983
  %v9336 = vpack.c.b16 %v8988, %v8984
  %v9337 = vpack.c.b16 %v8989, %v8985
  %v9338 = vpack.c.b16 %v8994, %v8990
  %v9339 = vpack.c.b16 %v8995, %v8991
  %v9340 = vpack.c.b16 %v8996, %v8992
  %v9341 = vpack.c.b16 %v8997, %v8993
  %v9342 = vpack.c.b16 %v9002, %v8998
  %v9343 = vpack.c.b16 %v9003, %v8999
  %v9344 = vpack.c.b16 %v9004, %v9000
  %v9345 = vpack.c.b16 %v9005, %v9001
  %v9346 = vpack.c.b16 %v9010, %v9006
  %v9347 = vpack.c.b16 %v9011, %v9007
  %v9348 = vpack.c.b16 %v9012, %v9008
  %v9349 = vpack.c.b16 %v9013, %v9009
  %v9350 = vpack.c.b16 %v9018, %v9014
  %v9351 = vpack.c.b16 %v9019, %v9015
  %v9352 = vpack.c.b16 %v9020, %v9016
  %v9353 = vpack.c.b16 %v9021, %v9017
  %v9354 = vpack.c.b16 %v9026, %v9022
  %v9355 = vpack.c.b16 %v9027, %v9023
  %v9356 = vpack.c.b16 %v9028, %v9024
  %v9357 = vpack.c.b16 %v9029, %v9025
  %v9358 = vpack.c.b16 %v9034, %v9030
  %v9359 = vpack.c.b16 %v9035, %v9031
  %v9360 = vpack.c.b16 %v9036, %v9032
  %v9361 = vpack.c.b16 %v9037, %v9033
  %v9362 = vpack.c.b16 %v9042, %v9038
  %v9363 = vpack.c.b16 %v9043, %v9039
  %v9364 = vpack.c.b16 %v9044, %v9040
  %v9365 = vpack.c.b16 %v9045, %v9041
  %v9366 = vpack.c.b16 %v9050, %v9046
  %v9367 = vpack.c.b16 %v9051, %v9047
  %v9368 = vpack.c.b16 %v9052, %v9048
  %v9369 = vpack.c.b16 %v9053, %v9049
  %v9370 = vpack.c.b16 %v9058, %v9054
  %v9371 = vpack.c.b16 %v9059, %v9055
  %v9372 = vpack.c.b16 %v9060, %v9056
  %v9373 = vpack.c.b16 %v9061, %v9057
  %v9374 = vpack.c.b16 %v9066, %v9062
  %v9375 = vpack.c.b16 %v9067, %v9063
  %v9376 = vpack.c.b16 %v9068, %v9064
  %v9377 = vpack.c.b16 %v9069, %v9065
  %v9378 = vpack.c.b16 %v9074, %v9070
  %v9379 = vpack.c.b16 %v9075, %v9071
  %v9380 = vpack.c.b16 %v9076, %v9072
  %v9381 = vpack.c.b16 %v9077, %v9073
  %v9382 = vpack.c.b16 %v9082, %v9078
  %v9383 = vpack.c.b16 %v9083, %v9079
  %v9384 = vpack.c.b16 %v9084, %v9080
  %v9385 = vpack.c.b16 %v9085, %v9081
  %v9386 = vpack.c.b16 %v9090, %v9086
  %v9387 = vpack.c.b16 %v9091, %v9087
  %v9388 = vpack.c.b16 %v9092, %v9088
  %v9389 = vpack.c.b16 %v9093, %v9089
  %v9390 = vpack.c.b16 %v9098, %v9094
  %v9391 = vpack.c.b16 %v9099, %v9095
  %v9392 = vpack.c.b16 %v9100, %v9096
  %v9393 = vpack.c.b16 %v9101, %v9097
  %v9394 = vpack.c.b16 %v9106, %v9102
  %v9395 = vpack.c.b16 %v9107, %v9103
  %v9396 = vpack.c.b16 %v9108, %v9104
  %v9397 = vpack.c.b16 %v9109, %v9105
  %v9398 = vpack.c.b16 %v9114, %v9110
  %v9399 = vpack.c.b16 %v9115, %v9111
  %v9400 = vpack.c.b16 %v9116, %v9112
  %v9401 = vpack.c.b16 %v9117, %v9113
  %v9402 = vpack.c.b16 %v9122, %v9118
  %v9403 = vpack.c.b16 %v9123, %v9119
  %v9404 = vpack.c.b16 %v9124, %v9120
  %v9405 = vpack.c.b16 %v9125, %v9121
  %v9406 = vpack.c.b16 %v9130, %v9126
  %v9407 = vpack.c.b16 %v9131, %v9127
  %v9408 = vpack.c.b16 %v9132, %v9128
  %v9409 = vpack.c.b16 %v9133, %v9129
  %v9410 = vpack.c.b16 %v9138, %v9134
  %v9411 = vpack.c.b16 %v9139, %v9135
  %v9412 = vpack.c.b16 %v9140, %v9136
  %v9413 = vpack.c.b16 %v9141, %v9137
  %v9414 = vpack.c.b16 %v9146, %v9142
  %v9415 = vpack.c.b16 %v9147, %v9143
  %v9416 = vpack.c.b16 %v9148, %v9144
  %v9417 = vpack.c.b16 %v9149, %v9145
  %v9418 = vpack.c.b16 %v9154, %v9150
  %v9419 = vpack.c.b16 %v9155, %v9151
  %v9420 = vpack.c.b16 %v9156, %v9152
  %v9421 = vpack.c.b16 %v9157, %v9153
  %v9422 = vpack.c.b16 %v9162, %v9158
  %v9423 = vpack.c.b16 %v9163, %v9159
  %v9424 = vpack.c.b16 %v9164, %v9160
  %v9425 = vpack.c.b16 %v9165, %v9161
  %v9426 = vpack.c.b16 %v9170, %v9166
  %v9427 = vpack.c.b16 %v9171, %v9167
  %v9428 = vpack.c.b16 %v9172, %v9168
  %v9429 = vpack.c.b16 %v9173, %v9169
  %9686 = vmatprep.subr.bf16.mxu0 %v9175
  %9687 = vmatpush1.bf16.msra.mxu0 %v9174
  %9688 = vmatprep.subr.bf16.mxu0 %v9179
  %9689 = vmatpush1.bf16.msra.mxu0 %v9178
  %9690 = vmatprep.subr.bf16.mxu0 %v9183
  %9691 = vmatpush1.bf16.msra.mxu0 %v9182
  %9692 = vmatprep.subr.bf16.mxu0 %v9187
  %9693 = vmatpush1.bf16.msra.mxu0 %v9186
  %9694 = vmatprep.subr.bf16.mxu0 %v9191
  %9695 = vmatpush1.bf16.msra.mxu0 %v9190
  %9696 = vmatprep.subr.bf16.mxu0 %v9195
  %9697 = vmatpush1.bf16.msra.mxu0 %v9194
  %9698 = vmatprep.subr.bf16.mxu0 %v9199
  %9699 = vmatpush1.bf16.msra.mxu0 %v9198
  %9700 = vmatprep.subr.bf16.mxu0 %v9203
  %9701 = vmatpush1.bf16.msra.mxu0 %v9202
  %9702 = vmatprep.subr.bf16.mxu0 %v9207
  %9703 = vmatpush1.bf16.msra.mxu0 %v9206
  %9704 = vmatprep.subr.bf16.mxu0 %v9211
  %9705 = vmatpush1.bf16.msra.mxu0 %v9210
  %9706 = vmatprep.subr.bf16.mxu0 %v9215
  %9707 = vmatpush1.bf16.msra.mxu0 %v9214
  %9708 = vmatprep.subr.bf16.mxu0 %v9219
  %9709 = vmatpush1.bf16.msra.mxu0 %v9218
  %9710 = vmatprep.subr.bf16.mxu0 %v9223
  %9711 = vmatpush1.bf16.msra.mxu0 %v9222
  %9712 = vmatprep.subr.bf16.mxu0 %v9227
  %9713 = vmatpush1.bf16.msra.mxu0 %v9226
  %9714 = vmatprep.subr.bf16.mxu0 %v9231
  %9715 = vmatpush1.bf16.msra.mxu0 %v9230
  %9716 = vmatprep.subr.bf16.mxu0 %v9235
  %9717 = vmatpush1.bf16.msra.mxu0 %v9234
  %9718 = vmatprep.mubr.bf16.mxu0 %v8121
  %9719 = vmatmul.mubr.bf16.gmra.mrb[0].mxu0 %v8120
  %v9720 = vpop.f32.mrb[0].mxu0
  %v9721 = vadd.f32 %v8389, %v9720
  %v9722 = vpop.f32.mrb[0].mxu0
  %v9723 = vadd.f32 %v8393, %v9722
  %v9724 = vpop.f32.mrb[0].mxu0
  %v9725 = vpop.f32.mrb[0].mxu0
  %9726 = vdwg.mxu0
  %9727 = vmatprep.subr.bf16.mxu0 %v9239
  %9728 = vmatpush1.bf16.msra.mxu0 %v9238
  %9729 = vmatprep.subr.bf16.mxu0 %v9243
  %9730 = vmatpush1.bf16.msra.mxu0 %v9242
  %9731 = vmatprep.subr.bf16.mxu0 %v9247
  %9732 = vmatpush1.bf16.msra.mxu0 %v9246
  %9733 = vmatprep.subr.bf16.mxu0 %v9251
  %9734 = vmatpush1.bf16.msra.mxu0 %v9250
  %9735 = vmatprep.subr.bf16.mxu0 %v9255
  %9736 = vmatpush1.bf16.msra.mxu0 %v9254
  %9737 = vmatprep.subr.bf16.mxu0 %v9259
  %9738 = vmatpush1.bf16.msra.mxu0 %v9258
  %9739 = vmatprep.subr.bf16.mxu0 %v9263
  %9740 = vmatpush1.bf16.msra.mxu0 %v9262
  %9741 = vmatprep.subr.bf16.mxu0 %v9267
  %9742 = vmatpush1.bf16.msra.mxu0 %v9266
  %9743 = vmatprep.subr.bf16.mxu0 %v9271
  %9744 = vmatpush1.bf16.msra.mxu0 %v9270
  %9745 = vmatprep.subr.bf16.mxu0 %v9275
  %9746 = vmatpush1.bf16.msra.mxu0 %v9274
  %9747 = vmatprep.subr.bf16.mxu0 %v9279
  %9748 = vmatpush1.bf16.msra.mxu0 %v9278
  %9749 = vmatprep.subr.bf16.mxu0 %v9283
  %9750 = vmatpush1.bf16.msra.mxu0 %v9282
  %9751 = vmatprep.subr.bf16.mxu0 %v9287
  %9752 = vmatpush1.bf16.msra.mxu0 %v9286
  %9753 = vmatprep.subr.bf16.mxu0 %v9291
  %9754 = vmatpush1.bf16.msra.mxu0 %v9290
  %9755 = vmatprep.subr.bf16.mxu0 %v9295
  %9756 = vmatpush1.bf16.msra.mxu0 %v9294
  %9757 = vmatprep.subr.bf16.mxu0 %v9299
  %9758 = vmatpush1.bf16.msra.mxu0 %v9298
  %9759 = vmatprep.mubr.bf16.mxu0 %v8123
  %9760 = vmatmul.mubr.bf16.gmra.mrb[0].mxu0 %v8122
  %v9761 = vpop.f32.mrb[0].mxu0
  %v9762 = vadd.f32 %v9721, %v9761
  %v9763 = vpop.f32.mrb[0].mxu0
  %v9764 = vadd.f32 %v9723, %v9763
  %v9765 = vpop.f32.mrb[0].mxu0
  %v9766 = vpop.f32.mrb[0].mxu0
  %9767 = vdwg.mxu0
  %9768 = vmatprep.subr.bf16.mxu0 %v9303
  %9769 = vmatpush1.bf16.msra.mxu0 %v9302
  %9770 = vmatprep.subr.bf16.mxu0 %v9307
  %9771 = vmatpush1.bf16.msra.mxu0 %v9306
  %9772 = vmatprep.subr.bf16.mxu0 %v9311
  %9773 = vmatpush1.bf16.msra.mxu0 %v9310
  %9774 = vmatprep.subr.bf16.mxu0 %v9315
  %9775 = vmatpush1.bf16.msra.mxu0 %v9314
  %9776 = vmatprep.subr.bf16.mxu0 %v9319
  %9777 = vmatpush1.bf16.msra.mxu0 %v9318
  %9778 = vmatprep.subr.bf16.mxu0 %v9323
  %9779 = vmatpush1.bf16.msra.mxu0 %v9322
  %9780 = vmatprep.subr.bf16.mxu0 %v9327
  %9781 = vmatpush1.bf16.msra.mxu0 %v9326
  %9782 = vmatprep.subr.bf16.mxu0 %v9331
  %9783 = vmatpush1.bf16.msra.mxu0 %v9330
  %9784 = vmatprep.subr.bf16.mxu0 %v9335
  %9785 = vmatpush1.bf16.msra.mxu0 %v9334
  %9786 = vmatprep.subr.bf16.mxu0 %v9339
  %9787 = vmatpush1.bf16.msra.mxu0 %v9338
  %9788 = vmatprep.subr.bf16.mxu0 %v9343
  %9789 = vmatpush1.bf16.msra.mxu0 %v9342
  %9790 = vmatprep.subr.bf16.mxu0 %v9347
  %9791 = vmatpush1.bf16.msra.mxu0 %v9346
  %9792 = vmatprep.subr.bf16.mxu0 %v9351
  %9793 = vmatpush1.bf16.msra.mxu0 %v9350
  %9794 = vmatprep.subr.bf16.mxu0 %v9355
  %9795 = vmatpush1.bf16.msra.mxu0 %v9354
  %9796 = vmatprep.subr.bf16.mxu0 %v9359
  %9797 = vmatpush1.bf16.msra.mxu0 %v9358
  %9798 = vmatprep.subr.bf16.mxu0 %v9363
  %9799 = vmatpush1.bf16.msra.mxu0 %v9362
  %9800 = vmatprep.mubr.bf16.mxu0 %v8125
  %9801 = vmatmul.mubr.bf16.gmra.mrb[0].mxu0 %v8124
  %v9802 = vpop.f32.mrb[0].mxu0
  %v9803 = vadd.f32 %v9762, %v9802
  %v9804 = vpop.f32.mrb[0].mxu0
  %v9805 = vadd.f32 %v9764, %v9804
  %v9806 = vpop.f32.mrb[0].mxu0
  %v9807 = vpop.f32.mrb[0].mxu0
  %9808 = vdwg.mxu0
  %9809 = vmatprep.subr.bf16.mxu0 %v9367
  %9810 = vmatpush1.bf16.msra.mxu0 %v9366
  %9811 = vmatprep.subr.bf16.mxu0 %v9371
  %9812 = vmatpush1.bf16.msra.mxu0 %v9370
  %9813 = vmatprep.subr.bf16.mxu0 %v9375
  %9814 = vmatpush1.bf16.msra.mxu0 %v9374
  %9815 = vmatprep.subr.bf16.mxu0 %v9379
  %9816 = vmatpush1.bf16.msra.mxu0 %v9378
  %9817 = vmatprep.subr.bf16.mxu0 %v9383
  %9818 = vmatpush1.bf16.msra.mxu0 %v9382
  %9819 = vmatprep.subr.bf16.mxu0 %v9387
  %9820 = vmatpush1.bf16.msra.mxu0 %v9386
  %9821 = vmatprep.subr.bf16.mxu0 %v9391
  %9822 = vmatpush1.bf16.msra.mxu0 %v9390
  %9823 = vmatprep.subr.bf16.mxu0 %v9395
  %9824 = vmatpush1.bf16.msra.mxu0 %v9394
  %9825 = vmatprep.subr.bf16.mxu0 %v9399
  %9826 = vmatpush1.bf16.msra.mxu0 %v9398
  %9827 = vmatprep.subr.bf16.mxu0 %v9403
  %9828 = vmatpush1.bf16.msra.mxu0 %v9402
  %9829 = vmatprep.subr.bf16.mxu0 %v9407
  %9830 = vmatpush1.bf16.msra.mxu0 %v9406
  %9831 = vmatprep.subr.bf16.mxu0 %v9411
  %9832 = vmatpush1.bf16.msra.mxu0 %v9410
  %9833 = vmatprep.subr.bf16.mxu0 %v9415
  %9834 = vmatpush1.bf16.msra.mxu0 %v9414
  %9835 = vmatprep.subr.bf16.mxu0 %v9419
  %9836 = vmatpush1.bf16.msra.mxu0 %v9418
  %9837 = vmatprep.subr.bf16.mxu0 %v9423
  %9838 = vmatpush1.bf16.msra.mxu0 %v9422
  %9839 = vmatprep.subr.bf16.mxu0 %v9427
  %9840 = vmatpush1.bf16.msra.mxu0 %v9426
  %9841 = vmatprep.mubr.bf16.mxu0 %v8127
  %9842 = vmatmul.mubr.bf16.gmra.mrb[0].mxu0 %v8126
  %v9843 = vpop.f32.mrb[0].mxu0
  %v9844 = vadd.f32 %v9803, %v9843
  %v9845 = vpop.f32.mrb[0].mxu0
  %v9846 = vadd.f32 %v9805, %v9845
  %v9847 = vpop.f32.mrb[0].mxu0
  %v9848 = vpop.f32.mrb[0].mxu0
  %9849 = vdwg.mxu0
  %9850 = vmatprep.subr.bf16.mxu0 %v9177
  %9851 = vmatpush1.bf16.msra.mxu0 %v9176
  %9852 = vmatprep.subr.bf16.mxu0 %v9181
  %9853 = vmatpush1.bf16.msra.mxu0 %v9180
  %9854 = vmatprep.subr.bf16.mxu0 %v9185
  %9855 = vmatpush1.bf16.msra.mxu0 %v9184
  %9856 = vmatprep.subr.bf16.mxu0 %v9189
  %9857 = vmatpush1.bf16.msra.mxu0 %v9188
  %9858 = vmatprep.subr.bf16.mxu0 %v9193
  %9859 = vmatpush1.bf16.msra.mxu0 %v9192
  %9860 = vmatprep.subr.bf16.mxu0 %v9197
  %9861 = vmatpush1.bf16.msra.mxu0 %v9196
  %9862 = vmatprep.subr.bf16.mxu0 %v9201
  %9863 = vmatpush1.bf16.msra.mxu0 %v9200
  %9864 = vmatprep.subr.bf16.mxu0 %v9205
  %9865 = vmatpush1.bf16.msra.mxu0 %v9204
  %9866 = vmatprep.subr.bf16.mxu0 %v9209
  %9867 = vmatpush1.bf16.msra.mxu0 %v9208
  %9868 = vmatprep.subr.bf16.mxu0 %v9213
  %9869 = vmatpush1.bf16.msra.mxu0 %v9212
  %9870 = vmatprep.subr.bf16.mxu0 %v9217
  %9871 = vmatpush1.bf16.msra.mxu0 %v9216
  %9872 = vmatprep.subr.bf16.mxu0 %v9221
  %9873 = vmatpush1.bf16.msra.mxu0 %v9220
  %9874 = vmatprep.subr.bf16.mxu0 %v9225
  %9875 = vmatpush1.bf16.msra.mxu0 %v9224
  %9876 = vmatprep.subr.bf16.mxu0 %v9229
  %9877 = vmatpush1.bf16.msra.mxu0 %v9228
  %9878 = vmatprep.subr.bf16.mxu0 %v9233
  %9879 = vmatpush1.bf16.msra.mxu0 %v9232
  %9880 = vmatprep.subr.bf16.mxu0 %v9237
  %9881 = vmatpush1.bf16.msra.mxu0 %v9236
  %9882 = vmatprep.mubr.bf16.mxu0 %v8121
  %9883 = vmatmul.mubr.bf16.gmra.mrb[0].mxu0 %v8120
  %v9884 = vpop.f32.mrb[0].mxu0
  %v9885 = vadd.f32 %v8397, %v9884
  %v9886 = vpop.f32.mrb[0].mxu0
  %v9887 = vadd.f32 %v8401, %v9886
  %v9888 = vpop.f32.mrb[0].mxu0
  %v9889 = vpop.f32.mrb[0].mxu0
  %9890 = vdwg.mxu0
  %9891 = vmatprep.subr.bf16.mxu0 %v9241
  %9892 = vmatpush1.bf16.msra.mxu0 %v9240
  %9893 = vmatprep.subr.bf16.mxu0 %v9245
  %9894 = vmatpush1.bf16.msra.mxu0 %v9244
  %9895 = vmatprep.subr.bf16.mxu0 %v9249
  %9896 = vmatpush1.bf16.msra.mxu0 %v9248
  %9897 = vmatprep.subr.bf16.mxu0 %v9253
  %9898 = vmatpush1.bf16.msra.mxu0 %v9252
  %9899 = vmatprep.subr.bf16.mxu0 %v9257
  %9900 = vmatpush1.bf16.msra.mxu0 %v9256
  %9901 = vmatprep.subr.bf16.mxu0 %v9261
  %9902 = vmatpush1.bf16.msra.mxu0 %v9260
  %9903 = vmatprep.subr.bf16.mxu0 %v9265
  %9904 = vmatpush1.bf16.msra.mxu0 %v9264
  %9905 = vmatprep.subr.bf16.mxu0 %v9269
  %9906 = vmatpush1.bf16.msra.mxu0 %v9268
  %9907 = vmatprep.subr.bf16.mxu0 %v9273
  %9908 = vmatpush1.bf16.msra.mxu0 %v9272
  %9909 = vmatprep.subr.bf16.mxu0 %v9277
  %9910 = vmatpush1.bf16.msra.mxu0 %v9276
  %9911 = vmatprep.subr.bf16.mxu0 %v9281
  %9912 = vmatpush1.bf16.msra.mxu0 %v9280
  %9913 = vmatprep.subr.bf16.mxu0 %v9285
  %9914 = vmatpush1.bf16.msra.mxu0 %v9284
  %9915 = vmatprep.subr.bf16.mxu0 %v9289
  %9916 = vmatpush1.bf16.msra.mxu0 %v9288
  %9917 = vmatprep.subr.bf16.mxu0 %v9293
  %9918 = vmatpush1.bf16.msra.mxu0 %v9292
  %9919 = vmatprep.subr.bf16.mxu0 %v9297
  %9920 = vmatpush1.bf16.msra.mxu0 %v9296
  %9921 = vmatprep.subr.bf16.mxu0 %v9301
  %9922 = vmatpush1.bf16.msra.mxu0 %v9300
  %9923 = vmatprep.mubr.bf16.mxu0 %v8123
  %9924 = vmatmul.mubr.bf16.gmra.mrb[0].mxu0 %v8122
  %v9925 = vpop.f32.mrb[0].mxu0
  %v9926 = vadd.f32 %v9885, %v9925
  %v9927 = vpop.f32.mrb[0].mxu0
  %v9928 = vadd.f32 %v9887, %v9927
  %v9929 = vpop.f32.mrb[0].mxu0
  %v9930 = vpop.f32.mrb[0].mxu0
  %9931 = vdwg.mxu0
  %9932 = vmatprep.subr.bf16.mxu0 %v9305
  %9933 = vmatpush1.bf16.msra.mxu0 %v9304
  %9934 = vmatprep.subr.bf16.mxu0 %v9309
  %9935 = vmatpush1.bf16.msra.mxu0 %v9308
  %9936 = vmatprep.subr.bf16.mxu0 %v9313
  %9937 = vmatpush1.bf16.msra.mxu0 %v9312
  %9938 = vmatprep.subr.bf16.mxu0 %v9317
  %9939 = vmatpush1.bf16.msra.mxu0 %v9316
  %9940 = vmatprep.subr.bf16.mxu0 %v9321
  %9941 = vmatpush1.bf16.msra.mxu0 %v9320
  %9942 = vmatprep.subr.bf16.mxu0 %v9325
  %9943 = vmatpush1.bf16.msra.mxu0 %v9324
  %9944 = vmatprep.subr.bf16.mxu0 %v9329
  %9945 = vmatpush1.bf16.msra.mxu0 %v9328
  %9946 = vmatprep.subr.bf16.mxu0 %v9333
  %9947 = vmatpush1.bf16.msra.mxu0 %v9332
  %9948 = vmatprep.subr.bf16.mxu0 %v9337
  %9949 = vmatpush1.bf16.msra.mxu0 %v9336
  %9950 = vmatprep.subr.bf16.mxu0 %v9341
  %9951 = vmatpush1.bf16.msra.mxu0 %v9340
  %9952 = vmatprep.subr.bf16.mxu0 %v9345
  %9953 = vmatpush1.bf16.msra.mxu0 %v9344
  %9954 = vmatprep.subr.bf16.mxu0 %v9349
  %9955 = vmatpush1.bf16.msra.mxu0 %v9348
  %9956 = vmatprep.subr.bf16.mxu0 %v9353
  %9957 = vmatpush1.bf16.msra.mxu0 %v9352
  %9958 = vmatprep.subr.bf16.mxu0 %v9357
  %9959 = vmatpush1.bf16.msra.mxu0 %v9356
  %9960 = vmatprep.subr.bf16.mxu0 %v9361
  %9961 = vmatpush1.bf16.msra.mxu0 %v9360
  %9962 = vmatprep.subr.bf16.mxu0 %v9365
  %9963 = vmatpush1.bf16.msra.mxu0 %v9364
  %9964 = vmatprep.mubr.bf16.mxu0 %v8125
  %9965 = vmatmul.mubr.bf16.gmra.mrb[0].mxu0 %v8124
  %v9966 = vpop.f32.mrb[0].mxu0
  %v9967 = vadd.f32 %v9926, %v9966
  %v9968 = vpop.f32.mrb[0].mxu0
  %v9969 = vadd.f32 %v9928, %v9968
  %v9970 = vpop.f32.mrb[0].mxu0
  %v9971 = vpop.f32.mrb[0].mxu0
  %9972 = vdwg.mxu0
  %9973 = vmatprep.subr.bf16.mxu0 %v9369
  %9974 = vmatpush1.bf16.msra.mxu0 %v9368
  %9975 = vmatprep.subr.bf16.mxu0 %v9373
  %9976 = vmatpush1.bf16.msra.mxu0 %v9372
  %9977 = vmatprep.subr.bf16.mxu0 %v9377
  %9978 = vmatpush1.bf16.msra.mxu0 %v9376
  %9979 = vmatprep.subr.bf16.mxu0 %v9381
  %9980 = vmatpush1.bf16.msra.mxu0 %v9380
  %9981 = vmatprep.subr.bf16.mxu0 %v9385
  %9982 = vmatpush1.bf16.msra.mxu0 %v9384
  %9983 = vmatprep.subr.bf16.mxu0 %v9389
  %9984 = vmatpush1.bf16.msra.mxu0 %v9388
  %9985 = vmatprep.subr.bf16.mxu0 %v9393
  %9986 = vmatpush1.bf16.msra.mxu0 %v9392
  %9987 = vmatprep.subr.bf16.mxu0 %v9397
  %9988 = vmatpush1.bf16.msra.mxu0 %v9396
  %9989 = vmatprep.subr.bf16.mxu0 %v9401
  %9990 = vmatpush1.bf16.msra.mxu0 %v9400
  %9991 = vmatprep.subr.bf16.mxu0 %v9405
  %9992 = vmatpush1.bf16.msra.mxu0 %v9404
  %9993 = vmatprep.subr.bf16.mxu0 %v9409
  %9994 = vmatpush1.bf16.msra.mxu0 %v9408
  %9995 = vmatprep.subr.bf16.mxu0 %v9413
  %9996 = vmatpush1.bf16.msra.mxu0 %v9412
  %9997 = vmatprep.subr.bf16.mxu0 %v9417
  %9998 = vmatpush1.bf16.msra.mxu0 %v9416
  %9999 = vmatprep.subr.bf16.mxu0 %v9421
  %10000 = vmatpush1.bf16.msra.mxu0 %v9420
  %10001 = vmatprep.subr.bf16.mxu0 %v9425
  %10002 = vmatpush1.bf16.msra.mxu0 %v9424
  %10003 = vmatprep.subr.bf16.mxu0 %v9429
  %10004 = vmatpush1.bf16.msra.mxu0 %v9428
  %10005 = vmatprep.mubr.bf16.mxu0 %v8127
  %10006 = vmatmul.mubr.bf16.gmra.mrb[0].mxu0 %v8126
  %v10007 = vpop.f32.mrb[0].mxu0
  %v10008 = vadd.f32 %v9967, %v10007
  %v10009 = vpop.f32.mrb[0].mxu0
  %v10010 = vadd.f32 %v9969, %v10009
  %v10011 = vpop.f32.mrb[0].mxu0
  %v10012 = vpop.f32.mrb[0].mxu0
  %10013 = vdwg.mxu0
  %v10014 = vpack.c.bf16 %v9844, %v9844
  %v10015 = vpack.c.bf16 %v9846, %v9846
  %v10016 = vpack.c.bf16 %v10008, %v10008
  %v10017 = vpack.c.bf16 %v10010, %v10010
  %v10018 = vmax.f32 %v9844, 0.0
  %v10019 = vmax.f32 %v9846, 0.0
  %v10020 = vmax.f32 %v10008, 0.0
  %v10021 = vmax.f32 %v10010, 0.0
  %v10022 = vpack.c.bf16 %v10018, %v10018
  %v10023 = vpack.c.bf16 %v10019, %v10019
  %v10024 = vpack.c.bf16 %v10020, %v10020
  %v10025 = vpack.c.bf16 %v10021, %v10021
  %v10026 = vld [vmem:[%s7] sm:$0xf]
  %v10027 = vld [vmem:[%s7 + $0x4] sm:$0xf]
  %v10028 = vld [vmem:[%s7 + $0x8] sm:$0xf]
  %v10029 = vld [vmem:[%s7 + $0xc] sm:$0xf]
  %v10030 = vld [vmem:[%s7 + $0x10] sm:$0xf]
  %v10031 = vld [vmem:[%s7 + $0x14] sm:$0xf]
  %v10032 = vld [vmem:[%s7 + $0x18] sm:$0xf]
  %v10033 = vld [vmem:[%s7 + $0x1c] sm:$0xf]
  %v10034 = vld [vmem:[%s7 + $0x20] sm:$0xf]
  %v10035 = vld [vmem:[%s7 + $0x24] sm:$0xf]
  %v10036 = vld [vmem:[%s7 + $0x28] sm:$0xf]
  %v10037 = vld [vmem:[%s7 + $0x2c] sm:$0xf]
  %v10038 = vld [vmem:[%s7 + $0x30] sm:$0xf]
  %v10039 = vld [vmem:[%s7 + $0x34] sm:$0xf]
  %v10040 = vld [vmem:[%s7 + $0x38] sm:$0xf]
  %v10041 = vld [vmem:[%s7 + $0x3c] sm:$0xf]
  %v10042 = vld [vmem:[%s7 + $0x40] sm:$0xf]
  %v10043 = vld [vmem:[%s7 + $0x44] sm:$0xf]
  %v10044 = vld [vmem:[%s7 + $0x48] sm:$0xf]
  %v10045 = vld [vmem:[%s7 + $0x4c] sm:$0xf]
  %v10046 = vld [vmem:[%s7 + $0x50] sm:$0xf]
  %v10047 = vld [vmem:[%s7 + $0x54] sm:$0xf]
  %v10048 = vld [vmem:[%s7 + $0x58] sm:$0xf]
  %v10049 = vld [vmem:[%s7 + $0x5c] sm:$0xf]
  %v10050 = vld [vmem:[%s7 + $0x60] sm:$0xf]
  %v10051 = vld [vmem:[%s7 + $0x64] sm:$0xf]
  %v10052 = vld [vmem:[%s7 + $0x68] sm:$0xf]
  %v10053 = vld [vmem:[%s7 + $0x6c] sm:$0xf]
  %v10054 = vld [vmem:[%s7 + $0x70] sm:$0xf]
  %v10055 = vld [vmem:[%s7 + $0x74] sm:$0xf]
  %v10056 = vld [vmem:[%s7 + $0x78] sm:$0xf]
  %v10057 = vld [vmem:[%s7 + $0x7c] sm:$0xf]
  %v10058 = vld [vmem:[%s7 + $0x80] sm:$0xf]
  %v10059 = vld [vmem:[%s7 + $0x84] sm:$0xf]
  %v10060 = vld [vmem:[%s7 + $0x88] sm:$0xf]
  %v10061 = vld [vmem:[%s7 + $0x8c] sm:$0xf]
  %v10062 = vld [vmem:[%s7 + $0x90] sm:$0xf]
  %v10063 = vld [vmem:[%s7 + $0x94] sm:$0xf]
  %v10064 = vld [vmem:[%s7 + $0x98] sm:$0xf]
  %v10065 = vld [vmem:[%s7 + $0x9c] sm:$0xf]
  %v10066 = vld [vmem:[%s7 + $0xa0] sm:$0xf]
  %v10067 = vld [vmem:[%s7 + $0xa4] sm:$0xf]
  %v10068 = vld [vmem:[%s7 + $0xa8] sm:$0xf]
  %v10069 = vld [vmem:[%s7 + $0xac] sm:$0xf]
  %v10070 = vld [vmem:[%s7 + $0xb0] sm:$0xf]
  %v10071 = vld [vmem:[%s7 + $0xb4] sm:$0xf]
  %v10072 = vld [vmem:[%s7 + $0xb8] sm:$0xf]
  %v10073 = vld [vmem:[%s7 + $0xbc] sm:$0xf]
  %v10074 = vld [vmem:[%s7 + $0xc0] sm:$0xf]
  %v10075 = vld [vmem:[%s7 + $0xc4] sm:$0xf]
  %v10076 = vld [vmem:[%s7 + $0xc8] sm:$0xf]
  %v10077 = vld [vmem:[%s7 + $0xcc] sm:$0xf]
  %v10078 = vld [vmem:[%s7 + $0xd0] sm:$0xf]
  %v10079 = vld [vmem:[%s7 + $0xd4] sm:$0xf]
  %v10080 = vld [vmem:[%s7 + $0xd8] sm:$0xf]
  %v10081 = vld [vmem:[%s7 + $0xdc] sm:$0xf]
  %v10082 = vld [vmem:[%s7 + $0xe0] sm:$0xf]
  %v10083 = vld [vmem:[%s7 + $0xe4] sm:$0xf]
  %v10084 = vld [vmem:[%s7 + $0xe8] sm:$0xf]
  %v10085 = vld [vmem:[%s7 + $0xec] sm:$0xf]
  %v10086 = vld [vmem:[%s7 + $0xf0] sm:$0xf]
  %v10087 = vld [vmem:[%s7 + $0xf4] sm:$0xf]
  %v10088 = vld [vmem:[%s7 + $0xf8] sm:$0xf]
  %v10089 = vld [vmem:[%s7 + $0xfc] sm:$0xf]
  %v10090 = vld [vmem:[%s8] sm:$0xf]
  %v10091 = vld [vmem:[%s8 + $0x4] sm:$0xf]
  %v10092 = vld [vmem:[%s8 + $0x8] sm:$0xf]
  %v10093 = vld [vmem:[%s8 + $0xc] sm:$0xf]
  %v10094 = vld [vmem:[%s8 + $0x10] sm:$0xf]
  %v10095 = vld [vmem:[%s8 + $0x14] sm:$0xf]
  %v10096 = vld [vmem:[%s8 + $0x18] sm:$0xf]
  %v10097 = vld [vmem:[%s8 + $0x1c] sm:$0xf]
  %v10098 = vld [vmem:[%s8 + $0x20] sm:$0xf]
  %v10099 = vld [vmem:[%s8 + $0x24] sm:$0xf]
  %v10100 = vld [vmem:[%s8 + $0x28] sm:$0xf]
  %v10101 = vld [vmem:[%s8 + $0x2c] sm:$0xf]
  %v10102 = vld [vmem:[%s8 + $0x30] sm:$0xf]
  %v10103 = vld [vmem:[%s8 + $0x34] sm:$0xf]
  %v10104 = vld [vmem:[%s8 + $0x38] sm:$0xf]
  %v10105 = vld [vmem:[%s8 + $0x3c] sm:$0xf]
  %v10106 = vld [vmem:[%s8 + $0x40] sm:$0xf]
  %v10107 = vld [vmem:[%s8 + $0x44] sm:$0xf]
  %v10108 = vld [vmem:[%s8 + $0x48] sm:$0xf]
  %v10109 = vld [vmem:[%s8 + $0x4c] sm:$0xf]
  %v10110 = vld [vmem:[%s8 + $0x50] sm:$0xf]
  %v10111 = vld [vmem:[%s8 + $0x54] sm:$0xf]
  %v10112 = vld [vmem:[%s8 + $0x58] sm:$0xf]
  %v10113 = vld [vmem:[%s8 + $0x5c] sm:$0xf]
  %v10114 = vld [vmem:[%s8 + $0x60] sm:$0xf]
  %v10115 = vld [vmem:[%s8 + $0x64] sm:$0xf]
  %v10116 = vld [vmem:[%s8 + $0x68] sm:$0xf]
  %v10117 = vld [vmem:[%s8 + $0x6c] sm:$0xf]
  %v10118 = vld [vmem:[%s8 + $0x70] sm:$0xf]
  %v10119 = vld [vmem:[%s8 + $0x74] sm:$0xf]
  %v10120 = vld [vmem:[%s8 + $0x78] sm:$0xf]
  %v10121 = vld [vmem:[%s8 + $0x7c] sm:$0xf]
  %v10122 = vld [vmem:[%s8 + $0x80] sm:$0xf]
  %v10123 = vld [vmem:[%s8 + $0x84] sm:$0xf]
  %v10124 = vld [vmem:[%s8 + $0x88] sm:$0xf]
  %v10125 = vld [vmem:[%s8 + $0x8c] sm:$0xf]
  %v10126 = vld [vmem:[%s8 + $0x90] sm:$0xf]
  %v10127 = vld [vmem:[%s8 + $0x94] sm:$0xf]
  %v10128 = vld [vmem:[%s8 + $0x98] sm:$0xf]
  %v10129 = vld [vmem:[%s8 + $0x9c] sm:$0xf]
  %v10130 = vld [vmem:[%s8 + $0xa0] sm:$0xf]
  %v10131 = vld [vmem:[%s8 + $0xa4] sm:$0xf]
  %v10132 = vld [vmem:[%s8 + $0xa8] sm:$0xf]
  %v10133 = vld [vmem:[%s8 + $0xac] sm:$0xf]
  %v10134 = vld [vmem:[%s8 + $0xb0] sm:$0xf]
  %v10135 = vld [vmem:[%s8 + $0xb4] sm:$0xf]
  %v10136 = vld [vmem:[%s8 + $0xb8] sm:$0xf]
  %v10137 = vld [vmem:[%s8 + $0xbc] sm:$0xf]
  %v10138 = vld [vmem:[%s8 + $0xc0] sm:$0xf]
  %v10139 = vld [vmem:[%s8 + $0xc4] sm:$0xf]
  %v10140 = vld [vmem:[%s8 + $0xc8] sm:$0xf]
  %v10141 = vld [vmem:[%s8 + $0xcc] sm:$0xf]
  %v10142 = vld [vmem:[%s8 + $0xd0] sm:$0xf]
  %v10143 = vld [vmem:[%s8 + $0xd4] sm:$0xf]
  %v10144 = vld [vmem:[%s8 + $0xd8] sm:$0xf]
  %v10145 = vld [vmem:[%s8 + $0xdc] sm:$0xf]
  %v10146 = vld [vmem:[%s8 + $0xe0] sm:$0xf]
  %v10147 = vld [vmem:[%s8 + $0xe4] sm:$0xf]
  %v10148 = vld [vmem:[%s8 + $0xe8] sm:$0xf]
  %v10149 = vld [vmem:[%s8 + $0xec] sm:$0xf]
  %v10150 = vld [vmem:[%s8 + $0xf0] sm:$0xf]
  %v10151 = vld [vmem:[%s8 + $0xf4] sm:$0xf]
  %v10152 = vld [vmem:[%s8 + $0xf8] sm:$0xf]
  %v10153 = vld [vmem:[%s8 + $0xfc] sm:$0xf]
  %v10218 = vunpack.c.l.b16 %v10090
  %v10219 = vunpack.c.l.b16 %v10091
  %v10220 = vunpack.c.l.b16 %v10092
  %v10221 = vunpack.c.l.b16 %v10093
  %v10222 = vunpack.c.l.b16 %v10094
  %v10223 = vunpack.c.l.b16 %v10095
  %v10224 = vunpack.c.l.b16 %v10096
  %v10225 = vunpack.c.l.b16 %v10097
  %v10226 = vunpack.c.l.b16 %v10098
  %v10227 = vunpack.c.l.b16 %v10099
  %v10228 = vunpack.c.l.b16 %v10100
  %v10229 = vunpack.c.l.b16 %v10101
  %v10230 = vunpack.c.l.b16 %v10102
  %v10231 = vunpack.c.l.b16 %v10103
  %v10232 = vunpack.c.l.b16 %v10104
  %v10233 = vunpack.c.l.b16 %v10105
  %v10234 = vunpack.c.l.b16 %v10106
  %v10235 = vunpack.c.l.b16 %v10107
  %v10236 = vunpack.c.l.b16 %v10108
  %v10237 = vunpack.c.l.b16 %v10109
  %v10238 = vunpack.c.l.b16 %v10110
  %v10239 = vunpack.c.l.b16 %v10111
  %v10240 = vunpack.c.l.b16 %v10112
  %v10241 = vunpack.c.l.b16 %v10113
  %v10242 = vunpack.c.l.b16 %v10114
  %v10243 = vunpack.c.l.b16 %v10115
  %v10244 = vunpack.c.l.b16 %v10116
  %v10245 = vunpack.c.l.b16 %v10117
  %v10246 = vunpack.c.l.b16 %v10118
  %v10247 = vunpack.c.l.b16 %v10119
  %v10248 = vunpack.c.l.b16 %v10120
  %v10249 = vunpack.c.l.b16 %v10121
  %v10250 = vunpack.c.l.b16 %v10122
  %v10251 = vunpack.c.l.b16 %v10123
  %v10252 = vunpack.c.l.b16 %v10124
  %v10253 = vunpack.c.l.b16 %v10125
  %v10254 = vunpack.c.l.b16 %v10126
  %v10255 = vunpack.c.l.b16 %v10127
  %v10256 = vunpack.c.l.b16 %v10128
  %v10257 = vunpack.c.l.b16 %v10129
  %v10258 = vunpack.c.l.b16 %v10130
  %v10259 = vunpack.c.l.b16 %v10131
  %v10260 = vunpack.c.l.b16 %v10132
  %v10261 = vunpack.c.l.b16 %v10133
  %v10262 = vunpack.c.l.b16 %v10134
  %v10263 = vunpack.c.l.b16 %v10135
  %v10264 = vunpack.c.l.b16 %v10136
  %v10265 = vunpack.c.l.b16 %v10137
  %v10266 = vunpack.c.l.b16 %v10138
  %v10267 = vunpack.c.l.b16 %v10139
  %v10268 = vunpack.c.l.b16 %v10140
  %v10269 = vunpack.c.l.b16 %v10141
  %v10270 = vunpack.c.l.b16 %v10142
  %v10271 = vunpack.c.l.b16 %v10143
  %v10272 = vunpack.c.l.b16 %v10144
  %v10273 = vunpack.c.l.b16 %v10145
  %v10274 = vunpack.c.l.b16 %v10146
  %v10275 = vunpack.c.l.b16 %v10147
  %v10276 = vunpack.c.l.b16 %v10148
  %v10277 = vunpack.c.l.b16 %v10149
  %v10278 = vunpack.c.l.b16 %v10150
  %v10279 = vunpack.c.l.b16 %v10151
  %v10280 = vunpack.c.l.b16 %v10152
  %v10281 = vunpack.c.l.b16 %v10153
  %v10282 = vpack.c.b16 %v10219, %v10218
  %v10283 = vpack.c.b16 %v10221, %v10220
  %v10284 = vpack.c.b16 %v10223, %v10222
  %v10285 = vpack.c.b16 %v10225, %v10224
  %v10286 = vpack.c.b16 %v10227, %v10226
  %v10287 = vpack.c.b16 %v10229, %v10228
  %v10288 = vpack.c.b16 %v10231, %v10230
  %v10289 = vpack.c.b16 %v10233, %v10232
  %v10290 = vpack.c.b16 %v10235, %v10234
  %v10291 = vpack.c.b16 %v10237, %v10236
  %v10292 = vpack.c.b16 %v10239, %v10238
  %v10293 = vpack.c.b16 %v10241, %v10240
  %v10294 = vpack.c.b16 %v10243, %v10242
  %v10295 = vpack.c.b16 %v10245, %v10244
  %v10296 = vpack.c.b16 %v10247, %v10246
  %v10297 = vpack.c.b16 %v10249, %v10248
  %v10298 = vpack.c.b16 %v10251, %v10250
  %v10299 = vpack.c.b16 %v10253, %v10252
  %v10300 = vpack.c.b16 %v10255, %v10254
  %v10301 = vpack.c.b16 %v10257, %v10256
  %v10302 = vpack.c.b16 %v10259, %v10258
  %v10303 = vpack.c.b16 %v10261, %v10260
  %v10304 = vpack.c.b16 %v10263, %v10262
  %v10305 = vpack.c.b16 %v10265, %v10264
  %v10306 = vpack.c.b16 %v10267, %v10266
  %v10307 = vpack.c.b16 %v10269, %v10268
  %v10308 = vpack.c.b16 %v10271, %v10270
  %v10309 = vpack.c.b16 %v10273, %v10272
  %v10310 = vpack.c.b16 %v10275, %v10274
  %v10311 = vpack.c.b16 %v10277, %v10276
  %v10312 = vpack.c.b16 %v10279, %v10278
  %v10313 = vpack.c.b16 %v10281, %v10280
  %10346 = vmatprep.subr.bf16.mxu0 0
  %10347 = vmatpush1.bf16.msra.mxu0 %v10282
  %10348 = vmatprep.subr.bf16.mxu0 0
  %10349 = vmatpush1.bf16.msra.mxu0 %v10283
  %10350 = vmatprep.subr.bf16.mxu0 0
  %10351 = vmatpush1.bf16.msra.mxu0 %v10284
  %10352 = vmatprep.subr.bf16.mxu0 0
  %10353 = vmatpush1.bf16.msra.mxu0 %v10285
  %10354 = vmatprep.subr.bf16.mxu0 0
  %10355 = vmatpush1.bf16.msra.mxu0 %v10286
  %10356 = vmatprep.subr.bf16.mxu0 0
  %10357 = vmatpush1.bf16.msra.mxu0 %v10287
  %10358 = vmatprep.subr.bf16.mxu0 0
  %10359 = vmatpush1.bf16.msra.mxu0 %v10288
  %10360 = vmatprep.subr.bf16.mxu0 0
  %10361 = vmatpush1.bf16.msra.mxu0 %v10289
  %10362 = vmatprep.subr.bf16.mxu0 0
  %10363 = vmatpush1.bf16.msra.mxu0 %v10290
  %10364 = vmatprep.subr.bf16.mxu0 0
  %10365 = vmatpush1.bf16.msra.mxu0 %v10291
  %10366 = vmatprep.subr.bf16.mxu0 0
  %10367 = vmatpush1.bf16.msra.mxu0 %v10292
  %10368 = vmatprep.subr.bf16.mxu0 0
  %10369 = vmatpush1.bf16.msra.mxu0 %v10293
  %10370 = vmatprep.subr.bf16.mxu0 0
  %10371 = vmatpush1.bf16.msra.mxu0 %v10294
  %10372 = vmatprep.subr.bf16.mxu0 0
  %10373 = vmatpush1.bf16.msra.mxu0 %v10295
  %10374 = vmatprep.subr.bf16.mxu0 0
  %10375 = vmatpush1.bf16.msra.mxu0 %v10296
  %10376 = vmatprep.subr.bf16.mxu0 0
  %10377 = vmatpush1.bf16.msra.mxu0 %v10297
  %10378 = vmatprep.mubr.bf16.mxu0 %v10023
  %10379 = vmatmul.mubr.bf16.gmra.mrb[0].mxu0 %v10022
  %v10380 = vpop.f32.mrb[0].mxu0
  %v10381 = vadd.f32 0.0, %v10380
  %v10382 = vpop.f32.mrb[0].mxu0
  %v10383 = vpop.f32.mrb[0].mxu0
  %v10384 = vpop.f32.mrb[0].mxu0
  %10385 = vdwg.mxu0
  %10386 = vmatprep.subr.bf16.mxu0 0
  %10387 = vmatpush1.bf16.msra.mxu0 %v10298
  %10388 = vmatprep.subr.bf16.mxu0 0
  %10389 = vmatpush1.bf16.msra.mxu0 %v10299
  %10390 = vmatprep.subr.bf16.mxu0 0
  %10391 = vmatpush1.bf16.msra.mxu0 %v10300
  %10392 = vmatprep.subr.bf16.mxu0 0
  %10393 = vmatpush1.bf16.msra.mxu0 %v10301
  %10394 = vmatprep.subr.bf16.mxu0 0
  %10395 = vmatpush1.bf16.msra.mxu0 %v10302
  %10396 = vmatprep.subr.bf16.mxu0 0
  %10397 = vmatpush1.bf16.msra.mxu0 %v10303
  %10398 = vmatprep.subr.bf16.mxu0 0
  %10399 = vmatpush1.bf16.msra.mxu0 %v10304
  %10400 = vmatprep.subr.bf16.mxu0 0
  %10401 = vmatpush1.bf16.msra.mxu0 %v10305
  %10402 = vmatprep.subr.bf16.mxu0 0
  %10403 = vmatpush1.bf16.msra.mxu0 %v10306
  %10404 = vmatprep.subr.bf16.mxu0 0
  %10405 = vmatpush1.bf16.msra.mxu0 %v10307
  %10406 = vmatprep.subr.bf16.mxu0 0
  %10407 = vmatpush1.bf16.msra.mxu0 %v10308
  %10408 = vmatprep.subr.bf16.mxu0 0
  %10409 = vmatpush1.bf16.msra.mxu0 %v10309
  %10410 = vmatprep.subr.bf16.mxu0 0
  %10411 = vmatpush1.bf16.msra.mxu0 %v10310
  %10412 = vmatprep.subr.bf16.mxu0 0
  %10413 = vmatpush1.bf16.msra.mxu0 %v10311
  %10414 = vmatprep.subr.bf16.mxu0 0
  %10415 = vmatpush1.bf16.msra.mxu0 %v10312
  %10416 = vmatprep.subr.bf16.mxu0 0
  %10417 = vmatpush1.bf16.msra.mxu0 %v10313
  %10418 = vmatprep.mubr.bf16.mxu0 %v10025
  %10419 = vmatmul.mubr.bf16.gmra.mrb[0].mxu0 %v10024
  %v10420 = vpop.f32.mrb[0].mxu0
  %v10421 = vadd.f32 %v10381, %v10420
  %v10422 = vpop.f32.mrb[0].mxu0
  %v10423 = vpop.f32.mrb[0].mxu0
  %v10424 = vpop.f32.mrb[0].mxu0
  %10425 = vdwg.mxu0
  %v10490 = vunpack.c.l.b16 %v10026
  %v10491 = vunpack.c.l.b16 %v10027
  %v10492 = vunpack.c.l.b16 %v10028
  %v10493 = vunpack.c.l.b16 %v10029
  %v10494 = vunpack.c.l.b16 %v10030
  %v10495 = vunpack.c.l.b16 %v10031
  %v10496 = vunpack.c.l.b16 %v10032
  %v10497 = vunpack.c.l.b16 %v10033
  %v10498 = vunpack.c.l.b16 %v10034
  %v10499 = vunpack.c.l.b16 %v10035
  %v10500 = vunpack.c.l.b16 %v10036
  %v10501 = vunpack.c.l.b16 %v10037
  %v10502 = vunpack.c.l.b16 %v10038
  %v10503 = vunpack.c.l.b16 %v10039
  %v10504 = vunpack.c.l.b16 %v10040
  %v10505 = vunpack.c.l.b16 %v10041
  %v10506 = vunpack.c.l.b16 %v10042
  %v10507 = vunpack.c.l.b16 %v10043
  %v10508 = vunpack.c.l.b16 %v10044
  %v10509 = vunpack.c.l.b16 %v10045
  %v10510 = vunpack.c.l.b16 %v10046
  %v10511 = vunpack.c.l.b16 %v10047
  %v10512 = vunpack.c.l.b16 %v10048
  %v10513 = vunpack.c.l.b16 %v10049
  %v10514 = vunpack.c.l.b16 %v10050
  %v10515 = vunpack.c.l.b16 %v10051
  %v10516 = vunpack.c.l.b16 %v10052
  %v10517 = vunpack.c.l.b16 %v10053
  %v10518 = vunpack.c.l.b16 %v10054
  %v10519 = vunpack.c.l.b16 %v10055
  %v10520 = vunpack.c.l.b16 %v10056
  %v10521 = vunpack.c.l.b16 %v10057
  %v10522 = vunpack.c.l.b16 %v10058
  %v10523 = vunpack.c.l.b16 %v10059
  %v10524 = vunpack.c.l.b16 %v10060
  %v10525 = vunpack.c.l.b16 %v10061
  %v10526 = vunpack.c.l.b16 %v10062
  %v10527 = vunpack.c.l.b16 %v10063
  %v10528 = vunpack.c.l.b16 %v10064
  %v10529 = vunpack.c.l.b16 %v10065
  %v10530 = vunpack.c.l.b16 %v10066
  %v10531 = vunpack.c.l.b16 %v10067
  %v10532 = vunpack.c.l.b16 %v10068
  %v10533 = vunpack.c.l.b16 %v10069
  %v10534 = vunpack.c.l.b16 %v10070
  %v10535 = vunpack.c.l.b16 %v10071
  %v10536 = vunpack.c.l.b16 %v10072
  %v10537 = vunpack.c.l.b16 %v10073
  %v10538 = vunpack.c.l.b16 %v10074
  %v10539 = vunpack.c.l.b16 %v10075
  %v10540 = vunpack.c.l.b16 %v10076
  %v10541 = vunpack.c.l.b16 %v10077
  %v10542 = vunpack.c.l.b16 %v10078
  %v10543 = vunpack.c.l.b16 %v10079
  %v10544 = vunpack.c.l.b16 %v10080
  %v10545 = vunpack.c.l.b16 %v10081
  %v10546 = vunpack.c.l.b16 %v10082
  %v10547 = vunpack.c.l.b16 %v10083
  %v10548 = vunpack.c.l.b16 %v10084
  %v10549 = vunpack.c.l.b16 %v10085
  %v10550 = vunpack.c.l.b16 %v10086
  %v10551 = vunpack.c.l.b16 %v10087
  %v10552 = vunpack.c.l.b16 %v10088
  %v10553 = vunpack.c.l.b16 %v10089
  %v10554 = vpack.c.b16 %v10491, %v10490
  %v10555 = vpack.c.b16 %v10493, %v10492
  %v10556 = vpack.c.b16 %v10495, %v10494
  %v10557 = vpack.c.b16 %v10497, %v10496
  %v10558 = vpack.c.b16 %v10499, %v10498
  %v10559 = vpack.c.b16 %v10501, %v10500
  %v10560 = vpack.c.b16 %v10503, %v10502
  %v10561 = vpack.c.b16 %v10505, %v10504
  %v10562 = vpack.c.b16 %v10507, %v10506
  %v10563 = vpack.c.b16 %v10509, %v10508
  %v10564 = vpack.c.b16 %v10511, %v10510
  %v10565 = vpack.c.b16 %v10513, %v10512
  %v10566 = vpack.c.b16 %v10515, %v10514
  %v10567 = vpack.c.b16 %v10517, %v10516
  %v10568 = vpack.c.b16 %v10519, %v10518
  %v10569 = vpack.c.b16 %v10521, %v10520
  %v10570 = vpack.c.b16 %v10523, %v10522
  %v10571 = vpack.c.b16 %v10525, %v10524
  %v10572 = vpack.c.b16 %v10527, %v10526
  %v10573 = vpack.c.b16 %v10529, %v10528
  %v10574 = vpack.c.b16 %v10531, %v10530
  %v10575 = vpack.c.b16 %v10533, %v10532
  %v10576 = vpack.c.b16 %v10535, %v10534
  %v10577 = vpack.c.b16 %v10537, %v10536
  %v10578 = vpack.c.b16 %v10539, %v10538
  %v10579 = vpack.c.b16 %v10541, %v10540
  %v10580 = vpack.c.b16 %v10543, %v10542
  %v10581 = vpack.c.b16 %v10545, %v10544
  %v10582 = vpack.c.b16 %v10547, %v10546
  %v10583 = vpack.c.b16 %v10549, %v10548
  %v10584 = vpack.c.b16 %v10551, %v10550
  %v10585 = vpack.c.b16 %v10553, %v10552
  %10618 = vmatprep.subr.bf16.mxu0 0
  %10619 = vmatpush1.bf16.msra.mxu0 %v10554
  %10620 = vmatprep.subr.bf16.mxu0 0
  %10621 = vmatpush1.bf16.msra.mxu0 %v10555
  %10622 = vmatprep.subr.bf16.mxu0 0
  %10623 = vmatpush1.bf16.msra.mxu0 %v10556
  %10624 = vmatprep.subr.bf16.mxu0 0
  %10625 = vmatpush1.bf16.msra.mxu0 %v10557
  %10626 = vmatprep.subr.bf16.mxu0 0
  %10627 = vmatpush1.bf16.msra.mxu0 %v10558
  %10628 = vmatprep.subr.bf16.mxu0 0
  %10629 = vmatpush1.bf16.msra.mxu0 %v10559
  %10630 = vmatprep.subr.bf16.mxu0 0
  %10631 = vmatpush1.bf16.msra.mxu0 %v10560
  %10632 = vmatprep.subr.bf16.mxu0 0
  %10633 = vmatpush1.bf16.msra.mxu0 %v10561
  %10634 = vmatprep.subr.bf16.mxu0 0
  %10635 = vmatpush1.bf16.msra.mxu0 %v10562
  %10636 = vmatprep.subr.bf16.mxu0 0
  %10637 = vmatpush1.bf16.msra.mxu0 %v10563
  %10638 = vmatprep.subr.bf16.mxu0 0
  %10639 = vmatpush1.bf16.msra.mxu0 %v10564
  %10640 = vmatprep.subr.bf16.mxu0 0
  %10641 = vmatpush1.bf16.msra.mxu0 %v10565
  %10642 = vmatprep.subr.bf16.mxu0 0
  %10643 = vmatpush1.bf16.msra.mxu0 %v10566
  %10644 = vmatprep.subr.bf16.mxu0 0
  %10645 = vmatpush1.bf16.msra.mxu0 %v10567
  %10646 = vmatprep.subr.bf16.mxu0 0
  %10647 = vmatpush1.bf16.msra.mxu0 %v10568
  %10648 = vmatprep.subr.bf16.mxu0 0
  %10649 = vmatpush1.bf16.msra.mxu0 %v10569
  %10650 = vmatprep.mubr.bf16.mxu0 %v10015
  %10651 = vmatmul.mubr.bf16.gmra.mrb[0].mxu0 %v10014
  %v10652 = vpop.f32.mrb[0].mxu0
  %v10653 = vadd.f32 %v10421, %v10652
  %v10654 = vpop.f32.mrb[0].mxu0
  %v10655 = vpop.f32.mrb[0].mxu0
  %v10656 = vpop.f32.mrb[0].mxu0
  %10657 = vdwg.mxu0
  %10658 = vmatprep.subr.bf16.mxu0 0
  %10659 = vmatpush1.bf16.msra.mxu0 %v10570
  %10660 = vmatprep.subr.bf16.mxu0 0
  %10661 = vmatpush1.bf16.msra.mxu0 %v10571
  %10662 = vmatprep.subr.bf16.mxu0 0
  %10663 = vmatpush1.bf16.msra.mxu0 %v10572
  %10664 = vmatprep.subr.bf16.mxu0 0
  %10665 = vmatpush1.bf16.msra.mxu0 %v10573
  %10666 = vmatprep.subr.bf16.mxu0 0
  %10667 = vmatpush1.bf16.msra.mxu0 %v10574
  %10668 = vmatprep.subr.bf16.mxu0 0
  %10669 = vmatpush1.bf16.msra.mxu0 %v10575
  %10670 = vmatprep.subr.bf16.mxu0 0
  %10671 = vmatpush1.bf16.msra.mxu0 %v10576
  %10672 = vmatprep.subr.bf16.mxu0 0
  %10673 = vmatpush1.bf16.msra.mxu0 %v10577
  %10674 = vmatprep.subr.bf16.mxu0 0
  %10675 = vmatpush1.bf16.msra.mxu0 %v10578
  %10676 = vmatprep.subr.bf16.mxu0 0
  %10677 = vmatpush1.bf16.msra.mxu0 %v10579
  %10678 = vmatprep.subr.bf16.mxu0 0
  %10679 = vmatpush1.bf16.msra.mxu0 %v10580
  %10680 = vmatprep.subr.bf16.mxu0 0
  %10681 = vmatpush1.bf16.msra.mxu0 %v10581
  %10682 = vmatprep.subr.bf16.mxu0 0
  %10683 = vmatpush1.bf16.msra.mxu0 %v10582
  %10684 = vmatprep.subr.bf16.mxu0 0
  %10685 = vmatpush1.bf16.msra.mxu0 %v10583
  %10686 = vmatprep.subr.bf16.mxu0 0
  %10687 = vmatpush1.bf16.msra.mxu0 %v10584
  %10688 = vmatprep.subr.bf16.mxu0 0
  %10689 = vmatpush1.bf16.msra.mxu0 %v10585
  %10690 = vmatprep.mubr.bf16.mxu0 %v10017
  %10691 = vmatmul.mubr.bf16.gmra.mrb[0].mxu0 %v10016
  %v10692 = vpop.f32.mrb[0].mxu0
  %v10693 = vadd.f32 %v10653, %v10692
  %v10694 = vpop.f32.mrb[0].mxu0
  %v10695 = vpop.f32.mrb[0].mxu0
  %v10696 = vpop.f32.mrb[0].mxu0
  %10697 = vdwg.mxu0
  %v10698 = vld [vmem:[%s9] sm:$0x1]
  %v10700 = vlaneseq
  %v10701 = vshrl.u32 %v10700, 7
  %v10702 = vsub.s32 0, %v10701
  %v10703 = vrot.slane %v10698, %v10702
  %v10705 = vadd.f32 %v10693, %v10703
  %v10706 = vlaneseq
  %v10707 = vand.u32 %v10706, 127
  %vm10708 = vcmp.lt.s32.totalorder %v10707, 6
  %v10709 = vmax.f32 %v10705, 0.0
  %v10710 = vand.u32 2147483647, %v10705
  %v10711 = vsub.f32 0.0, %v10710
  %v10712 = vmul.f32 %v10711, 1.442695
  %v10713 = vpow.pop %v10712
  %v10714 = vadd.f32 %v10713, 1.0
  %v10715 = vlog2.pop %v10714
  %v10716 = vmul.f32 %v10715, 0.6931472
  %v10717 = vmul.f32 -0.5, %v10713
  %v10718 = vadd.f32 %v10717, 1.0
  %v10719 = vmul.f32 %v10718, %v10713
  %v10720 = vand.u32 2147483647, %v10713
  %vm10721 = vcmp.lt.f32.partialorder %v10720, 0.0004427343
  %v10722 = vsel %vm10721, %v10719, %v10716
  %v10723 = vadd.f32 %v10709, %v10722
  %v10724 = vsel %vm10708, %v10705, %v10723
  %10725 = vst [vmem:[%s10] sm:$0xff] %v10724
  // Predicated region
  $region42: #{sirats_forward.1} parent=0 // pred_check
    _
  $region43: #{sirats_forward.1} parent=0 // pred_check_branch
    %10727 = sbr.rel (0) target = $region45
  $region44: #{sirats_forward.1} parent=0 // pred_region
    _
  $region45: #{sirats_forward.1} parent=0 // pred_fallthru
    _
  // Predicated region
  $region46: #{sirats_forward.1} parent=0 // pred_check
    _
  $region47: #{sirats_forward.1} parent=0 // pred_check_branch
    %10729 = sbr.rel (0) target = $region49
  $region48: #{sirats_forward.1} parent=0 // pred_region
    _
  $region49: #{sirats_forward.1} parent=0 // pred_fallthru
    _

</llo_original>
